<compile_context>
chip_gen: v5e
topology: v5e:2x2
jax: 0.10.0
libtpu: 0.0.40
codegen_flags: <defaults>
</compile_context>

<pallas_src>
import numpy as np
import jax
import jax.numpy as jnp
from jax import lax
from jax.experimental import pallas as pl
from jax.experimental.pallas import tpu as pltpu

HIDDEN = 32
GENE_NUM = 16
NUM_LAYERS = 2
BATCH_SIZE = 2
N = 32                       # per-graph padded node count
NODES = 2 * N                # graph0 (whole genome) rows 0..31, graph1 (perturbed batch) rows 32..63
NMAPS = 4                    # (graph, relation) maps: (g0,phys),(g0,reg),(g1,phys),(g1,reg)
G_TOT = 8                    # padded aggregation groups: col0 = whole genome, cols 1..B = batch samples
CHUNK = 8                    # src-chunk size so each (CHUNK, N, 4H) slab stays in the vreg file
EPS_LN = 1e-5
NEG_INF = -1e30              # f32-safe softmax mask sentinel

_VMEM = pl.BlockSpec(memory_space=pltpu.MemorySpace.VMEM)


def _recip(x):
    # divide on the EUP slot (free bundle slot) when available; exact divide otherwise
    if hasattr(pl, "reciprocal"):
        return pl.reciprocal(x, approx=True)
    return 1.0 / x


# ---------------------------------------------------------------------------
# The single fused kernel: whole forward for both graphs + prediction head.
# ---------------------------------------------------------------------------
def hetero_cell_kernel(x_ref, adjT_ref, nmask_ref, onehot_ref,
                       pre_w_ref, pre_b_ref, pre_g_ref, pre_be_ref,
                       conv_w_ref, conv_b_ref, conv_att_ref,
                       conv_bias_ref, conv_g_ref, conv_be_ref,
                       w_tail_ref, b_tail_ref, wg2t_ref, bg2_ref,
                       wh_ref, bh_ref,
                       agg_ref, zp_ref, pred_ref):
    f32 = jnp.float32
    x = x_ref[...]                       # (2N, H) both graphs stacked along rows
    nmask = nmask_ref[...]               # (N, 2)  real-node mask per graph
    onehot = onehot_ref[...]             # (2N, G_TOT) aggregation group membership
    n0 = jnp.sum(nmask[:, 0:1])          # real nodes in graph 0
    n1 = jnp.sum(nmask[:, 1:2])          # real nodes in graph 1
    n_real = (n0, n1)

    # ---- PreProcessor: 2 x (Linear + nn.LayerNorm + ReLU); Dropout = identity ----
    for l in range(2):
        y = jnp.dot(x, pre_w_ref[l], preferred_element_type=f32) + pre_b_ref[l]
        mu = jnp.mean(y, axis=-1, keepdims=True)
        yc = y - mu
        var = jnp.mean(yc * yc, axis=-1, keepdims=True)
        y = yc * lax.rsqrt(var + EPS_LN) * pre_g_ref[l] + pre_be_ref[l]
        x = jnp.maximum(y, 0.0)

    # ---- HeteroConv layers: 2 relations x 2 graphs, lane-packed GATv2 ----
    for l in range(NUM_LAYERS):
        # one lane-dense MXU pass: columns = [lin_l_phys | lin_l_reg | lin_r_phys | lin_r_reg]
        xlr = jnp.dot(x, conv_w_ref[l], preferred_element_type=f32) + conv_b_ref[l]   # (2N, 4H)
        # lane-pack graph x relation -> 4*H = 128 full lanes
        xl_all = jnp.concatenate(
            [xlr[0:N, 0:2 * HIDDEN], xlr[N:2 * N, 0:2 * HIDDEN]], axis=-1)             # (N, 128)
        xr_all = jnp.concatenate(
            [xlr[0:N, 2 * HIDDEN:4 * HIDDEN], xlr[N:2 * N, 2 * HIDDEN:4 * HIDDEN]], axis=-1)
        att_l = conv_att_ref[l]          # (NMAPS, 128) lane-masked attention vectors

        # GATv2 logits, chunked over src so each (CHUNK, N, 128) slab stays in registers
        e_chunks = [[] for _ in range(NMAPS)]
        for c in range(N // CHUNK):
            xl_c = xl_all[c * CHUNK:(c + 1) * CHUNK, :]                # (CHUNK, 128)
            z = xl_c[:, None, :] + xr_all[None, :, :]                  # (CHUNK, N, 128)
            z = jnp.maximum(z, 0.2 * z)                                # LeakyReLU(0.2)
            for m in range(NMAPS):
                am = att_l[m:m + 1, :].reshape(1, 1, NMAPS * HIDDEN)   # att only in its segment
                e_chunks[m].append(jnp.sum(z * am, axis=-1))           # (CHUNK, N): dst in lanes

        h = [jnp.zeros((N, HIDDEN), f32), jnp.zeros((N, HIDDEN), f32)]
        cbias_l = conv_bias_ref[l]       # (2, H)
        cg_l = conv_g_ref[l]             # (2, H)
        cbe_l = conv_be_ref[l]           # (2, H)
        for m in range(NMAPS):
            g, r = m // 2, m % 2
            eT = jnp.concatenate(e_chunks[m], axis=0)                  # (N_src, N_dst)
            adjT_m = adjT_ref[m]                                       # adjT[src, dst]
            eT = jnp.where(adjT_m > 0, eT, NEG_INF)
            cmax = jnp.max(eT, axis=0, keepdims=True)                  # per-dst max (exact)
            pexp = jnp.exp(eT - cmax) * adjT_m                         # keep the 0-guard!
            denom = jnp.sum(pexp, axis=0, keepdims=True)
            alphaT = pexp * _recip(jnp.maximum(denom, 1e-30))          # (N_src, N_dst)
            xl_m = xl_all[:, m * HIDDEN:(m + 1) * HIDDEN]              # (N_src, H) messages
            out = lax.dot_general(alphaT, xl_m, (((0,), (0,)), ((), ())),
                                  preferred_element_type=f32)          # (N_dst, H)
            out = out + cbias_l[r:r + 1, :]
            # AttentionConvWrapper: PyG LayerNorm(mode='graph', batch=None), real nodes only
            mask_g = nmask[:, g:g + 1]
            n_g = n_real[g]
            mu = jnp.sum(out * mask_g) / (n_g * HIDDEN)
            oc = out - mu
            var = jnp.sum((oc * mask_g) ** 2) / (n_g * HIDDEN)
            out = oc / (jnp.sqrt(var) + EPS_LN) * cg_l[r:r + 1, :] + cbe_l[r:r + 1, :]
            h[g] = h[g] + jnp.maximum(out, 0.0)                        # ReLU; dropout = identity
        x = jnp.concatenate([h[0], h[1]], axis=0)                      # HeteroConv aggr='sum'

    # ---- AttentionalAggregation (both graphs at once), packed tail matmul ----
    t = jnp.dot(x, w_tail_ref[...], preferred_element_type=f32) + b_tail_ref[...]   # (2N, H+H/2)
    xt = jnp.maximum(t[:, 0:HIDDEN], 0.0)                              # transform_nn
    h1 = jnp.maximum(t[:, HIDDEN:HIDDEN + HIDDEN // 2], 0.0)           # gate_nn hidden
    gate = jnp.sum(h1 * wg2t_ref[...], axis=-1, keepdims=True) + bg2_ref[...]        # (2N, 1)
    scores = jnp.where(onehot > 0, gate, NEG_INF)                      # (2N, G_TOT)
    gmax = jnp.max(scores, axis=0, keepdims=True)
    pexp = jnp.exp(scores - gmax) * onehot
    denom = jnp.sum(pexp, axis=0, keepdims=True)
    alpha = pexp * _recip(jnp.maximum(denom, 1e-30))                   # per-group softmax
    agg = lax.dot_general(alpha, xt, (((0,), (0,)), ((), ())),
                          preferred_element_type=f32)                  # (G_TOT, H)
    agg_ref[...] = agg

    # ---- prediction head (fused; no second launch): z_p = z_w - z_i ; Linear(H, 2) ----
    z_w = agg[0:1, :]
    z_i = agg[1:1 + BATCH_SIZE, :]
    z_p = z_w - z_i
    zp_ref[...] = z_p
    pred_ref[...] = jnp.dot(z_p, wh_ref[...], preferred_element_type=f32) + bh_ref[...]


# ---------------------------------------------------------------------------
# Parameter init (deterministic, synthetic), packed for the fused kernel
# ---------------------------------------------------------------------------
def _dense(key, fan_in, fan_out):
    kw, kb = jax.random.split(key)
    lim = 1.0 / np.sqrt(fan_in)
    w = jax.random.uniform(kw, (fan_in, fan_out), jnp.float32, -lim, lim)
    b = jax.random.uniform(kb, (1, fan_out), jnp.float32, -lim, lim)
    return w, b


def init_params(key):
    keys = jax.random.split(key, 40)
    ki = iter(keys)
    p = {}
    p["gene_emb"] = jax.random.normal(next(ki), (GENE_NUM, HIDDEN), jnp.float32)

    pre_w, pre_b = [], []
    for _ in range(2):                                   # PreProcessor num_layers = 2
        w, b = _dense(next(ki), HIDDEN, HIDDEN)
        pre_w.append(w)
        pre_b.append(b)
    p["pre_w"] = jnp.stack(pre_w)                        # (2, H, H)
    p["pre_b"] = jnp.stack(pre_b)                        # (2, 1, H)
    p["pre_g"] = jnp.ones((2, 1, HIDDEN), jnp.float32)
    p["pre_be"] = jnp.zeros((2, 1, HIDDEN), jnp.float32)

    cw, cb, catt, cbias, cg, cbe = [], [], [], [], [], []
    for _ in range(NUM_LAYERS):
        ws, bs, atts = [], [], []
        for _r in range(2):                              # r=0: physical, r=1: regulatory
            wl, bl = _dense(next(ki), HIDDEN, HIDDEN)
            wr, br = _dense(next(ki), HIDDEN, HIDDEN)
            att = jax.random.normal(next(ki), (HIDDEN,), jnp.float32) / np.sqrt(HIDDEN)
            ws.append((wl, wr))
            bs.append((bl, br))
            atts.append(att)
        # packed columns: [lin_l_phys | lin_l_reg | lin_r_phys | lin_r_reg]
        cw.append(jnp.concatenate([ws[0][0], ws[1][0], ws[0][1], ws[1][1]], axis=1))   # (H, 4H)
        cb.append(jnp.concatenate([bs[0][0], bs[1][0], bs[0][1], bs[1][1]], axis=1))   # (1, 4H)
        # lane-masked attention vectors per (graph, relation) map
        att_mask = np.zeros((NMAPS, NMAPS * HIDDEN), np.float32)
        for m in range(NMAPS):
            att_mask[m, m * HIDDEN:(m + 1) * HIDDEN] = np.asarray(atts[m % 2])
        catt.append(jnp.asarray(att_mask))
        cbias.append(jnp.zeros((2, HIDDEN), jnp.float32))    # GATv2 output bias
        cg.append(jnp.ones((2, HIDDEN), jnp.float32))        # graph-LN gamma
        cbe.append(jnp.zeros((2, HIDDEN), jnp.float32))      # graph-LN beta
    p["conv_w"] = jnp.stack(cw)          # (L, H, 4H)
    p["conv_b"] = jnp.stack(cb)          # (L, 1, 4H)
    p["conv_att"] = jnp.stack(catt)      # (L, NMAPS, 4H)
    p["conv_bias"] = jnp.stack(cbias)    # (L, 2, H)
    p["conv_g"] = jnp.stack(cg)
    p["conv_be"] = jnp.stack(cbe)

    wg1, bg1 = _dense(next(ki), HIDDEN, HIDDEN // 2)     # gate_nn first layer
    wg2, bg2 = _dense(next(ki), HIDDEN // 2, 1)          # gate_nn second layer
    wt, bt = _dense(next(ki), HIDDEN, HIDDEN)            # transform_nn
    p["w_tail"] = jnp.concatenate([wt, wg1], axis=1)     # (H, H + H//2): [transform | gate-hidden]
    p["b_tail"] = jnp.concatenate([bt, bg1], axis=1)     # (1, H + H//2)
    p["wg2t"], p["bg2"] = wg2.T, bg2                     # (1, H//2), (1, 1)
    wh, bh = _dense(next(ki), HIDDEN, 2)
    p["wh"], p["bh"] = wh, bh                            # (H, 2), (1, 2)
    return p


# ---------------------------------------------------------------------------
# Forward: exactly ONE pallas_call
# ---------------------------------------------------------------------------
def hetero_cell_forward(params, x_nodes, adjT, node_mask, onehot):
    weights = (params["pre_w"], params["pre_b"], params["pre_g"], params["pre_be"],
               params["conv_w"], params["conv_b"], params["conv_att"],
               params["conv_bias"], params["conv_g"], params["conv_be"],
               params["w_tail"], params["b_tail"], params["wg2t"], params["bg2"],
               params["wh"], params["bh"])
    n_in = 4 + len(weights)
    agg, z_p, preds = pl.pallas_call(
        hetero_cell_kernel,
        out_shape=(jax.ShapeDtypeStruct((G_TOT, HIDDEN), jnp.float32),
                   jax.ShapeDtypeStruct((BATCH_SIZE, HIDDEN), jnp.float32),
                   jax.ShapeDtypeStruct((BATCH_SIZE, 2), jnp.float32)),
        in_specs=[_VMEM] * n_in,
        out_specs=(_VMEM, _VMEM, _VMEM),
    )(x_nodes, adjT, node_mask, onehot, *weights)

    z_w = agg[0:1, :]                    # whole-genome aggregate
    z_i = agg[1:1 + BATCH_SIZE, :]       # per-sample aggregates
    return preds, {"z_w": z_w, "z_i": z_i, "z_p": z_p,
                   "fitness": preds[:, 0:1], "gene_interaction": preds[:, 1:2]}


hetero_cell_forward_jit = jax.jit(hetero_cell_forward)


def _block_diag(blocks):
    n = sum(b.shape[0] for b in blocks)
    out = np.zeros((n, n), dtype=np.float32)
    o = 0
    for b in blocks:
        k = b.shape[0]
        out[o:o + k, o:o + k] = b
        o += k
    return out


if __name__ == "__main__":
    key = jax.random.PRNGKey(0)
    k_params, k_phys, k_reg = jax.random.split(key, 3)
    params = init_params(k_params)

    # genome-level edge structure: dense adj[dst, src] masks, no self loops
    eye = np.eye(GENE_NUM, dtype=np.float32)
    adj_phys_g = (np.asarray(jax.random.uniform(k_phys, (GENE_NUM, GENE_NUM))) < 0.3
                  ).astype(np.float32) * (1.0 - eye)
    adj_reg_g = (np.asarray(jax.random.uniform(k_reg, (GENE_NUM, GENE_NUM))) < 0.3
                 ).astype(np.float32) * (1.0 - eye)
    emb_np = np.asarray(params["gene_emb"])

    # perturbed batch: BATCH_SIZE genomes, one gene knocked out per sample (pert_mask)
    pert = np.zeros((BATCH_SIZE, GENE_NUM), dtype=bool)
    pert[0, 3] = True
    pert[1, 7] = True

    # rows 0..31: whole-genome cell graph (16 real genes); rows 32..63: perturbed batch
    # (block-diagonal over samples, 30 real nodes).  Padded nodes have zero adjacency
    # and zero one-hot, so they never enter softmaxes, graph-LN stats, or aggregation.
    x_nodes = np.zeros((NODES, HIDDEN), np.float32)
    adjT = np.zeros((NMAPS, N, N), np.float32)           # adjT[map, src, dst]
    node_mask = np.zeros((N, 2), np.float32)
    onehot = np.zeros((NODES, G_TOT), np.float32)

    # graph 0 = whole-genome cell graph
    x_nodes[:GENE_NUM] = emb_np
    adjT[0, :GENE_NUM, :GENE_NUM] = adj_phys_g.T         # (g0, physical)
    adjT[1, :GENE_NUM, :GENE_NUM] = adj_reg_g.T          # (g0, regulatory)
    node_mask[:GENE_NUM, 0] = 1.0
    onehot[:GENE_NUM, 0] = 1.0                           # single group (dim_size = 1)

    # graph 1 = perturbed batch
    off = 0
    blk_p, blk_r = [], []
    for s in range(BATCH_SIZE):
        keep = np.nonzero(~pert[s])[0]
        k = len(keep)
        x_nodes[N + off:N + off + k] = emb_np[keep]
        blk_p.append(adj_phys_g[np.ix_(keep, keep)])
        blk_r.append(adj_reg_g[np.ix_(keep, keep)])
        onehot[N + off:N + off + k, 1 + s] = 1.0
        off += k
    assert off <= N
    adjT[2, :off, :off] = _block_diag(blk_p).T           # (g1, physical)
    adjT[3, :off, :off] = _block_diag(blk_r).T           # (g1, regulatory)
    node_mask[:off, 1] = 1.0

    preds, aux = hetero_cell_forward_jit(
        params, jnp.asarray(x_nodes), jnp.asarray(adjT),
        jnp.asarray(node_mask), jnp.asarray(onehot))
    jax.block_until_ready(preds)
    jax.block_until_ready(aux["z_p"])

    assert preds.shape == (BATCH_SIZE, 2)
    assert aux["z_w"].shape == (1, HIDDEN)
    assert aux["z_i"].shape == (BATCH_SIZE, HIDDEN)
    assert aux["z_p"].shape == (BATCH_SIZE, HIDDEN)
    assert bool(jnp.all(jnp.isfinite(preds)))
    assert bool(jnp.all(jnp.isfinite(aux["z_p"])))
    print("KERNEL_OK")
</pallas_src>

<mosaic_0001>
module attributes {stable_mosaic.version = 11 : i64} {
  func.func @hetero_cell_kernel(%arg0: memref<64x32xf32, #tpu.memory_space<vmem>>, %arg1: memref<4x32x32xf32, #tpu.memory_space<vmem>>, %arg2: memref<32x2xf32, #tpu.memory_space<vmem>>, %arg3: memref<64x8xf32, #tpu.memory_space<vmem>>, %arg4: memref<2x32x32xf32, #tpu.memory_space<vmem>>, %arg5: memref<2x1x32xf32, #tpu.memory_space<vmem>>, %arg6: memref<2x1x32xf32, #tpu.memory_space<vmem>>, %arg7: memref<2x1x32xf32, #tpu.memory_space<vmem>>, %arg8: memref<2x32x128xf32, #tpu.memory_space<vmem>>, %arg9: memref<2x1x128xf32, #tpu.memory_space<vmem>>, %arg10: memref<2x4x128xf32, #tpu.memory_space<vmem>>, %arg11: memref<2x2x32xf32, #tpu.memory_space<vmem>>, %arg12: memref<2x2x32xf32, #tpu.memory_space<vmem>>, %arg13: memref<2x2x32xf32, #tpu.memory_space<vmem>>, %arg14: memref<32x48xf32, #tpu.memory_space<vmem>>, %arg15: memref<1x48xf32, #tpu.memory_space<vmem>>, %arg16: memref<1x16xf32, #tpu.memory_space<vmem>>, %arg17: memref<1x1xf32, #tpu.memory_space<vmem>>, %arg18: memref<32x2xf32, #tpu.memory_space<vmem>>, %arg19: memref<1x2xf32, #tpu.memory_space<vmem>>, %arg20: memref<8x32xf32, #tpu.memory_space<vmem>>, %arg21: memref<2x32xf32, #tpu.memory_space<vmem>>, %arg22: memref<2x2xf32, #tpu.memory_space<vmem>>) attributes {dimension_semantics = [], scalar_prefetch = 0 : i64, scratch_operands = 0 : i64, tpu.core_type = #tpu.core_type<tc>} {
    %c0 = arith.constant 0 : index
    %c0_0 = arith.constant 0 : index
    %0 = vector.load %arg0[%c0, %c0_0] : memref<64x32xf32, #tpu.memory_space<vmem>>, vector<64x32xf32>
    %c0_1 = arith.constant 0 : index
    %c0_2 = arith.constant 0 : index
    %1 = vector.load %arg2[%c0_1, %c0_2] : memref<32x2xf32, #tpu.memory_space<vmem>>, vector<32x2xf32>
    %c0_3 = arith.constant 0 : index
    %c0_4 = arith.constant 0 : index
    %2 = vector.load %arg3[%c0_3, %c0_4] : memref<64x8xf32, #tpu.memory_space<vmem>>, vector<64x8xf32>
    %3 = vector.extract_strided_slice %1 {offsets = [0, 0], sizes = [32, 1], strides = [1, 1]} : vector<32x2xf32> to vector<32x1xf32>
    %4 = vector.shape_cast %3 : vector<32x1xf32> to vector<1x32x1xf32>
    %cst = arith.constant dense<0.000000e+00> : vector<1xf32>
    %5 = vector.multi_reduction <add>, %4, %cst [1, 2] : vector<1x32x1xf32> to vector<1xf32>
    %6 = vector.shape_cast %5 : vector<1xf32> to vector<1x1x1xf32>
    %7 = vector.extract %6[0, 0, 0] : f32 from vector<1x1x1xf32>
    %8 = vector.extract_strided_slice %1 {offsets = [0, 1], sizes = [32, 1], strides = [1, 1]} : vector<32x2xf32> to vector<32x1xf32>
    %9 = vector.shape_cast %8 : vector<32x1xf32> to vector<1x32x1xf32>
    %cst_5 = arith.constant dense<0.000000e+00> : vector<1xf32>
    %10 = vector.multi_reduction <add>, %9, %cst_5 [1, 2] : vector<1x32x1xf32> to vector<1xf32>
    %11 = vector.shape_cast %10 : vector<1xf32> to vector<1x1x1xf32>
    %12 = vector.extract %11[0, 0, 0] : f32 from vector<1x1x1xf32>
    %c0_6 = arith.constant 0 : index
    %c0_7 = arith.constant 0 : index
    %c0_8 = arith.constant 0 : index
    %13 = vector.load %arg4[%c0_6, %c0_7, %c0_8] : memref<2x32x32xf32, #tpu.memory_space<vmem>>, vector<1x32x32xf32>
    %14 = vector.shape_cast %13 : vector<1x32x32xf32> to vector<32x32xf32>
    %cst_9 = arith.constant dense<0.000000e+00> : vector<64x32xf32>
    %15 = tpu.matmul %0, %14, %cst_9 {dimension_numbers = #tpu.dot_dimension_numbers<[1], [0], [0], [1], [0, 0, 1, 1], [], []>} : vector<64x32xf32>, vector<32x32xf32>, vector<64x32xf32> -> vector<64x32xf32>
    %c0_10 = arith.constant 0 : index
    %c0_11 = arith.constant 0 : index
    %c0_12 = arith.constant 0 : index
    %16 = vector.load %arg5[%c0_10, %c0_11, %c0_12] : memref<2x1x32xf32, #tpu.memory_space<vmem>>, vector<1x1x32xf32>
    %17 = vector.shape_cast %16 : vector<1x1x32xf32> to vector<1x32xf32>
    %18 = vector.broadcast %17 : vector<1x32xf32> to vector<64x32xf32>
    %19 = arith.addf %15, %18 : vector<64x32xf32>
    %cst_13 = arith.constant dense<0.000000e+00> : vector<64xf32>
    %20 = vector.multi_reduction <add>, %19, %cst_13 [1] : vector<64x32xf32> to vector<64xf32>
    %21 = vector.shape_cast %20 : vector<64xf32> to vector<64x1xf32>
    %cst_14 = arith.constant 3.200000e+01 : f32
    %22 = vector.broadcast %cst_14 : f32 to vector<64x1xf32>
    %23 = arith.divf %21, %22 : vector<64x1xf32>
    %24 = vector.broadcast %23 : vector<64x1xf32> to vector<64x32xf32>
    %25 = arith.subf %19, %24 : vector<64x32xf32>
    %26 = arith.mulf %25, %25 : vector<64x32xf32>
    %cst_15 = arith.constant dense<0.000000e+00> : vector<64xf32>
    %27 = vector.multi_reduction <add>, %26, %cst_15 [1] : vector<64x32xf32> to vector<64xf32>
    %28 = vector.shape_cast %27 : vector<64xf32> to vector<64x1xf32>
    %cst_16 = arith.constant 3.200000e+01 : f32
    %29 = vector.broadcast %cst_16 : f32 to vector<64x1xf32>
    %30 = arith.divf %28, %29 : vector<64x1xf32>
    %cst_17 = arith.constant 9.99999974E-6 : f32
    %31 = vector.broadcast %cst_17 : f32 to vector<64x1xf32>
    %32 = arith.addf %30, %31 : vector<64x1xf32>
    %33 = math.rsqrt %32 : vector<64x1xf32>
    %34 = vector.broadcast %33 : vector<64x1xf32> to vector<64x32xf32>
    %35 = arith.mulf %25, %34 : vector<64x32xf32>
    %c0_18 = arith.constant 0 : index
    %c0_19 = arith.constant 0 : index
    %c0_20 = arith.constant 0 : index
    %36 = vector.load %arg6[%c0_18, %c0_19, %c0_20] : memref<2x1x32xf32, #tpu.memory_space<vmem>>, vector<1x1x32xf32>
    %37 = vector.shape_cast %36 : vector<1x1x32xf32> to vector<1x32xf32>
    %38 = vector.broadcast %37 : vector<1x32xf32> to vector<64x32xf32>
    %39 = arith.mulf %35, %38 : vector<64x32xf32>
    %c0_21 = arith.constant 0 : index
    %c0_22 = arith.constant 0 : index
    %c0_23 = arith.constant 0 : index
    %40 = vector.load %arg7[%c0_21, %c0_22, %c0_23] : memref<2x1x32xf32, #tpu.memory_space<vmem>>, vector<1x1x32xf32>
    %41 = vector.shape_cast %40 : vector<1x1x32xf32> to vector<1x32xf32>
    %42 = vector.broadcast %41 : vector<1x32xf32> to vector<64x32xf32>
    %43 = arith.addf %39, %42 : vector<64x32xf32>
    %cst_24 = arith.constant 0.000000e+00 : f32
    %44 = vector.broadcast %cst_24 : f32 to vector<64x32xf32>
    %45 = arith.maximumf %43, %44 : vector<64x32xf32>
    %c1 = arith.constant 1 : index
    %c0_25 = arith.constant 0 : index
    %c0_26 = arith.constant 0 : index
    %46 = vector.load %arg4[%c1, %c0_25, %c0_26] : memref<2x32x32xf32, #tpu.memory_space<vmem>>, vector<1x32x32xf32>
    %47 = vector.shape_cast %46 : vector<1x32x32xf32> to vector<32x32xf32>
    %cst_27 = arith.constant dense<0.000000e+00> : vector<64x32xf32>
    %48 = tpu.matmul %45, %47, %cst_27 {dimension_numbers = #tpu.dot_dimension_numbers<[1], [0], [0], [1], [0, 0, 1, 1], [], []>} : vector<64x32xf32>, vector<32x32xf32>, vector<64x32xf32> -> vector<64x32xf32>
    %c1_28 = arith.constant 1 : index
    %c0_29 = arith.constant 0 : index
    %c0_30 = arith.constant 0 : index
    %49 = vector.load %arg5[%c1_28, %c0_29, %c0_30] : memref<2x1x32xf32, #tpu.memory_space<vmem>>, vector<1x1x32xf32>
    %50 = vector.shape_cast %49 : vector<1x1x32xf32> to vector<1x32xf32>
    %51 = vector.broadcast %50 : vector<1x32xf32> to vector<64x32xf32>
    %52 = arith.addf %48, %51 : vector<64x32xf32>
    %cst_31 = arith.constant dense<0.000000e+00> : vector<64xf32>
    %53 = vector.multi_reduction <add>, %52, %cst_31 [1] : vector<64x32xf32> to vector<64xf32>
    %54 = vector.shape_cast %53 : vector<64xf32> to vector<64x1xf32>
    %cst_32 = arith.constant 3.200000e+01 : f32
    %55 = vector.broadcast %cst_32 : f32 to vector<64x1xf32>
    %56 = arith.divf %54, %55 : vector<64x1xf32>
    %57 = vector.broadcast %56 : vector<64x1xf32> to vector<64x32xf32>
    %58 = arith.subf %52, %57 : vector<64x32xf32>
    %59 = arith.mulf %58, %58 : vector<64x32xf32>
    %cst_33 = arith.constant dense<0.000000e+00> : vector<64xf32>
    %60 = vector.multi_reduction <add>, %59, %cst_33 [1] : vector<64x32xf32> to vector<64xf32>
    %61 = vector.shape_cast %60 : vector<64xf32> to vector<64x1xf32>
    %cst_34 = arith.constant 3.200000e+01 : f32
    %62 = vector.broadcast %cst_34 : f32 to vector<64x1xf32>
    %63 = arith.divf %61, %62 : vector<64x1xf32>
    %cst_35 = arith.constant 9.99999974E-6 : f32
    %64 = vector.broadcast %cst_35 : f32 to vector<64x1xf32>
    %65 = arith.addf %63, %64 : vector<64x1xf32>
    %66 = math.rsqrt %65 : vector<64x1xf32>
    %67 = vector.broadcast %66 : vector<64x1xf32> to vector<64x32xf32>
    %68 = arith.mulf %58, %67 : vector<64x32xf32>
    %c1_36 = arith.constant 1 : index
    %c0_37 = arith.constant 0 : index
    %c0_38 = arith.constant 0 : index
    %69 = vector.load %arg6[%c1_36, %c0_37, %c0_38] : memref<2x1x32xf32, #tpu.memory_space<vmem>>, vector<1x1x32xf32>
    %70 = vector.shape_cast %69 : vector<1x1x32xf32> to vector<1x32xf32>
    %71 = vector.broadcast %70 : vector<1x32xf32> to vector<64x32xf32>
    %72 = arith.mulf %68, %71 : vector<64x32xf32>
    %c1_39 = arith.constant 1 : index
    %c0_40 = arith.constant 0 : index
    %c0_41 = arith.constant 0 : index
    %73 = vector.load %arg7[%c1_39, %c0_40, %c0_41] : memref<2x1x32xf32, #tpu.memory_space<vmem>>, vector<1x1x32xf32>
    %74 = vector.shape_cast %73 : vector<1x1x32xf32> to vector<1x32xf32>
    %75 = vector.broadcast %74 : vector<1x32xf32> to vector<64x32xf32>
    %76 = arith.addf %72, %75 : vector<64x32xf32>
    %cst_42 = arith.constant 0.000000e+00 : f32
    %77 = vector.broadcast %cst_42 : f32 to vector<64x32xf32>
    %78 = arith.maximumf %76, %77 : vector<64x32xf32>
    %c0_43 = arith.constant 0 : index
    %c0_44 = arith.constant 0 : index
    %c0_45 = arith.constant 0 : index
    %79 = vector.load %arg8[%c0_43, %c0_44, %c0_45] : memref<2x32x128xf32, #tpu.memory_space<vmem>>, vector<1x32x128xf32>
    %80 = vector.shape_cast %79 : vector<1x32x128xf32> to vector<32x128xf32>
    %cst_46 = arith.constant dense<0.000000e+00> : vector<64x128xf32>
    %81 = tpu.matmul %78, %80, %cst_46 {dimension_numbers = #tpu.dot_dimension_numbers<[1], [0], [0], [1], [0, 0, 1, 1], [], []>} : vector<64x32xf32>, vector<32x128xf32>, vector<64x128xf32> -> vector<64x128xf32>
    %c0_47 = arith.constant 0 : index
    %c0_48 = arith.constant 0 : index
    %c0_49 = arith.constant 0 : index
    %82 = vector.load %arg9[%c0_47, %c0_48, %c0_49] : memref<2x1x128xf32, #tpu.memory_space<vmem>>, vector<1x1x128xf32>
    %83 = vector.shape_cast %82 : vector<1x1x128xf32> to vector<1x128xf32>
    %84 = vector.broadcast %83 : vector<1x128xf32> to vector<64x128xf32>
    %85 = arith.addf %81, %84 : vector<64x128xf32>
    %86 = vector.extract_strided_slice %85 {offsets = [0, 0], sizes = [32, 64], strides = [1, 1]} : vector<64x128xf32> to vector<32x64xf32>
    %87 = vector.extract_strided_slice %85 {offsets = [32, 0], sizes = [32, 64], strides = [1, 1]} : vector<64x128xf32> to vector<32x64xf32>
    %88 = tpu.concatenate %86, %87 in 1 : vector<32x64xf32>, vector<32x64xf32> -> vector<32x128xf32>
    %89 = vector.extract_strided_slice %85 {offsets = [0, 64], sizes = [32, 64], strides = [1, 1]} : vector<64x128xf32> to vector<32x64xf32>
    %90 = vector.extract_strided_slice %85 {offsets = [32, 64], sizes = [32, 64], strides = [1, 1]} : vector<64x128xf32> to vector<32x64xf32>
    %91 = tpu.concatenate %89, %90 in 1 : vector<32x64xf32>, vector<32x64xf32> -> vector<32x128xf32>
    %c0_50 = arith.constant 0 : index
    %c0_51 = arith.constant 0 : index
    %c0_52 = arith.constant 0 : index
    %92 = vector.load %arg10[%c0_50, %c0_51, %c0_52] : memref<2x4x128xf32, #tpu.memory_space<vmem>>, vector<1x4x128xf32>
    %93 = vector.shape_cast %92 : vector<1x4x128xf32> to vector<4x128xf32>
    %94 = vector.extract_strided_slice %88 {offsets = [0, 0], sizes = [8, 128], strides = [1, 1]} : vector<32x128xf32> to vector<8x128xf32>
    %95 = vector.shape_cast %94 : vector<8x128xf32> to vector<8x1x128xf32>
    %96 = vector.shape_cast %91 : vector<32x128xf32> to vector<1x32x128xf32>
    %97 = vector.broadcast %95 : vector<8x1x128xf32> to vector<8x32x128xf32>
    %98 = vector.broadcast %96 : vector<1x32x128xf32> to vector<8x32x128xf32>
    %99 = arith.addf %97, %98 : vector<8x32x128xf32>
    %cst_53 = arith.constant 2.000000e-01 : f32
    %100 = vector.broadcast %cst_53 : f32 to vector<8x32x128xf32>
    %101 = arith.mulf %100, %99 : vector<8x32x128xf32>
    %102 = arith.maximumf %99, %101 : vector<8x32x128xf32>
    %103 = vector.extract_strided_slice %93 {offsets = [0, 0], sizes = [1, 128], strides = [1, 1]} : vector<4x128xf32> to vector<1x128xf32>
    %104 = vector.shape_cast %103 : vector<1x128xf32> to vector<1x1x128xf32>
    %105 = vector.broadcast %104 : vector<1x1x128xf32> to vector<8x32x128xf32>
    %106 = arith.mulf %102, %105 : vector<8x32x128xf32>
    %cst_54 = arith.constant dense<0.000000e+00> : vector<8x32xf32>
    %107 = vector.multi_reduction <add>, %106, %cst_54 [2] : vector<8x32x128xf32> to vector<8x32xf32>
    %108 = vector.extract_strided_slice %93 {offsets = [1, 0], sizes = [1, 128], strides = [1, 1]} : vector<4x128xf32> to vector<1x128xf32>
    %109 = vector.shape_cast %108 : vector<1x128xf32> to vector<1x1x128xf32>
    %110 = vector.broadcast %109 : vector<1x1x128xf32> to vector<8x32x128xf32>
    %111 = arith.mulf %102, %110 : vector<8x32x128xf32>
    %cst_55 = arith.constant dense<0.000000e+00> : vector<8x32xf32>
    %112 = vector.multi_reduction <add>, %111, %cst_55 [2] : vector<8x32x128xf32> to vector<8x32xf32>
    %113 = vector.extract_strided_slice %93 {offsets = [2, 0], sizes = [1, 128], strides = [1, 1]} : vector<4x128xf32> to vector<1x128xf32>
    %114 = vector.shape_cast %113 : vector<1x128xf32> to vector<1x1x128xf32>
    %115 = vector.broadcast %114 : vector<1x1x128xf32> to vector<8x32x128xf32>
    %116 = arith.mulf %102, %115 : vector<8x32x128xf32>
    %cst_56 = arith.constant dense<0.000000e+00> : vector<8x32xf32>
    %117 = vector.multi_reduction <add>, %116, %cst_56 [2] : vector<8x32x128xf32> to vector<8x32xf32>
    %118 = vector.extract_strided_slice %93 {offsets = [3, 0], sizes = [1, 128], strides = [1, 1]} : vector<4x128xf32> to vector<1x128xf32>
    %119 = vector.shape_cast %118 : vector<1x128xf32> to vector<1x1x128xf32>
    %120 = vector.broadcast %119 : vector<1x1x128xf32> to vector<8x32x128xf32>
    %121 = arith.mulf %102, %120 : vector<8x32x128xf32>
    %cst_57 = arith.constant dense<0.000000e+00> : vector<8x32xf32>
    %122 = vector.multi_reduction <add>, %121, %cst_57 [2] : vector<8x32x128xf32> to vector<8x32xf32>
    %123 = vector.extract_strided_slice %88 {offsets = [8, 0], sizes = [8, 128], strides = [1, 1]} : vector<32x128xf32> to vector<8x128xf32>
    %124 = vector.shape_cast %123 : vector<8x128xf32> to vector<8x1x128xf32>
    %125 = vector.shape_cast %91 : vector<32x128xf32> to vector<1x32x128xf32>
    %126 = vector.broadcast %124 : vector<8x1x128xf32> to vector<8x32x128xf32>
    %127 = vector.broadcast %125 : vector<1x32x128xf32> to vector<8x32x128xf32>
    %128 = arith.addf %126, %127 : vector<8x32x128xf32>
    %cst_58 = arith.constant 2.000000e-01 : f32
    %129 = vector.broadcast %cst_58 : f32 to vector<8x32x128xf32>
    %130 = arith.mulf %129, %128 : vector<8x32x128xf32>
    %131 = arith.maximumf %128, %130 : vector<8x32x128xf32>
    %132 = vector.extract_strided_slice %93 {offsets = [0, 0], sizes = [1, 128], strides = [1, 1]} : vector<4x128xf32> to vector<1x128xf32>
    %133 = vector.shape_cast %132 : vector<1x128xf32> to vector<1x1x128xf32>
    %134 = vector.broadcast %133 : vector<1x1x128xf32> to vector<8x32x128xf32>
    %135 = arith.mulf %131, %134 : vector<8x32x128xf32>
    %cst_59 = arith.constant dense<0.000000e+00> : vector<8x32xf32>
    %136 = vector.multi_reduction <add>, %135, %cst_59 [2] : vector<8x32x128xf32> to vector<8x32xf32>
    %137 = vector.extract_strided_slice %93 {offsets = [1, 0], sizes = [1, 128], strides = [1, 1]} : vector<4x128xf32> to vector<1x128xf32>
    %138 = vector.shape_cast %137 : vector<1x128xf32> to vector<1x1x128xf32>
    %139 = vector.broadcast %138 : vector<1x1x128xf32> to vector<8x32x128xf32>
    %140 = arith.mulf %131, %139 : vector<8x32x128xf32>
    %cst_60 = arith.constant dense<0.000000e+00> : vector<8x32xf32>
    %141 = vector.multi_reduction <add>, %140, %cst_60 [2] : vector<8x32x128xf32> to vector<8x32xf32>
    %142 = vector.extract_strided_slice %93 {offsets = [2, 0], sizes = [1, 128], strides = [1, 1]} : vector<4x128xf32> to vector<1x128xf32>
    %143 = vector.shape_cast %142 : vector<1x128xf32> to vector<1x1x128xf32>
    %144 = vector.broadcast %143 : vector<1x1x128xf32> to vector<8x32x128xf32>
    %145 = arith.mulf %131, %144 : vector<8x32x128xf32>
    %cst_61 = arith.constant dense<0.000000e+00> : vector<8x32xf32>
    %146 = vector.multi_reduction <add>, %145, %cst_61 [2] : vector<8x32x128xf32> to vector<8x32xf32>
    %147 = vector.extract_strided_slice %93 {offsets = [3, 0], sizes = [1, 128], strides = [1, 1]} : vector<4x128xf32> to vector<1x128xf32>
    %148 = vector.shape_cast %147 : vector<1x128xf32> to vector<1x1x128xf32>
    %149 = vector.broadcast %148 : vector<1x1x128xf32> to vector<8x32x128xf32>
    %150 = arith.mulf %131, %149 : vector<8x32x128xf32>
    %cst_62 = arith.constant dense<0.000000e+00> : vector<8x32xf32>
    %151 = vector.multi_reduction <add>, %150, %cst_62 [2] : vector<8x32x128xf32> to vector<8x32xf32>
    %152 = vector.extract_strided_slice %88 {offsets = [16, 0], sizes = [8, 128], strides = [1, 1]} : vector<32x128xf32> to vector<8x128xf32>
    %153 = vector.shape_cast %152 : vector<8x128xf32> to vector<8x1x128xf32>
    %154 = vector.shape_cast %91 : vector<32x128xf32> to vector<1x32x128xf32>
    %155 = vector.broadcast %153 : vector<8x1x128xf32> to vector<8x32x128xf32>
    %156 = vector.broadcast %154 : vector<1x32x128xf32> to vector<8x32x128xf32>
    %157 = arith.addf %155, %156 : vector<8x32x128xf32>
    %cst_63 = arith.constant 2.000000e-01 : f32
    %158 = vector.broadcast %cst_63 : f32 to vector<8x32x128xf32>
    %159 = arith.mulf %158, %157 : vector<8x32x128xf32>
    %160 = arith.maximumf %157, %159 : vector<8x32x128xf32>
    %161 = vector.extract_strided_slice %93 {offsets = [0, 0], sizes = [1, 128], strides = [1, 1]} : vector<4x128xf32> to vector<1x128xf32>
    %162 = vector.shape_cast %161 : vector<1x128xf32> to vector<1x1x128xf32>
    %163 = vector.broadcast %162 : vector<1x1x128xf32> to vector<8x32x128xf32>
    %164 = arith.mulf %160, %163 : vector<8x32x128xf32>
    %cst_64 = arith.constant dense<0.000000e+00> : vector<8x32xf32>
    %165 = vector.multi_reduction <add>, %164, %cst_64 [2] : vector<8x32x128xf32> to vector<8x32xf32>
    %166 = vector.extract_strided_slice %93 {offsets = [1, 0], sizes = [1, 128], strides = [1, 1]} : vector<4x128xf32> to vector<1x128xf32>
    %167 = vector.shape_cast %166 : vector<1x128xf32> to vector<1x1x128xf32>
    %168 = vector.broadcast %167 : vector<1x1x128xf32> to vector<8x32x128xf32>
    %169 = arith.mulf %160, %168 : vector<8x32x128xf32>
    %cst_65 = arith.constant dense<0.000000e+00> : vector<8x32xf32>
    %170 = vector.multi_reduction <add>, %169, %cst_65 [2] : vector<8x32x128xf32> to vector<8x32xf32>
    %171 = vector.extract_strided_slice %93 {offsets = [2, 0], sizes = [1, 128], strides = [1, 1]} : vector<4x128xf32> to vector<1x128xf32>
    %172 = vector.shape_cast %171 : vector<1x128xf32> to vector<1x1x128xf32>
    %173 = vector.broadcast %172 : vector<1x1x128xf32> to vector<8x32x128xf32>
    %174 = arith.mulf %160, %173 : vector<8x32x128xf32>
    %cst_66 = arith.constant dense<0.000000e+00> : vector<8x32xf32>
    %175 = vector.multi_reduction <add>, %174, %cst_66 [2] : vector<8x32x128xf32> to vector<8x32xf32>
    %176 = vector.extract_strided_slice %93 {offsets = [3, 0], sizes = [1, 128], strides = [1, 1]} : vector<4x128xf32> to vector<1x128xf32>
    %177 = vector.shape_cast %176 : vector<1x128xf32> to vector<1x1x128xf32>
    %178 = vector.broadcast %177 : vector<1x1x128xf32> to vector<8x32x128xf32>
    %179 = arith.mulf %160, %178 : vector<8x32x128xf32>
    %cst_67 = arith.constant dense<0.000000e+00> : vector<8x32xf32>
    %180 = vector.multi_reduction <add>, %179, %cst_67 [2] : vector<8x32x128xf32> to vector<8x32xf32>
    %181 = vector.extract_strided_slice %88 {offsets = [24, 0], sizes = [8, 128], strides = [1, 1]} : vector<32x128xf32> to vector<8x128xf32>
    %182 = vector.shape_cast %181 : vector<8x128xf32> to vector<8x1x128xf32>
    %183 = vector.shape_cast %91 : vector<32x128xf32> to vector<1x32x128xf32>
    %184 = vector.broadcast %182 : vector<8x1x128xf32> to vector<8x32x128xf32>
    %185 = vector.broadcast %183 : vector<1x32x128xf32> to vector<8x32x128xf32>
    %186 = arith.addf %184, %185 : vector<8x32x128xf32>
    %cst_68 = arith.constant 2.000000e-01 : f32
    %187 = vector.broadcast %cst_68 : f32 to vector<8x32x128xf32>
    %188 = arith.mulf %187, %186 : vector<8x32x128xf32>
    %189 = arith.maximumf %186, %188 : vector<8x32x128xf32>
    %190 = vector.extract_strided_slice %93 {offsets = [0, 0], sizes = [1, 128], strides = [1, 1]} : vector<4x128xf32> to vector<1x128xf32>
    %191 = vector.shape_cast %190 : vector<1x128xf32> to vector<1x1x128xf32>
    %192 = vector.broadcast %191 : vector<1x1x128xf32> to vector<8x32x128xf32>
    %193 = arith.mulf %189, %192 : vector<8x32x128xf32>
    %cst_69 = arith.constant dense<0.000000e+00> : vector<8x32xf32>
    %194 = vector.multi_reduction <add>, %193, %cst_69 [2] : vector<8x32x128xf32> to vector<8x32xf32>
    %195 = vector.extract_strided_slice %93 {offsets = [1, 0], sizes = [1, 128], strides = [1, 1]} : vector<4x128xf32> to vector<1x128xf32>
    %196 = vector.shape_cast %195 : vector<1x128xf32> to vector<1x1x128xf32>
    %197 = vector.broadcast %196 : vector<1x1x128xf32> to vector<8x32x128xf32>
    %198 = arith.mulf %189, %197 : vector<8x32x128xf32>
    %cst_70 = arith.constant dense<0.000000e+00> : vector<8x32xf32>
    %199 = vector.multi_reduction <add>, %198, %cst_70 [2] : vector<8x32x128xf32> to vector<8x32xf32>
    %200 = vector.extract_strided_slice %93 {offsets = [2, 0], sizes = [1, 128], strides = [1, 1]} : vector<4x128xf32> to vector<1x128xf32>
    %201 = vector.shape_cast %200 : vector<1x128xf32> to vector<1x1x128xf32>
    %202 = vector.broadcast %201 : vector<1x1x128xf32> to vector<8x32x128xf32>
    %203 = arith.mulf %189, %202 : vector<8x32x128xf32>
    %cst_71 = arith.constant dense<0.000000e+00> : vector<8x32xf32>
    %204 = vector.multi_reduction <add>, %203, %cst_71 [2] : vector<8x32x128xf32> to vector<8x32xf32>
    %205 = vector.extract_strided_slice %93 {offsets = [3, 0], sizes = [1, 128], strides = [1, 1]} : vector<4x128xf32> to vector<1x128xf32>
    %206 = vector.shape_cast %205 : vector<1x128xf32> to vector<1x1x128xf32>
    %207 = vector.broadcast %206 : vector<1x1x128xf32> to vector<8x32x128xf32>
    %208 = arith.mulf %189, %207 : vector<8x32x128xf32>
    %cst_72 = arith.constant dense<0.000000e+00> : vector<8x32xf32>
    %209 = vector.multi_reduction <add>, %208, %cst_72 [2] : vector<8x32x128xf32> to vector<8x32xf32>
    %cst_73 = arith.constant 0.000000e+00 : f32
    %210 = vector.broadcast %cst_73 : f32 to vector<32x32xf32>
    %cst_74 = arith.constant 0.000000e+00 : f32
    %211 = vector.broadcast %cst_74 : f32 to vector<32x32xf32>
    %c0_75 = arith.constant 0 : index
    %c0_76 = arith.constant 0 : index
    %c0_77 = arith.constant 0 : index
    %212 = vector.load %arg11[%c0_75, %c0_76, %c0_77] : memref<2x2x32xf32, #tpu.memory_space<vmem>>, vector<1x2x32xf32>
    %213 = vector.shape_cast %212 : vector<1x2x32xf32> to vector<2x32xf32>
    %c0_78 = arith.constant 0 : index
    %c0_79 = arith.constant 0 : index
    %c0_80 = arith.constant 0 : index
    %214 = vector.load %arg12[%c0_78, %c0_79, %c0_80] : memref<2x2x32xf32, #tpu.memory_space<vmem>>, vector<1x2x32xf32>
    %215 = vector.shape_cast %214 : vector<1x2x32xf32> to vector<2x32xf32>
    %c0_81 = arith.constant 0 : index
    %c0_82 = arith.constant 0 : index
    %c0_83 = arith.constant 0 : index
    %216 = vector.load %arg13[%c0_81, %c0_82, %c0_83] : memref<2x2x32xf32, #tpu.memory_space<vmem>>, vector<1x2x32xf32>
    %217 = vector.shape_cast %216 : vector<1x2x32xf32> to vector<2x32xf32>
    %218 = tpu.concatenate %107, %136, %165, %194 in 0 : vector<8x32xf32>, vector<8x32xf32>, vector<8x32xf32>, vector<8x32xf32> -> vector<32x32xf32>
    %c0_84 = arith.constant 0 : index
    %c0_85 = arith.constant 0 : index
    %c0_86 = arith.constant 0 : index
    %219 = vector.load %arg1[%c0_84, %c0_85, %c0_86] : memref<4x32x32xf32, #tpu.memory_space<vmem>>, vector<1x32x32xf32>
    %220 = vector.shape_cast %219 : vector<1x32x32xf32> to vector<32x32xf32>
    %cst_87 = arith.constant 0.000000e+00 : f32
    %221 = vector.broadcast %cst_87 : f32 to vector<32x32xf32>
    %222 = arith.cmpf ogt, %220, %221 : vector<32x32xf32>
    %cst_88 = arith.constant -1.000000e+30 : f32
    %223 = vector.broadcast %cst_88 : f32 to vector<32x32xf32>
    %224 = arith.select %222, %218, %223 : vector<32x32xi1>, vector<32x32xf32>
    %cst_89 = arith.constant dense<0xFF800000> : vector<32xf32>
    %225 = vector.multi_reduction <maximumf>, %224, %cst_89 [0] : vector<32x32xf32> to vector<32xf32>
    %226 = vector.shape_cast %225 : vector<32xf32> to vector<1x32xf32>
    %227 = vector.broadcast %226 : vector<1x32xf32> to vector<32x32xf32>
    %228 = arith.subf %224, %227 : vector<32x32xf32>
    %229 = math.exp %228 : vector<32x32xf32>
    %230 = arith.mulf %229, %220 : vector<32x32xf32>
    %cst_90 = arith.constant dense<0.000000e+00> : vector<32xf32>
    %231 = vector.multi_reduction <add>, %230, %cst_90 [0] : vector<32x32xf32> to vector<32xf32>
    %232 = vector.shape_cast %231 : vector<32xf32> to vector<1x32xf32>
    %cst_91 = arith.constant 1.000000e-30 : f32
    %233 = vector.broadcast %cst_91 : f32 to vector<1x32xf32>
    %234 = arith.maximumf %232, %233 : vector<1x32xf32>
    %235 = tpu.reciprocal %234 {approx = true} : vector<1x32xf32> -> vector<1x32xf32>
    %236 = vector.broadcast %235 : vector<1x32xf32> to vector<32x32xf32>
    %237 = arith.mulf %230, %236 : vector<32x32xf32>
    %238 = vector.extract_strided_slice %88 {offsets = [0, 0], sizes = [32, 32], strides = [1, 1]} : vector<32x128xf32> to vector<32x32xf32>
    %cst_92 = arith.constant dense<0.000000e+00> : vector<32x32xf32>
    %239 = tpu.matmul %237, %238, %cst_92 {dimension_numbers = #tpu.dot_dimension_numbers<[0], [0], [1], [1], [0, 1, 1, 1], [], []>} : vector<32x32xf32>, vector<32x32xf32>, vector<32x32xf32> -> vector<32x32xf32>
    %240 = vector.extract_strided_slice %213 {offsets = [0, 0], sizes = [1, 32], strides = [1, 1]} : vector<2x32xf32> to vector<1x32xf32>
    %241 = vector.broadcast %240 : vector<1x32xf32> to vector<32x32xf32>
    %242 = arith.addf %239, %241 : vector<32x32xf32>
    %243 = vector.extract_strided_slice %1 {offsets = [0, 0], sizes = [32, 1], strides = [1, 1]} : vector<32x2xf32> to vector<32x1xf32>
    %244 = vector.broadcast %243 : vector<32x1xf32> to vector<32x32xf32>
    %245 = arith.mulf %242, %244 : vector<32x32xf32>
    %246 = vector.shape_cast %245 : vector<32x32xf32> to vector<1x32x32xf32>
    %cst_93 = arith.constant dense<0.000000e+00> : vector<1xf32>
    %247 = vector.multi_reduction <add>, %246, %cst_93 [1, 2] : vector<1x32x32xf32> to vector<1xf32>
    %248 = vector.shape_cast %247 : vector<1xf32> to vector<1x1x1xf32>
    %249 = vector.extract %248[0, 0, 0] : f32 from vector<1x1x1xf32>
    %cst_94 = arith.constant 3.200000e+01 : f32
    %250 = arith.mulf %7, %cst_94 : f32
    %251 = arith.divf %249, %250 : f32
    %252 = vector.broadcast %251 : f32 to vector<32x32xf32>
    %253 = arith.subf %242, %252 : vector<32x32xf32>
    %254 = vector.broadcast %243 : vector<32x1xf32> to vector<32x32xf32>
    %255 = arith.mulf %253, %254 : vector<32x32xf32>
    %256 = arith.mulf %255, %255 : vector<32x32xf32>
    %257 = vector.shape_cast %256 : vector<32x32xf32> to vector<1x32x32xf32>
    %cst_95 = arith.constant dense<0.000000e+00> : vector<1xf32>
    %258 = vector.multi_reduction <add>, %257, %cst_95 [1, 2] : vector<1x32x32xf32> to vector<1xf32>
    %259 = vector.shape_cast %258 : vector<1xf32> to vector<1x1x1xf32>
    %260 = vector.extract %259[0, 0, 0] : f32 from vector<1x1x1xf32>
    %cst_96 = arith.constant 3.200000e+01 : f32
    %261 = arith.mulf %7, %cst_96 : f32
    %262 = arith.divf %260, %261 : f32
    %263 = math.sqrt %262 : f32
    %cst_97 = arith.constant 9.99999974E-6 : f32
    %264 = arith.addf %263, %cst_97 : f32
    %265 = vector.broadcast %264 : f32 to vector<32x32xf32>
    %266 = arith.divf %253, %265 : vector<32x32xf32>
    %267 = vector.extract_strided_slice %215 {offsets = [0, 0], sizes = [1, 32], strides = [1, 1]} : vector<2x32xf32> to vector<1x32xf32>
    %268 = vector.broadcast %267 : vector<1x32xf32> to vector<32x32xf32>
    %269 = arith.mulf %266, %268 : vector<32x32xf32>
    %270 = vector.extract_strided_slice %217 {offsets = [0, 0], sizes = [1, 32], strides = [1, 1]} : vector<2x32xf32> to vector<1x32xf32>
    %271 = vector.broadcast %270 : vector<1x32xf32> to vector<32x32xf32>
    %272 = arith.addf %269, %271 : vector<32x32xf32>
    %cst_98 = arith.constant 0.000000e+00 : f32
    %273 = vector.broadcast %cst_98 : f32 to vector<32x32xf32>
    %274 = arith.maximumf %272, %273 : vector<32x32xf32>
    %275 = arith.addf %210, %274 : vector<32x32xf32>
    %276 = tpu.concatenate %112, %141, %170, %199 in 0 : vector<8x32xf32>, vector<8x32xf32>, vector<8x32xf32>, vector<8x32xf32> -> vector<32x32xf32>
    %c1_99 = arith.constant 1 : index
    %c0_100 = arith.constant 0 : index
    %c0_101 = arith.constant 0 : index
    %277 = vector.load %arg1[%c1_99, %c0_100, %c0_101] : memref<4x32x32xf32, #tpu.memory_space<vmem>>, vector<1x32x32xf32>
    %278 = vector.shape_cast %277 : vector<1x32x32xf32> to vector<32x32xf32>
    %cst_102 = arith.constant 0.000000e+00 : f32
    %279 = vector.broadcast %cst_102 : f32 to vector<32x32xf32>
    %280 = arith.cmpf ogt, %278, %279 : vector<32x32xf32>
    %cst_103 = arith.constant -1.000000e+30 : f32
    %281 = vector.broadcast %cst_103 : f32 to vector<32x32xf32>
    %282 = arith.select %280, %276, %281 : vector<32x32xi1>, vector<32x32xf32>
    %cst_104 = arith.constant dense<0xFF800000> : vector<32xf32>
    %283 = vector.multi_reduction <maximumf>, %282, %cst_104 [0] : vector<32x32xf32> to vector<32xf32>
    %284 = vector.shape_cast %283 : vector<32xf32> to vector<1x32xf32>
    %285 = vector.broadcast %284 : vector<1x32xf32> to vector<32x32xf32>
    %286 = arith.subf %282, %285 : vector<32x32xf32>
    %287 = math.exp %286 : vector<32x32xf32>
    %288 = arith.mulf %287, %278 : vector<32x32xf32>
    %cst_105 = arith.constant dense<0.000000e+00> : vector<32xf32>
    %289 = vector.multi_reduction <add>, %288, %cst_105 [0] : vector<32x32xf32> to vector<32xf32>
    %290 = vector.shape_cast %289 : vector<32xf32> to vector<1x32xf32>
    %cst_106 = arith.constant 1.000000e-30 : f32
    %291 = vector.broadcast %cst_106 : f32 to vector<1x32xf32>
    %292 = arith.maximumf %290, %291 : vector<1x32xf32>
    %293 = tpu.reciprocal %292 {approx = true} : vector<1x32xf32> -> vector<1x32xf32>
    %294 = vector.broadcast %293 : vector<1x32xf32> to vector<32x32xf32>
    %295 = arith.mulf %288, %294 : vector<32x32xf32>
    %296 = vector.extract_strided_slice %88 {offsets = [0, 32], sizes = [32, 32], strides = [1, 1]} : vector<32x128xf32> to vector<32x32xf32>
    %cst_107 = arith.constant dense<0.000000e+00> : vector<32x32xf32>
    %297 = tpu.matmul %295, %296, %cst_107 {dimension_numbers = #tpu.dot_dimension_numbers<[0], [0], [1], [1], [0, 1, 1, 1], [], []>} : vector<32x32xf32>, vector<32x32xf32>, vector<32x32xf32> -> vector<32x32xf32>
    %298 = vector.extract_strided_slice %213 {offsets = [1, 0], sizes = [1, 32], strides = [1, 1]} : vector<2x32xf32> to vector<1x32xf32>
    %299 = vector.broadcast %298 : vector<1x32xf32> to vector<32x32xf32>
    %300 = arith.addf %297, %299 : vector<32x32xf32>
    %301 = vector.extract_strided_slice %1 {offsets = [0, 0], sizes = [32, 1], strides = [1, 1]} : vector<32x2xf32> to vector<32x1xf32>
    %302 = vector.broadcast %301 : vector<32x1xf32> to vector<32x32xf32>
    %303 = arith.mulf %300, %302 : vector<32x32xf32>
    %304 = vector.shape_cast %303 : vector<32x32xf32> to vector<1x32x32xf32>
    %cst_108 = arith.constant dense<0.000000e+00> : vector<1xf32>
    %305 = vector.multi_reduction <add>, %304, %cst_108 [1, 2] : vector<1x32x32xf32> to vector<1xf32>
    %306 = vector.shape_cast %305 : vector<1xf32> to vector<1x1x1xf32>
    %307 = vector.extract %306[0, 0, 0] : f32 from vector<1x1x1xf32>
    %cst_109 = arith.constant 3.200000e+01 : f32
    %308 = arith.mulf %7, %cst_109 : f32
    %309 = arith.divf %307, %308 : f32
    %310 = vector.broadcast %309 : f32 to vector<32x32xf32>
    %311 = arith.subf %300, %310 : vector<32x32xf32>
    %312 = vector.broadcast %301 : vector<32x1xf32> to vector<32x32xf32>
    %313 = arith.mulf %311, %312 : vector<32x32xf32>
    %314 = arith.mulf %313, %313 : vector<32x32xf32>
    %315 = vector.shape_cast %314 : vector<32x32xf32> to vector<1x32x32xf32>
    %cst_110 = arith.constant dense<0.000000e+00> : vector<1xf32>
    %316 = vector.multi_reduction <add>, %315, %cst_110 [1, 2] : vector<1x32x32xf32> to vector<1xf32>
    %317 = vector.shape_cast %316 : vector<1xf32> to vector<1x1x1xf32>
    %318 = vector.extract %317[0, 0, 0] : f32 from vector<1x1x1xf32>
    %cst_111 = arith.constant 3.200000e+01 : f32
    %319 = arith.mulf %7, %cst_111 : f32
    %320 = arith.divf %318, %319 : f32
    %321 = math.sqrt %320 : f32
    %cst_112 = arith.constant 9.99999974E-6 : f32
    %322 = arith.addf %321, %cst_112 : f32
    %323 = vector.broadcast %322 : f32 to vector<32x32xf32>
    %324 = arith.divf %311, %323 : vector<32x32xf32>
    %325 = vector.extract_strided_slice %215 {offsets = [1, 0], sizes = [1, 32], strides = [1, 1]} : vector<2x32xf32> to vector<1x32xf32>
    %326 = vector.broadcast %325 : vector<1x32xf32> to vector<32x32xf32>
    %327 = arith.mulf %324, %326 : vector<32x32xf32>
    %328 = vector.extract_strided_slice %217 {offsets = [1, 0], sizes = [1, 32], strides = [1, 1]} : vector<2x32xf32> to vector<1x32xf32>
    %329 = vector.broadcast %328 : vector<1x32xf32> to vector<32x32xf32>
    %330 = arith.addf %327, %329 : vector<32x32xf32>
    %cst_113 = arith.constant 0.000000e+00 : f32
    %331 = vector.broadcast %cst_113 : f32 to vector<32x32xf32>
    %332 = arith.maximumf %330, %331 : vector<32x32xf32>
    %333 = arith.addf %275, %332 : vector<32x32xf32>
    %334 = tpu.concatenate %117, %146, %175, %204 in 0 : vector<8x32xf32>, vector<8x32xf32>, vector<8x32xf32>, vector<8x32xf32> -> vector<32x32xf32>
    %c2 = arith.constant 2 : index
    %c0_114 = arith.constant 0 : index
    %c0_115 = arith.constant 0 : index
    %335 = vector.load %arg1[%c2, %c0_114, %c0_115] : memref<4x32x32xf32, #tpu.memory_space<vmem>>, vector<1x32x32xf32>
    %336 = vector.shape_cast %335 : vector<1x32x32xf32> to vector<32x32xf32>
    %cst_116 = arith.constant 0.000000e+00 : f32
    %337 = vector.broadcast %cst_116 : f32 to vector<32x32xf32>
    %338 = arith.cmpf ogt, %336, %337 : vector<32x32xf32>
    %cst_117 = arith.constant -1.000000e+30 : f32
    %339 = vector.broadcast %cst_117 : f32 to vector<32x32xf32>
    %340 = arith.select %338, %334, %339 : vector<32x32xi1>, vector<32x32xf32>
    %cst_118 = arith.constant dense<0xFF800000> : vector<32xf32>
    %341 = vector.multi_reduction <maximumf>, %340, %cst_118 [0] : vector<32x32xf32> to vector<32xf32>
    %342 = vector.shape_cast %341 : vector<32xf32> to vector<1x32xf32>
    %343 = vector.broadcast %342 : vector<1x32xf32> to vector<32x32xf32>
    %344 = arith.subf %340, %343 : vector<32x32xf32>
    %345 = math.exp %344 : vector<32x32xf32>
    %346 = arith.mulf %345, %336 : vector<32x32xf32>
    %cst_119 = arith.constant dense<0.000000e+00> : vector<32xf32>
    %347 = vector.multi_reduction <add>, %346, %cst_119 [0] : vector<32x32xf32> to vector<32xf32>
    %348 = vector.shape_cast %347 : vector<32xf32> to vector<1x32xf32>
    %cst_120 = arith.constant 1.000000e-30 : f32
    %349 = vector.broadcast %cst_120 : f32 to vector<1x32xf32>
    %350 = arith.maximumf %348, %349 : vector<1x32xf32>
    %351 = tpu.reciprocal %350 {approx = true} : vector<1x32xf32> -> vector<1x32xf32>
    %352 = vector.broadcast %351 : vector<1x32xf32> to vector<32x32xf32>
    %353 = arith.mulf %346, %352 : vector<32x32xf32>
    %354 = vector.extract_strided_slice %88 {offsets = [0, 64], sizes = [32, 32], strides = [1, 1]} : vector<32x128xf32> to vector<32x32xf32>
    %cst_121 = arith.constant dense<0.000000e+00> : vector<32x32xf32>
    %355 = tpu.matmul %353, %354, %cst_121 {dimension_numbers = #tpu.dot_dimension_numbers<[0], [0], [1], [1], [0, 1, 1, 1], [], []>} : vector<32x32xf32>, vector<32x32xf32>, vector<32x32xf32> -> vector<32x32xf32>
    %356 = vector.extract_strided_slice %213 {offsets = [0, 0], sizes = [1, 32], strides = [1, 1]} : vector<2x32xf32> to vector<1x32xf32>
    %357 = vector.broadcast %356 : vector<1x32xf32> to vector<32x32xf32>
    %358 = arith.addf %355, %357 : vector<32x32xf32>
    %359 = vector.extract_strided_slice %1 {offsets = [0, 1], sizes = [32, 1], strides = [1, 1]} : vector<32x2xf32> to vector<32x1xf32>
    %360 = vector.broadcast %359 : vector<32x1xf32> to vector<32x32xf32>
    %361 = arith.mulf %358, %360 : vector<32x32xf32>
    %362 = vector.shape_cast %361 : vector<32x32xf32> to vector<1x32x32xf32>
    %cst_122 = arith.constant dense<0.000000e+00> : vector<1xf32>
    %363 = vector.multi_reduction <add>, %362, %cst_122 [1, 2] : vector<1x32x32xf32> to vector<1xf32>
    %364 = vector.shape_cast %363 : vector<1xf32> to vector<1x1x1xf32>
    %365 = vector.extract %364[0, 0, 0] : f32 from vector<1x1x1xf32>
    %cst_123 = arith.constant 3.200000e+01 : f32
    %366 = arith.mulf %12, %cst_123 : f32
    %367 = arith.divf %365, %366 : f32
    %368 = vector.broadcast %367 : f32 to vector<32x32xf32>
    %369 = arith.subf %358, %368 : vector<32x32xf32>
    %370 = vector.broadcast %359 : vector<32x1xf32> to vector<32x32xf32>
    %371 = arith.mulf %369, %370 : vector<32x32xf32>
    %372 = arith.mulf %371, %371 : vector<32x32xf32>
    %373 = vector.shape_cast %372 : vector<32x32xf32> to vector<1x32x32xf32>
    %cst_124 = arith.constant dense<0.000000e+00> : vector<1xf32>
    %374 = vector.multi_reduction <add>, %373, %cst_124 [1, 2] : vector<1x32x32xf32> to vector<1xf32>
    %375 = vector.shape_cast %374 : vector<1xf32> to vector<1x1x1xf32>
    %376 = vector.extract %375[0, 0, 0] : f32 from vector<1x1x1xf32>
    %cst_125 = arith.constant 3.200000e+01 : f32
    %377 = arith.mulf %12, %cst_125 : f32
    %378 = arith.divf %376, %377 : f32
    %379 = math.sqrt %378 : f32
    %cst_126 = arith.constant 9.99999974E-6 : f32
    %380 = arith.addf %379, %cst_126 : f32
    %381 = vector.broadcast %380 : f32 to vector<32x32xf32>
    %382 = arith.divf %369, %381 : vector<32x32xf32>
    %383 = vector.extract_strided_slice %215 {offsets = [0, 0], sizes = [1, 32], strides = [1, 1]} : vector<2x32xf32> to vector<1x32xf32>
    %384 = vector.broadcast %383 : vector<1x32xf32> to vector<32x32xf32>
    %385 = arith.mulf %382, %384 : vector<32x32xf32>
    %386 = vector.extract_strided_slice %217 {offsets = [0, 0], sizes = [1, 32], strides = [1, 1]} : vector<2x32xf32> to vector<1x32xf32>
    %387 = vector.broadcast %386 : vector<1x32xf32> to vector<32x32xf32>
    %388 = arith.addf %385, %387 : vector<32x32xf32>
    %cst_127 = arith.constant 0.000000e+00 : f32
    %389 = vector.broadcast %cst_127 : f32 to vector<32x32xf32>
    %390 = arith.maximumf %388, %389 : vector<32x32xf32>
    %391 = arith.addf %211, %390 : vector<32x32xf32>
    %392 = tpu.concatenate %122, %151, %180, %209 in 0 : vector<8x32xf32>, vector<8x32xf32>, vector<8x32xf32>, vector<8x32xf32> -> vector<32x32xf32>
    %c3 = arith.constant 3 : index
    %c0_128 = arith.constant 0 : index
    %c0_129 = arith.constant 0 : index
    %393 = vector.load %arg1[%c3, %c0_128, %c0_129] : memref<4x32x32xf32, #tpu.memory_space<vmem>>, vector<1x32x32xf32>
    %394 = vector.shape_cast %393 : vector<1x32x32xf32> to vector<32x32xf32>
    %cst_130 = arith.constant 0.000000e+00 : f32
    %395 = vector.broadcast %cst_130 : f32 to vector<32x32xf32>
    %396 = arith.cmpf ogt, %394, %395 : vector<32x32xf32>
    %cst_131 = arith.constant -1.000000e+30 : f32
    %397 = vector.broadcast %cst_131 : f32 to vector<32x32xf32>
    %398 = arith.select %396, %392, %397 : vector<32x32xi1>, vector<32x32xf32>
    %cst_132 = arith.constant dense<0xFF800000> : vector<32xf32>
    %399 = vector.multi_reduction <maximumf>, %398, %cst_132 [0] : vector<32x32xf32> to vector<32xf32>
    %400 = vector.shape_cast %399 : vector<32xf32> to vector<1x32xf32>
    %401 = vector.broadcast %400 : vector<1x32xf32> to vector<32x32xf32>
    %402 = arith.subf %398, %401 : vector<32x32xf32>
    %403 = math.exp %402 : vector<32x32xf32>
    %404 = arith.mulf %403, %394 : vector<32x32xf32>
    %cst_133 = arith.constant dense<0.000000e+00> : vector<32xf32>
    %405 = vector.multi_reduction <add>, %404, %cst_133 [0] : vector<32x32xf32> to vector<32xf32>
    %406 = vector.shape_cast %405 : vector<32xf32> to vector<1x32xf32>
    %cst_134 = arith.constant 1.000000e-30 : f32
    %407 = vector.broadcast %cst_134 : f32 to vector<1x32xf32>
    %408 = arith.maximumf %406, %407 : vector<1x32xf32>
    %409 = tpu.reciprocal %408 {approx = true} : vector<1x32xf32> -> vector<1x32xf32>
    %410 = vector.broadcast %409 : vector<1x32xf32> to vector<32x32xf32>
    %411 = arith.mulf %404, %410 : vector<32x32xf32>
    %412 = vector.extract_strided_slice %88 {offsets = [0, 96], sizes = [32, 32], strides = [1, 1]} : vector<32x128xf32> to vector<32x32xf32>
    %cst_135 = arith.constant dense<0.000000e+00> : vector<32x32xf32>
    %413 = tpu.matmul %411, %412, %cst_135 {dimension_numbers = #tpu.dot_dimension_numbers<[0], [0], [1], [1], [0, 1, 1, 1], [], []>} : vector<32x32xf32>, vector<32x32xf32>, vector<32x32xf32> -> vector<32x32xf32>
    %414 = vector.extract_strided_slice %213 {offsets = [1, 0], sizes = [1, 32], strides = [1, 1]} : vector<2x32xf32> to vector<1x32xf32>
    %415 = vector.broadcast %414 : vector<1x32xf32> to vector<32x32xf32>
    %416 = arith.addf %413, %415 : vector<32x32xf32>
    %417 = vector.extract_strided_slice %1 {offsets = [0, 1], sizes = [32, 1], strides = [1, 1]} : vector<32x2xf32> to vector<32x1xf32>
    %418 = vector.broadcast %417 : vector<32x1xf32> to vector<32x32xf32>
    %419 = arith.mulf %416, %418 : vector<32x32xf32>
    %420 = vector.shape_cast %419 : vector<32x32xf32> to vector<1x32x32xf32>
    %cst_136 = arith.constant dense<0.000000e+00> : vector<1xf32>
    %421 = vector.multi_reduction <add>, %420, %cst_136 [1, 2] : vector<1x32x32xf32> to vector<1xf32>
    %422 = vector.shape_cast %421 : vector<1xf32> to vector<1x1x1xf32>
    %423 = vector.extract %422[0, 0, 0] : f32 from vector<1x1x1xf32>
    %cst_137 = arith.constant 3.200000e+01 : f32
    %424 = arith.mulf %12, %cst_137 : f32
    %425 = arith.divf %423, %424 : f32
    %426 = vector.broadcast %425 : f32 to vector<32x32xf32>
    %427 = arith.subf %416, %426 : vector<32x32xf32>
    %428 = vector.broadcast %417 : vector<32x1xf32> to vector<32x32xf32>
    %429 = arith.mulf %427, %428 : vector<32x32xf32>
    %430 = arith.mulf %429, %429 : vector<32x32xf32>
    %431 = vector.shape_cast %430 : vector<32x32xf32> to vector<1x32x32xf32>
    %cst_138 = arith.constant dense<0.000000e+00> : vector<1xf32>
    %432 = vector.multi_reduction <add>, %431, %cst_138 [1, 2] : vector<1x32x32xf32> to vector<1xf32>
    %433 = vector.shape_cast %432 : vector<1xf32> to vector<1x1x1xf32>
    %434 = vector.extract %433[0, 0, 0] : f32 from vector<1x1x1xf32>
    %cst_139 = arith.constant 3.200000e+01 : f32
    %435 = arith.mulf %12, %cst_139 : f32
    %436 = arith.divf %434, %435 : f32
    %437 = math.sqrt %436 : f32
    %cst_140 = arith.constant 9.99999974E-6 : f32
    %438 = arith.addf %437, %cst_140 : f32
    %439 = vector.broadcast %438 : f32 to vector<32x32xf32>
    %440 = arith.divf %427, %439 : vector<32x32xf32>
    %441 = vector.extract_strided_slice %215 {offsets = [1, 0], sizes = [1, 32], strides = [1, 1]} : vector<2x32xf32> to vector<1x32xf32>
    %442 = vector.broadcast %441 : vector<1x32xf32> to vector<32x32xf32>
    %443 = arith.mulf %440, %442 : vector<32x32xf32>
    %444 = vector.extract_strided_slice %217 {offsets = [1, 0], sizes = [1, 32], strides = [1, 1]} : vector<2x32xf32> to vector<1x32xf32>
    %445 = vector.broadcast %444 : vector<1x32xf32> to vector<32x32xf32>
    %446 = arith.addf %443, %445 : vector<32x32xf32>
    %cst_141 = arith.constant 0.000000e+00 : f32
    %447 = vector.broadcast %cst_141 : f32 to vector<32x32xf32>
    %448 = arith.maximumf %446, %447 : vector<32x32xf32>
    %449 = arith.addf %391, %448 : vector<32x32xf32>
    %450 = tpu.concatenate %333, %449 in 0 : vector<32x32xf32>, vector<32x32xf32> -> vector<64x32xf32>
    %c1_142 = arith.constant 1 : index
    %c0_143 = arith.constant 0 : index
    %c0_144 = arith.constant 0 : index
    %451 = vector.load %arg8[%c1_142, %c0_143, %c0_144] : memref<2x32x128xf32, #tpu.memory_space<vmem>>, vector<1x32x128xf32>
    %452 = vector.shape_cast %451 : vector<1x32x128xf32> to vector<32x128xf32>
    %cst_145 = arith.constant dense<0.000000e+00> : vector<64x128xf32>
    %453 = tpu.matmul %450, %452, %cst_145 {dimension_numbers = #tpu.dot_dimension_numbers<[1], [0], [0], [1], [0, 0, 1, 1], [], []>} : vector<64x32xf32>, vector<32x128xf32>, vector<64x128xf32> -> vector<64x128xf32>
    %c1_146 = arith.constant 1 : index
    %c0_147 = arith.constant 0 : index
    %c0_148 = arith.constant 0 : index
    %454 = vector.load %arg9[%c1_146, %c0_147, %c0_148] : memref<2x1x128xf32, #tpu.memory_space<vmem>>, vector<1x1x128xf32>
    %455 = vector.shape_cast %454 : vector<1x1x128xf32> to vector<1x128xf32>
    %456 = vector.broadcast %455 : vector<1x128xf32> to vector<64x128xf32>
    %457 = arith.addf %453, %456 : vector<64x128xf32>
    %458 = vector.extract_strided_slice %457 {offsets = [0, 0], sizes = [32, 64], strides = [1, 1]} : vector<64x128xf32> to vector<32x64xf32>
    %459 = vector.extract_strided_slice %457 {offsets = [32, 0], sizes = [32, 64], strides = [1, 1]} : vector<64x128xf32> to vector<32x64xf32>
    %460 = tpu.concatenate %458, %459 in 1 : vector<32x64xf32>, vector<32x64xf32> -> vector<32x128xf32>
    %461 = vector.extract_strided_slice %457 {offsets = [0, 64], sizes = [32, 64], strides = [1, 1]} : vector<64x128xf32> to vector<32x64xf32>
    %462 = vector.extract_strided_slice %457 {offsets = [32, 64], sizes = [32, 64], strides = [1, 1]} : vector<64x128xf32> to vector<32x64xf32>
    %463 = tpu.concatenate %461, %462 in 1 : vector<32x64xf32>, vector<32x64xf32> -> vector<32x128xf32>
    %c1_149 = arith.constant 1 : index
    %c0_150 = arith.constant 0 : index
    %c0_151 = arith.constant 0 : index
    %464 = vector.load %arg10[%c1_149, %c0_150, %c0_151] : memref<2x4x128xf32, #tpu.memory_space<vmem>>, vector<1x4x128xf32>
    %465 = vector.shape_cast %464 : vector<1x4x128xf32> to vector<4x128xf32>
    %466 = vector.extract_strided_slice %460 {offsets = [0, 0], sizes = [8, 128], strides = [1, 1]} : vector<32x128xf32> to vector<8x128xf32>
    %467 = vector.shape_cast %466 : vector<8x128xf32> to vector<8x1x128xf32>
    %468 = vector.shape_cast %463 : vector<32x128xf32> to vector<1x32x128xf32>
    %469 = vector.broadcast %467 : vector<8x1x128xf32> to vector<8x32x128xf32>
    %470 = vector.broadcast %468 : vector<1x32x128xf32> to vector<8x32x128xf32>
    %471 = arith.addf %469, %470 : vector<8x32x128xf32>
    %cst_152 = arith.constant 2.000000e-01 : f32
    %472 = vector.broadcast %cst_152 : f32 to vector<8x32x128xf32>
    %473 = arith.mulf %472, %471 : vector<8x32x128xf32>
    %474 = arith.maximumf %471, %473 : vector<8x32x128xf32>
    %475 = vector.extract_strided_slice %465 {offsets = [0, 0], sizes = [1, 128], strides = [1, 1]} : vector<4x128xf32> to vector<1x128xf32>
    %476 = vector.shape_cast %475 : vector<1x128xf32> to vector<1x1x128xf32>
    %477 = vector.broadcast %476 : vector<1x1x128xf32> to vector<8x32x128xf32>
    %478 = arith.mulf %474, %477 : vector<8x32x128xf32>
    %cst_153 = arith.constant dense<0.000000e+00> : vector<8x32xf32>
    %479 = vector.multi_reduction <add>, %478, %cst_153 [2] : vector<8x32x128xf32> to vector<8x32xf32>
    %480 = vector.extract_strided_slice %465 {offsets = [1, 0], sizes = [1, 128], strides = [1, 1]} : vector<4x128xf32> to vector<1x128xf32>
    %481 = vector.shape_cast %480 : vector<1x128xf32> to vector<1x1x128xf32>
    %482 = vector.broadcast %481 : vector<1x1x128xf32> to vector<8x32x128xf32>
    %483 = arith.mulf %474, %482 : vector<8x32x128xf32>
    %cst_154 = arith.constant dense<0.000000e+00> : vector<8x32xf32>
    %484 = vector.multi_reduction <add>, %483, %cst_154 [2] : vector<8x32x128xf32> to vector<8x32xf32>
    %485 = vector.extract_strided_slice %465 {offsets = [2, 0], sizes = [1, 128], strides = [1, 1]} : vector<4x128xf32> to vector<1x128xf32>
    %486 = vector.shape_cast %485 : vector<1x128xf32> to vector<1x1x128xf32>
    %487 = vector.broadcast %486 : vector<1x1x128xf32> to vector<8x32x128xf32>
    %488 = arith.mulf %474, %487 : vector<8x32x128xf32>
    %cst_155 = arith.constant dense<0.000000e+00> : vector<8x32xf32>
    %489 = vector.multi_reduction <add>, %488, %cst_155 [2] : vector<8x32x128xf32> to vector<8x32xf32>
    %490 = vector.extract_strided_slice %465 {offsets = [3, 0], sizes = [1, 128], strides = [1, 1]} : vector<4x128xf32> to vector<1x128xf32>
    %491 = vector.shape_cast %490 : vector<1x128xf32> to vector<1x1x128xf32>
    %492 = vector.broadcast %491 : vector<1x1x128xf32> to vector<8x32x128xf32>
    %493 = arith.mulf %474, %492 : vector<8x32x128xf32>
    %cst_156 = arith.constant dense<0.000000e+00> : vector<8x32xf32>
    %494 = vector.multi_reduction <add>, %493, %cst_156 [2] : vector<8x32x128xf32> to vector<8x32xf32>
    %495 = vector.extract_strided_slice %460 {offsets = [8, 0], sizes = [8, 128], strides = [1, 1]} : vector<32x128xf32> to vector<8x128xf32>
    %496 = vector.shape_cast %495 : vector<8x128xf32> to vector<8x1x128xf32>
    %497 = vector.shape_cast %463 : vector<32x128xf32> to vector<1x32x128xf32>
    %498 = vector.broadcast %496 : vector<8x1x128xf32> to vector<8x32x128xf32>
    %499 = vector.broadcast %497 : vector<1x32x128xf32> to vector<8x32x128xf32>
    %500 = arith.addf %498, %499 : vector<8x32x128xf32>
    %cst_157 = arith.constant 2.000000e-01 : f32
    %501 = vector.broadcast %cst_157 : f32 to vector<8x32x128xf32>
    %502 = arith.mulf %501, %500 : vector<8x32x128xf32>
    %503 = arith.maximumf %500, %502 : vector<8x32x128xf32>
    %504 = vector.extract_strided_slice %465 {offsets = [0, 0], sizes = [1, 128], strides = [1, 1]} : vector<4x128xf32> to vector<1x128xf32>
    %505 = vector.shape_cast %504 : vector<1x128xf32> to vector<1x1x128xf32>
    %506 = vector.broadcast %505 : vector<1x1x128xf32> to vector<8x32x128xf32>
    %507 = arith.mulf %503, %506 : vector<8x32x128xf32>
    %cst_158 = arith.constant dense<0.000000e+00> : vector<8x32xf32>
    %508 = vector.multi_reduction <add>, %507, %cst_158 [2] : vector<8x32x128xf32> to vector<8x32xf32>
    %509 = vector.extract_strided_slice %465 {offsets = [1, 0], sizes = [1, 128], strides = [1, 1]} : vector<4x128xf32> to vector<1x128xf32>
    %510 = vector.shape_cast %509 : vector<1x128xf32> to vector<1x1x128xf32>
    %511 = vector.broadcast %510 : vector<1x1x128xf32> to vector<8x32x128xf32>
    %512 = arith.mulf %503, %511 : vector<8x32x128xf32>
    %cst_159 = arith.constant dense<0.000000e+00> : vector<8x32xf32>
    %513 = vector.multi_reduction <add>, %512, %cst_159 [2] : vector<8x32x128xf32> to vector<8x32xf32>
    %514 = vector.extract_strided_slice %465 {offsets = [2, 0], sizes = [1, 128], strides = [1, 1]} : vector<4x128xf32> to vector<1x128xf32>
    %515 = vector.shape_cast %514 : vector<1x128xf32> to vector<1x1x128xf32>
    %516 = vector.broadcast %515 : vector<1x1x128xf32> to vector<8x32x128xf32>
    %517 = arith.mulf %503, %516 : vector<8x32x128xf32>
    %cst_160 = arith.constant dense<0.000000e+00> : vector<8x32xf32>
    %518 = vector.multi_reduction <add>, %517, %cst_160 [2] : vector<8x32x128xf32> to vector<8x32xf32>
    %519 = vector.extract_strided_slice %465 {offsets = [3, 0], sizes = [1, 128], strides = [1, 1]} : vector<4x128xf32> to vector<1x128xf32>
    %520 = vector.shape_cast %519 : vector<1x128xf32> to vector<1x1x128xf32>
    %521 = vector.broadcast %520 : vector<1x1x128xf32> to vector<8x32x128xf32>
    %522 = arith.mulf %503, %521 : vector<8x32x128xf32>
    %cst_161 = arith.constant dense<0.000000e+00> : vector<8x32xf32>
    %523 = vector.multi_reduction <add>, %522, %cst_161 [2] : vector<8x32x128xf32> to vector<8x32xf32>
    %524 = vector.extract_strided_slice %460 {offsets = [16, 0], sizes = [8, 128], strides = [1, 1]} : vector<32x128xf32> to vector<8x128xf32>
    %525 = vector.shape_cast %524 : vector<8x128xf32> to vector<8x1x128xf32>
    %526 = vector.shape_cast %463 : vector<32x128xf32> to vector<1x32x128xf32>
    %527 = vector.broadcast %525 : vector<8x1x128xf32> to vector<8x32x128xf32>
    %528 = vector.broadcast %526 : vector<1x32x128xf32> to vector<8x32x128xf32>
    %529 = arith.addf %527, %528 : vector<8x32x128xf32>
    %cst_162 = arith.constant 2.000000e-01 : f32
    %530 = vector.broadcast %cst_162 : f32 to vector<8x32x128xf32>
    %531 = arith.mulf %530, %529 : vector<8x32x128xf32>
    %532 = arith.maximumf %529, %531 : vector<8x32x128xf32>
    %533 = vector.extract_strided_slice %465 {offsets = [0, 0], sizes = [1, 128], strides = [1, 1]} : vector<4x128xf32> to vector<1x128xf32>
    %534 = vector.shape_cast %533 : vector<1x128xf32> to vector<1x1x128xf32>
    %535 = vector.broadcast %534 : vector<1x1x128xf32> to vector<8x32x128xf32>
    %536 = arith.mulf %532, %535 : vector<8x32x128xf32>
    %cst_163 = arith.constant dense<0.000000e+00> : vector<8x32xf32>
    %537 = vector.multi_reduction <add>, %536, %cst_163 [2] : vector<8x32x128xf32> to vector<8x32xf32>
    %538 = vector.extract_strided_slice %465 {offsets = [1, 0], sizes = [1, 128], strides = [1, 1]} : vector<4x128xf32> to vector<1x128xf32>
    %539 = vector.shape_cast %538 : vector<1x128xf32> to vector<1x1x128xf32>
    %540 = vector.broadcast %539 : vector<1x1x128xf32> to vector<8x32x128xf32>
    %541 = arith.mulf %532, %540 : vector<8x32x128xf32>
    %cst_164 = arith.constant dense<0.000000e+00> : vector<8x32xf32>
    %542 = vector.multi_reduction <add>, %541, %cst_164 [2] : vector<8x32x128xf32> to vector<8x32xf32>
    %543 = vector.extract_strided_slice %465 {offsets = [2, 0], sizes = [1, 128], strides = [1, 1]} : vector<4x128xf32> to vector<1x128xf32>
    %544 = vector.shape_cast %543 : vector<1x128xf32> to vector<1x1x128xf32>
    %545 = vector.broadcast %544 : vector<1x1x128xf32> to vector<8x32x128xf32>
    %546 = arith.mulf %532, %545 : vector<8x32x128xf32>
    %cst_165 = arith.constant dense<0.000000e+00> : vector<8x32xf32>
    %547 = vector.multi_reduction <add>, %546, %cst_165 [2] : vector<8x32x128xf32> to vector<8x32xf32>
    %548 = vector.extract_strided_slice %465 {offsets = [3, 0], sizes = [1, 128], strides = [1, 1]} : vector<4x128xf32> to vector<1x128xf32>
    %549 = vector.shape_cast %548 : vector<1x128xf32> to vector<1x1x128xf32>
    %550 = vector.broadcast %549 : vector<1x1x128xf32> to vector<8x32x128xf32>
    %551 = arith.mulf %532, %550 : vector<8x32x128xf32>
    %cst_166 = arith.constant dense<0.000000e+00> : vector<8x32xf32>
    %552 = vector.multi_reduction <add>, %551, %cst_166 [2] : vector<8x32x128xf32> to vector<8x32xf32>
    %553 = vector.extract_strided_slice %460 {offsets = [24, 0], sizes = [8, 128], strides = [1, 1]} : vector<32x128xf32> to vector<8x128xf32>
    %554 = vector.shape_cast %553 : vector<8x128xf32> to vector<8x1x128xf32>
    %555 = vector.shape_cast %463 : vector<32x128xf32> to vector<1x32x128xf32>
    %556 = vector.broadcast %554 : vector<8x1x128xf32> to vector<8x32x128xf32>
    %557 = vector.broadcast %555 : vector<1x32x128xf32> to vector<8x32x128xf32>
    %558 = arith.addf %556, %557 : vector<8x32x128xf32>
    %cst_167 = arith.constant 2.000000e-01 : f32
    %559 = vector.broadcast %cst_167 : f32 to vector<8x32x128xf32>
    %560 = arith.mulf %559, %558 : vector<8x32x128xf32>
    %561 = arith.maximumf %558, %560 : vector<8x32x128xf32>
    %562 = vector.extract_strided_slice %465 {offsets = [0, 0], sizes = [1, 128], strides = [1, 1]} : vector<4x128xf32> to vector<1x128xf32>
    %563 = vector.shape_cast %562 : vector<1x128xf32> to vector<1x1x128xf32>
    %564 = vector.broadcast %563 : vector<1x1x128xf32> to vector<8x32x128xf32>
    %565 = arith.mulf %561, %564 : vector<8x32x128xf32>
    %cst_168 = arith.constant dense<0.000000e+00> : vector<8x32xf32>
    %566 = vector.multi_reduction <add>, %565, %cst_168 [2] : vector<8x32x128xf32> to vector<8x32xf32>
    %567 = vector.extract_strided_slice %465 {offsets = [1, 0], sizes = [1, 128], strides = [1, 1]} : vector<4x128xf32> to vector<1x128xf32>
    %568 = vector.shape_cast %567 : vector<1x128xf32> to vector<1x1x128xf32>
    %569 = vector.broadcast %568 : vector<1x1x128xf32> to vector<8x32x128xf32>
    %570 = arith.mulf %561, %569 : vector<8x32x128xf32>
    %cst_169 = arith.constant dense<0.000000e+00> : vector<8x32xf32>
    %571 = vector.multi_reduction <add>, %570, %cst_169 [2] : vector<8x32x128xf32> to vector<8x32xf32>
    %572 = vector.extract_strided_slice %465 {offsets = [2, 0], sizes = [1, 128], strides = [1, 1]} : vector<4x128xf32> to vector<1x128xf32>
    %573 = vector.shape_cast %572 : vector<1x128xf32> to vector<1x1x128xf32>
    %574 = vector.broadcast %573 : vector<1x1x128xf32> to vector<8x32x128xf32>
    %575 = arith.mulf %561, %574 : vector<8x32x128xf32>
    %cst_170 = arith.constant dense<0.000000e+00> : vector<8x32xf32>
    %576 = vector.multi_reduction <add>, %575, %cst_170 [2] : vector<8x32x128xf32> to vector<8x32xf32>
    %577 = vector.extract_strided_slice %465 {offsets = [3, 0], sizes = [1, 128], strides = [1, 1]} : vector<4x128xf32> to vector<1x128xf32>
    %578 = vector.shape_cast %577 : vector<1x128xf32> to vector<1x1x128xf32>
    %579 = vector.broadcast %578 : vector<1x1x128xf32> to vector<8x32x128xf32>
    %580 = arith.mulf %561, %579 : vector<8x32x128xf32>
    %cst_171 = arith.constant dense<0.000000e+00> : vector<8x32xf32>
    %581 = vector.multi_reduction <add>, %580, %cst_171 [2] : vector<8x32x128xf32> to vector<8x32xf32>
    %cst_172 = arith.constant 0.000000e+00 : f32
    %582 = vector.broadcast %cst_172 : f32 to vector<32x32xf32>
    %cst_173 = arith.constant 0.000000e+00 : f32
    %583 = vector.broadcast %cst_173 : f32 to vector<32x32xf32>
    %c1_174 = arith.constant 1 : index
    %c0_175 = arith.constant 0 : index
    %c0_176 = arith.constant 0 : index
    %584 = vector.load %arg11[%c1_174, %c0_175, %c0_176] : memref<2x2x32xf32, #tpu.memory_space<vmem>>, vector<1x2x32xf32>
    %585 = vector.shape_cast %584 : vector<1x2x32xf32> to vector<2x32xf32>
    %c1_177 = arith.constant 1 : index
    %c0_178 = arith.constant 0 : index
    %c0_179 = arith.constant 0 : index
    %586 = vector.load %arg12[%c1_177, %c0_178, %c0_179] : memref<2x2x32xf32, #tpu.memory_space<vmem>>, vector<1x2x32xf32>
    %587 = vector.shape_cast %586 : vector<1x2x32xf32> to vector<2x32xf32>
    %c1_180 = arith.constant 1 : index
    %c0_181 = arith.constant 0 : index
    %c0_182 = arith.constant 0 : index
    %588 = vector.load %arg13[%c1_180, %c0_181, %c0_182] : memref<2x2x32xf32, #tpu.memory_space<vmem>>, vector<1x2x32xf32>
    %589 = vector.shape_cast %588 : vector<1x2x32xf32> to vector<2x32xf32>
    %590 = tpu.concatenate %479, %508, %537, %566 in 0 : vector<8x32xf32>, vector<8x32xf32>, vector<8x32xf32>, vector<8x32xf32> -> vector<32x32xf32>
    %c0_183 = arith.constant 0 : index
    %c0_184 = arith.constant 0 : index
    %c0_185 = arith.constant 0 : index
    %591 = vector.load %arg1[%c0_183, %c0_184, %c0_185] : memref<4x32x32xf32, #tpu.memory_space<vmem>>, vector<1x32x32xf32>
    %592 = vector.shape_cast %591 : vector<1x32x32xf32> to vector<32x32xf32>
    %cst_186 = arith.constant 0.000000e+00 : f32
    %593 = vector.broadcast %cst_186 : f32 to vector<32x32xf32>
    %594 = arith.cmpf ogt, %592, %593 : vector<32x32xf32>
    %cst_187 = arith.constant -1.000000e+30 : f32
    %595 = vector.broadcast %cst_187 : f32 to vector<32x32xf32>
    %596 = arith.select %594, %590, %595 : vector<32x32xi1>, vector<32x32xf32>
    %cst_188 = arith.constant dense<0xFF800000> : vector<32xf32>
    %597 = vector.multi_reduction <maximumf>, %596, %cst_188 [0] : vector<32x32xf32> to vector<32xf32>
    %598 = vector.shape_cast %597 : vector<32xf32> to vector<1x32xf32>
    %599 = vector.broadcast %598 : vector<1x32xf32> to vector<32x32xf32>
    %600 = arith.subf %596, %599 : vector<32x32xf32>
    %601 = math.exp %600 : vector<32x32xf32>
    %602 = arith.mulf %601, %592 : vector<32x32xf32>
    %cst_189 = arith.constant dense<0.000000e+00> : vector<32xf32>
    %603 = vector.multi_reduction <add>, %602, %cst_189 [0] : vector<32x32xf32> to vector<32xf32>
    %604 = vector.shape_cast %603 : vector<32xf32> to vector<1x32xf32>
    %cst_190 = arith.constant 1.000000e-30 : f32
    %605 = vector.broadcast %cst_190 : f32 to vector<1x32xf32>
    %606 = arith.maximumf %604, %605 : vector<1x32xf32>
    %607 = tpu.reciprocal %606 {approx = true} : vector<1x32xf32> -> vector<1x32xf32>
    %608 = vector.broadcast %607 : vector<1x32xf32> to vector<32x32xf32>
    %609 = arith.mulf %602, %608 : vector<32x32xf32>
    %610 = vector.extract_strided_slice %460 {offsets = [0, 0], sizes = [32, 32], strides = [1, 1]} : vector<32x128xf32> to vector<32x32xf32>
    %cst_191 = arith.constant dense<0.000000e+00> : vector<32x32xf32>
    %611 = tpu.matmul %609, %610, %cst_191 {dimension_numbers = #tpu.dot_dimension_numbers<[0], [0], [1], [1], [0, 1, 1, 1], [], []>} : vector<32x32xf32>, vector<32x32xf32>, vector<32x32xf32> -> vector<32x32xf32>
    %612 = vector.extract_strided_slice %585 {offsets = [0, 0], sizes = [1, 32], strides = [1, 1]} : vector<2x32xf32> to vector<1x32xf32>
    %613 = vector.broadcast %612 : vector<1x32xf32> to vector<32x32xf32>
    %614 = arith.addf %611, %613 : vector<32x32xf32>
    %615 = vector.extract_strided_slice %1 {offsets = [0, 0], sizes = [32, 1], strides = [1, 1]} : vector<32x2xf32> to vector<32x1xf32>
    %616 = vector.broadcast %615 : vector<32x1xf32> to vector<32x32xf32>
    %617 = arith.mulf %614, %616 : vector<32x32xf32>
    %618 = vector.shape_cast %617 : vector<32x32xf32> to vector<1x32x32xf32>
    %cst_192 = arith.constant dense<0.000000e+00> : vector<1xf32>
    %619 = vector.multi_reduction <add>, %618, %cst_192 [1, 2] : vector<1x32x32xf32> to vector<1xf32>
    %620 = vector.shape_cast %619 : vector<1xf32> to vector<1x1x1xf32>
    %621 = vector.extract %620[0, 0, 0] : f32 from vector<1x1x1xf32>
    %cst_193 = arith.constant 3.200000e+01 : f32
    %622 = arith.mulf %7, %cst_193 : f32
    %623 = arith.divf %621, %622 : f32
    %624 = vector.broadcast %623 : f32 to vector<32x32xf32>
    %625 = arith.subf %614, %624 : vector<32x32xf32>
    %626 = vector.broadcast %615 : vector<32x1xf32> to vector<32x32xf32>
    %627 = arith.mulf %625, %626 : vector<32x32xf32>
    %628 = arith.mulf %627, %627 : vector<32x32xf32>
    %629 = vector.shape_cast %628 : vector<32x32xf32> to vector<1x32x32xf32>
    %cst_194 = arith.constant dense<0.000000e+00> : vector<1xf32>
    %630 = vector.multi_reduction <add>, %629, %cst_194 [1, 2] : vector<1x32x32xf32> to vector<1xf32>
    %631 = vector.shape_cast %630 : vector<1xf32> to vector<1x1x1xf32>
    %632 = vector.extract %631[0, 0, 0] : f32 from vector<1x1x1xf32>
    %cst_195 = arith.constant 3.200000e+01 : f32
    %633 = arith.mulf %7, %cst_195 : f32
    %634 = arith.divf %632, %633 : f32
    %635 = math.sqrt %634 : f32
    %cst_196 = arith.constant 9.99999974E-6 : f32
    %636 = arith.addf %635, %cst_196 : f32
    %637 = vector.broadcast %636 : f32 to vector<32x32xf32>
    %638 = arith.divf %625, %637 : vector<32x32xf32>
    %639 = vector.extract_strided_slice %587 {offsets = [0, 0], sizes = [1, 32], strides = [1, 1]} : vector<2x32xf32> to vector<1x32xf32>
    %640 = vector.broadcast %639 : vector<1x32xf32> to vector<32x32xf32>
    %641 = arith.mulf %638, %640 : vector<32x32xf32>
    %642 = vector.extract_strided_slice %589 {offsets = [0, 0], sizes = [1, 32], strides = [1, 1]} : vector<2x32xf32> to vector<1x32xf32>
    %643 = vector.broadcast %642 : vector<1x32xf32> to vector<32x32xf32>
    %644 = arith.addf %641, %643 : vector<32x32xf32>
    %cst_197 = arith.constant 0.000000e+00 : f32
    %645 = vector.broadcast %cst_197 : f32 to vector<32x32xf32>
    %646 = arith.maximumf %644, %645 : vector<32x32xf32>
    %647 = arith.addf %582, %646 : vector<32x32xf32>
    %648 = tpu.concatenate %484, %513, %542, %571 in 0 : vector<8x32xf32>, vector<8x32xf32>, vector<8x32xf32>, vector<8x32xf32> -> vector<32x32xf32>
    %c1_198 = arith.constant 1 : index
    %c0_199 = arith.constant 0 : index
    %c0_200 = arith.constant 0 : index
    %649 = vector.load %arg1[%c1_198, %c0_199, %c0_200] : memref<4x32x32xf32, #tpu.memory_space<vmem>>, vector<1x32x32xf32>
    %650 = vector.shape_cast %649 : vector<1x32x32xf32> to vector<32x32xf32>
    %cst_201 = arith.constant 0.000000e+00 : f32
    %651 = vector.broadcast %cst_201 : f32 to vector<32x32xf32>
    %652 = arith.cmpf ogt, %650, %651 : vector<32x32xf32>
    %cst_202 = arith.constant -1.000000e+30 : f32
    %653 = vector.broadcast %cst_202 : f32 to vector<32x32xf32>
    %654 = arith.select %652, %648, %653 : vector<32x32xi1>, vector<32x32xf32>
    %cst_203 = arith.constant dense<0xFF800000> : vector<32xf32>
    %655 = vector.multi_reduction <maximumf>, %654, %cst_203 [0] : vector<32x32xf32> to vector<32xf32>
    %656 = vector.shape_cast %655 : vector<32xf32> to vector<1x32xf32>
    %657 = vector.broadcast %656 : vector<1x32xf32> to vector<32x32xf32>
    %658 = arith.subf %654, %657 : vector<32x32xf32>
    %659 = math.exp %658 : vector<32x32xf32>
    %660 = arith.mulf %659, %650 : vector<32x32xf32>
    %cst_204 = arith.constant dense<0.000000e+00> : vector<32xf32>
    %661 = vector.multi_reduction <add>, %660, %cst_204 [0] : vector<32x32xf32> to vector<32xf32>
    %662 = vector.shape_cast %661 : vector<32xf32> to vector<1x32xf32>
    %cst_205 = arith.constant 1.000000e-30 : f32
    %663 = vector.broadcast %cst_205 : f32 to vector<1x32xf32>
    %664 = arith.maximumf %662, %663 : vector<1x32xf32>
    %665 = tpu.reciprocal %664 {approx = true} : vector<1x32xf32> -> vector<1x32xf32>
    %666 = vector.broadcast %665 : vector<1x32xf32> to vector<32x32xf32>
    %667 = arith.mulf %660, %666 : vector<32x32xf32>
    %668 = vector.extract_strided_slice %460 {offsets = [0, 32], sizes = [32, 32], strides = [1, 1]} : vector<32x128xf32> to vector<32x32xf32>
    %cst_206 = arith.constant dense<0.000000e+00> : vector<32x32xf32>
    %669 = tpu.matmul %667, %668, %cst_206 {dimension_numbers = #tpu.dot_dimension_numbers<[0], [0], [1], [1], [0, 1, 1, 1], [], []>} : vector<32x32xf32>, vector<32x32xf32>, vector<32x32xf32> -> vector<32x32xf32>
    %670 = vector.extract_strided_slice %585 {offsets = [1, 0], sizes = [1, 32], strides = [1, 1]} : vector<2x32xf32> to vector<1x32xf32>
    %671 = vector.broadcast %670 : vector<1x32xf32> to vector<32x32xf32>
    %672 = arith.addf %669, %671 : vector<32x32xf32>
    %673 = vector.extract_strided_slice %1 {offsets = [0, 0], sizes = [32, 1], strides = [1, 1]} : vector<32x2xf32> to vector<32x1xf32>
    %674 = vector.broadcast %673 : vector<32x1xf32> to vector<32x32xf32>
    %675 = arith.mulf %672, %674 : vector<32x32xf32>
    %676 = vector.shape_cast %675 : vector<32x32xf32> to vector<1x32x32xf32>
    %cst_207 = arith.constant dense<0.000000e+00> : vector<1xf32>
    %677 = vector.multi_reduction <add>, %676, %cst_207 [1, 2] : vector<1x32x32xf32> to vector<1xf32>
    %678 = vector.shape_cast %677 : vector<1xf32> to vector<1x1x1xf32>
    %679 = vector.extract %678[0, 0, 0] : f32 from vector<1x1x1xf32>
    %cst_208 = arith.constant 3.200000e+01 : f32
    %680 = arith.mulf %7, %cst_208 : f32
    %681 = arith.divf %679, %680 : f32
    %682 = vector.broadcast %681 : f32 to vector<32x32xf32>
    %683 = arith.subf %672, %682 : vector<32x32xf32>
    %684 = vector.broadcast %673 : vector<32x1xf32> to vector<32x32xf32>
    %685 = arith.mulf %683, %684 : vector<32x32xf32>
    %686 = arith.mulf %685, %685 : vector<32x32xf32>
    %687 = vector.shape_cast %686 : vector<32x32xf32> to vector<1x32x32xf32>
    %cst_209 = arith.constant dense<0.000000e+00> : vector<1xf32>
    %688 = vector.multi_reduction <add>, %687, %cst_209 [1, 2] : vector<1x32x32xf32> to vector<1xf32>
    %689 = vector.shape_cast %688 : vector<1xf32> to vector<1x1x1xf32>
    %690 = vector.extract %689[0, 0, 0] : f32 from vector<1x1x1xf32>
    %cst_210 = arith.constant 3.200000e+01 : f32
    %691 = arith.mulf %7, %cst_210 : f32
    %692 = arith.divf %690, %691 : f32
    %693 = math.sqrt %692 : f32
    %cst_211 = arith.constant 9.99999974E-6 : f32
    %694 = arith.addf %693, %cst_211 : f32
    %695 = vector.broadcast %694 : f32 to vector<32x32xf32>
    %696 = arith.divf %683, %695 : vector<32x32xf32>
    %697 = vector.extract_strided_slice %587 {offsets = [1, 0], sizes = [1, 32], strides = [1, 1]} : vector<2x32xf32> to vector<1x32xf32>
    %698 = vector.broadcast %697 : vector<1x32xf32> to vector<32x32xf32>
    %699 = arith.mulf %696, %698 : vector<32x32xf32>
    %700 = vector.extract_strided_slice %589 {offsets = [1, 0], sizes = [1, 32], strides = [1, 1]} : vector<2x32xf32> to vector<1x32xf32>
    %701 = vector.broadcast %700 : vector<1x32xf32> to vector<32x32xf32>
    %702 = arith.addf %699, %701 : vector<32x32xf32>
    %cst_212 = arith.constant 0.000000e+00 : f32
    %703 = vector.broadcast %cst_212 : f32 to vector<32x32xf32>
    %704 = arith.maximumf %702, %703 : vector<32x32xf32>
    %705 = arith.addf %647, %704 : vector<32x32xf32>
    %706 = tpu.concatenate %489, %518, %547, %576 in 0 : vector<8x32xf32>, vector<8x32xf32>, vector<8x32xf32>, vector<8x32xf32> -> vector<32x32xf32>
    %c2_213 = arith.constant 2 : index
    %c0_214 = arith.constant 0 : index
    %c0_215 = arith.constant 0 : index
    %707 = vector.load %arg1[%c2_213, %c0_214, %c0_215] : memref<4x32x32xf32, #tpu.memory_space<vmem>>, vector<1x32x32xf32>
    %708 = vector.shape_cast %707 : vector<1x32x32xf32> to vector<32x32xf32>
    %cst_216 = arith.constant 0.000000e+00 : f32
    %709 = vector.broadcast %cst_216 : f32 to vector<32x32xf32>
    %710 = arith.cmpf ogt, %708, %709 : vector<32x32xf32>
    %cst_217 = arith.constant -1.000000e+30 : f32
    %711 = vector.broadcast %cst_217 : f32 to vector<32x32xf32>
    %712 = arith.select %710, %706, %711 : vector<32x32xi1>, vector<32x32xf32>
    %cst_218 = arith.constant dense<0xFF800000> : vector<32xf32>
    %713 = vector.multi_reduction <maximumf>, %712, %cst_218 [0] : vector<32x32xf32> to vector<32xf32>
    %714 = vector.shape_cast %713 : vector<32xf32> to vector<1x32xf32>
    %715 = vector.broadcast %714 : vector<1x32xf32> to vector<32x32xf32>
    %716 = arith.subf %712, %715 : vector<32x32xf32>
    %717 = math.exp %716 : vector<32x32xf32>
    %718 = arith.mulf %717, %708 : vector<32x32xf32>
    %cst_219 = arith.constant dense<0.000000e+00> : vector<32xf32>
    %719 = vector.multi_reduction <add>, %718, %cst_219 [0] : vector<32x32xf32> to vector<32xf32>
    %720 = vector.shape_cast %719 : vector<32xf32> to vector<1x32xf32>
    %cst_220 = arith.constant 1.000000e-30 : f32
    %721 = vector.broadcast %cst_220 : f32 to vector<1x32xf32>
    %722 = arith.maximumf %720, %721 : vector<1x32xf32>
    %723 = tpu.reciprocal %722 {approx = true} : vector<1x32xf32> -> vector<1x32xf32>
    %724 = vector.broadcast %723 : vector<1x32xf32> to vector<32x32xf32>
    %725 = arith.mulf %718, %724 : vector<32x32xf32>
    %726 = vector.extract_strided_slice %460 {offsets = [0, 64], sizes = [32, 32], strides = [1, 1]} : vector<32x128xf32> to vector<32x32xf32>
    %cst_221 = arith.constant dense<0.000000e+00> : vector<32x32xf32>
    %727 = tpu.matmul %725, %726, %cst_221 {dimension_numbers = #tpu.dot_dimension_numbers<[0], [0], [1], [1], [0, 1, 1, 1], [], []>} : vector<32x32xf32>, vector<32x32xf32>, vector<32x32xf32> -> vector<32x32xf32>
    %728 = vector.extract_strided_slice %585 {offsets = [0, 0], sizes = [1, 32], strides = [1, 1]} : vector<2x32xf32> to vector<1x32xf32>
    %729 = vector.broadcast %728 : vector<1x32xf32> to vector<32x32xf32>
    %730 = arith.addf %727, %729 : vector<32x32xf32>
    %731 = vector.extract_strided_slice %1 {offsets = [0, 1], sizes = [32, 1], strides = [1, 1]} : vector<32x2xf32> to vector<32x1xf32>
    %732 = vector.broadcast %731 : vector<32x1xf32> to vector<32x32xf32>
    %733 = arith.mulf %730, %732 : vector<32x32xf32>
    %734 = vector.shape_cast %733 : vector<32x32xf32> to vector<1x32x32xf32>
    %cst_222 = arith.constant dense<0.000000e+00> : vector<1xf32>
    %735 = vector.multi_reduction <add>, %734, %cst_222 [1, 2] : vector<1x32x32xf32> to vector<1xf32>
    %736 = vector.shape_cast %735 : vector<1xf32> to vector<1x1x1xf32>
    %737 = vector.extract %736[0, 0, 0] : f32 from vector<1x1x1xf32>
    %cst_223 = arith.constant 3.200000e+01 : f32
    %738 = arith.mulf %12, %cst_223 : f32
    %739 = arith.divf %737, %738 : f32
    %740 = vector.broadcast %739 : f32 to vector<32x32xf32>
    %741 = arith.subf %730, %740 : vector<32x32xf32>
    %742 = vector.broadcast %731 : vector<32x1xf32> to vector<32x32xf32>
    %743 = arith.mulf %741, %742 : vector<32x32xf32>
    %744 = arith.mulf %743, %743 : vector<32x32xf32>
    %745 = vector.shape_cast %744 : vector<32x32xf32> to vector<1x32x32xf32>
    %cst_224 = arith.constant dense<0.000000e+00> : vector<1xf32>
    %746 = vector.multi_reduction <add>, %745, %cst_224 [1, 2] : vector<1x32x32xf32> to vector<1xf32>
    %747 = vector.shape_cast %746 : vector<1xf32> to vector<1x1x1xf32>
    %748 = vector.extract %747[0, 0, 0] : f32 from vector<1x1x1xf32>
    %cst_225 = arith.constant 3.200000e+01 : f32
    %749 = arith.mulf %12, %cst_225 : f32
    %750 = arith.divf %748, %749 : f32
    %751 = math.sqrt %750 : f32
    %cst_226 = arith.constant 9.99999974E-6 : f32
    %752 = arith.addf %751, %cst_226 : f32
    %753 = vector.broadcast %752 : f32 to vector<32x32xf32>
    %754 = arith.divf %741, %753 : vector<32x32xf32>
    %755 = vector.extract_strided_slice %587 {offsets = [0, 0], sizes = [1, 32], strides = [1, 1]} : vector<2x32xf32> to vector<1x32xf32>
    %756 = vector.broadcast %755 : vector<1x32xf32> to vector<32x32xf32>
    %757 = arith.mulf %754, %756 : vector<32x32xf32>
    %758 = vector.extract_strided_slice %589 {offsets = [0, 0], sizes = [1, 32], strides = [1, 1]} : vector<2x32xf32> to vector<1x32xf32>
    %759 = vector.broadcast %758 : vector<1x32xf32> to vector<32x32xf32>
    %760 = arith.addf %757, %759 : vector<32x32xf32>
    %cst_227 = arith.constant 0.000000e+00 : f32
    %761 = vector.broadcast %cst_227 : f32 to vector<32x32xf32>
    %762 = arith.maximumf %760, %761 : vector<32x32xf32>
    %763 = arith.addf %583, %762 : vector<32x32xf32>
    %764 = tpu.concatenate %494, %523, %552, %581 in 0 : vector<8x32xf32>, vector<8x32xf32>, vector<8x32xf32>, vector<8x32xf32> -> vector<32x32xf32>
    %c3_228 = arith.constant 3 : index
    %c0_229 = arith.constant 0 : index
    %c0_230 = arith.constant 0 : index
    %765 = vector.load %arg1[%c3_228, %c0_229, %c0_230] : memref<4x32x32xf32, #tpu.memory_space<vmem>>, vector<1x32x32xf32>
    %766 = vector.shape_cast %765 : vector<1x32x32xf32> to vector<32x32xf32>
    %cst_231 = arith.constant 0.000000e+00 : f32
    %767 = vector.broadcast %cst_231 : f32 to vector<32x32xf32>
    %768 = arith.cmpf ogt, %766, %767 : vector<32x32xf32>
    %cst_232 = arith.constant -1.000000e+30 : f32
    %769 = vector.broadcast %cst_232 : f32 to vector<32x32xf32>
    %770 = arith.select %768, %764, %769 : vector<32x32xi1>, vector<32x32xf32>
    %cst_233 = arith.constant dense<0xFF800000> : vector<32xf32>
    %771 = vector.multi_reduction <maximumf>, %770, %cst_233 [0] : vector<32x32xf32> to vector<32xf32>
    %772 = vector.shape_cast %771 : vector<32xf32> to vector<1x32xf32>
    %773 = vector.broadcast %772 : vector<1x32xf32> to vector<32x32xf32>
    %774 = arith.subf %770, %773 : vector<32x32xf32>
    %775 = math.exp %774 : vector<32x32xf32>
    %776 = arith.mulf %775, %766 : vector<32x32xf32>
    %cst_234 = arith.constant dense<0.000000e+00> : vector<32xf32>
    %777 = vector.multi_reduction <add>, %776, %cst_234 [0] : vector<32x32xf32> to vector<32xf32>
    %778 = vector.shape_cast %777 : vector<32xf32> to vector<1x32xf32>
    %cst_235 = arith.constant 1.000000e-30 : f32
    %779 = vector.broadcast %cst_235 : f32 to vector<1x32xf32>
    %780 = arith.maximumf %778, %779 : vector<1x32xf32>
    %781 = tpu.reciprocal %780 {approx = true} : vector<1x32xf32> -> vector<1x32xf32>
    %782 = vector.broadcast %781 : vector<1x32xf32> to vector<32x32xf32>
    %783 = arith.mulf %776, %782 : vector<32x32xf32>
    %784 = vector.extract_strided_slice %460 {offsets = [0, 96], sizes = [32, 32], strides = [1, 1]} : vector<32x128xf32> to vector<32x32xf32>
    %cst_236 = arith.constant dense<0.000000e+00> : vector<32x32xf32>
    %785 = tpu.matmul %783, %784, %cst_236 {dimension_numbers = #tpu.dot_dimension_numbers<[0], [0], [1], [1], [0, 1, 1, 1], [], []>} : vector<32x32xf32>, vector<32x32xf32>, vector<32x32xf32> -> vector<32x32xf32>
    %786 = vector.extract_strided_slice %585 {offsets = [1, 0], sizes = [1, 32], strides = [1, 1]} : vector<2x32xf32> to vector<1x32xf32>
    %787 = vector.broadcast %786 : vector<1x32xf32> to vector<32x32xf32>
    %788 = arith.addf %785, %787 : vector<32x32xf32>
    %789 = vector.extract_strided_slice %1 {offsets = [0, 1], sizes = [32, 1], strides = [1, 1]} : vector<32x2xf32> to vector<32x1xf32>
    %790 = vector.broadcast %789 : vector<32x1xf32> to vector<32x32xf32>
    %791 = arith.mulf %788, %790 : vector<32x32xf32>
    %792 = vector.shape_cast %791 : vector<32x32xf32> to vector<1x32x32xf32>
    %cst_237 = arith.constant dense<0.000000e+00> : vector<1xf32>
    %793 = vector.multi_reduction <add>, %792, %cst_237 [1, 2] : vector<1x32x32xf32> to vector<1xf32>
    %794 = vector.shape_cast %793 : vector<1xf32> to vector<1x1x1xf32>
    %795 = vector.extract %794[0, 0, 0] : f32 from vector<1x1x1xf32>
    %cst_238 = arith.constant 3.200000e+01 : f32
    %796 = arith.mulf %12, %cst_238 : f32
    %797 = arith.divf %795, %796 : f32
    %798 = vector.broadcast %797 : f32 to vector<32x32xf32>
    %799 = arith.subf %788, %798 : vector<32x32xf32>
    %800 = vector.broadcast %789 : vector<32x1xf32> to vector<32x32xf32>
    %801 = arith.mulf %799, %800 : vector<32x32xf32>
    %802 = arith.mulf %801, %801 : vector<32x32xf32>
    %803 = vector.shape_cast %802 : vector<32x32xf32> to vector<1x32x32xf32>
    %cst_239 = arith.constant dense<0.000000e+00> : vector<1xf32>
    %804 = vector.multi_reduction <add>, %803, %cst_239 [1, 2] : vector<1x32x32xf32> to vector<1xf32>
    %805 = vector.shape_cast %804 : vector<1xf32> to vector<1x1x1xf32>
    %806 = vector.extract %805[0, 0, 0] : f32 from vector<1x1x1xf32>
    %cst_240 = arith.constant 3.200000e+01 : f32
    %807 = arith.mulf %12, %cst_240 : f32
    %808 = arith.divf %806, %807 : f32
    %809 = math.sqrt %808 : f32
    %cst_241 = arith.constant 9.99999974E-6 : f32
    %810 = arith.addf %809, %cst_241 : f32
    %811 = vector.broadcast %810 : f32 to vector<32x32xf32>
    %812 = arith.divf %799, %811 : vector<32x32xf32>
    %813 = vector.extract_strided_slice %587 {offsets = [1, 0], sizes = [1, 32], strides = [1, 1]} : vector<2x32xf32> to vector<1x32xf32>
    %814 = vector.broadcast %813 : vector<1x32xf32> to vector<32x32xf32>
    %815 = arith.mulf %812, %814 : vector<32x32xf32>
    %816 = vector.extract_strided_slice %589 {offsets = [1, 0], sizes = [1, 32], strides = [1, 1]} : vector<2x32xf32> to vector<1x32xf32>
    %817 = vector.broadcast %816 : vector<1x32xf32> to vector<32x32xf32>
    %818 = arith.addf %815, %817 : vector<32x32xf32>
    %cst_242 = arith.constant 0.000000e+00 : f32
    %819 = vector.broadcast %cst_242 : f32 to vector<32x32xf32>
    %820 = arith.maximumf %818, %819 : vector<32x32xf32>
    %821 = arith.addf %763, %820 : vector<32x32xf32>
    %822 = tpu.concatenate %705, %821 in 0 : vector<32x32xf32>, vector<32x32xf32> -> vector<64x32xf32>
    %c0_243 = arith.constant 0 : index
    %c0_244 = arith.constant 0 : index
    %823 = vector.load %arg14[%c0_243, %c0_244] : memref<32x48xf32, #tpu.memory_space<vmem>>, vector<32x48xf32>
    %cst_245 = arith.constant dense<0.000000e+00> : vector<64x48xf32>
    %824 = tpu.matmul %822, %823, %cst_245 {dimension_numbers = #tpu.dot_dimension_numbers<[1], [0], [0], [1], [0, 0, 1, 1], [], []>} : vector<64x32xf32>, vector<32x48xf32>, vector<64x48xf32> -> vector<64x48xf32>
    %c0_246 = arith.constant 0 : index
    %c0_247 = arith.constant 0 : index
    %825 = vector.load %arg15[%c0_246, %c0_247] : memref<1x48xf32, #tpu.memory_space<vmem>>, vector<1x48xf32>
    %826 = vector.broadcast %825 : vector<1x48xf32> to vector<64x48xf32>
    %827 = arith.addf %824, %826 : vector<64x48xf32>
    %828 = vector.extract_strided_slice %827 {offsets = [0, 0], sizes = [64, 32], strides = [1, 1]} : vector<64x48xf32> to vector<64x32xf32>
    %cst_248 = arith.constant 0.000000e+00 : f32
    %829 = vector.broadcast %cst_248 : f32 to vector<64x32xf32>
    %830 = arith.maximumf %828, %829 : vector<64x32xf32>
    %831 = vector.extract_strided_slice %827 {offsets = [0, 32], sizes = [64, 16], strides = [1, 1]} : vector<64x48xf32> to vector<64x16xf32>
    %cst_249 = arith.constant 0.000000e+00 : f32
    %832 = vector.broadcast %cst_249 : f32 to vector<64x16xf32>
    %833 = arith.maximumf %831, %832 : vector<64x16xf32>
    %c0_250 = arith.constant 0 : index
    %c0_251 = arith.constant 0 : index
    %834 = vector.load %arg16[%c0_250, %c0_251] : memref<1x16xf32, #tpu.memory_space<vmem>>, vector<1x16xf32>
    %835 = vector.broadcast %834 : vector<1x16xf32> to vector<64x16xf32>
    %836 = arith.mulf %833, %835 : vector<64x16xf32>
    %cst_252 = arith.constant dense<0.000000e+00> : vector<64xf32>
    %837 = vector.multi_reduction <add>, %836, %cst_252 [1] : vector<64x16xf32> to vector<64xf32>
    %838 = vector.shape_cast %837 : vector<64xf32> to vector<64x1xf32>
    %c0_253 = arith.constant 0 : index
    %c0_254 = arith.constant 0 : index
    %839 = vector.load %arg17[%c0_253, %c0_254] : memref<1x1xf32, #tpu.memory_space<vmem>>, vector<1x1xf32>
    %840 = vector.broadcast %839 : vector<1x1xf32> to vector<64x1xf32>
    %841 = arith.addf %838, %840 : vector<64x1xf32>
    %cst_255 = arith.constant 0.000000e+00 : f32
    %842 = vector.broadcast %cst_255 : f32 to vector<64x8xf32>
    %843 = arith.cmpf ogt, %2, %842 : vector<64x8xf32>
    %cst_256 = arith.constant -1.000000e+30 : f32
    %844 = vector.shape_cast %841 : vector<64x1xf32> to vector<64x1xf32>
    %845 = vector.broadcast %844 : vector<64x1xf32> to vector<64x8xf32>
    %846 = vector.broadcast %cst_256 : f32 to vector<64x8xf32>
    %847 = arith.select %843, %845, %846 : vector<64x8xi1>, vector<64x8xf32>
    %cst_257 = arith.constant dense<0xFF800000> : vector<8xf32>
    %848 = vector.multi_reduction <maximumf>, %847, %cst_257 [0] : vector<64x8xf32> to vector<8xf32>
    %849 = vector.shape_cast %848 : vector<8xf32> to vector<1x8xf32>
    %850 = vector.broadcast %849 : vector<1x8xf32> to vector<64x8xf32>
    %851 = arith.subf %847, %850 : vector<64x8xf32>
    %852 = math.exp %851 : vector<64x8xf32>
    %853 = arith.mulf %852, %2 : vector<64x8xf32>
    %cst_258 = arith.constant dense<0.000000e+00> : vector<8xf32>
    %854 = vector.multi_reduction <add>, %853, %cst_258 [0] : vector<64x8xf32> to vector<8xf32>
    %855 = vector.shape_cast %854 : vector<8xf32> to vector<1x8xf32>
    %cst_259 = arith.constant 1.000000e-30 : f32
    %856 = vector.broadcast %cst_259 : f32 to vector<1x8xf32>
    %857 = arith.maximumf %855, %856 : vector<1x8xf32>
    %858 = tpu.reciprocal %857 {approx = true} : vector<1x8xf32> -> vector<1x8xf32>
    %859 = vector.broadcast %858 : vector<1x8xf32> to vector<64x8xf32>
    %860 = arith.mulf %853, %859 : vector<64x8xf32>
    %cst_260 = arith.constant dense<0.000000e+00> : vector<8x32xf32>
    %861 = tpu.matmul %860, %830, %cst_260 {dimension_numbers = #tpu.dot_dimension_numbers<[0], [0], [1], [1], [0, 1, 1, 1], [], []>} : vector<64x8xf32>, vector<64x32xf32>, vector<8x32xf32> -> vector<8x32xf32>
    %c0_261 = arith.constant 0 : index
    %c0_262 = arith.constant 0 : index
    %862 = vector.load %arg20[%c0_261, %c0_262] : memref<8x32xf32, #tpu.memory_space<vmem>>, vector<8x32xf32>
    tpu.vector_store %arg20[%c0_261, %c0_262], %861 {strides = array<i32>} : memref<8x32xf32, #tpu.memory_space<vmem>>, vector<8x32xf32>,
    %863 = vector.extract_strided_slice %861 {offsets = [0, 0], sizes = [1, 32], strides = [1, 1]} : vector<8x32xf32> to vector<1x32xf32>
    %864 = vector.extract_strided_slice %861 {offsets = [1, 0], sizes = [2, 32], strides = [1, 1]} : vector<8x32xf32> to vector<2x32xf32>
    %865 = vector.broadcast %863 : vector<1x32xf32> to vector<2x32xf32>
    %866 = arith.subf %865, %864 : vector<2x32xf32>
    %c0_263 = arith.constant 0 : index
    %c0_264 = arith.constant 0 : index
    %867 = vector.load %arg21[%c0_263, %c0_264] : memref<2x32xf32, #tpu.memory_space<vmem>>, vector<2x32xf32>
    tpu.vector_store %arg21[%c0_263, %c0_264], %866 {strides = array<i32>} : memref<2x32xf32, #tpu.memory_space<vmem>>, vector<2x32xf32>,
    %c0_265 = arith.constant 0 : index
    %c0_266 = arith.constant 0 : index
    %868 = vector.load %arg18[%c0_265, %c0_266] : memref<32x2xf32, #tpu.memory_space<vmem>>, vector<32x2xf32>
    %cst_267 = arith.constant dense<0.000000e+00> : vector<2x2xf32>
    %869 = tpu.matmul %866, %868, %cst_267 {dimension_numbers = #tpu.dot_dimension_numbers<[1], [0], [0], [1], [0, 0, 1, 1], [], []>} : vector<2x32xf32>, vector<32x2xf32>, vector<2x2xf32> -> vector<2x2xf32>
    %c0_268 = arith.constant 0 : index
    %c0_269 = arith.constant 0 : index
    %870 = vector.load %arg19[%c0_268, %c0_269] : memref<1x2xf32, #tpu.memory_space<vmem>>, vector<1x2xf32>
    %871 = vector.broadcast %870 : vector<1x2xf32> to vector<2x2xf32>
    %872 = arith.addf %869, %871 : vector<2x2xf32>
    %c0_270 = arith.constant 0 : index
    %c0_271 = arith.constant 0 : index
    %873 = vector.load %arg22[%c0_270, %c0_271] : memref<2x2xf32, #tpu.memory_space<vmem>>, vector<2x2xf32>
    tpu.vector_store %arg22[%c0_270, %c0_271], %872 {strides = array<i32>} : memref<2x2xf32, #tpu.memory_space<vmem>>, vector<2x2xf32>,
    return
  }
}

</mosaic_0001>

<llo_original>
// kernel: hetero_cell_forward.1
$region0: #{hetero_cell_forward.1}
  #allocation0 [shape = 'u32[]', space=smem, size = 0x4, offset = 0x4, fixed_abs, tag = 'smem constant byte address 0x4 - core index']
  #allocation1 [shape = 'u32[72,128]{1,0:T(1,128)}', space=vmem, size = 0x9000, scoped, tag = 'internal scratch']
  #allocation2 [shape = 'f32[1,1]{1,0:T(1,128)S(1)}', space=vmem, size = 0x200, scoped, tag = 'scoped memory for hetero_cell_forward.1']
  %s0 = inlined_call_operand.vmem [shape: f32[64,32], index: 0, kind: input, shape index: {}]
  %s1 = inlined_call_operand.vmem [shape: f32[4,32,32], index: 1, kind: input, shape index: {}]
  %s2 = inlined_call_operand.vmem [shape: f32[32,2], index: 2, kind: input, shape index: {}]
  %s3 = inlined_call_operand.vmem [shape: f32[64,8], index: 3, kind: input, shape index: {}]
  %s4 = inlined_call_operand.vmem [shape: f32[2,32,32], index: 4, kind: input, shape index: {}]
  %s5 = inlined_call_operand.vmem [shape: f32[2,1,32], index: 5, kind: input, shape index: {}]
  %s6 = inlined_call_operand.vmem [shape: f32[2,1,32], index: 6, kind: input, shape index: {}]
  %s7 = inlined_call_operand.vmem [shape: f32[2,1,32], index: 7, kind: input, shape index: {}]
  %s8 = inlined_call_operand.hbm [shape: f32[2,32,128], index: 8, kind: input, shape index: {}]
  %s9 = inlined_call_operand.hbm [shape: f32[2,1,128], index: 9, kind: input, shape index: {}]
  %s10 = inlined_call_operand.hbm [shape: f32[2,4,128], index: 10, kind: input, shape index: {}]
  %s11 = inlined_call_operand.hbm [shape: f32[2,2,32], index: 11, kind: input, shape index: {}]
  %s12 = inlined_call_operand.hbm [shape: f32[2,2,32], index: 12, kind: input, shape index: {}]
  %s13 = inlined_call_operand.hbm [shape: f32[2,2,32], index: 13, kind: input, shape index: {}]
  %s14 = inlined_call_operand.hbm [shape: f32[32,48], index: 14, kind: input, shape index: {}]
  %s15 = inlined_call_operand.hbm [shape: f32[1,48], index: 15, kind: input, shape index: {}]
  %s16 = inlined_call_operand.vmem [shape: f32[1,16], index: 16, kind: input, shape index: {}]
  %s17 = inlined_call_operand.<no memory space> [shape: f32[1,1], index: 17, kind: input, shape index: {}]
  %s18 = inlined_call_operand.vmem [shape: f32[32,2], index: 18, kind: input, shape index: {}]
  %s19 = inlined_call_operand.hbm [shape: f32[1,2], index: 19, kind: input, shape index: {}]
  %s20 = inlined_call_operand.vmem [shape: f32[8,32], index: 20, kind: output, shape index: {0}]
  %s21 = inlined_call_operand.hbm [shape: f32[2,32], index: 21, kind: output, shape index: {1}]
  %s22 = inlined_call_operand.vmem [shape: f32[2,2], index: 22, kind: output, shape index: {2}]
  %23 = xla_tuple %s20, %s21, %s22
  %s24 = sld [smem:[#allocation0]]
  $region142: #{hetero_cell_forward.1} parent=0
    _
  %s26 = ssub.s32 1, %s24
  %s27 = scalar_select 0, %s26, %s24
  %v28 = vstv %s17
  %29 = vst [vmem:[#allocation2] sm:$0x1] %v28
  $region1: #{hetero_cell_forward.1} parent=0
    #allocation3 [shape = 'u8[32768]{0}', space=vmem, size = 0x8000, scoped, tag = 'input window, operand 8, single buffered']
    #allocation4 [shape = 's32[1]{0}', space=sflag, size = 0x4, scoped, tag = 'scoped memory for hetero_cell_forward.1']
    #allocation5 [shape = 's32[1]{0}', space=sflag, size = 0x4, scoped, tag = 'scoped memory for hetero_cell_forward.1']
    #allocation6 [shape = 'u8[1024]{0}', space=vmem, size = 0x400, scoped, tag = 'input window, operand 9, single buffered']
    #allocation7 [shape = 's32[1]{0}', space=sflag, size = 0x4, scoped, tag = 'scoped memory for hetero_cell_forward.1']
    #allocation8 [shape = 'u8[4096]{0}', space=vmem, size = 0x1000, scoped, tag = 'input window, operand 10, single buffered']
    #allocation9 [shape = 'u8[2048]{0}', space=vmem, size = 0x800, scoped, tag = 'input window, operand 11, single buffered']
    #allocation10 [shape = 's32[1]{0}', space=sflag, size = 0x4, scoped, tag = 'scoped memory for hetero_cell_forward.1']
    #allocation11 [shape = 'u8[2048]{0}', space=vmem, size = 0x800, scoped, tag = 'input window, operand 12, single buffered']
    #allocation12 [shape = 'u8[2048]{0}', space=vmem, size = 0x800, scoped, tag = 'input window, operand 13, single buffered']
    #allocation13 [shape = 's32[1]{0}', space=sflag, size = 0x4, scoped, tag = 'scoped memory for hetero_cell_forward.1']
    #allocation14 [shape = 'u8[16384]{0}', space=vmem, size = 0x4000, scoped, tag = 'input window, operand 14, single buffered']
    #allocation15 [shape = 'u8[512]{0}', space=vmem, size = 0x400, scoped, tag = 'input window, operand 15, single buffered']
    #allocation16 [shape = 's32[1]{0}', space=sflag, size = 0x4, scoped, tag = 'scoped memory for hetero_cell_forward.1']
    #allocation17 [shape = 'u8[512]{0}', space=vmem, size = 0x400, scoped, tag = 'input window, operand 19, single buffered']
    #allocation18 [shape = 'u8[1024]{0}', space=vmem, size = 0x400, scoped, tag = 'output window, operand 1, single buffered']
    %30 = vsyncpa [#allocation4], 0
    %31 = vsyncpa [#allocation7], 0
    %32 = vsyncpa [#allocation10], 0
    %33 = vsyncpa [#allocation13], 0
    %34 = vsyncpa [#allocation16], 0
    %35 = vsyncpa [#allocation5], 0
    // Predicated region
    $region2: #{hetero_cell_forward.1} parent=1 // pred_check
      _
    $region3: #{hetero_cell_forward.1} parent=1 // pred_check_branch
      %37 = sbr.rel (0) target = $region5
    $region4: #{hetero_cell_forward.1} parent=1 // pred_region
      _
    $region5: #{hetero_cell_forward.1} parent=1 // pred_fallthru
      _
    // Predicated region
    $region6: #{hetero_cell_forward.1} parent=1 // pred_check
      _
    $region7: #{hetero_cell_forward.1} parent=1 // pred_check_branch
      %39 = sbr.rel (0) target = $region9
    $region8: #{hetero_cell_forward.1} parent=1 // pred_region
      _
    $region9: #{hetero_cell_forward.1} parent=1 // pred_fallthru
      _
    // Predicated region
    $region10: #{hetero_cell_forward.1} parent=1 // pred_check
      _
    $region11: #{hetero_cell_forward.1} parent=1 // pred_check_branch
      %41 = sbr.rel (0) target = $region13
    $region12: #{hetero_cell_forward.1} parent=1 // pred_region
      _
    $region13: #{hetero_cell_forward.1} parent=1 // pred_fallthru
      _
    // Predicated region
    $region14: #{hetero_cell_forward.1} parent=1 // pred_check
      _
    $region15: #{hetero_cell_forward.1} parent=1 // pred_check_branch
      %43 = sbr.rel (0) target = $region17
    $region16: #{hetero_cell_forward.1} parent=1 // pred_region
      _
    $region17: #{hetero_cell_forward.1} parent=1 // pred_fallthru
      _
    // Predicated region
    $region18: #{hetero_cell_forward.1} parent=1 // pred_check
      _
    $region19: #{hetero_cell_forward.1} parent=1 // pred_check_branch
      %45 = sbr.rel (0) target = $region21
    $region20: #{hetero_cell_forward.1} parent=1 // pred_region
      _
    $region21: #{hetero_cell_forward.1} parent=1 // pred_fallthru
      _
    // Predicated region
    $region22: #{hetero_cell_forward.1} parent=1 // pred_check
      _
    $region23: #{hetero_cell_forward.1} parent=1 // pred_check_branch
      %47 = sbr.rel (0) target = $region25
    $region24: #{hetero_cell_forward.1} parent=1 // pred_region
      _
    $region25: #{hetero_cell_forward.1} parent=1 // pred_fallthru
      _
    // Predicated region
    $region26: #{hetero_cell_forward.1} parent=1 // pred_check
      _
    $region27: #{hetero_cell_forward.1} parent=1 // pred_check_branch
      %49 = sbr.rel (0) target = $region29
    $region28: #{hetero_cell_forward.1} parent=1 // pred_region
      _
    $region29: #{hetero_cell_forward.1} parent=1 // pred_fallthru
      _
    // Predicated region
    $region30: #{hetero_cell_forward.1} parent=1 // pred_check
      _
    $region31: #{hetero_cell_forward.1} parent=1 // pred_check_branch
      %51 = sbr.rel (0) target = $region33
    $region32: #{hetero_cell_forward.1} parent=1 // pred_region
      _
    $region33: #{hetero_cell_forward.1} parent=1 // pred_fallthru
      _
    // Predicated region
    $region34: #{hetero_cell_forward.1} parent=1 // pred_check
      _
    $region35: #{hetero_cell_forward.1} parent=1 // pred_check_branch
      %53 = sbr.rel (0) target = $region37
    $region36: #{hetero_cell_forward.1} parent=1 // pred_region
      %55 = vsyncadd [#allocation4], 0
      %s56 = sshll.u32 %s8, 4
      %s57 = int_to_ptr.hbm [resolvable:$true] %s56
      %s58 = sshll.u32 [#allocation3], 4
      %s59 = int_to_ptr.vmem [resolvable:$true] %s58
      %64 = dma.hbm_to_vmem [thread:$0]  %s57, 1024, %s59, [#allocation4], 128, 128, 8
    $region37: #{hetero_cell_forward.1} parent=1 // pred_fallthru
      _
    // Predicated region
    $region38: #{hetero_cell_forward.1} parent=1 // pred_check
      _
    $region39: #{hetero_cell_forward.1} parent=1 // pred_check_branch
      %66 = sbr.rel (0) target = $region41
    $region40: #{hetero_cell_forward.1} parent=1 // pred_region
      %68 = vsyncadd [#allocation7], 0
      %s69 = sshll.u32 %s9, 4
      %s70 = int_to_ptr.hbm [resolvable:$true] %s69
      %s71 = sshll.u32 [#allocation6], 4
      %s72 = int_to_ptr.vmem [resolvable:$true] %s71
      %77 = dma.hbm_to_vmem [thread:$0]  %s70, 32, %s72, [#allocation7], 16, 16, 1
    $region41: #{hetero_cell_forward.1} parent=1 // pred_fallthru
      _
    // Predicated region
    $region42: #{hetero_cell_forward.1} parent=1 // pred_check
      _
    $region43: #{hetero_cell_forward.1} parent=1 // pred_check_branch
      %79 = sbr.rel (0) target = $region45
    $region44: #{hetero_cell_forward.1} parent=1 // pred_region
      %81 = vsyncadd [#allocation7], 0
      %s82 = sshll.u32 %s10, 4
      %s83 = int_to_ptr.hbm [resolvable:$true] %s82
      %s84 = sshll.u32 [#allocation8], 4
      %s85 = int_to_ptr.vmem [resolvable:$true] %s84
      %90 = dma.hbm_to_vmem [thread:$0]  %s83, 128, %s85, [#allocation7], 64, 64, 4
    $region45: #{hetero_cell_forward.1} parent=1 // pred_fallthru
      _
    // Predicated region
    $region46: #{hetero_cell_forward.1} parent=1 // pred_check
      _
    $region47: #{hetero_cell_forward.1} parent=1 // pred_check_branch
      %92 = sbr.rel (0) target = $region49
    $region48: #{hetero_cell_forward.1} parent=1 // pred_region
      %94 = vsyncadd [#allocation10], 0
      %s95 = sshll.u32 %s11, 4
      %s96 = int_to_ptr.hbm [resolvable:$true] %s95
      %s97 = sshll.u32 [#allocation9], 4
      %s98 = int_to_ptr.vmem [resolvable:$true] %s97
      %103 = dma.hbm_to_vmem [thread:$0]  %s96, 64, %s98, [#allocation10], 32, 32, 2
    $region49: #{hetero_cell_forward.1} parent=1 // pred_fallthru
      _
    // Predicated region
    $region50: #{hetero_cell_forward.1} parent=1 // pred_check
      _
    $region51: #{hetero_cell_forward.1} parent=1 // pred_check_branch
      %105 = sbr.rel (0) target = $region53
    $region52: #{hetero_cell_forward.1} parent=1 // pred_region
      %107 = vsyncadd [#allocation10], 0
      %s108 = sshll.u32 %s12, 4
      %s109 = int_to_ptr.hbm [resolvable:$true] %s108
      %s110 = sshll.u32 [#allocation11], 4
      %s111 = int_to_ptr.vmem [resolvable:$true] %s110
      %116 = dma.hbm_to_vmem [thread:$0]  %s109, 64, %s111, [#allocation10], 32, 32, 2
    $region53: #{hetero_cell_forward.1} parent=1 // pred_fallthru
      _
    // Predicated region
    $region54: #{hetero_cell_forward.1} parent=1 // pred_check
      _
    $region55: #{hetero_cell_forward.1} parent=1 // pred_check_branch
      %118 = sbr.rel (0) target = $region57
    $region56: #{hetero_cell_forward.1} parent=1 // pred_region
      %120 = vsyncadd [#allocation13], 0
      %s121 = sshll.u32 %s13, 4
      %s122 = int_to_ptr.hbm [resolvable:$true] %s121
      %s123 = sshll.u32 [#allocation12], 4
      %s124 = int_to_ptr.vmem [resolvable:$true] %s123
      %129 = dma.hbm_to_vmem [thread:$0]  %s122, 64, %s124, [#allocation13], 32, 32, 2
    $region57: #{hetero_cell_forward.1} parent=1 // pred_fallthru
      _
    // Predicated region
    $region58: #{hetero_cell_forward.1} parent=1 // pred_check
      _
    $region59: #{hetero_cell_forward.1} parent=1 // pred_check_branch
      %131 = sbr.rel (0) target = $region61
    $region60: #{hetero_cell_forward.1} parent=1 // pred_region
      %133 = vsyncadd [#allocation13], 0
      %s134 = sshll.u32 %s14, 4
      %s135 = int_to_ptr.hbm [resolvable:$true] %s134
      %s136 = sshll.u32 [#allocation14], 4
      %s137 = int_to_ptr.vmem [resolvable:$true] %s136
      %142 = dma.hbm_to_vmem [thread:$0]  %s135, 512, %s137, [#allocation13], 128, 128, 8
    $region61: #{hetero_cell_forward.1} parent=1 // pred_fallthru
      _
    // Predicated region
    $region62: #{hetero_cell_forward.1} parent=1 // pred_check
      _
    $region63: #{hetero_cell_forward.1} parent=1 // pred_check_branch
      %144 = sbr.rel (0) target = $region65
    $region64: #{hetero_cell_forward.1} parent=1 // pred_region
      %146 = vsyncadd [#allocation16], 0
      %s148 = sshll.u32 %s15, 4
      %s149 = int_to_ptr.hbm [resolvable:$true] %s148
      %s150 = sshll.u32 [#allocation15], 4
      %s151 = int_to_ptr.vmem [resolvable:$true] %s150
      %153 = dma.hbm_to_vmem [thread:$0]  %s149, 16, %s151, [#allocation16]
    $region65: #{hetero_cell_forward.1} parent=1 // pred_fallthru
      _
    // Predicated region
    $region66: #{hetero_cell_forward.1} parent=1 // pred_check
      _
    $region67: #{hetero_cell_forward.1} parent=1 // pred_check_branch
      %155 = sbr.rel (0) target = $region69
    $region68: #{hetero_cell_forward.1} parent=1 // pred_region
      _
    $region69: #{hetero_cell_forward.1} parent=1 // pred_fallthru
      _
    // Predicated region
    $region70: #{hetero_cell_forward.1} parent=1 // pred_check
      _
    $region71: #{hetero_cell_forward.1} parent=1 // pred_check_branch
      %157 = sbr.rel (0) target = $region73
    $region72: #{hetero_cell_forward.1} parent=1 // pred_region
      _
    $region73: #{hetero_cell_forward.1} parent=1 // pred_fallthru
      _
    // Predicated region
    $region74: #{hetero_cell_forward.1} parent=1 // pred_check
      _
    $region75: #{hetero_cell_forward.1} parent=1 // pred_check_branch
      %159 = sbr.rel (0) target = $region77
    $region76: #{hetero_cell_forward.1} parent=1 // pred_region
      _
    $region77: #{hetero_cell_forward.1} parent=1 // pred_fallthru
      _
    // Predicated region
    $region78: #{hetero_cell_forward.1} parent=1 // pred_check
      _
    $region79: #{hetero_cell_forward.1} parent=1 // pred_check_branch
      %161 = sbr.rel (0) target = $region81
    $region80: #{hetero_cell_forward.1} parent=1 // pred_region
      %163 = vsyncadd [#allocation16], 0
      %s165 = sshll.u32 %s19, 4
      %s166 = int_to_ptr.hbm [resolvable:$true] %s165
      %s167 = sshll.u32 [#allocation17], 4
      %s168 = int_to_ptr.vmem [resolvable:$true] %s167
      %170 = dma.hbm_to_vmem [thread:$0]  %s166, 16, %s168, [#allocation16]
    $region81: #{hetero_cell_forward.1} parent=1 // pred_fallthru
      _
    // Predicated region
    $region82: #{hetero_cell_forward.1} parent=1 // pred_check
      _
    $region83: #{hetero_cell_forward.1} parent=1 // pred_check_branch
      %172 = sbr.rel (0) target = $region85
    $region84: #{hetero_cell_forward.1} parent=1 // pred_region
      %174 = dma.done [#allocation4], 1024
    $region85: #{hetero_cell_forward.1} parent=1 // pred_fallthru
      _
    // Predicated region
    $region86: #{hetero_cell_forward.1} parent=1 // pred_check
      _
    $region87: #{hetero_cell_forward.1} parent=1 // pred_check_branch
      %176 = sbr.rel (0) target = $region89
    $region88: #{hetero_cell_forward.1} parent=1 // pred_region
      %178 = dma.done [#allocation7], 32
    $region89: #{hetero_cell_forward.1} parent=1 // pred_fallthru
      _
    // Predicated region
    $region90: #{hetero_cell_forward.1} parent=1 // pred_check
      _
    $region91: #{hetero_cell_forward.1} parent=1 // pred_check_branch
      %180 = sbr.rel (0) target = $region93
    $region92: #{hetero_cell_forward.1} parent=1 // pred_region
      %182 = dma.done [#allocation7], 128
    $region93: #{hetero_cell_forward.1} parent=1 // pred_fallthru
      _
    // Predicated region
    $region94: #{hetero_cell_forward.1} parent=1 // pred_check
      _
    $region95: #{hetero_cell_forward.1} parent=1 // pred_check_branch
      %184 = sbr.rel (0) target = $region97
    $region96: #{hetero_cell_forward.1} parent=1 // pred_region
      %186 = dma.done [#allocation10], 64
    $region97: #{hetero_cell_forward.1} parent=1 // pred_fallthru
      _
    // Predicated region
    $region98: #{hetero_cell_forward.1} parent=1 // pred_check
      _
    $region99: #{hetero_cell_forward.1} parent=1 // pred_check_branch
      %188 = sbr.rel (0) target = $region101
    $region100: #{hetero_cell_forward.1} parent=1 // pred_region
      %190 = dma.done [#allocation10], 64
    $region101: #{hetero_cell_forward.1} parent=1 // pred_fallthru
      _
    // Predicated region
    $region102: #{hetero_cell_forward.1} parent=1 // pred_check
      _
    $region103: #{hetero_cell_forward.1} parent=1 // pred_check_branch
      %192 = sbr.rel (0) target = $region105
    $region104: #{hetero_cell_forward.1} parent=1 // pred_region
      %194 = dma.done [#allocation13], 64
    $region105: #{hetero_cell_forward.1} parent=1 // pred_fallthru
      _
    // Predicated region
    $region106: #{hetero_cell_forward.1} parent=1 // pred_check
      _
    $region107: #{hetero_cell_forward.1} parent=1 // pred_check_branch
      %196 = sbr.rel (0) target = $region109
    $region108: #{hetero_cell_forward.1} parent=1 // pred_region
      %198 = dma.done [#allocation13], 512
    $region109: #{hetero_cell_forward.1} parent=1 // pred_fallthru
      _
    // Predicated region
    $region110: #{hetero_cell_forward.1} parent=1 // pred_check
      _
    $region111: #{hetero_cell_forward.1} parent=1 // pred_check_branch
      %200 = sbr.rel (0) target = $region113
    $region112: #{hetero_cell_forward.1} parent=1 // pred_region
      %202 = dma.done [#allocation16], 16
    $region113: #{hetero_cell_forward.1} parent=1 // pred_fallthru
      _
    // Predicated region
    $region114: #{hetero_cell_forward.1} parent=1 // pred_check
      _
    $region115: #{hetero_cell_forward.1} parent=1 // pred_check_branch
      %204 = sbr.rel (0) target = $region117
    $region116: #{hetero_cell_forward.1} parent=1 // pred_region
      %206 = dma.done [#allocation16], 16
    $region117: #{hetero_cell_forward.1} parent=1 // pred_fallthru
      _
    %v207 = vld [vmem:[%s0] sm:$0xff]
    %v208 = vld [vmem:[%s0 + $0x8] sm:$0xff]
    %v209 = vld [vmem:[%s0 + $0x10] sm:$0xff]
    %v210 = vld [vmem:[%s0 + $0x18] sm:$0xff]
    %v211 = vld [vmem:[%s0 + $0x20] sm:$0xff]
    %v212 = vld [vmem:[%s0 + $0x28] sm:$0xff]
    %v213 = vld [vmem:[%s0 + $0x30] sm:$0xff]
    %v214 = vld [vmem:[%s0 + $0x38] sm:$0xff]
    %v215 = vld [vmem:[%s2] sm:$0xff]
    %v216 = vld [vmem:[%s2 + $0x8] sm:$0xff]
    %v217 = vld [vmem:[%s2 + $0x10] sm:$0xff]
    %v218 = vld [vmem:[%s2 + $0x18] sm:$0xff]
    %v219 = vld [vmem:[%s3] sm:$0xff]
    %v220 = vld [vmem:[%s3 + $0x8] sm:$0xff]
    %v221 = vld [vmem:[%s3 + $0x10] sm:$0xff]
    %v222 = vld [vmem:[%s3 + $0x18] sm:$0xff]
    %v223 = vld [vmem:[%s3 + $0x20] sm:$0xff]
    %v224 = vld [vmem:[%s3 + $0x28] sm:$0xff]
    %v225 = vld [vmem:[%s3 + $0x30] sm:$0xff]
    %v226 = vld [vmem:[%s3 + $0x38] sm:$0xff]
    %vm227 = vcmask 7168
    %v228 = vsel %vm227, %v215, 0.0
    %v229 = vsel %vm227, %v216, 0.0
    %v230 = vadd.f32 %v228, %v229
    %v231 = vsel %vm227, %v217, 0.0
    %v232 = vadd.f32 %v230, %v231
    %v233 = vsel %vm227, %v218, 0.0
    %v234 = vadd.f32 %v232, %v233
    %235 = vadd.xlane.f32.xlu0 %v234
    %v236 = vpop.xlane.xlu0 %235
    %v237 = vrot.slane %v236, 4
    %v238 = vadd.f32 %v236, %v237
    %v239 = vrot.slane %v238, 2
    %v240 = vadd.f32 %v238, %v239
    %v241 = vrot.slane %v240, 1
    %v242 = vadd.f32 %v240, %v241
    %s243 = vtos %v242
    %248 = vrot.lane.b32.xlu0 %v215, 127
    %v249 = vpop.permute.xlu0 %248
    %250 = vrot.lane.b32.xlu0 %v216, 127
    %v251 = vpop.permute.xlu0 %250
    %252 = vrot.lane.b32.xlu0 %v217, 127
    %v253 = vpop.permute.xlu0 %252
    %254 = vrot.lane.b32.xlu0 %v218, 127
    %v255 = vpop.permute.xlu0 %254
    %v260 = vsel %vm227, %v249, 0.0
    %v261 = vsel %vm227, %v251, 0.0
    %v262 = vadd.f32 %v260, %v261
    %v263 = vsel %vm227, %v253, 0.0
    %v264 = vadd.f32 %v262, %v263
    %v265 = vsel %vm227, %v255, 0.0
    %v266 = vadd.f32 %v264, %v265
    %267 = vadd.xlane.f32.xlu0 %v266
    %v268 = vpop.xlane.xlu0 %267
    %v269 = vrot.slane %v268, 4
    %v270 = vadd.f32 %v268, %v269
    %v271 = vrot.slane %v270, 2
    %v272 = vadd.f32 %v270, %v271
    %v273 = vrot.slane %v272, 1
    %v274 = vadd.f32 %v272, %v273
    %s275 = vtos %v274
    %v276 = vld [vmem:[%s4] sm:$0xff]
    %v277 = vld [vmem:[%s4 + $0x8] sm:$0xff]
    %v278 = vld [vmem:[%s4 + $0x10] sm:$0xff]
    %v279 = vld [vmem:[%s4 + $0x18] sm:$0xff]
    %v280 = vld [vmem:[%s5] sm:$0x1]
    %v282 = vperm.slane %v280, 0
    %vm284 = vcmask 261120
    %v286 = vsel %vm284, %v207, 0
    %v289 = vsel %vm284, %v208, 0
    %v292 = vsel %vm284, %v209, 0
    %v295 = vsel %vm284, %v210, 0
    %v298 = vsel %vm284, %v211, 0
    %v301 = vsel %vm284, %v212, 0
    %v304 = vsel %vm284, %v213, 0
    %v307 = vsel %vm284, %v214, 0
    %309 = vmatpush.msra.mxu0 0.0
    %310 = vmatpush.msra.mxu0 0.0
    %311 = vmatpush.msra.mxu0 0.0
    %312 = vmatpush.msra.mxu0 0.0
    %313 = vmatpush.msra.mxu0 0.0
    %314 = vmatpush.msra.mxu0 0.0
    %315 = vmatpush.msra.mxu0 0.0
    %316 = vmatpush.msra.mxu0 0.0
    %317 = vmatpush.msra.mxu0 0.0
    %318 = vmatpush.msra.mxu0 0.0
    %319 = vmatpush.msra.mxu0 0.0
    %320 = vmatpush.msra.mxu0 0.0
    %321 = vmatpush.msra.mxu0 %v279
    %322 = vmatpush.msra.mxu0 %v278
    %323 = vmatpush.msra.mxu0 %v277
    %324 = vmatpush.msra.mxu0 %v276
    %325 = vmatmul.f32.gmra.mxu0 %v286
    %v326 = vpop.f32.mrf.mxu0
    %v327 = vadd.f32 %v282, %v326
    %328 = vmatmul.f32.gmra.mxu0 %v289
    %v329 = vpop.f32.mrf.mxu0
    %v330 = vadd.f32 %v282, %v329
    %331 = vmatmul.f32.gmra.mxu0 %v292
    %v332 = vpop.f32.mrf.mxu0
    %v333 = vadd.f32 %v282, %v332
    %334 = vmatmul.f32.gmra.mxu0 %v295
    %v335 = vpop.f32.mrf.mxu0
    %v336 = vadd.f32 %v282, %v335
    %337 = vmatmul.f32.gmra.mxu0 %v298
    %v338 = vpop.f32.mrf.mxu0
    %v339 = vadd.f32 %v282, %v338
    %340 = vmatmul.f32.gmra.mxu0 %v301
    %v341 = vpop.f32.mrf.mxu0
    %v342 = vadd.f32 %v282, %v341
    %343 = vmatmul.f32.gmra.mxu0 %v304
    %v344 = vpop.f32.mrf.mxu0
    %v345 = vadd.f32 %v282, %v344
    %346 = vmatmul.f32.gmra.mxu0 %v307
    %v347 = vpop.f32.mrf.mxu0
    %v348 = vadd.f32 %v282, %v347
    %349 = vdwg.mxu0
    %v350 = vsel %vm284, %v327, 0.0
    %351 = vadd.xlane.f32.xlu0 %v350
    %v352 = vpop.xlane.xlu0 %351
    %v353 = vsel %vm284, %v330, 0.0
    %354 = vadd.xlane.f32.xlu0 %v353
    %v355 = vpop.xlane.xlu0 %354
    %v356 = vsel %vm284, %v333, 0.0
    %357 = vadd.xlane.f32.xlu0 %v356
    %v358 = vpop.xlane.xlu0 %357
    %v359 = vsel %vm284, %v336, 0.0
    %360 = vadd.xlane.f32.xlu0 %v359
    %v361 = vpop.xlane.xlu0 %360
    %v362 = vsel %vm284, %v339, 0.0
    %363 = vadd.xlane.f32.xlu0 %v362
    %v364 = vpop.xlane.xlu0 %363
    %v365 = vsel %vm284, %v342, 0.0
    %366 = vadd.xlane.f32.xlu0 %v365
    %v367 = vpop.xlane.xlu0 %366
    %v368 = vsel %vm284, %v345, 0.0
    %369 = vadd.xlane.f32.xlu0 %v368
    %v370 = vpop.xlane.xlu0 %369
    %v371 = vsel %vm284, %v348, 0.0
    %372 = vadd.xlane.f32.xlu0 %v371
    %v373 = vpop.xlane.xlu0 %372
    %v374 = vrcp.pop 32.0
    %v375 = vmul.f32 32.0, %v374
    %v376 = vsub.f32 1.0, %v375
    %v377 = vmul.f32 %v374, %v376
    %v378 = vadd.f32 %v374, %v377
    %vm379 = vweird.f32 %v374
    %v380 = vsel %vm379, %v374, %v378
    %v381 = vmul.f32 %v352, %v380
    %v382 = vmul.f32 %v355, %v380
    %v383 = vmul.f32 %v358, %v380
    %v384 = vmul.f32 %v361, %v380
    %v385 = vmul.f32 %v364, %v380
    %v386 = vmul.f32 %v367, %v380
    %v387 = vmul.f32 %v370, %v380
    %v388 = vmul.f32 %v373, %v380
    %v389 = vsub.f32 %v327, %v381
    %v390 = vsub.f32 %v330, %v382
    %v391 = vsub.f32 %v333, %v383
    %v392 = vsub.f32 %v336, %v384
    %v393 = vsub.f32 %v339, %v385
    %v394 = vsub.f32 %v342, %v386
    %v395 = vsub.f32 %v345, %v387
    %v396 = vsub.f32 %v348, %v388
    %v397 = vmul.f32 %v389, %v389
    %v398 = vmul.f32 %v390, %v390
    %v399 = vmul.f32 %v391, %v391
    %v400 = vmul.f32 %v392, %v392
    %v401 = vmul.f32 %v393, %v393
    %v402 = vmul.f32 %v394, %v394
    %v403 = vmul.f32 %v395, %v395
    %v404 = vmul.f32 %v396, %v396
    %v405 = vsel %vm284, %v397, 0.0
    %406 = vadd.xlane.f32.xlu0 %v405
    %v407 = vpop.xlane.xlu0 %406
    %v408 = vsel %vm284, %v398, 0.0
    %409 = vadd.xlane.f32.xlu0 %v408
    %v410 = vpop.xlane.xlu0 %409
    %v411 = vsel %vm284, %v399, 0.0
    %412 = vadd.xlane.f32.xlu0 %v411
    %v413 = vpop.xlane.xlu0 %412
    %v414 = vsel %vm284, %v400, 0.0
    %415 = vadd.xlane.f32.xlu0 %v414
    %v416 = vpop.xlane.xlu0 %415
    %v417 = vsel %vm284, %v401, 0.0
    %418 = vadd.xlane.f32.xlu0 %v417
    %v419 = vpop.xlane.xlu0 %418
    %v420 = vsel %vm284, %v402, 0.0
    %421 = vadd.xlane.f32.xlu0 %v420
    %v422 = vpop.xlane.xlu0 %421
    %v423 = vsel %vm284, %v403, 0.0
    %424 = vadd.xlane.f32.xlu0 %v423
    %v425 = vpop.xlane.xlu0 %424
    %v426 = vsel %vm284, %v404, 0.0
    %427 = vadd.xlane.f32.xlu0 %v426
    %v428 = vpop.xlane.xlu0 %427
    %v429 = vmul.f32 %v407, %v380
    %v430 = vmul.f32 %v410, %v380
    %v431 = vmul.f32 %v413, %v380
    %v432 = vmul.f32 %v416, %v380
    %v433 = vmul.f32 %v419, %v380
    %v434 = vmul.f32 %v422, %v380
    %v435 = vmul.f32 %v425, %v380
    %v436 = vmul.f32 %v428, %v380
    %v437 = vadd.f32 %v429, 1e-05
    %v438 = vadd.f32 %v430, 1e-05
    %v439 = vadd.f32 %v431, 1e-05
    %v440 = vadd.f32 %v432, 1e-05
    %v441 = vadd.f32 %v433, 1e-05
    %v442 = vadd.f32 %v434, 1e-05
    %v443 = vadd.f32 %v435, 1e-05
    %v444 = vadd.f32 %v436, 1e-05
    %v445 = vrsqrt.pop %v437
    %v446 = vmul.f32 %v445, %v437
    %v447 = vmul.f32 %v446, %v445
    %v448 = vmul.f32 0.5, %v447
    %v449 = vsub.f32 1.5, %v448
    %v450 = vmul.f32 %v445, %v449
    %vm451 = vweird.f32 %v437
    %vm452 = vweird.f32 %v445
    %vm453 = vmor %vm451, %vm452
    %v454 = vsel %vm453, %v445, %v450
    %v455 = vrsqrt.pop %v438
    %v456 = vmul.f32 %v455, %v438
    %v457 = vmul.f32 %v456, %v455
    %v458 = vmul.f32 0.5, %v457
    %v459 = vsub.f32 1.5, %v458
    %v460 = vmul.f32 %v455, %v459
    %vm461 = vweird.f32 %v438
    %vm462 = vweird.f32 %v455
    %vm463 = vmor %vm461, %vm462
    %v464 = vsel %vm463, %v455, %v460
    %v465 = vrsqrt.pop %v439
    %v466 = vmul.f32 %v465, %v439
    %v467 = vmul.f32 %v466, %v465
    %v468 = vmul.f32 0.5, %v467
    %v469 = vsub.f32 1.5, %v468
    %v470 = vmul.f32 %v465, %v469
    %vm471 = vweird.f32 %v439
    %vm472 = vweird.f32 %v465
    %vm473 = vmor %vm471, %vm472
    %v474 = vsel %vm473, %v465, %v470
    %v475 = vrsqrt.pop %v440
    %v476 = vmul.f32 %v475, %v440
    %v477 = vmul.f32 %v476, %v475
    %v478 = vmul.f32 0.5, %v477
    %v479 = vsub.f32 1.5, %v478
    %v480 = vmul.f32 %v475, %v479
    %vm481 = vweird.f32 %v440
    %vm482 = vweird.f32 %v475
    %vm483 = vmor %vm481, %vm482
    %v484 = vsel %vm483, %v475, %v480
    %v485 = vrsqrt.pop %v441
    %v486 = vmul.f32 %v485, %v441
    %v487 = vmul.f32 %v486, %v485
    %v488 = vmul.f32 0.5, %v487
    %v489 = vsub.f32 1.5, %v488
    %v490 = vmul.f32 %v485, %v489
    %vm491 = vweird.f32 %v441
    %vm492 = vweird.f32 %v485
    %vm493 = vmor %vm491, %vm492
    %v494 = vsel %vm493, %v485, %v490
    %v495 = vrsqrt.pop %v442
    %v496 = vmul.f32 %v495, %v442
    %v497 = vmul.f32 %v496, %v495
    %v498 = vmul.f32 0.5, %v497
    %v499 = vsub.f32 1.5, %v498
    %v500 = vmul.f32 %v495, %v499
    %vm501 = vweird.f32 %v442
    %vm502 = vweird.f32 %v495
    %vm503 = vmor %vm501, %vm502
    %v504 = vsel %vm503, %v495, %v500
    %v505 = vrsqrt.pop %v443
    %v506 = vmul.f32 %v505, %v443
    %v507 = vmul.f32 %v506, %v505
    %v508 = vmul.f32 0.5, %v507
    %v509 = vsub.f32 1.5, %v508
    %v510 = vmul.f32 %v505, %v509
    %vm511 = vweird.f32 %v443
    %vm512 = vweird.f32 %v505
    %vm513 = vmor %vm511, %vm512
    %v514 = vsel %vm513, %v505, %v510
    %v515 = vrsqrt.pop %v444
    %v516 = vmul.f32 %v515, %v444
    %v517 = vmul.f32 %v516, %v515
    %v518 = vmul.f32 0.5, %v517
    %v519 = vsub.f32 1.5, %v518
    %v520 = vmul.f32 %v515, %v519
    %vm521 = vweird.f32 %v444
    %vm522 = vweird.f32 %v515
    %vm523 = vmor %vm521, %vm522
    %v524 = vsel %vm523, %v515, %v520
    %v525 = vmul.f32 %v389, %v454
    %v526 = vmul.f32 %v390, %v464
    %v527 = vmul.f32 %v391, %v474
    %v528 = vmul.f32 %v392, %v484
    %v529 = vmul.f32 %v393, %v494
    %v530 = vmul.f32 %v394, %v504
    %v531 = vmul.f32 %v395, %v514
    %v532 = vmul.f32 %v396, %v524
    %v533 = vld [vmem:[%s6] sm:$0x1]
    %v535 = vperm.slane %v533, 0
    %v537 = vmul.f32 %v525, %v535
    %v538 = vmul.f32 %v526, %v535
    %v539 = vmul.f32 %v527, %v535
    %v540 = vmul.f32 %v528, %v535
    %v541 = vmul.f32 %v529, %v535
    %v542 = vmul.f32 %v530, %v535
    %v543 = vmul.f32 %v531, %v535
    %v544 = vmul.f32 %v532, %v535
    %v545 = vld [vmem:[%s7] sm:$0x1]
    %v547 = vperm.slane %v545, 0
    %v549 = vadd.f32 %v537, %v547
    %v550 = vadd.f32 %v538, %v547
    %v551 = vadd.f32 %v539, %v547
    %v552 = vadd.f32 %v540, %v547
    %v553 = vadd.f32 %v541, %v547
    %v554 = vadd.f32 %v542, %v547
    %v555 = vadd.f32 %v543, %v547
    %v556 = vadd.f32 %v544, %v547
    %v557 = vmax.f32 %v549, 0.0
    %v558 = vmax.f32 %v550, 0.0
    %v559 = vmax.f32 %v551, 0.0
    %v560 = vmax.f32 %v552, 0.0
    %v561 = vmax.f32 %v553, 0.0
    %v562 = vmax.f32 %v554, 0.0
    %v563 = vmax.f32 %v555, 0.0
    %v564 = vmax.f32 %v556, 0.0
    %s565 = scalar_lea.vmem %s4, 32
    %v566 = vld [vmem:[%s565] sm:$0xff]
    %v567 = vld [vmem:[%s565 + $0x8] sm:$0xff]
    %v568 = vld [vmem:[%s565 + $0x10] sm:$0xff]
    %v569 = vld [vmem:[%s565 + $0x18] sm:$0xff]
    %s570 = scalar_lea.vmem %s5, 1
    %v571 = vld [vmem:[%s570] sm:$0x1]
    %v573 = vperm.slane %v571, 0
    %v576 = vsel %vm284, %v557, 0
    %v579 = vsel %vm284, %v558, 0
    %v582 = vsel %vm284, %v559, 0
    %v585 = vsel %vm284, %v560, 0
    %v588 = vsel %vm284, %v561, 0
    %v591 = vsel %vm284, %v562, 0
    %v594 = vsel %vm284, %v563, 0
    %v597 = vsel %vm284, %v564, 0
    %599 = vmatpush.msra.mxu0 0.0
    %600 = vmatpush.msra.mxu0 0.0
    %601 = vmatpush.msra.mxu0 0.0
    %602 = vmatpush.msra.mxu0 0.0
    %603 = vmatpush.msra.mxu0 0.0
    %604 = vmatpush.msra.mxu0 0.0
    %605 = vmatpush.msra.mxu0 0.0
    %606 = vmatpush.msra.mxu0 0.0
    %607 = vmatpush.msra.mxu0 0.0
    %608 = vmatpush.msra.mxu0 0.0
    %609 = vmatpush.msra.mxu0 0.0
    %610 = vmatpush.msra.mxu0 0.0
    %611 = vmatpush.msra.mxu0 %v569
    %612 = vmatpush.msra.mxu0 %v568
    %613 = vmatpush.msra.mxu0 %v567
    %614 = vmatpush.msra.mxu0 %v566
    %615 = vmatmul.f32.gmra.mxu0 %v576
    %v616 = vpop.f32.mrf.mxu0
    %v617 = vadd.f32 %v573, %v616
    %618 = vmatmul.f32.gmra.mxu0 %v579
    %v619 = vpop.f32.mrf.mxu0
    %v620 = vadd.f32 %v573, %v619
    %621 = vmatmul.f32.gmra.mxu0 %v582
    %v622 = vpop.f32.mrf.mxu0
    %v623 = vadd.f32 %v573, %v622
    %624 = vmatmul.f32.gmra.mxu0 %v585
    %v625 = vpop.f32.mrf.mxu0
    %v626 = vadd.f32 %v573, %v625
    %627 = vmatmul.f32.gmra.mxu0 %v588
    %v628 = vpop.f32.mrf.mxu0
    %v629 = vadd.f32 %v573, %v628
    %630 = vmatmul.f32.gmra.mxu0 %v591
    %v631 = vpop.f32.mrf.mxu0
    %v632 = vadd.f32 %v573, %v631
    %633 = vmatmul.f32.gmra.mxu0 %v594
    %v634 = vpop.f32.mrf.mxu0
    %v635 = vadd.f32 %v573, %v634
    %636 = vmatmul.f32.gmra.mxu0 %v597
    %v637 = vpop.f32.mrf.mxu0
    %v638 = vadd.f32 %v573, %v637
    %639 = vdwg.mxu0
    %v640 = vsel %vm284, %v617, 0.0
    %641 = vadd.xlane.f32.xlu0 %v640
    %v642 = vpop.xlane.xlu0 %641
    %v643 = vsel %vm284, %v620, 0.0
    %644 = vadd.xlane.f32.xlu0 %v643
    %v645 = vpop.xlane.xlu0 %644
    %v646 = vsel %vm284, %v623, 0.0
    %647 = vadd.xlane.f32.xlu0 %v646
    %v648 = vpop.xlane.xlu0 %647
    %v649 = vsel %vm284, %v626, 0.0
    %650 = vadd.xlane.f32.xlu0 %v649
    %v651 = vpop.xlane.xlu0 %650
    %v652 = vsel %vm284, %v629, 0.0
    %653 = vadd.xlane.f32.xlu0 %v652
    %v654 = vpop.xlane.xlu0 %653
    %v655 = vsel %vm284, %v632, 0.0
    %656 = vadd.xlane.f32.xlu0 %v655
    %v657 = vpop.xlane.xlu0 %656
    %v658 = vsel %vm284, %v635, 0.0
    %659 = vadd.xlane.f32.xlu0 %v658
    %v660 = vpop.xlane.xlu0 %659
    %v661 = vsel %vm284, %v638, 0.0
    %662 = vadd.xlane.f32.xlu0 %v661
    %v663 = vpop.xlane.xlu0 %662
    %v664 = vmul.f32 %v642, %v380
    %v665 = vmul.f32 %v645, %v380
    %v666 = vmul.f32 %v648, %v380
    %v667 = vmul.f32 %v651, %v380
    %v668 = vmul.f32 %v654, %v380
    %v669 = vmul.f32 %v657, %v380
    %v670 = vmul.f32 %v660, %v380
    %v671 = vmul.f32 %v663, %v380
    %v672 = vsub.f32 %v617, %v664
    %v673 = vsub.f32 %v620, %v665
    %v674 = vsub.f32 %v623, %v666
    %v675 = vsub.f32 %v626, %v667
    %v676 = vsub.f32 %v629, %v668
    %v677 = vsub.f32 %v632, %v669
    %v678 = vsub.f32 %v635, %v670
    %v679 = vsub.f32 %v638, %v671
    %v680 = vmul.f32 %v672, %v672
    %v681 = vmul.f32 %v673, %v673
    %v682 = vmul.f32 %v674, %v674
    %v683 = vmul.f32 %v675, %v675
    %v684 = vmul.f32 %v676, %v676
    %v685 = vmul.f32 %v677, %v677
    %v686 = vmul.f32 %v678, %v678
    %v687 = vmul.f32 %v679, %v679
    %v688 = vsel %vm284, %v680, 0.0
    %689 = vadd.xlane.f32.xlu0 %v688
    %v690 = vpop.xlane.xlu0 %689
    %v691 = vsel %vm284, %v681, 0.0
    %692 = vadd.xlane.f32.xlu0 %v691
    %v693 = vpop.xlane.xlu0 %692
    %v694 = vsel %vm284, %v682, 0.0
    %695 = vadd.xlane.f32.xlu0 %v694
    %v696 = vpop.xlane.xlu0 %695
    %v697 = vsel %vm284, %v683, 0.0
    %698 = vadd.xlane.f32.xlu0 %v697
    %v699 = vpop.xlane.xlu0 %698
    %v700 = vsel %vm284, %v684, 0.0
    %701 = vadd.xlane.f32.xlu0 %v700
    %v702 = vpop.xlane.xlu0 %701
    %v703 = vsel %vm284, %v685, 0.0
    %704 = vadd.xlane.f32.xlu0 %v703
    %v705 = vpop.xlane.xlu0 %704
    %v706 = vsel %vm284, %v686, 0.0
    %707 = vadd.xlane.f32.xlu0 %v706
    %v708 = vpop.xlane.xlu0 %707
    %v709 = vsel %vm284, %v687, 0.0
    %710 = vadd.xlane.f32.xlu0 %v709
    %v711 = vpop.xlane.xlu0 %710
    %v712 = vmul.f32 %v690, %v380
    %v713 = vmul.f32 %v693, %v380
    %v714 = vmul.f32 %v696, %v380
    %v715 = vmul.f32 %v699, %v380
    %v716 = vmul.f32 %v702, %v380
    %v717 = vmul.f32 %v705, %v380
    %v718 = vmul.f32 %v708, %v380
    %v719 = vmul.f32 %v711, %v380
    %v720 = vadd.f32 %v712, 1e-05
    %v721 = vadd.f32 %v713, 1e-05
    %v722 = vadd.f32 %v714, 1e-05
    %v723 = vadd.f32 %v715, 1e-05
    %v724 = vadd.f32 %v716, 1e-05
    %v725 = vadd.f32 %v717, 1e-05
    %v726 = vadd.f32 %v718, 1e-05
    %v727 = vadd.f32 %v719, 1e-05
    %v728 = vrsqrt.pop %v720
    %v729 = vmul.f32 %v728, %v720
    %v730 = vmul.f32 %v729, %v728
    %v731 = vmul.f32 0.5, %v730
    %v732 = vsub.f32 1.5, %v731
    %v733 = vmul.f32 %v728, %v732
    %vm734 = vweird.f32 %v720
    %vm735 = vweird.f32 %v728
    %vm736 = vmor %vm734, %vm735
    %v737 = vsel %vm736, %v728, %v733
    %v738 = vrsqrt.pop %v721
    %v739 = vmul.f32 %v738, %v721
    %v740 = vmul.f32 %v739, %v738
    %v741 = vmul.f32 0.5, %v740
    %v742 = vsub.f32 1.5, %v741
    %v743 = vmul.f32 %v738, %v742
    %vm744 = vweird.f32 %v721
    %vm745 = vweird.f32 %v738
    %vm746 = vmor %vm744, %vm745
    %v747 = vsel %vm746, %v738, %v743
    %v748 = vrsqrt.pop %v722
    %v749 = vmul.f32 %v748, %v722
    %v750 = vmul.f32 %v749, %v748
    %v751 = vmul.f32 0.5, %v750
    %v752 = vsub.f32 1.5, %v751
    %v753 = vmul.f32 %v748, %v752
    %vm754 = vweird.f32 %v722
    %vm755 = vweird.f32 %v748
    %vm756 = vmor %vm754, %vm755
    %v757 = vsel %vm756, %v748, %v753
    %v758 = vrsqrt.pop %v723
    %v759 = vmul.f32 %v758, %v723
    %v760 = vmul.f32 %v759, %v758
    %v761 = vmul.f32 0.5, %v760
    %v762 = vsub.f32 1.5, %v761
    %v763 = vmul.f32 %v758, %v762
    %vm764 = vweird.f32 %v723
    %vm765 = vweird.f32 %v758
    %vm766 = vmor %vm764, %vm765
    %v767 = vsel %vm766, %v758, %v763
    %v768 = vrsqrt.pop %v724
    %v769 = vmul.f32 %v768, %v724
    %v770 = vmul.f32 %v769, %v768
    %v771 = vmul.f32 0.5, %v770
    %v772 = vsub.f32 1.5, %v771
    %v773 = vmul.f32 %v768, %v772
    %vm774 = vweird.f32 %v724
    %vm775 = vweird.f32 %v768
    %vm776 = vmor %vm774, %vm775
    %v777 = vsel %vm776, %v768, %v773
    %v778 = vrsqrt.pop %v725
    %v779 = vmul.f32 %v778, %v725
    %v780 = vmul.f32 %v779, %v778
    %v781 = vmul.f32 0.5, %v780
    %v782 = vsub.f32 1.5, %v781
    %v783 = vmul.f32 %v778, %v782
    %vm784 = vweird.f32 %v725
    %vm785 = vweird.f32 %v778
    %vm786 = vmor %vm784, %vm785
    %v787 = vsel %vm786, %v778, %v783
    %v788 = vrsqrt.pop %v726
    %v789 = vmul.f32 %v788, %v726
    %v790 = vmul.f32 %v789, %v788
    %v791 = vmul.f32 0.5, %v790
    %v792 = vsub.f32 1.5, %v791
    %v793 = vmul.f32 %v788, %v792
    %vm794 = vweird.f32 %v726
    %vm795 = vweird.f32 %v788
    %vm796 = vmor %vm794, %vm795
    %v797 = vsel %vm796, %v788, %v793
    %v798 = vrsqrt.pop %v727
    %v799 = vmul.f32 %v798, %v727
    %v800 = vmul.f32 %v799, %v798
    %v801 = vmul.f32 0.5, %v800
    %v802 = vsub.f32 1.5, %v801
    %v803 = vmul.f32 %v798, %v802
    %vm804 = vweird.f32 %v727
    %vm805 = vweird.f32 %v798
    %vm806 = vmor %vm804, %vm805
    %v807 = vsel %vm806, %v798, %v803
    %v808 = vmul.f32 %v672, %v737
    %v809 = vmul.f32 %v673, %v747
    %v810 = vmul.f32 %v674, %v757
    %v811 = vmul.f32 %v675, %v767
    %v812 = vmul.f32 %v676, %v777
    %v813 = vmul.f32 %v677, %v787
    %v814 = vmul.f32 %v678, %v797
    %v815 = vmul.f32 %v679, %v807
    %s816 = scalar_lea.vmem %s6, 1
    %v817 = vld [vmem:[%s816] sm:$0x1]
    %v819 = vperm.slane %v817, 0
    %v821 = vmul.f32 %v808, %v819
    %v822 = vmul.f32 %v809, %v819
    %v823 = vmul.f32 %v810, %v819
    %v824 = vmul.f32 %v811, %v819
    %v825 = vmul.f32 %v812, %v819
    %v826 = vmul.f32 %v813, %v819
    %v827 = vmul.f32 %v814, %v819
    %v828 = vmul.f32 %v815, %v819
    %s829 = scalar_lea.vmem %s7, 1
    %v830 = vld [vmem:[%s829] sm:$0x1]
    %v832 = vperm.slane %v830, 0
    %v834 = vadd.f32 %v821, %v832
    %v835 = vadd.f32 %v822, %v832
    %v836 = vadd.f32 %v823, %v832
    %v837 = vadd.f32 %v824, %v832
    %v838 = vadd.f32 %v825, %v832
    %v839 = vadd.f32 %v826, %v832
    %v840 = vadd.f32 %v827, %v832
    %v841 = vadd.f32 %v828, %v832
    %v842 = vmax.f32 %v834, 0.0
    %v843 = vmax.f32 %v835, 0.0
    %v844 = vmax.f32 %v836, 0.0
    %v845 = vmax.f32 %v837, 0.0
    %v846 = vmax.f32 %v838, 0.0
    %v847 = vmax.f32 %v839, 0.0
    %v848 = vmax.f32 %v840, 0.0
    %v849 = vmax.f32 %v841, 0.0
    %v850 = vld [vmem:[#allocation3] sm:$0xff]
    %v851 = vld [vmem:[#allocation3 + $0x8] sm:$0xff]
    %v852 = vld [vmem:[#allocation3 + $0x10] sm:$0xff]
    %v853 = vld [vmem:[#allocation3 + $0x18] sm:$0xff]
    %v854 = vld [vmem:[#allocation6] sm:$0x1]
    %v856 = vperm.slane %v854, 0
    %v859 = vsel %vm284, %v842, 0
    %v862 = vsel %vm284, %v843, 0
    %v865 = vsel %vm284, %v844, 0
    %v868 = vsel %vm284, %v845, 0
    %v871 = vsel %vm284, %v846, 0
    %v874 = vsel %vm284, %v847, 0
    %v877 = vsel %vm284, %v848, 0
    %v880 = vsel %vm284, %v849, 0
    %882 = vmatpush.msra.mxu0 0.0
    %883 = vmatpush.msra.mxu0 0.0
    %884 = vmatpush.msra.mxu0 0.0
    %885 = vmatpush.msra.mxu0 0.0
    %886 = vmatpush.msra.mxu0 0.0
    %887 = vmatpush.msra.mxu0 0.0
    %888 = vmatpush.msra.mxu0 0.0
    %889 = vmatpush.msra.mxu0 0.0
    %890 = vmatpush.msra.mxu0 0.0
    %891 = vmatpush.msra.mxu0 0.0
    %892 = vmatpush.msra.mxu0 0.0
    %893 = vmatpush.msra.mxu0 0.0
    %894 = vmatpush.msra.mxu0 %v853
    %895 = vmatpush.msra.mxu0 %v852
    %896 = vmatpush.msra.mxu0 %v851
    %897 = vmatpush.msra.mxu0 %v850
    %898 = vmatmul.f32.gmra.mxu0 %v859
    %v899 = vpop.f32.mrf.mxu0
    %v900 = vadd.f32 %v856, %v899
    %901 = vmatmul.f32.gmra.mxu0 %v862
    %v902 = vpop.f32.mrf.mxu0
    %v903 = vadd.f32 %v856, %v902
    %904 = vmatmul.f32.gmra.mxu0 %v865
    %v905 = vpop.f32.mrf.mxu0
    %v906 = vadd.f32 %v856, %v905
    %907 = vmatmul.f32.gmra.mxu0 %v868
    %v908 = vpop.f32.mrf.mxu0
    %v909 = vadd.f32 %v856, %v908
    %910 = vmatmul.f32.gmra.mxu0 %v871
    %v911 = vpop.f32.mrf.mxu0
    %v912 = vadd.f32 %v856, %v911
    %913 = vmatmul.f32.gmra.mxu0 %v874
    %v914 = vpop.f32.mrf.mxu0
    %v915 = vadd.f32 %v856, %v914
    %916 = vmatmul.f32.gmra.mxu0 %v877
    %v917 = vpop.f32.mrf.mxu0
    %v918 = vadd.f32 %v856, %v917
    %919 = vmatmul.f32.gmra.mxu0 %v880
    %v920 = vpop.f32.mrf.mxu0
    %v921 = vadd.f32 %v856, %v920
    %922 = vdwg.mxu0
    %927 = vrot.lane.b32.xlu0 %v912, 64
    %v928 = vpop.permute.xlu0 %927
    %929 = vrot.lane.b32.xlu0 %v915, 64
    %v930 = vpop.permute.xlu0 %929
    %931 = vrot.lane.b32.xlu0 %v918, 64
    %v932 = vpop.permute.xlu0 %931
    %933 = vrot.lane.b32.xlu0 %v921, 64
    %v934 = vpop.permute.xlu0 %933
    %vm939 = vcmask 523264
    %v940 = vsel %vm939, %v900, %v928
    %v941 = vsel %vm939, %v903, %v930
    %v942 = vsel %vm939, %v906, %v932
    %v943 = vsel %vm939, %v909, %v934
    %948 = vrot.lane.b32.xlu0 %v900, 64
    %v949 = vpop.permute.xlu0 %948
    %950 = vrot.lane.b32.xlu0 %v903, 64
    %v951 = vpop.permute.xlu0 %950
    %952 = vrot.lane.b32.xlu0 %v906, 64
    %v953 = vpop.permute.xlu0 %952
    %954 = vrot.lane.b32.xlu0 %v909, 64
    %v955 = vpop.permute.xlu0 %954
    %v960 = vsel %vm939, %v949, %v912
    %v961 = vsel %vm939, %v951, %v915
    %v962 = vsel %vm939, %v953, %v918
    %v963 = vsel %vm939, %v955, %v921
    %v964 = vld [vmem:[#allocation8] sm:$0xf]
    %v966 = vrot.slane %v940, 1
    %v967 = vrot.slane %v940, 2
    %v968 = vrot.slane %v940, 3
    %v969 = vrot.slane %v940, 4
    %v970 = vrot.slane %v940, 5
    %v971 = vrot.slane %v940, 6
    %v972 = vrot.slane %v940, 7
    %v973 = vperm.slane %v940, 0
    %v974 = vperm.slane %v966, 0
    %v975 = vperm.slane %v967, 0
    %v976 = vperm.slane %v968, 0
    %v977 = vperm.slane %v969, 0
    %v978 = vperm.slane %v970, 0
    %v979 = vperm.slane %v971, 0
    %v980 = vperm.slane %v972, 0
    %v989 = vadd.f32 %v973, %v960
    %v990 = vadd.f32 %v973, %v961
    %v991 = vadd.f32 %v973, %v962
    %v992 = vadd.f32 %v973, %v963
    %v993 = vadd.f32 %v974, %v960
    %v994 = vadd.f32 %v974, %v961
    %v995 = vadd.f32 %v974, %v962
    %v996 = vadd.f32 %v974, %v963
    %v997 = vadd.f32 %v975, %v960
    %v998 = vadd.f32 %v975, %v961
    %v999 = vadd.f32 %v975, %v962
    %v1000 = vadd.f32 %v975, %v963
    %v1001 = vadd.f32 %v976, %v960
    %v1002 = vadd.f32 %v976, %v961
    %v1003 = vadd.f32 %v976, %v962
    %v1004 = vadd.f32 %v976, %v963
    %v1005 = vadd.f32 %v977, %v960
    %v1006 = vadd.f32 %v977, %v961
    %v1007 = vadd.f32 %v977, %v962
    %v1008 = vadd.f32 %v977, %v963
    %v1009 = vadd.f32 %v978, %v960
    %v1010 = vadd.f32 %v978, %v961
    %v1011 = vadd.f32 %v978, %v962
    %v1012 = vadd.f32 %v978, %v963
    %v1013 = vadd.f32 %v979, %v960
    %v1014 = vadd.f32 %v979, %v961
    %v1015 = vadd.f32 %v979, %v962
    %v1016 = vadd.f32 %v979, %v963
    %v1017 = vadd.f32 %v980, %v960
    %v1018 = vadd.f32 %v980, %v961
    %v1019 = vadd.f32 %v980, %v962
    %v1020 = vadd.f32 %v980, %v963
    %v1021 = vmul.f32 %v989, 0.2
    %v1022 = vmul.f32 %v990, 0.2
    %v1023 = vmul.f32 %v991, 0.2
    %v1024 = vmul.f32 %v992, 0.2
    %v1025 = vmul.f32 %v993, 0.2
    %v1026 = vmul.f32 %v994, 0.2
    %v1027 = vmul.f32 %v995, 0.2
    %v1028 = vmul.f32 %v996, 0.2
    %v1029 = vmul.f32 %v997, 0.2
    %v1030 = vmul.f32 %v998, 0.2
    %v1031 = vmul.f32 %v999, 0.2
    %v1032 = vmul.f32 %v1000, 0.2
    %v1033 = vmul.f32 %v1001, 0.2
    %v1034 = vmul.f32 %v1002, 0.2
    %v1035 = vmul.f32 %v1003, 0.2
    %v1036 = vmul.f32 %v1004, 0.2
    %v1037 = vmul.f32 %v1005, 0.2
    %v1038 = vmul.f32 %v1006, 0.2
    %v1039 = vmul.f32 %v1007, 0.2
    %v1040 = vmul.f32 %v1008, 0.2
    %v1041 = vmul.f32 %v1009, 0.2
    %v1042 = vmul.f32 %v1010, 0.2
    %v1043 = vmul.f32 %v1011, 0.2
    %v1044 = vmul.f32 %v1012, 0.2
    %v1045 = vmul.f32 %v1013, 0.2
    %v1046 = vmul.f32 %v1014, 0.2
    %v1047 = vmul.f32 %v1015, 0.2
    %v1048 = vmul.f32 %v1016, 0.2
    %v1049 = vmul.f32 %v1017, 0.2
    %v1050 = vmul.f32 %v1018, 0.2
    %v1051 = vmul.f32 %v1019, 0.2
    %v1052 = vmul.f32 %v1020, 0.2
    %v1053 = vmax.f32 %v989, %v1021
    %v1054 = vmax.f32 %v990, %v1022
    %v1055 = vmax.f32 %v991, %v1023
    %v1056 = vmax.f32 %v992, %v1024
    %v1057 = vmax.f32 %v993, %v1025
    %v1058 = vmax.f32 %v994, %v1026
    %v1059 = vmax.f32 %v995, %v1027
    %v1060 = vmax.f32 %v996, %v1028
    %v1061 = vmax.f32 %v997, %v1029
    %v1062 = vmax.f32 %v998, %v1030
    %v1063 = vmax.f32 %v999, %v1031
    %v1064 = vmax.f32 %v1000, %v1032
    %v1065 = vmax.f32 %v1001, %v1033
    %v1066 = vmax.f32 %v1002, %v1034
    %v1067 = vmax.f32 %v1003, %v1035
    %v1068 = vmax.f32 %v1004, %v1036
    %v1069 = vmax.f32 %v1005, %v1037
    %v1070 = vmax.f32 %v1006, %v1038
    %v1071 = vmax.f32 %v1007, %v1039
    %v1072 = vmax.f32 %v1008, %v1040
    %v1073 = vmax.f32 %v1009, %v1041
    %v1074 = vmax.f32 %v1010, %v1042
    %v1075 = vmax.f32 %v1011, %v1043
    %v1076 = vmax.f32 %v1012, %v1044
    %v1077 = vmax.f32 %v1013, %v1045
    %v1078 = vmax.f32 %v1014, %v1046
    %v1079 = vmax.f32 %v1015, %v1047
    %v1080 = vmax.f32 %v1016, %v1048
    %v1081 = vmax.f32 %v1017, %v1049
    %v1082 = vmax.f32 %v1018, %v1050
    %v1083 = vmax.f32 %v1019, %v1051
    %v1084 = vmax.f32 %v1020, %v1052
    %v1085 = vperm.slane %v964, 0
    %v1086 = vmul.f32 %v1053, %v1085
    %v1087 = vmul.f32 %v1054, %v1085
    %v1088 = vmul.f32 %v1055, %v1085
    %v1089 = vmul.f32 %v1056, %v1085
    %v1090 = vmul.f32 %v1057, %v1085
    %v1091 = vmul.f32 %v1058, %v1085
    %v1092 = vmul.f32 %v1059, %v1085
    %v1093 = vmul.f32 %v1060, %v1085
    %v1094 = vmul.f32 %v1061, %v1085
    %v1095 = vmul.f32 %v1062, %v1085
    %v1096 = vmul.f32 %v1063, %v1085
    %v1097 = vmul.f32 %v1064, %v1085
    %v1098 = vmul.f32 %v1065, %v1085
    %v1099 = vmul.f32 %v1066, %v1085
    %v1100 = vmul.f32 %v1067, %v1085
    %v1101 = vmul.f32 %v1068, %v1085
    %v1102 = vmul.f32 %v1069, %v1085
    %v1103 = vmul.f32 %v1070, %v1085
    %v1104 = vmul.f32 %v1071, %v1085
    %v1105 = vmul.f32 %v1072, %v1085
    %v1106 = vmul.f32 %v1073, %v1085
    %v1107 = vmul.f32 %v1074, %v1085
    %v1108 = vmul.f32 %v1075, %v1085
    %v1109 = vmul.f32 %v1076, %v1085
    %v1110 = vmul.f32 %v1077, %v1085
    %v1111 = vmul.f32 %v1078, %v1085
    %v1112 = vmul.f32 %v1079, %v1085
    %v1113 = vmul.f32 %v1080, %v1085
    %v1114 = vmul.f32 %v1081, %v1085
    %v1115 = vmul.f32 %v1082, %v1085
    %v1116 = vmul.f32 %v1083, %v1085
    %v1117 = vmul.f32 %v1084, %v1085
    %1118 = vadd.xlane.f32.xlu0 %v1086
    %v1119 = vpop.xlane.xlu0 %1118
    %1120 = vadd.xlane.f32.xlu0 %v1087
    %v1121 = vpop.xlane.xlu0 %1120
    %1122 = vadd.xlane.f32.xlu0 %v1088
    %v1123 = vpop.xlane.xlu0 %1122
    %1124 = vadd.xlane.f32.xlu0 %v1089
    %v1125 = vpop.xlane.xlu0 %1124
    %1126 = vadd.xlane.f32.xlu0 %v1090
    %v1127 = vpop.xlane.xlu0 %1126
    %1128 = vadd.xlane.f32.xlu0 %v1091
    %v1129 = vpop.xlane.xlu0 %1128
    %1130 = vadd.xlane.f32.xlu0 %v1092
    %v1131 = vpop.xlane.xlu0 %1130
    %1132 = vadd.xlane.f32.xlu0 %v1093
    %v1133 = vpop.xlane.xlu0 %1132
    %1134 = vadd.xlane.f32.xlu0 %v1094
    %v1135 = vpop.xlane.xlu0 %1134
    %1136 = vadd.xlane.f32.xlu0 %v1095
    %v1137 = vpop.xlane.xlu0 %1136
    %1138 = vadd.xlane.f32.xlu0 %v1096
    %v1139 = vpop.xlane.xlu0 %1138
    %1140 = vadd.xlane.f32.xlu0 %v1097
    %v1141 = vpop.xlane.xlu0 %1140
    %1142 = vadd.xlane.f32.xlu0 %v1098
    %v1143 = vpop.xlane.xlu0 %1142
    %1144 = vadd.xlane.f32.xlu0 %v1099
    %v1145 = vpop.xlane.xlu0 %1144
    %1146 = vadd.xlane.f32.xlu0 %v1100
    %v1147 = vpop.xlane.xlu0 %1146
    %1148 = vadd.xlane.f32.xlu0 %v1101
    %v1149 = vpop.xlane.xlu0 %1148
    %1150 = vadd.xlane.f32.xlu0 %v1102
    %v1151 = vpop.xlane.xlu0 %1150
    %1152 = vadd.xlane.f32.xlu0 %v1103
    %v1153 = vpop.xlane.xlu0 %1152
    %1154 = vadd.xlane.f32.xlu0 %v1104
    %v1155 = vpop.xlane.xlu0 %1154
    %1156 = vadd.xlane.f32.xlu0 %v1105
    %v1157 = vpop.xlane.xlu0 %1156
    %1158 = vadd.xlane.f32.xlu0 %v1106
    %v1159 = vpop.xlane.xlu0 %1158
    %1160 = vadd.xlane.f32.xlu0 %v1107
    %v1161 = vpop.xlane.xlu0 %1160
    %1162 = vadd.xlane.f32.xlu0 %v1108
    %v1163 = vpop.xlane.xlu0 %1162
    %1164 = vadd.xlane.f32.xlu0 %v1109
    %v1165 = vpop.xlane.xlu0 %1164
    %1166 = vadd.xlane.f32.xlu0 %v1110
    %v1167 = vpop.xlane.xlu0 %1166
    %1168 = vadd.xlane.f32.xlu0 %v1111
    %v1169 = vpop.xlane.xlu0 %1168
    %1170 = vadd.xlane.f32.xlu0 %v1112
    %v1171 = vpop.xlane.xlu0 %1170
    %1172 = vadd.xlane.f32.xlu0 %v1113
    %v1173 = vpop.xlane.xlu0 %1172
    %1174 = vadd.xlane.f32.xlu0 %v1114
    %v1175 = vpop.xlane.xlu0 %1174
    %1176 = vadd.xlane.f32.xlu0 %v1115
    %v1177 = vpop.xlane.xlu0 %1176
    %1178 = vadd.xlane.f32.xlu0 %v1116
    %v1179 = vpop.xlane.xlu0 %1178
    %1180 = vadd.xlane.f32.xlu0 %v1117
    %v1181 = vpop.xlane.xlu0 %1180
    %v1182 = vperm.slane %v964, 1
    %v1183 = vmul.f32 %v1053, %v1182
    %v1184 = vmul.f32 %v1054, %v1182
    %v1185 = vmul.f32 %v1055, %v1182
    %v1186 = vmul.f32 %v1056, %v1182
    %v1187 = vmul.f32 %v1057, %v1182
    %v1188 = vmul.f32 %v1058, %v1182
    %v1189 = vmul.f32 %v1059, %v1182
    %v1190 = vmul.f32 %v1060, %v1182
    %v1191 = vmul.f32 %v1061, %v1182
    %v1192 = vmul.f32 %v1062, %v1182
    %v1193 = vmul.f32 %v1063, %v1182
    %v1194 = vmul.f32 %v1064, %v1182
    %v1195 = vmul.f32 %v1065, %v1182
    %v1196 = vmul.f32 %v1066, %v1182
    %v1197 = vmul.f32 %v1067, %v1182
    %v1198 = vmul.f32 %v1068, %v1182
    %v1199 = vmul.f32 %v1069, %v1182
    %v1200 = vmul.f32 %v1070, %v1182
    %v1201 = vmul.f32 %v1071, %v1182
    %v1202 = vmul.f32 %v1072, %v1182
    %v1203 = vmul.f32 %v1073, %v1182
    %v1204 = vmul.f32 %v1074, %v1182
    %v1205 = vmul.f32 %v1075, %v1182
    %v1206 = vmul.f32 %v1076, %v1182
    %v1207 = vmul.f32 %v1077, %v1182
    %v1208 = vmul.f32 %v1078, %v1182
    %v1209 = vmul.f32 %v1079, %v1182
    %v1210 = vmul.f32 %v1080, %v1182
    %v1211 = vmul.f32 %v1081, %v1182
    %v1212 = vmul.f32 %v1082, %v1182
    %v1213 = vmul.f32 %v1083, %v1182
    %v1214 = vmul.f32 %v1084, %v1182
    %1215 = vadd.xlane.f32.xlu0 %v1183
    %v1216 = vpop.xlane.xlu0 %1215
    %1217 = vadd.xlane.f32.xlu0 %v1184
    %v1218 = vpop.xlane.xlu0 %1217
    %1219 = vadd.xlane.f32.xlu0 %v1185
    %v1220 = vpop.xlane.xlu0 %1219
    %1221 = vadd.xlane.f32.xlu0 %v1186
    %v1222 = vpop.xlane.xlu0 %1221
    %1223 = vadd.xlane.f32.xlu0 %v1187
    %v1224 = vpop.xlane.xlu0 %1223
    %1225 = vadd.xlane.f32.xlu0 %v1188
    %v1226 = vpop.xlane.xlu0 %1225
    %1227 = vadd.xlane.f32.xlu0 %v1189
    %v1228 = vpop.xlane.xlu0 %1227
    %1229 = vadd.xlane.f32.xlu0 %v1190
    %v1230 = vpop.xlane.xlu0 %1229
    %1231 = vadd.xlane.f32.xlu0 %v1191
    %v1232 = vpop.xlane.xlu0 %1231
    %1233 = vadd.xlane.f32.xlu0 %v1192
    %v1234 = vpop.xlane.xlu0 %1233
    %1235 = vadd.xlane.f32.xlu0 %v1193
    %v1236 = vpop.xlane.xlu0 %1235
    %1237 = vadd.xlane.f32.xlu0 %v1194
    %v1238 = vpop.xlane.xlu0 %1237
    %1239 = vadd.xlane.f32.xlu0 %v1195
    %v1240 = vpop.xlane.xlu0 %1239
    %1241 = vadd.xlane.f32.xlu0 %v1196
    %v1242 = vpop.xlane.xlu0 %1241
    %1243 = vadd.xlane.f32.xlu0 %v1197
    %v1244 = vpop.xlane.xlu0 %1243
    %1245 = vadd.xlane.f32.xlu0 %v1198
    %v1246 = vpop.xlane.xlu0 %1245
    %1247 = vadd.xlane.f32.xlu0 %v1199
    %v1248 = vpop.xlane.xlu0 %1247
    %1249 = vadd.xlane.f32.xlu0 %v1200
    %v1250 = vpop.xlane.xlu0 %1249
    %1251 = vadd.xlane.f32.xlu0 %v1201
    %v1252 = vpop.xlane.xlu0 %1251
    %1253 = vadd.xlane.f32.xlu0 %v1202
    %v1254 = vpop.xlane.xlu0 %1253
    %1255 = vadd.xlane.f32.xlu0 %v1203
    %v1256 = vpop.xlane.xlu0 %1255
    %1257 = vadd.xlane.f32.xlu0 %v1204
    %v1258 = vpop.xlane.xlu0 %1257
    %1259 = vadd.xlane.f32.xlu0 %v1205
    %v1260 = vpop.xlane.xlu0 %1259
    %1261 = vadd.xlane.f32.xlu0 %v1206
    %v1262 = vpop.xlane.xlu0 %1261
    %1263 = vadd.xlane.f32.xlu0 %v1207
    %v1264 = vpop.xlane.xlu0 %1263
    %1265 = vadd.xlane.f32.xlu0 %v1208
    %v1266 = vpop.xlane.xlu0 %1265
    %1267 = vadd.xlane.f32.xlu0 %v1209
    %v1268 = vpop.xlane.xlu0 %1267
    %1269 = vadd.xlane.f32.xlu0 %v1210
    %v1270 = vpop.xlane.xlu0 %1269
    %1271 = vadd.xlane.f32.xlu0 %v1211
    %v1272 = vpop.xlane.xlu0 %1271
    %1273 = vadd.xlane.f32.xlu0 %v1212
    %v1274 = vpop.xlane.xlu0 %1273
    %1275 = vadd.xlane.f32.xlu0 %v1213
    %v1276 = vpop.xlane.xlu0 %1275
    %1277 = vadd.xlane.f32.xlu0 %v1214
    %v1278 = vpop.xlane.xlu0 %1277
    %v1279 = vperm.slane %v964, 2
    %v1280 = vmul.f32 %v1053, %v1279
    %v1281 = vmul.f32 %v1054, %v1279
    %v1282 = vmul.f32 %v1055, %v1279
    %v1283 = vmul.f32 %v1056, %v1279
    %v1284 = vmul.f32 %v1057, %v1279
    %v1285 = vmul.f32 %v1058, %v1279
    %v1286 = vmul.f32 %v1059, %v1279
    %v1287 = vmul.f32 %v1060, %v1279
    %v1288 = vmul.f32 %v1061, %v1279
    %v1289 = vmul.f32 %v1062, %v1279
    %v1290 = vmul.f32 %v1063, %v1279
    %v1291 = vmul.f32 %v1064, %v1279
    %v1292 = vmul.f32 %v1065, %v1279
    %v1293 = vmul.f32 %v1066, %v1279
    %v1294 = vmul.f32 %v1067, %v1279
    %v1295 = vmul.f32 %v1068, %v1279
    %v1296 = vmul.f32 %v1069, %v1279
    %v1297 = vmul.f32 %v1070, %v1279
    %v1298 = vmul.f32 %v1071, %v1279
    %v1299 = vmul.f32 %v1072, %v1279
    %v1300 = vmul.f32 %v1073, %v1279
    %v1301 = vmul.f32 %v1074, %v1279
    %v1302 = vmul.f32 %v1075, %v1279
    %v1303 = vmul.f32 %v1076, %v1279
    %v1304 = vmul.f32 %v1077, %v1279
    %v1305 = vmul.f32 %v1078, %v1279
    %v1306 = vmul.f32 %v1079, %v1279
    %v1307 = vmul.f32 %v1080, %v1279
    %v1308 = vmul.f32 %v1081, %v1279
    %v1309 = vmul.f32 %v1082, %v1279
    %v1310 = vmul.f32 %v1083, %v1279
    %v1311 = vmul.f32 %v1084, %v1279
    %1312 = vadd.xlane.f32.xlu0 %v1280
    %v1313 = vpop.xlane.xlu0 %1312
    %1314 = vadd.xlane.f32.xlu0 %v1281
    %v1315 = vpop.xlane.xlu0 %1314
    %1316 = vadd.xlane.f32.xlu0 %v1282
    %v1317 = vpop.xlane.xlu0 %1316
    %1318 = vadd.xlane.f32.xlu0 %v1283
    %v1319 = vpop.xlane.xlu0 %1318
    %1320 = vadd.xlane.f32.xlu0 %v1284
    %v1321 = vpop.xlane.xlu0 %1320
    %1322 = vadd.xlane.f32.xlu0 %v1285
    %v1323 = vpop.xlane.xlu0 %1322
    %1324 = vadd.xlane.f32.xlu0 %v1286
    %v1325 = vpop.xlane.xlu0 %1324
    %1326 = vadd.xlane.f32.xlu0 %v1287
    %v1327 = vpop.xlane.xlu0 %1326
    %1328 = vadd.xlane.f32.xlu0 %v1288
    %v1329 = vpop.xlane.xlu0 %1328
    %1330 = vadd.xlane.f32.xlu0 %v1289
    %v1331 = vpop.xlane.xlu0 %1330
    %1332 = vadd.xlane.f32.xlu0 %v1290
    %v1333 = vpop.xlane.xlu0 %1332
    %1334 = vadd.xlane.f32.xlu0 %v1291
    %v1335 = vpop.xlane.xlu0 %1334
    %1336 = vadd.xlane.f32.xlu0 %v1292
    %v1337 = vpop.xlane.xlu0 %1336
    %1338 = vadd.xlane.f32.xlu0 %v1293
    %v1339 = vpop.xlane.xlu0 %1338
    %1340 = vadd.xlane.f32.xlu0 %v1294
    %v1341 = vpop.xlane.xlu0 %1340
    %1342 = vadd.xlane.f32.xlu0 %v1295
    %v1343 = vpop.xlane.xlu0 %1342
    %1344 = vadd.xlane.f32.xlu0 %v1296
    %v1345 = vpop.xlane.xlu0 %1344
    %1346 = vadd.xlane.f32.xlu0 %v1297
    %v1347 = vpop.xlane.xlu0 %1346
    %1348 = vadd.xlane.f32.xlu0 %v1298
    %v1349 = vpop.xlane.xlu0 %1348
    %1350 = vadd.xlane.f32.xlu0 %v1299
    %v1351 = vpop.xlane.xlu0 %1350
    %1352 = vadd.xlane.f32.xlu0 %v1300
    %v1353 = vpop.xlane.xlu0 %1352
    %1354 = vadd.xlane.f32.xlu0 %v1301
    %v1355 = vpop.xlane.xlu0 %1354
    %1356 = vadd.xlane.f32.xlu0 %v1302
    %v1357 = vpop.xlane.xlu0 %1356
    %1358 = vadd.xlane.f32.xlu0 %v1303
    %v1359 = vpop.xlane.xlu0 %1358
    %1360 = vadd.xlane.f32.xlu0 %v1304
    %v1361 = vpop.xlane.xlu0 %1360
    %1362 = vadd.xlane.f32.xlu0 %v1305
    %v1363 = vpop.xlane.xlu0 %1362
    %1364 = vadd.xlane.f32.xlu0 %v1306
    %v1365 = vpop.xlane.xlu0 %1364
    %1366 = vadd.xlane.f32.xlu0 %v1307
    %v1367 = vpop.xlane.xlu0 %1366
    %1368 = vadd.xlane.f32.xlu0 %v1308
    %v1369 = vpop.xlane.xlu0 %1368
    %1370 = vadd.xlane.f32.xlu0 %v1309
    %v1371 = vpop.xlane.xlu0 %1370
    %1372 = vadd.xlane.f32.xlu0 %v1310
    %v1373 = vpop.xlane.xlu0 %1372
    %1374 = vadd.xlane.f32.xlu0 %v1311
    %v1375 = vpop.xlane.xlu0 %1374
    %v1376 = vperm.slane %v964, 3
    %v1377 = vmul.f32 %v1053, %v1376
    %v1378 = vmul.f32 %v1054, %v1376
    %v1379 = vmul.f32 %v1055, %v1376
    %v1380 = vmul.f32 %v1056, %v1376
    %v1381 = vmul.f32 %v1057, %v1376
    %v1382 = vmul.f32 %v1058, %v1376
    %v1383 = vmul.f32 %v1059, %v1376
    %v1384 = vmul.f32 %v1060, %v1376
    %v1385 = vmul.f32 %v1061, %v1376
    %v1386 = vmul.f32 %v1062, %v1376
    %v1387 = vmul.f32 %v1063, %v1376
    %v1388 = vmul.f32 %v1064, %v1376
    %v1389 = vmul.f32 %v1065, %v1376
    %v1390 = vmul.f32 %v1066, %v1376
    %v1391 = vmul.f32 %v1067, %v1376
    %v1392 = vmul.f32 %v1068, %v1376
    %v1393 = vmul.f32 %v1069, %v1376
    %v1394 = vmul.f32 %v1070, %v1376
    %v1395 = vmul.f32 %v1071, %v1376
    %v1396 = vmul.f32 %v1072, %v1376
    %v1397 = vmul.f32 %v1073, %v1376
    %v1398 = vmul.f32 %v1074, %v1376
    %v1399 = vmul.f32 %v1075, %v1376
    %v1400 = vmul.f32 %v1076, %v1376
    %v1401 = vmul.f32 %v1077, %v1376
    %v1402 = vmul.f32 %v1078, %v1376
    %v1403 = vmul.f32 %v1079, %v1376
    %v1404 = vmul.f32 %v1080, %v1376
    %v1405 = vmul.f32 %v1081, %v1376
    %v1406 = vmul.f32 %v1082, %v1376
    %v1407 = vmul.f32 %v1083, %v1376
    %v1408 = vmul.f32 %v1084, %v1376
    %1409 = vadd.xlane.f32.xlu0 %v1377
    %v1410 = vpop.xlane.xlu0 %1409
    %1411 = vadd.xlane.f32.xlu0 %v1378
    %v1412 = vpop.xlane.xlu0 %1411
    %1413 = vadd.xlane.f32.xlu0 %v1379
    %v1414 = vpop.xlane.xlu0 %1413
    %1415 = vadd.xlane.f32.xlu0 %v1380
    %v1416 = vpop.xlane.xlu0 %1415
    %1417 = vadd.xlane.f32.xlu0 %v1381
    %v1418 = vpop.xlane.xlu0 %1417
    %1419 = vadd.xlane.f32.xlu0 %v1382
    %v1420 = vpop.xlane.xlu0 %1419
    %1421 = vadd.xlane.f32.xlu0 %v1383
    %v1422 = vpop.xlane.xlu0 %1421
    %1423 = vadd.xlane.f32.xlu0 %v1384
    %v1424 = vpop.xlane.xlu0 %1423
    %1425 = vadd.xlane.f32.xlu0 %v1385
    %v1426 = vpop.xlane.xlu0 %1425
    %1427 = vadd.xlane.f32.xlu0 %v1386
    %v1428 = vpop.xlane.xlu0 %1427
    %1429 = vadd.xlane.f32.xlu0 %v1387
    %v1430 = vpop.xlane.xlu0 %1429
    %1431 = vadd.xlane.f32.xlu0 %v1388
    %v1432 = vpop.xlane.xlu0 %1431
    %1433 = vadd.xlane.f32.xlu0 %v1389
    %v1434 = vpop.xlane.xlu0 %1433
    %1435 = vadd.xlane.f32.xlu0 %v1390
    %v1436 = vpop.xlane.xlu0 %1435
    %1437 = vadd.xlane.f32.xlu0 %v1391
    %v1438 = vpop.xlane.xlu0 %1437
    %1439 = vadd.xlane.f32.xlu0 %v1392
    %v1440 = vpop.xlane.xlu0 %1439
    %1441 = vadd.xlane.f32.xlu0 %v1393
    %v1442 = vpop.xlane.xlu0 %1441
    %1443 = vadd.xlane.f32.xlu0 %v1394
    %v1444 = vpop.xlane.xlu0 %1443
    %1445 = vadd.xlane.f32.xlu0 %v1395
    %v1446 = vpop.xlane.xlu0 %1445
    %1447 = vadd.xlane.f32.xlu0 %v1396
    %v1448 = vpop.xlane.xlu0 %1447
    %1449 = vadd.xlane.f32.xlu0 %v1397
    %v1450 = vpop.xlane.xlu0 %1449
    %1451 = vadd.xlane.f32.xlu0 %v1398
    %v1452 = vpop.xlane.xlu0 %1451
    %1453 = vadd.xlane.f32.xlu0 %v1399
    %v1454 = vpop.xlane.xlu0 %1453
    %1455 = vadd.xlane.f32.xlu0 %v1400
    %v1456 = vpop.xlane.xlu0 %1455
    %1457 = vadd.xlane.f32.xlu0 %v1401
    %v1458 = vpop.xlane.xlu0 %1457
    %1459 = vadd.xlane.f32.xlu0 %v1402
    %v1460 = vpop.xlane.xlu0 %1459
    %1461 = vadd.xlane.f32.xlu0 %v1403
    %v1462 = vpop.xlane.xlu0 %1461
    %1463 = vadd.xlane.f32.xlu0 %v1404
    %v1464 = vpop.xlane.xlu0 %1463
    %1465 = vadd.xlane.f32.xlu0 %v1405
    %v1466 = vpop.xlane.xlu0 %1465
    %1467 = vadd.xlane.f32.xlu0 %v1406
    %v1468 = vpop.xlane.xlu0 %1467
    %1469 = vadd.xlane.f32.xlu0 %v1407
    %v1470 = vpop.xlane.xlu0 %1469
    %1471 = vadd.xlane.f32.xlu0 %v1408
    %v1472 = vpop.xlane.xlu0 %1471
    %v1474 = vrot.slane %v941, 1
    %v1475 = vrot.slane %v941, 2
    %v1476 = vrot.slane %v941, 3
    %v1477 = vrot.slane %v941, 4
    %v1478 = vrot.slane %v941, 5
    %v1479 = vrot.slane %v941, 6
    %v1480 = vrot.slane %v941, 7
    %v1481 = vperm.slane %v941, 0
    %v1482 = vperm.slane %v1474, 0
    %v1483 = vperm.slane %v1475, 0
    %v1484 = vperm.slane %v1476, 0
    %v1485 = vperm.slane %v1477, 0
    %v1486 = vperm.slane %v1478, 0
    %v1487 = vperm.slane %v1479, 0
    %v1488 = vperm.slane %v1480, 0
    %v1497 = vadd.f32 %v1481, %v960
    %v1498 = vadd.f32 %v1481, %v961
    %v1499 = vadd.f32 %v1481, %v962
    %v1500 = vadd.f32 %v1481, %v963
    %v1501 = vadd.f32 %v1482, %v960
    %v1502 = vadd.f32 %v1482, %v961
    %v1503 = vadd.f32 %v1482, %v962
    %v1504 = vadd.f32 %v1482, %v963
    %v1505 = vadd.f32 %v1483, %v960
    %v1506 = vadd.f32 %v1483, %v961
    %v1507 = vadd.f32 %v1483, %v962
    %v1508 = vadd.f32 %v1483, %v963
    %v1509 = vadd.f32 %v1484, %v960
    %v1510 = vadd.f32 %v1484, %v961
    %v1511 = vadd.f32 %v1484, %v962
    %v1512 = vadd.f32 %v1484, %v963
    %v1513 = vadd.f32 %v1485, %v960
    %v1514 = vadd.f32 %v1485, %v961
    %v1515 = vadd.f32 %v1485, %v962
    %v1516 = vadd.f32 %v1485, %v963
    %v1517 = vadd.f32 %v1486, %v960
    %v1518 = vadd.f32 %v1486, %v961
    %v1519 = vadd.f32 %v1486, %v962
    %v1520 = vadd.f32 %v1486, %v963
    %v1521 = vadd.f32 %v1487, %v960
    %v1522 = vadd.f32 %v1487, %v961
    %v1523 = vadd.f32 %v1487, %v962
    %v1524 = vadd.f32 %v1487, %v963
    %v1525 = vadd.f32 %v1488, %v960
    %v1526 = vadd.f32 %v1488, %v961
    %v1527 = vadd.f32 %v1488, %v962
    %v1528 = vadd.f32 %v1488, %v963
    %v1529 = vmul.f32 %v1497, 0.2
    %v1530 = vmul.f32 %v1498, 0.2
    %v1531 = vmul.f32 %v1499, 0.2
    %v1532 = vmul.f32 %v1500, 0.2
    %v1533 = vmul.f32 %v1501, 0.2
    %v1534 = vmul.f32 %v1502, 0.2
    %v1535 = vmul.f32 %v1503, 0.2
    %v1536 = vmul.f32 %v1504, 0.2
    %v1537 = vmul.f32 %v1505, 0.2
    %v1538 = vmul.f32 %v1506, 0.2
    %v1539 = vmul.f32 %v1507, 0.2
    %v1540 = vmul.f32 %v1508, 0.2
    %v1541 = vmul.f32 %v1509, 0.2
    %v1542 = vmul.f32 %v1510, 0.2
    %v1543 = vmul.f32 %v1511, 0.2
    %v1544 = vmul.f32 %v1512, 0.2
    %v1545 = vmul.f32 %v1513, 0.2
    %v1546 = vmul.f32 %v1514, 0.2
    %v1547 = vmul.f32 %v1515, 0.2
    %v1548 = vmul.f32 %v1516, 0.2
    %v1549 = vmul.f32 %v1517, 0.2
    %v1550 = vmul.f32 %v1518, 0.2
    %v1551 = vmul.f32 %v1519, 0.2
    %v1552 = vmul.f32 %v1520, 0.2
    %v1553 = vmul.f32 %v1521, 0.2
    %v1554 = vmul.f32 %v1522, 0.2
    %v1555 = vmul.f32 %v1523, 0.2
    %v1556 = vmul.f32 %v1524, 0.2
    %v1557 = vmul.f32 %v1525, 0.2
    %v1558 = vmul.f32 %v1526, 0.2
    %v1559 = vmul.f32 %v1527, 0.2
    %v1560 = vmul.f32 %v1528, 0.2
    %v1561 = vmax.f32 %v1497, %v1529
    %v1562 = vmax.f32 %v1498, %v1530
    %v1563 = vmax.f32 %v1499, %v1531
    %v1564 = vmax.f32 %v1500, %v1532
    %v1565 = vmax.f32 %v1501, %v1533
    %v1566 = vmax.f32 %v1502, %v1534
    %v1567 = vmax.f32 %v1503, %v1535
    %v1568 = vmax.f32 %v1504, %v1536
    %v1569 = vmax.f32 %v1505, %v1537
    %v1570 = vmax.f32 %v1506, %v1538
    %v1571 = vmax.f32 %v1507, %v1539
    %v1572 = vmax.f32 %v1508, %v1540
    %v1573 = vmax.f32 %v1509, %v1541
    %v1574 = vmax.f32 %v1510, %v1542
    %v1575 = vmax.f32 %v1511, %v1543
    %v1576 = vmax.f32 %v1512, %v1544
    %v1577 = vmax.f32 %v1513, %v1545
    %v1578 = vmax.f32 %v1514, %v1546
    %v1579 = vmax.f32 %v1515, %v1547
    %v1580 = vmax.f32 %v1516, %v1548
    %v1581 = vmax.f32 %v1517, %v1549
    %v1582 = vmax.f32 %v1518, %v1550
    %v1583 = vmax.f32 %v1519, %v1551
    %v1584 = vmax.f32 %v1520, %v1552
    %v1585 = vmax.f32 %v1521, %v1553
    %v1586 = vmax.f32 %v1522, %v1554
    %v1587 = vmax.f32 %v1523, %v1555
    %v1588 = vmax.f32 %v1524, %v1556
    %v1589 = vmax.f32 %v1525, %v1557
    %v1590 = vmax.f32 %v1526, %v1558
    %v1591 = vmax.f32 %v1527, %v1559
    %v1592 = vmax.f32 %v1528, %v1560
    %v1593 = vmul.f32 %v1561, %v1085
    %v1594 = vmul.f32 %v1562, %v1085
    %v1595 = vmul.f32 %v1563, %v1085
    %v1596 = vmul.f32 %v1564, %v1085
    %v1597 = vmul.f32 %v1565, %v1085
    %v1598 = vmul.f32 %v1566, %v1085
    %v1599 = vmul.f32 %v1567, %v1085
    %v1600 = vmul.f32 %v1568, %v1085
    %v1601 = vmul.f32 %v1569, %v1085
    %v1602 = vmul.f32 %v1570, %v1085
    %v1603 = vmul.f32 %v1571, %v1085
    %v1604 = vmul.f32 %v1572, %v1085
    %v1605 = vmul.f32 %v1573, %v1085
    %v1606 = vmul.f32 %v1574, %v1085
    %v1607 = vmul.f32 %v1575, %v1085
    %v1608 = vmul.f32 %v1576, %v1085
    %v1609 = vmul.f32 %v1577, %v1085
    %v1610 = vmul.f32 %v1578, %v1085
    %v1611 = vmul.f32 %v1579, %v1085
    %v1612 = vmul.f32 %v1580, %v1085
    %v1613 = vmul.f32 %v1581, %v1085
    %v1614 = vmul.f32 %v1582, %v1085
    %v1615 = vmul.f32 %v1583, %v1085
    %v1616 = vmul.f32 %v1584, %v1085
    %v1617 = vmul.f32 %v1585, %v1085
    %v1618 = vmul.f32 %v1586, %v1085
    %v1619 = vmul.f32 %v1587, %v1085
    %v1620 = vmul.f32 %v1588, %v1085
    %v1621 = vmul.f32 %v1589, %v1085
    %v1622 = vmul.f32 %v1590, %v1085
    %v1623 = vmul.f32 %v1591, %v1085
    %v1624 = vmul.f32 %v1592, %v1085
    %1625 = vadd.xlane.f32.xlu0 %v1593
    %v1626 = vpop.xlane.xlu0 %1625
    %1627 = vadd.xlane.f32.xlu0 %v1594
    %v1628 = vpop.xlane.xlu0 %1627
    %1629 = vadd.xlane.f32.xlu0 %v1595
    %v1630 = vpop.xlane.xlu0 %1629
    %1631 = vadd.xlane.f32.xlu0 %v1596
    %v1632 = vpop.xlane.xlu0 %1631
    %1633 = vadd.xlane.f32.xlu0 %v1597
    %v1634 = vpop.xlane.xlu0 %1633
    %1635 = vadd.xlane.f32.xlu0 %v1598
    %v1636 = vpop.xlane.xlu0 %1635
    %1637 = vadd.xlane.f32.xlu0 %v1599
    %v1638 = vpop.xlane.xlu0 %1637
    %1639 = vadd.xlane.f32.xlu0 %v1600
    %v1640 = vpop.xlane.xlu0 %1639
    %1641 = vadd.xlane.f32.xlu0 %v1601
    %v1642 = vpop.xlane.xlu0 %1641
    %1643 = vadd.xlane.f32.xlu0 %v1602
    %v1644 = vpop.xlane.xlu0 %1643
    %1645 = vadd.xlane.f32.xlu0 %v1603
    %v1646 = vpop.xlane.xlu0 %1645
    %1647 = vadd.xlane.f32.xlu0 %v1604
    %v1648 = vpop.xlane.xlu0 %1647
    %1649 = vadd.xlane.f32.xlu0 %v1605
    %v1650 = vpop.xlane.xlu0 %1649
    %1651 = vadd.xlane.f32.xlu0 %v1606
    %v1652 = vpop.xlane.xlu0 %1651
    %1653 = vadd.xlane.f32.xlu0 %v1607
    %v1654 = vpop.xlane.xlu0 %1653
    %1655 = vadd.xlane.f32.xlu0 %v1608
    %v1656 = vpop.xlane.xlu0 %1655
    %1657 = vadd.xlane.f32.xlu0 %v1609
    %v1658 = vpop.xlane.xlu0 %1657
    %1659 = vadd.xlane.f32.xlu0 %v1610
    %v1660 = vpop.xlane.xlu0 %1659
    %1661 = vadd.xlane.f32.xlu0 %v1611
    %v1662 = vpop.xlane.xlu0 %1661
    %1663 = vadd.xlane.f32.xlu0 %v1612
    %v1664 = vpop.xlane.xlu0 %1663
    %1665 = vadd.xlane.f32.xlu0 %v1613
    %v1666 = vpop.xlane.xlu0 %1665
    %1667 = vadd.xlane.f32.xlu0 %v1614
    %v1668 = vpop.xlane.xlu0 %1667
    %1669 = vadd.xlane.f32.xlu0 %v1615
    %v1670 = vpop.xlane.xlu0 %1669
    %1671 = vadd.xlane.f32.xlu0 %v1616
    %v1672 = vpop.xlane.xlu0 %1671
    %1673 = vadd.xlane.f32.xlu0 %v1617
    %v1674 = vpop.xlane.xlu0 %1673
    %1675 = vadd.xlane.f32.xlu0 %v1618
    %v1676 = vpop.xlane.xlu0 %1675
    %1677 = vadd.xlane.f32.xlu0 %v1619
    %v1678 = vpop.xlane.xlu0 %1677
    %1679 = vadd.xlane.f32.xlu0 %v1620
    %v1680 = vpop.xlane.xlu0 %1679
    %1681 = vadd.xlane.f32.xlu0 %v1621
    %v1682 = vpop.xlane.xlu0 %1681
    %1683 = vadd.xlane.f32.xlu0 %v1622
    %v1684 = vpop.xlane.xlu0 %1683
    %1685 = vadd.xlane.f32.xlu0 %v1623
    %v1686 = vpop.xlane.xlu0 %1685
    %1687 = vadd.xlane.f32.xlu0 %v1624
    %v1688 = vpop.xlane.xlu0 %1687
    %v1689 = vmul.f32 %v1561, %v1182
    %v1690 = vmul.f32 %v1562, %v1182
    %v1691 = vmul.f32 %v1563, %v1182
    %v1692 = vmul.f32 %v1564, %v1182
    %v1693 = vmul.f32 %v1565, %v1182
    %v1694 = vmul.f32 %v1566, %v1182
    %v1695 = vmul.f32 %v1567, %v1182
    %v1696 = vmul.f32 %v1568, %v1182
    %v1697 = vmul.f32 %v1569, %v1182
    %v1698 = vmul.f32 %v1570, %v1182
    %v1699 = vmul.f32 %v1571, %v1182
    %v1700 = vmul.f32 %v1572, %v1182
    %v1701 = vmul.f32 %v1573, %v1182
    %v1702 = vmul.f32 %v1574, %v1182
    %v1703 = vmul.f32 %v1575, %v1182
    %v1704 = vmul.f32 %v1576, %v1182
    %v1705 = vmul.f32 %v1577, %v1182
    %v1706 = vmul.f32 %v1578, %v1182
    %v1707 = vmul.f32 %v1579, %v1182
    %v1708 = vmul.f32 %v1580, %v1182
    %v1709 = vmul.f32 %v1581, %v1182
    %v1710 = vmul.f32 %v1582, %v1182
    %v1711 = vmul.f32 %v1583, %v1182
    %v1712 = vmul.f32 %v1584, %v1182
    %v1713 = vmul.f32 %v1585, %v1182
    %v1714 = vmul.f32 %v1586, %v1182
    %v1715 = vmul.f32 %v1587, %v1182
    %v1716 = vmul.f32 %v1588, %v1182
    %v1717 = vmul.f32 %v1589, %v1182
    %v1718 = vmul.f32 %v1590, %v1182
    %v1719 = vmul.f32 %v1591, %v1182
    %v1720 = vmul.f32 %v1592, %v1182
    %1721 = vadd.xlane.f32.xlu0 %v1689
    %v1722 = vpop.xlane.xlu0 %1721
    %1723 = vadd.xlane.f32.xlu0 %v1690
    %v1724 = vpop.xlane.xlu0 %1723
    %1725 = vadd.xlane.f32.xlu0 %v1691
    %v1726 = vpop.xlane.xlu0 %1725
    %1727 = vadd.xlane.f32.xlu0 %v1692
    %v1728 = vpop.xlane.xlu0 %1727
    %1729 = vadd.xlane.f32.xlu0 %v1693
    %v1730 = vpop.xlane.xlu0 %1729
    %1731 = vadd.xlane.f32.xlu0 %v1694
    %v1732 = vpop.xlane.xlu0 %1731
    %1733 = vadd.xlane.f32.xlu0 %v1695
    %v1734 = vpop.xlane.xlu0 %1733
    %1735 = vadd.xlane.f32.xlu0 %v1696
    %v1736 = vpop.xlane.xlu0 %1735
    %1737 = vadd.xlane.f32.xlu0 %v1697
    %v1738 = vpop.xlane.xlu0 %1737
    %1739 = vadd.xlane.f32.xlu0 %v1698
    %v1740 = vpop.xlane.xlu0 %1739
    %1741 = vadd.xlane.f32.xlu0 %v1699
    %v1742 = vpop.xlane.xlu0 %1741
    %1743 = vadd.xlane.f32.xlu0 %v1700
    %v1744 = vpop.xlane.xlu0 %1743
    %1745 = vadd.xlane.f32.xlu0 %v1701
    %v1746 = vpop.xlane.xlu0 %1745
    %1747 = vadd.xlane.f32.xlu0 %v1702
    %v1748 = vpop.xlane.xlu0 %1747
    %1749 = vadd.xlane.f32.xlu0 %v1703
    %v1750 = vpop.xlane.xlu0 %1749
    %1751 = vadd.xlane.f32.xlu0 %v1704
    %v1752 = vpop.xlane.xlu0 %1751
    %1753 = vadd.xlane.f32.xlu0 %v1705
    %v1754 = vpop.xlane.xlu0 %1753
    %1755 = vadd.xlane.f32.xlu0 %v1706
    %v1756 = vpop.xlane.xlu0 %1755
    %1757 = vadd.xlane.f32.xlu0 %v1707
    %v1758 = vpop.xlane.xlu0 %1757
    %1759 = vadd.xlane.f32.xlu0 %v1708
    %v1760 = vpop.xlane.xlu0 %1759
    %1761 = vadd.xlane.f32.xlu0 %v1709
    %v1762 = vpop.xlane.xlu0 %1761
    %1763 = vadd.xlane.f32.xlu0 %v1710
    %v1764 = vpop.xlane.xlu0 %1763
    %1765 = vadd.xlane.f32.xlu0 %v1711
    %v1766 = vpop.xlane.xlu0 %1765
    %1767 = vadd.xlane.f32.xlu0 %v1712
    %v1768 = vpop.xlane.xlu0 %1767
    %1769 = vadd.xlane.f32.xlu0 %v1713
    %v1770 = vpop.xlane.xlu0 %1769
    %1771 = vadd.xlane.f32.xlu0 %v1714
    %v1772 = vpop.xlane.xlu0 %1771
    %1773 = vadd.xlane.f32.xlu0 %v1715
    %v1774 = vpop.xlane.xlu0 %1773
    %1775 = vadd.xlane.f32.xlu0 %v1716
    %v1776 = vpop.xlane.xlu0 %1775
    %1777 = vadd.xlane.f32.xlu0 %v1717
    %v1778 = vpop.xlane.xlu0 %1777
    %1779 = vadd.xlane.f32.xlu0 %v1718
    %v1780 = vpop.xlane.xlu0 %1779
    %1781 = vadd.xlane.f32.xlu0 %v1719
    %v1782 = vpop.xlane.xlu0 %1781
    %1783 = vadd.xlane.f32.xlu0 %v1720
    %v1784 = vpop.xlane.xlu0 %1783
    %v1785 = vmul.f32 %v1561, %v1279
    %v1786 = vmul.f32 %v1562, %v1279
    %v1787 = vmul.f32 %v1563, %v1279
    %v1788 = vmul.f32 %v1564, %v1279
    %v1789 = vmul.f32 %v1565, %v1279
    %v1790 = vmul.f32 %v1566, %v1279
    %v1791 = vmul.f32 %v1567, %v1279
    %v1792 = vmul.f32 %v1568, %v1279
    %v1793 = vmul.f32 %v1569, %v1279
    %v1794 = vmul.f32 %v1570, %v1279
    %v1795 = vmul.f32 %v1571, %v1279
    %v1796 = vmul.f32 %v1572, %v1279
    %v1797 = vmul.f32 %v1573, %v1279
    %v1798 = vmul.f32 %v1574, %v1279
    %v1799 = vmul.f32 %v1575, %v1279
    %v1800 = vmul.f32 %v1576, %v1279
    %v1801 = vmul.f32 %v1577, %v1279
    %v1802 = vmul.f32 %v1578, %v1279
    %v1803 = vmul.f32 %v1579, %v1279
    %v1804 = vmul.f32 %v1580, %v1279
    %v1805 = vmul.f32 %v1581, %v1279
    %v1806 = vmul.f32 %v1582, %v1279
    %v1807 = vmul.f32 %v1583, %v1279
    %v1808 = vmul.f32 %v1584, %v1279
    %v1809 = vmul.f32 %v1585, %v1279
    %v1810 = vmul.f32 %v1586, %v1279
    %v1811 = vmul.f32 %v1587, %v1279
    %v1812 = vmul.f32 %v1588, %v1279
    %v1813 = vmul.f32 %v1589, %v1279
    %v1814 = vmul.f32 %v1590, %v1279
    %v1815 = vmul.f32 %v1591, %v1279
    %v1816 = vmul.f32 %v1592, %v1279
    %1817 = vadd.xlane.f32.xlu0 %v1785
    %v1818 = vpop.xlane.xlu0 %1817
    %1819 = vadd.xlane.f32.xlu0 %v1786
    %v1820 = vpop.xlane.xlu0 %1819
    %1821 = vadd.xlane.f32.xlu0 %v1787
    %v1822 = vpop.xlane.xlu0 %1821
    %1823 = vadd.xlane.f32.xlu0 %v1788
    %v1824 = vpop.xlane.xlu0 %1823
    %1825 = vadd.xlane.f32.xlu0 %v1789
    %v1826 = vpop.xlane.xlu0 %1825
    %1827 = vadd.xlane.f32.xlu0 %v1790
    %v1828 = vpop.xlane.xlu0 %1827
    %1829 = vadd.xlane.f32.xlu0 %v1791
    %v1830 = vpop.xlane.xlu0 %1829
    %1831 = vadd.xlane.f32.xlu0 %v1792
    %v1832 = vpop.xlane.xlu0 %1831
    %1833 = vadd.xlane.f32.xlu0 %v1793
    %v1834 = vpop.xlane.xlu0 %1833
    %1835 = vadd.xlane.f32.xlu0 %v1794
    %v1836 = vpop.xlane.xlu0 %1835
    %1837 = vadd.xlane.f32.xlu0 %v1795
    %v1838 = vpop.xlane.xlu0 %1837
    %1839 = vadd.xlane.f32.xlu0 %v1796
    %v1840 = vpop.xlane.xlu0 %1839
    %1841 = vadd.xlane.f32.xlu0 %v1797
    %v1842 = vpop.xlane.xlu0 %1841
    %1843 = vadd.xlane.f32.xlu0 %v1798
    %v1844 = vpop.xlane.xlu0 %1843
    %1845 = vadd.xlane.f32.xlu0 %v1799
    %v1846 = vpop.xlane.xlu0 %1845
    %1847 = vadd.xlane.f32.xlu0 %v1800
    %v1848 = vpop.xlane.xlu0 %1847
    %1849 = vadd.xlane.f32.xlu0 %v1801
    %v1850 = vpop.xlane.xlu0 %1849
    %1851 = vadd.xlane.f32.xlu0 %v1802
    %v1852 = vpop.xlane.xlu0 %1851
    %1853 = vadd.xlane.f32.xlu0 %v1803
    %v1854 = vpop.xlane.xlu0 %1853
    %1855 = vadd.xlane.f32.xlu0 %v1804
    %v1856 = vpop.xlane.xlu0 %1855
    %1857 = vadd.xlane.f32.xlu0 %v1805
    %v1858 = vpop.xlane.xlu0 %1857
    %1859 = vadd.xlane.f32.xlu0 %v1806
    %v1860 = vpop.xlane.xlu0 %1859
    %1861 = vadd.xlane.f32.xlu0 %v1807
    %v1862 = vpop.xlane.xlu0 %1861
    %1863 = vadd.xlane.f32.xlu0 %v1808
    %v1864 = vpop.xlane.xlu0 %1863
    %1865 = vadd.xlane.f32.xlu0 %v1809
    %v1866 = vpop.xlane.xlu0 %1865
    %1867 = vadd.xlane.f32.xlu0 %v1810
    %v1868 = vpop.xlane.xlu0 %1867
    %1869 = vadd.xlane.f32.xlu0 %v1811
    %v1870 = vpop.xlane.xlu0 %1869
    %1871 = vadd.xlane.f32.xlu0 %v1812
    %v1872 = vpop.xlane.xlu0 %1871
    %1873 = vadd.xlane.f32.xlu0 %v1813
    %v1874 = vpop.xlane.xlu0 %1873
    %1875 = vadd.xlane.f32.xlu0 %v1814
    %v1876 = vpop.xlane.xlu0 %1875
    %1877 = vadd.xlane.f32.xlu0 %v1815
    %v1878 = vpop.xlane.xlu0 %1877
    %1879 = vadd.xlane.f32.xlu0 %v1816
    %v1880 = vpop.xlane.xlu0 %1879
    %v1881 = vmul.f32 %v1561, %v1376
    %v1882 = vmul.f32 %v1562, %v1376
    %v1883 = vmul.f32 %v1563, %v1376
    %v1884 = vmul.f32 %v1564, %v1376
    %v1885 = vmul.f32 %v1565, %v1376
    %v1886 = vmul.f32 %v1566, %v1376
    %v1887 = vmul.f32 %v1567, %v1376
    %v1888 = vmul.f32 %v1568, %v1376
    %v1889 = vmul.f32 %v1569, %v1376
    %v1890 = vmul.f32 %v1570, %v1376
    %v1891 = vmul.f32 %v1571, %v1376
    %v1892 = vmul.f32 %v1572, %v1376
    %v1893 = vmul.f32 %v1573, %v1376
    %v1894 = vmul.f32 %v1574, %v1376
    %v1895 = vmul.f32 %v1575, %v1376
    %v1896 = vmul.f32 %v1576, %v1376
    %v1897 = vmul.f32 %v1577, %v1376
    %v1898 = vmul.f32 %v1578, %v1376
    %v1899 = vmul.f32 %v1579, %v1376
    %v1900 = vmul.f32 %v1580, %v1376
    %v1901 = vmul.f32 %v1581, %v1376
    %v1902 = vmul.f32 %v1582, %v1376
    %v1903 = vmul.f32 %v1583, %v1376
    %v1904 = vmul.f32 %v1584, %v1376
    %v1905 = vmul.f32 %v1585, %v1376
    %v1906 = vmul.f32 %v1586, %v1376
    %v1907 = vmul.f32 %v1587, %v1376
    %v1908 = vmul.f32 %v1588, %v1376
    %v1909 = vmul.f32 %v1589, %v1376
    %v1910 = vmul.f32 %v1590, %v1376
    %v1911 = vmul.f32 %v1591, %v1376
    %v1912 = vmul.f32 %v1592, %v1376
    %1913 = vadd.xlane.f32.xlu0 %v1881
    %v1914 = vpop.xlane.xlu0 %1913
    %1915 = vadd.xlane.f32.xlu0 %v1882
    %v1916 = vpop.xlane.xlu0 %1915
    %1917 = vadd.xlane.f32.xlu0 %v1883
    %v1918 = vpop.xlane.xlu0 %1917
    %1919 = vadd.xlane.f32.xlu0 %v1884
    %v1920 = vpop.xlane.xlu0 %1919
    %1921 = vadd.xlane.f32.xlu0 %v1885
    %v1922 = vpop.xlane.xlu0 %1921
    %1923 = vadd.xlane.f32.xlu0 %v1886
    %v1924 = vpop.xlane.xlu0 %1923
    %1925 = vadd.xlane.f32.xlu0 %v1887
    %v1926 = vpop.xlane.xlu0 %1925
    %1927 = vadd.xlane.f32.xlu0 %v1888
    %v1928 = vpop.xlane.xlu0 %1927
    %1929 = vadd.xlane.f32.xlu0 %v1889
    %v1930 = vpop.xlane.xlu0 %1929
    %1931 = vadd.xlane.f32.xlu0 %v1890
    %v1932 = vpop.xlane.xlu0 %1931
    %1933 = vadd.xlane.f32.xlu0 %v1891
    %v1934 = vpop.xlane.xlu0 %1933
    %1935 = vadd.xlane.f32.xlu0 %v1892
    %v1936 = vpop.xlane.xlu0 %1935
    %1937 = vadd.xlane.f32.xlu0 %v1893
    %v1938 = vpop.xlane.xlu0 %1937
    %1939 = vadd.xlane.f32.xlu0 %v1894
    %v1940 = vpop.xlane.xlu0 %1939
    %1941 = vadd.xlane.f32.xlu0 %v1895
    %v1942 = vpop.xlane.xlu0 %1941
    %1943 = vadd.xlane.f32.xlu0 %v1896
    %v1944 = vpop.xlane.xlu0 %1943
    %1945 = vadd.xlane.f32.xlu0 %v1897
    %v1946 = vpop.xlane.xlu0 %1945
    %1947 = vadd.xlane.f32.xlu0 %v1898
    %v1948 = vpop.xlane.xlu0 %1947
    %1949 = vadd.xlane.f32.xlu0 %v1899
    %v1950 = vpop.xlane.xlu0 %1949
    %1951 = vadd.xlane.f32.xlu0 %v1900
    %v1952 = vpop.xlane.xlu0 %1951
    %1953 = vadd.xlane.f32.xlu0 %v1901
    %v1954 = vpop.xlane.xlu0 %1953
    %1955 = vadd.xlane.f32.xlu0 %v1902
    %v1956 = vpop.xlane.xlu0 %1955
    %1957 = vadd.xlane.f32.xlu0 %v1903
    %v1958 = vpop.xlane.xlu0 %1957
    %1959 = vadd.xlane.f32.xlu0 %v1904
    %v1960 = vpop.xlane.xlu0 %1959
    %1961 = vadd.xlane.f32.xlu0 %v1905
    %v1962 = vpop.xlane.xlu0 %1961
    %1963 = vadd.xlane.f32.xlu0 %v1906
    %v1964 = vpop.xlane.xlu0 %1963
    %1965 = vadd.xlane.f32.xlu0 %v1907
    %v1966 = vpop.xlane.xlu0 %1965
    %1967 = vadd.xlane.f32.xlu0 %v1908
    %v1968 = vpop.xlane.xlu0 %1967
    %1969 = vadd.xlane.f32.xlu0 %v1909
    %v1970 = vpop.xlane.xlu0 %1969
    %1971 = vadd.xlane.f32.xlu0 %v1910
    %v1972 = vpop.xlane.xlu0 %1971
    %1973 = vadd.xlane.f32.xlu0 %v1911
    %v1974 = vpop.xlane.xlu0 %1973
    %1975 = vadd.xlane.f32.xlu0 %v1912
    %v1976 = vpop.xlane.xlu0 %1975
    %v1978 = vrot.slane %v942, 1
    %v1979 = vrot.slane %v942, 2
    %v1980 = vrot.slane %v942, 3
    %v1981 = vrot.slane %v942, 4
    %v1982 = vrot.slane %v942, 5
    %v1983 = vrot.slane %v942, 6
    %v1984 = vrot.slane %v942, 7
    %v1985 = vperm.slane %v942, 0
    %v1986 = vperm.slane %v1978, 0
    %v1987 = vperm.slane %v1979, 0
    %v1988 = vperm.slane %v1980, 0
    %v1989 = vperm.slane %v1981, 0
    %v1990 = vperm.slane %v1982, 0
    %v1991 = vperm.slane %v1983, 0
    %v1992 = vperm.slane %v1984, 0
    %v2001 = vadd.f32 %v1985, %v960
    %v2002 = vadd.f32 %v1985, %v961
    %v2003 = vadd.f32 %v1985, %v962
    %v2004 = vadd.f32 %v1985, %v963
    %v2005 = vadd.f32 %v1986, %v960
    %v2006 = vadd.f32 %v1986, %v961
    %v2007 = vadd.f32 %v1986, %v962
    %v2008 = vadd.f32 %v1986, %v963
    %v2009 = vadd.f32 %v1987, %v960
    %v2010 = vadd.f32 %v1987, %v961
    %v2011 = vadd.f32 %v1987, %v962
    %v2012 = vadd.f32 %v1987, %v963
    %v2013 = vadd.f32 %v1988, %v960
    %v2014 = vadd.f32 %v1988, %v961
    %v2015 = vadd.f32 %v1988, %v962
    %v2016 = vadd.f32 %v1988, %v963
    %v2017 = vadd.f32 %v1989, %v960
    %v2018 = vadd.f32 %v1989, %v961
    %v2019 = vadd.f32 %v1989, %v962
    %v2020 = vadd.f32 %v1989, %v963
    %v2021 = vadd.f32 %v1990, %v960
    %v2022 = vadd.f32 %v1990, %v961
    %v2023 = vadd.f32 %v1990, %v962
    %v2024 = vadd.f32 %v1990, %v963
    %v2025 = vadd.f32 %v1991, %v960
    %v2026 = vadd.f32 %v1991, %v961
    %v2027 = vadd.f32 %v1991, %v962
    %v2028 = vadd.f32 %v1991, %v963
    %v2029 = vadd.f32 %v1992, %v960
    %v2030 = vadd.f32 %v1992, %v961
    %v2031 = vadd.f32 %v1992, %v962
    %v2032 = vadd.f32 %v1992, %v963
    %v2033 = vmul.f32 %v2001, 0.2
    %v2034 = vmul.f32 %v2002, 0.2
    %v2035 = vmul.f32 %v2003, 0.2
    %v2036 = vmul.f32 %v2004, 0.2
    %v2037 = vmul.f32 %v2005, 0.2
    %v2038 = vmul.f32 %v2006, 0.2
    %v2039 = vmul.f32 %v2007, 0.2
    %v2040 = vmul.f32 %v2008, 0.2
    %v2041 = vmul.f32 %v2009, 0.2
    %v2042 = vmul.f32 %v2010, 0.2
    %v2043 = vmul.f32 %v2011, 0.2
    %v2044 = vmul.f32 %v2012, 0.2
    %v2045 = vmul.f32 %v2013, 0.2
    %v2046 = vmul.f32 %v2014, 0.2
    %v2047 = vmul.f32 %v2015, 0.2
    %v2048 = vmul.f32 %v2016, 0.2
    %v2049 = vmul.f32 %v2017, 0.2
    %v2050 = vmul.f32 %v2018, 0.2
    %v2051 = vmul.f32 %v2019, 0.2
    %v2052 = vmul.f32 %v2020, 0.2
    %v2053 = vmul.f32 %v2021, 0.2
    %v2054 = vmul.f32 %v2022, 0.2
    %v2055 = vmul.f32 %v2023, 0.2
    %v2056 = vmul.f32 %v2024, 0.2
    %v2057 = vmul.f32 %v2025, 0.2
    %v2058 = vmul.f32 %v2026, 0.2
    %v2059 = vmul.f32 %v2027, 0.2
    %v2060 = vmul.f32 %v2028, 0.2
    %v2061 = vmul.f32 %v2029, 0.2
    %v2062 = vmul.f32 %v2030, 0.2
    %v2063 = vmul.f32 %v2031, 0.2
    %v2064 = vmul.f32 %v2032, 0.2
    %v2065 = vmax.f32 %v2001, %v2033
    %v2066 = vmax.f32 %v2002, %v2034
    %v2067 = vmax.f32 %v2003, %v2035
    %v2068 = vmax.f32 %v2004, %v2036
    %v2069 = vmax.f32 %v2005, %v2037
    %v2070 = vmax.f32 %v2006, %v2038
    %v2071 = vmax.f32 %v2007, %v2039
    %v2072 = vmax.f32 %v2008, %v2040
    %v2073 = vmax.f32 %v2009, %v2041
    %v2074 = vmax.f32 %v2010, %v2042
    %v2075 = vmax.f32 %v2011, %v2043
    %v2076 = vmax.f32 %v2012, %v2044
    %v2077 = vmax.f32 %v2013, %v2045
    %v2078 = vmax.f32 %v2014, %v2046
    %v2079 = vmax.f32 %v2015, %v2047
    %v2080 = vmax.f32 %v2016, %v2048
    %v2081 = vmax.f32 %v2017, %v2049
    %v2082 = vmax.f32 %v2018, %v2050
    %v2083 = vmax.f32 %v2019, %v2051
    %v2084 = vmax.f32 %v2020, %v2052
    %v2085 = vmax.f32 %v2021, %v2053
    %v2086 = vmax.f32 %v2022, %v2054
    %v2087 = vmax.f32 %v2023, %v2055
    %v2088 = vmax.f32 %v2024, %v2056
    %v2089 = vmax.f32 %v2025, %v2057
    %v2090 = vmax.f32 %v2026, %v2058
    %v2091 = vmax.f32 %v2027, %v2059
    %v2092 = vmax.f32 %v2028, %v2060
    %v2093 = vmax.f32 %v2029, %v2061
    %v2094 = vmax.f32 %v2030, %v2062
    %v2095 = vmax.f32 %v2031, %v2063
    %v2096 = vmax.f32 %v2032, %v2064
    %v2097 = vmul.f32 %v2065, %v1085
    %v2098 = vmul.f32 %v2066, %v1085
    %v2099 = vmul.f32 %v2067, %v1085
    %v2100 = vmul.f32 %v2068, %v1085
    %v2101 = vmul.f32 %v2069, %v1085
    %v2102 = vmul.f32 %v2070, %v1085
    %v2103 = vmul.f32 %v2071, %v1085
    %v2104 = vmul.f32 %v2072, %v1085
    %v2105 = vmul.f32 %v2073, %v1085
    %v2106 = vmul.f32 %v2074, %v1085
    %v2107 = vmul.f32 %v2075, %v1085
    %v2108 = vmul.f32 %v2076, %v1085
    %v2109 = vmul.f32 %v2077, %v1085
    %v2110 = vmul.f32 %v2078, %v1085
    %v2111 = vmul.f32 %v2079, %v1085
    %v2112 = vmul.f32 %v2080, %v1085
    %v2113 = vmul.f32 %v2081, %v1085
    %v2114 = vmul.f32 %v2082, %v1085
    %v2115 = vmul.f32 %v2083, %v1085
    %v2116 = vmul.f32 %v2084, %v1085
    %v2117 = vmul.f32 %v2085, %v1085
    %v2118 = vmul.f32 %v2086, %v1085
    %v2119 = vmul.f32 %v2087, %v1085
    %v2120 = vmul.f32 %v2088, %v1085
    %v2121 = vmul.f32 %v2089, %v1085
    %v2122 = vmul.f32 %v2090, %v1085
    %v2123 = vmul.f32 %v2091, %v1085
    %v2124 = vmul.f32 %v2092, %v1085
    %v2125 = vmul.f32 %v2093, %v1085
    %v2126 = vmul.f32 %v2094, %v1085
    %v2127 = vmul.f32 %v2095, %v1085
    %v2128 = vmul.f32 %v2096, %v1085
    %2129 = vadd.xlane.f32.xlu0 %v2097
    %v2130 = vpop.xlane.xlu0 %2129
    %2131 = vadd.xlane.f32.xlu0 %v2098
    %v2132 = vpop.xlane.xlu0 %2131
    %2133 = vadd.xlane.f32.xlu0 %v2099
    %v2134 = vpop.xlane.xlu0 %2133
    %2135 = vadd.xlane.f32.xlu0 %v2100
    %v2136 = vpop.xlane.xlu0 %2135
    %2137 = vadd.xlane.f32.xlu0 %v2101
    %v2138 = vpop.xlane.xlu0 %2137
    %2139 = vadd.xlane.f32.xlu0 %v2102
    %v2140 = vpop.xlane.xlu0 %2139
    %2141 = vadd.xlane.f32.xlu0 %v2103
    %v2142 = vpop.xlane.xlu0 %2141
    %2143 = vadd.xlane.f32.xlu0 %v2104
    %v2144 = vpop.xlane.xlu0 %2143
    %2145 = vadd.xlane.f32.xlu0 %v2105
    %v2146 = vpop.xlane.xlu0 %2145
    %2147 = vadd.xlane.f32.xlu0 %v2106
    %v2148 = vpop.xlane.xlu0 %2147
    %2149 = vadd.xlane.f32.xlu0 %v2107
    %v2150 = vpop.xlane.xlu0 %2149
    %2151 = vadd.xlane.f32.xlu0 %v2108
    %v2152 = vpop.xlane.xlu0 %2151
    %2153 = vadd.xlane.f32.xlu0 %v2109
    %v2154 = vpop.xlane.xlu0 %2153
    %2155 = vadd.xlane.f32.xlu0 %v2110
    %v2156 = vpop.xlane.xlu0 %2155
    %2157 = vadd.xlane.f32.xlu0 %v2111
    %v2158 = vpop.xlane.xlu0 %2157
    %2159 = vadd.xlane.f32.xlu0 %v2112
    %v2160 = vpop.xlane.xlu0 %2159
    %2161 = vadd.xlane.f32.xlu0 %v2113
    %v2162 = vpop.xlane.xlu0 %2161
    %2163 = vadd.xlane.f32.xlu0 %v2114
    %v2164 = vpop.xlane.xlu0 %2163
    %2165 = vadd.xlane.f32.xlu0 %v2115
    %v2166 = vpop.xlane.xlu0 %2165
    %2167 = vadd.xlane.f32.xlu0 %v2116
    %v2168 = vpop.xlane.xlu0 %2167
    %2169 = vadd.xlane.f32.xlu0 %v2117
    %v2170 = vpop.xlane.xlu0 %2169
    %2171 = vadd.xlane.f32.xlu0 %v2118
    %v2172 = vpop.xlane.xlu0 %2171
    %2173 = vadd.xlane.f32.xlu0 %v2119
    %v2174 = vpop.xlane.xlu0 %2173
    %2175 = vadd.xlane.f32.xlu0 %v2120
    %v2176 = vpop.xlane.xlu0 %2175
    %2177 = vadd.xlane.f32.xlu0 %v2121
    %v2178 = vpop.xlane.xlu0 %2177
    %2179 = vadd.xlane.f32.xlu0 %v2122
    %v2180 = vpop.xlane.xlu0 %2179
    %2181 = vadd.xlane.f32.xlu0 %v2123
    %v2182 = vpop.xlane.xlu0 %2181
    %2183 = vadd.xlane.f32.xlu0 %v2124
    %v2184 = vpop.xlane.xlu0 %2183
    %2185 = vadd.xlane.f32.xlu0 %v2125
    %v2186 = vpop.xlane.xlu0 %2185
    %2187 = vadd.xlane.f32.xlu0 %v2126
    %v2188 = vpop.xlane.xlu0 %2187
    %2189 = vadd.xlane.f32.xlu0 %v2127
    %v2190 = vpop.xlane.xlu0 %2189
    %2191 = vadd.xlane.f32.xlu0 %v2128
    %v2192 = vpop.xlane.xlu0 %2191
    %v2193 = vmul.f32 %v2065, %v1182
    %v2194 = vmul.f32 %v2066, %v1182
    %v2195 = vmul.f32 %v2067, %v1182
    %v2196 = vmul.f32 %v2068, %v1182
    %v2197 = vmul.f32 %v2069, %v1182
    %v2198 = vmul.f32 %v2070, %v1182
    %v2199 = vmul.f32 %v2071, %v1182
    %v2200 = vmul.f32 %v2072, %v1182
    %v2201 = vmul.f32 %v2073, %v1182
    %v2202 = vmul.f32 %v2074, %v1182
    %v2203 = vmul.f32 %v2075, %v1182
    %v2204 = vmul.f32 %v2076, %v1182
    %v2205 = vmul.f32 %v2077, %v1182
    %v2206 = vmul.f32 %v2078, %v1182
    %v2207 = vmul.f32 %v2079, %v1182
    %v2208 = vmul.f32 %v2080, %v1182
    %v2209 = vmul.f32 %v2081, %v1182
    %v2210 = vmul.f32 %v2082, %v1182
    %v2211 = vmul.f32 %v2083, %v1182
    %v2212 = vmul.f32 %v2084, %v1182
    %v2213 = vmul.f32 %v2085, %v1182
    %v2214 = vmul.f32 %v2086, %v1182
    %v2215 = vmul.f32 %v2087, %v1182
    %v2216 = vmul.f32 %v2088, %v1182
    %v2217 = vmul.f32 %v2089, %v1182
    %v2218 = vmul.f32 %v2090, %v1182
    %v2219 = vmul.f32 %v2091, %v1182
    %v2220 = vmul.f32 %v2092, %v1182
    %v2221 = vmul.f32 %v2093, %v1182
    %v2222 = vmul.f32 %v2094, %v1182
    %v2223 = vmul.f32 %v2095, %v1182
    %v2224 = vmul.f32 %v2096, %v1182
    %2225 = vadd.xlane.f32.xlu0 %v2193
    %v2226 = vpop.xlane.xlu0 %2225
    %2227 = vadd.xlane.f32.xlu0 %v2194
    %v2228 = vpop.xlane.xlu0 %2227
    %2229 = vadd.xlane.f32.xlu0 %v2195
    %v2230 = vpop.xlane.xlu0 %2229
    %2231 = vadd.xlane.f32.xlu0 %v2196
    %v2232 = vpop.xlane.xlu0 %2231
    %2233 = vadd.xlane.f32.xlu0 %v2197
    %v2234 = vpop.xlane.xlu0 %2233
    %2235 = vadd.xlane.f32.xlu0 %v2198
    %v2236 = vpop.xlane.xlu0 %2235
    %2237 = vadd.xlane.f32.xlu0 %v2199
    %v2238 = vpop.xlane.xlu0 %2237
    %2239 = vadd.xlane.f32.xlu0 %v2200
    %v2240 = vpop.xlane.xlu0 %2239
    %2241 = vadd.xlane.f32.xlu0 %v2201
    %v2242 = vpop.xlane.xlu0 %2241
    %2243 = vadd.xlane.f32.xlu0 %v2202
    %v2244 = vpop.xlane.xlu0 %2243
    %2245 = vadd.xlane.f32.xlu0 %v2203
    %v2246 = vpop.xlane.xlu0 %2245
    %2247 = vadd.xlane.f32.xlu0 %v2204
    %v2248 = vpop.xlane.xlu0 %2247
    %2249 = vadd.xlane.f32.xlu0 %v2205
    %v2250 = vpop.xlane.xlu0 %2249
    %2251 = vadd.xlane.f32.xlu0 %v2206
    %v2252 = vpop.xlane.xlu0 %2251
    %2253 = vadd.xlane.f32.xlu0 %v2207
    %v2254 = vpop.xlane.xlu0 %2253
    %2255 = vadd.xlane.f32.xlu0 %v2208
    %v2256 = vpop.xlane.xlu0 %2255
    %2257 = vadd.xlane.f32.xlu0 %v2209
    %v2258 = vpop.xlane.xlu0 %2257
    %2259 = vadd.xlane.f32.xlu0 %v2210
    %v2260 = vpop.xlane.xlu0 %2259
    %2261 = vadd.xlane.f32.xlu0 %v2211
    %v2262 = vpop.xlane.xlu0 %2261
    %2263 = vadd.xlane.f32.xlu0 %v2212
    %v2264 = vpop.xlane.xlu0 %2263
    %2265 = vadd.xlane.f32.xlu0 %v2213
    %v2266 = vpop.xlane.xlu0 %2265
    %2267 = vadd.xlane.f32.xlu0 %v2214
    %v2268 = vpop.xlane.xlu0 %2267
    %2269 = vadd.xlane.f32.xlu0 %v2215
    %v2270 = vpop.xlane.xlu0 %2269
    %2271 = vadd.xlane.f32.xlu0 %v2216
    %v2272 = vpop.xlane.xlu0 %2271
    %2273 = vadd.xlane.f32.xlu0 %v2217
    %v2274 = vpop.xlane.xlu0 %2273
    %2275 = vadd.xlane.f32.xlu0 %v2218
    %v2276 = vpop.xlane.xlu0 %2275
    %2277 = vadd.xlane.f32.xlu0 %v2219
    %v2278 = vpop.xlane.xlu0 %2277
    %2279 = vadd.xlane.f32.xlu0 %v2220
    %v2280 = vpop.xlane.xlu0 %2279
    %2281 = vadd.xlane.f32.xlu0 %v2221
    %v2282 = vpop.xlane.xlu0 %2281
    %2283 = vadd.xlane.f32.xlu0 %v2222
    %v2284 = vpop.xlane.xlu0 %2283
    %2285 = vadd.xlane.f32.xlu0 %v2223
    %v2286 = vpop.xlane.xlu0 %2285
    %2287 = vadd.xlane.f32.xlu0 %v2224
    %v2288 = vpop.xlane.xlu0 %2287
    %v2289 = vmul.f32 %v2065, %v1279
    %v2290 = vmul.f32 %v2066, %v1279
    %v2291 = vmul.f32 %v2067, %v1279
    %v2292 = vmul.f32 %v2068, %v1279
    %v2293 = vmul.f32 %v2069, %v1279
    %v2294 = vmul.f32 %v2070, %v1279
    %v2295 = vmul.f32 %v2071, %v1279
    %v2296 = vmul.f32 %v2072, %v1279
    %v2297 = vmul.f32 %v2073, %v1279
    %v2298 = vmul.f32 %v2074, %v1279
    %v2299 = vmul.f32 %v2075, %v1279
    %v2300 = vmul.f32 %v2076, %v1279
    %v2301 = vmul.f32 %v2077, %v1279
    %v2302 = vmul.f32 %v2078, %v1279
    %v2303 = vmul.f32 %v2079, %v1279
    %v2304 = vmul.f32 %v2080, %v1279
    %v2305 = vmul.f32 %v2081, %v1279
    %v2306 = vmul.f32 %v2082, %v1279
    %v2307 = vmul.f32 %v2083, %v1279
    %v2308 = vmul.f32 %v2084, %v1279
    %v2309 = vmul.f32 %v2085, %v1279
    %v2310 = vmul.f32 %v2086, %v1279
    %v2311 = vmul.f32 %v2087, %v1279
    %v2312 = vmul.f32 %v2088, %v1279
    %v2313 = vmul.f32 %v2089, %v1279
    %v2314 = vmul.f32 %v2090, %v1279
    %v2315 = vmul.f32 %v2091, %v1279
    %v2316 = vmul.f32 %v2092, %v1279
    %v2317 = vmul.f32 %v2093, %v1279
    %v2318 = vmul.f32 %v2094, %v1279
    %v2319 = vmul.f32 %v2095, %v1279
    %v2320 = vmul.f32 %v2096, %v1279
    %2321 = vadd.xlane.f32.xlu0 %v2289
    %v2322 = vpop.xlane.xlu0 %2321
    %2323 = vadd.xlane.f32.xlu0 %v2290
    %v2324 = vpop.xlane.xlu0 %2323
    %2325 = vadd.xlane.f32.xlu0 %v2291
    %v2326 = vpop.xlane.xlu0 %2325
    %2327 = vadd.xlane.f32.xlu0 %v2292
    %v2328 = vpop.xlane.xlu0 %2327
    %2329 = vadd.xlane.f32.xlu0 %v2293
    %v2330 = vpop.xlane.xlu0 %2329
    %2331 = vadd.xlane.f32.xlu0 %v2294
    %v2332 = vpop.xlane.xlu0 %2331
    %2333 = vadd.xlane.f32.xlu0 %v2295
    %v2334 = vpop.xlane.xlu0 %2333
    %2335 = vadd.xlane.f32.xlu0 %v2296
    %v2336 = vpop.xlane.xlu0 %2335
    %2337 = vadd.xlane.f32.xlu0 %v2297
    %v2338 = vpop.xlane.xlu0 %2337
    %2339 = vadd.xlane.f32.xlu0 %v2298
    %v2340 = vpop.xlane.xlu0 %2339
    %2341 = vadd.xlane.f32.xlu0 %v2299
    %v2342 = vpop.xlane.xlu0 %2341
    %2343 = vadd.xlane.f32.xlu0 %v2300
    %v2344 = vpop.xlane.xlu0 %2343
    %2345 = vadd.xlane.f32.xlu0 %v2301
    %v2346 = vpop.xlane.xlu0 %2345
    %2347 = vadd.xlane.f32.xlu0 %v2302
    %v2348 = vpop.xlane.xlu0 %2347
    %2349 = vadd.xlane.f32.xlu0 %v2303
    %v2350 = vpop.xlane.xlu0 %2349
    %2351 = vadd.xlane.f32.xlu0 %v2304
    %v2352 = vpop.xlane.xlu0 %2351
    %2353 = vadd.xlane.f32.xlu0 %v2305
    %v2354 = vpop.xlane.xlu0 %2353
    %2355 = vadd.xlane.f32.xlu0 %v2306
    %v2356 = vpop.xlane.xlu0 %2355
    %2357 = vadd.xlane.f32.xlu0 %v2307
    %v2358 = vpop.xlane.xlu0 %2357
    %2359 = vadd.xlane.f32.xlu0 %v2308
    %v2360 = vpop.xlane.xlu0 %2359
    %2361 = vadd.xlane.f32.xlu0 %v2309
    %v2362 = vpop.xlane.xlu0 %2361
    %2363 = vadd.xlane.f32.xlu0 %v2310
    %v2364 = vpop.xlane.xlu0 %2363
    %2365 = vadd.xlane.f32.xlu0 %v2311
    %v2366 = vpop.xlane.xlu0 %2365
    %2367 = vadd.xlane.f32.xlu0 %v2312
    %v2368 = vpop.xlane.xlu0 %2367
    %2369 = vadd.xlane.f32.xlu0 %v2313
    %v2370 = vpop.xlane.xlu0 %2369
    %2371 = vadd.xlane.f32.xlu0 %v2314
    %v2372 = vpop.xlane.xlu0 %2371
    %2373 = vadd.xlane.f32.xlu0 %v2315
    %v2374 = vpop.xlane.xlu0 %2373
    %2375 = vadd.xlane.f32.xlu0 %v2316
    %v2376 = vpop.xlane.xlu0 %2375
    %2377 = vadd.xlane.f32.xlu0 %v2317
    %v2378 = vpop.xlane.xlu0 %2377
    %2379 = vadd.xlane.f32.xlu0 %v2318
    %v2380 = vpop.xlane.xlu0 %2379
    %2381 = vadd.xlane.f32.xlu0 %v2319
    %v2382 = vpop.xlane.xlu0 %2381
    %2383 = vadd.xlane.f32.xlu0 %v2320
    %v2384 = vpop.xlane.xlu0 %2383
    %v2385 = vmul.f32 %v2065, %v1376
    %v2386 = vmul.f32 %v2066, %v1376
    %v2387 = vmul.f32 %v2067, %v1376
    %v2388 = vmul.f32 %v2068, %v1376
    %v2389 = vmul.f32 %v2069, %v1376
    %v2390 = vmul.f32 %v2070, %v1376
    %v2391 = vmul.f32 %v2071, %v1376
    %v2392 = vmul.f32 %v2072, %v1376
    %v2393 = vmul.f32 %v2073, %v1376
    %v2394 = vmul.f32 %v2074, %v1376
    %v2395 = vmul.f32 %v2075, %v1376
    %v2396 = vmul.f32 %v2076, %v1376
    %v2397 = vmul.f32 %v2077, %v1376
    %v2398 = vmul.f32 %v2078, %v1376
    %v2399 = vmul.f32 %v2079, %v1376
    %v2400 = vmul.f32 %v2080, %v1376
    %v2401 = vmul.f32 %v2081, %v1376
    %v2402 = vmul.f32 %v2082, %v1376
    %v2403 = vmul.f32 %v2083, %v1376
    %v2404 = vmul.f32 %v2084, %v1376
    %v2405 = vmul.f32 %v2085, %v1376
    %v2406 = vmul.f32 %v2086, %v1376
    %v2407 = vmul.f32 %v2087, %v1376
    %v2408 = vmul.f32 %v2088, %v1376
    %v2409 = vmul.f32 %v2089, %v1376
    %v2410 = vmul.f32 %v2090, %v1376
    %v2411 = vmul.f32 %v2091, %v1376
    %v2412 = vmul.f32 %v2092, %v1376
    %v2413 = vmul.f32 %v2093, %v1376
    %v2414 = vmul.f32 %v2094, %v1376
    %v2415 = vmul.f32 %v2095, %v1376
    %v2416 = vmul.f32 %v2096, %v1376
    %2417 = vadd.xlane.f32.xlu0 %v2385
    %v2418 = vpop.xlane.xlu0 %2417
    %2419 = vadd.xlane.f32.xlu0 %v2386
    %v2420 = vpop.xlane.xlu0 %2419
    %2421 = vadd.xlane.f32.xlu0 %v2387
    %v2422 = vpop.xlane.xlu0 %2421
    %2423 = vadd.xlane.f32.xlu0 %v2388
    %v2424 = vpop.xlane.xlu0 %2423
    %2425 = vadd.xlane.f32.xlu0 %v2389
    %v2426 = vpop.xlane.xlu0 %2425
    %2427 = vadd.xlane.f32.xlu0 %v2390
    %v2428 = vpop.xlane.xlu0 %2427
    %2429 = vadd.xlane.f32.xlu0 %v2391
    %v2430 = vpop.xlane.xlu0 %2429
    %2431 = vadd.xlane.f32.xlu0 %v2392
    %v2432 = vpop.xlane.xlu0 %2431
    %2433 = vadd.xlane.f32.xlu0 %v2393
    %v2434 = vpop.xlane.xlu0 %2433
    %2435 = vadd.xlane.f32.xlu0 %v2394
    %v2436 = vpop.xlane.xlu0 %2435
    %2437 = vadd.xlane.f32.xlu0 %v2395
    %v2438 = vpop.xlane.xlu0 %2437
    %2439 = vadd.xlane.f32.xlu0 %v2396
    %v2440 = vpop.xlane.xlu0 %2439
    %2441 = vadd.xlane.f32.xlu0 %v2397
    %v2442 = vpop.xlane.xlu0 %2441
    %2443 = vadd.xlane.f32.xlu0 %v2398
    %v2444 = vpop.xlane.xlu0 %2443
    %2445 = vadd.xlane.f32.xlu0 %v2399
    %v2446 = vpop.xlane.xlu0 %2445
    %2447 = vadd.xlane.f32.xlu0 %v2400
    %v2448 = vpop.xlane.xlu0 %2447
    %2449 = vadd.xlane.f32.xlu0 %v2401
    %v2450 = vpop.xlane.xlu0 %2449
    %2451 = vadd.xlane.f32.xlu0 %v2402
    %v2452 = vpop.xlane.xlu0 %2451
    %2453 = vadd.xlane.f32.xlu0 %v2403
    %v2454 = vpop.xlane.xlu0 %2453
    %2455 = vadd.xlane.f32.xlu0 %v2404
    %v2456 = vpop.xlane.xlu0 %2455
    %2457 = vadd.xlane.f32.xlu0 %v2405
    %v2458 = vpop.xlane.xlu0 %2457
    %2459 = vadd.xlane.f32.xlu0 %v2406
    %v2460 = vpop.xlane.xlu0 %2459
    %2461 = vadd.xlane.f32.xlu0 %v2407
    %v2462 = vpop.xlane.xlu0 %2461
    %2463 = vadd.xlane.f32.xlu0 %v2408
    %v2464 = vpop.xlane.xlu0 %2463
    %2465 = vadd.xlane.f32.xlu0 %v2409
    %v2466 = vpop.xlane.xlu0 %2465
    %2467 = vadd.xlane.f32.xlu0 %v2410
    %v2468 = vpop.xlane.xlu0 %2467
    %2469 = vadd.xlane.f32.xlu0 %v2411
    %v2470 = vpop.xlane.xlu0 %2469
    %2471 = vadd.xlane.f32.xlu0 %v2412
    %v2472 = vpop.xlane.xlu0 %2471
    %2473 = vadd.xlane.f32.xlu0 %v2413
    %v2474 = vpop.xlane.xlu0 %2473
    %2475 = vadd.xlane.f32.xlu0 %v2414
    %v2476 = vpop.xlane.xlu0 %2475
    %2477 = vadd.xlane.f32.xlu0 %v2415
    %v2478 = vpop.xlane.xlu0 %2477
    %2479 = vadd.xlane.f32.xlu0 %v2416
    %v2480 = vpop.xlane.xlu0 %2479
    %v2482 = vrot.slane %v943, 1
    %v2483 = vrot.slane %v943, 2
    %v2484 = vrot.slane %v943, 3
    %v2485 = vrot.slane %v943, 4
    %v2486 = vrot.slane %v943, 5
    %v2487 = vrot.slane %v943, 6
    %v2488 = vrot.slane %v943, 7
    %v2489 = vperm.slane %v943, 0
    %v2490 = vperm.slane %v2482, 0
    %v2491 = vperm.slane %v2483, 0
    %v2492 = vperm.slane %v2484, 0
    %v2493 = vperm.slane %v2485, 0
    %v2494 = vperm.slane %v2486, 0
    %v2495 = vperm.slane %v2487, 0
    %v2496 = vperm.slane %v2488, 0
    %v2505 = vadd.f32 %v2489, %v960
    %v2506 = vadd.f32 %v2489, %v961
    %v2507 = vadd.f32 %v2489, %v962
    %v2508 = vadd.f32 %v2489, %v963
    %v2509 = vadd.f32 %v2490, %v960
    %v2510 = vadd.f32 %v2490, %v961
    %v2511 = vadd.f32 %v2490, %v962
    %v2512 = vadd.f32 %v2490, %v963
    %v2513 = vadd.f32 %v2491, %v960
    %v2514 = vadd.f32 %v2491, %v961
    %v2515 = vadd.f32 %v2491, %v962
    %v2516 = vadd.f32 %v2491, %v963
    %v2517 = vadd.f32 %v2492, %v960
    %v2518 = vadd.f32 %v2492, %v961
    %v2519 = vadd.f32 %v2492, %v962
    %v2520 = vadd.f32 %v2492, %v963
    %v2521 = vadd.f32 %v2493, %v960
    %v2522 = vadd.f32 %v2493, %v961
    %v2523 = vadd.f32 %v2493, %v962
    %v2524 = vadd.f32 %v2493, %v963
    %v2525 = vadd.f32 %v2494, %v960
    %v2526 = vadd.f32 %v2494, %v961
    %v2527 = vadd.f32 %v2494, %v962
    %v2528 = vadd.f32 %v2494, %v963
    %v2529 = vadd.f32 %v2495, %v960
    %v2530 = vadd.f32 %v2495, %v961
    %v2531 = vadd.f32 %v2495, %v962
    %v2532 = vadd.f32 %v2495, %v963
    %v2533 = vadd.f32 %v2496, %v960
    %v2534 = vadd.f32 %v2496, %v961
    %v2535 = vadd.f32 %v2496, %v962
    %v2536 = vadd.f32 %v2496, %v963
    %v2537 = vmul.f32 %v2505, 0.2
    %v2538 = vmul.f32 %v2506, 0.2
    %v2539 = vmul.f32 %v2507, 0.2
    %v2540 = vmul.f32 %v2508, 0.2
    %v2541 = vmul.f32 %v2509, 0.2
    %v2542 = vmul.f32 %v2510, 0.2
    %v2543 = vmul.f32 %v2511, 0.2
    %v2544 = vmul.f32 %v2512, 0.2
    %v2545 = vmul.f32 %v2513, 0.2
    %v2546 = vmul.f32 %v2514, 0.2
    %v2547 = vmul.f32 %v2515, 0.2
    %v2548 = vmul.f32 %v2516, 0.2
    %v2549 = vmul.f32 %v2517, 0.2
    %v2550 = vmul.f32 %v2518, 0.2
    %v2551 = vmul.f32 %v2519, 0.2
    %v2552 = vmul.f32 %v2520, 0.2
    %v2553 = vmul.f32 %v2521, 0.2
    %v2554 = vmul.f32 %v2522, 0.2
    %v2555 = vmul.f32 %v2523, 0.2
    %v2556 = vmul.f32 %v2524, 0.2
    %v2557 = vmul.f32 %v2525, 0.2
    %v2558 = vmul.f32 %v2526, 0.2
    %v2559 = vmul.f32 %v2527, 0.2
    %v2560 = vmul.f32 %v2528, 0.2
    %v2561 = vmul.f32 %v2529, 0.2
    %v2562 = vmul.f32 %v2530, 0.2
    %v2563 = vmul.f32 %v2531, 0.2
    %v2564 = vmul.f32 %v2532, 0.2
    %v2565 = vmul.f32 %v2533, 0.2
    %v2566 = vmul.f32 %v2534, 0.2
    %v2567 = vmul.f32 %v2535, 0.2
    %v2568 = vmul.f32 %v2536, 0.2
    %v2569 = vmax.f32 %v2505, %v2537
    %v2570 = vmax.f32 %v2506, %v2538
    %v2571 = vmax.f32 %v2507, %v2539
    %v2572 = vmax.f32 %v2508, %v2540
    %v2573 = vmax.f32 %v2509, %v2541
    %v2574 = vmax.f32 %v2510, %v2542
    %v2575 = vmax.f32 %v2511, %v2543
    %v2576 = vmax.f32 %v2512, %v2544
    %v2577 = vmax.f32 %v2513, %v2545
    %v2578 = vmax.f32 %v2514, %v2546
    %v2579 = vmax.f32 %v2515, %v2547
    %v2580 = vmax.f32 %v2516, %v2548
    %v2581 = vmax.f32 %v2517, %v2549
    %v2582 = vmax.f32 %v2518, %v2550
    %v2583 = vmax.f32 %v2519, %v2551
    %v2584 = vmax.f32 %v2520, %v2552
    %v2585 = vmax.f32 %v2521, %v2553
    %v2586 = vmax.f32 %v2522, %v2554
    %v2587 = vmax.f32 %v2523, %v2555
    %v2588 = vmax.f32 %v2524, %v2556
    %v2589 = vmax.f32 %v2525, %v2557
    %v2590 = vmax.f32 %v2526, %v2558
    %v2591 = vmax.f32 %v2527, %v2559
    %v2592 = vmax.f32 %v2528, %v2560
    %v2593 = vmax.f32 %v2529, %v2561
    %v2594 = vmax.f32 %v2530, %v2562
    %v2595 = vmax.f32 %v2531, %v2563
    %v2596 = vmax.f32 %v2532, %v2564
    %v2597 = vmax.f32 %v2533, %v2565
    %v2598 = vmax.f32 %v2534, %v2566
    %v2599 = vmax.f32 %v2535, %v2567
    %v2600 = vmax.f32 %v2536, %v2568
    %v2601 = vmul.f32 %v2569, %v1085
    %v2602 = vmul.f32 %v2570, %v1085
    %v2603 = vmul.f32 %v2571, %v1085
    %v2604 = vmul.f32 %v2572, %v1085
    %v2605 = vmul.f32 %v2573, %v1085
    %v2606 = vmul.f32 %v2574, %v1085
    %v2607 = vmul.f32 %v2575, %v1085
    %v2608 = vmul.f32 %v2576, %v1085
    %v2609 = vmul.f32 %v2577, %v1085
    %v2610 = vmul.f32 %v2578, %v1085
    %v2611 = vmul.f32 %v2579, %v1085
    %v2612 = vmul.f32 %v2580, %v1085
    %v2613 = vmul.f32 %v2581, %v1085
    %v2614 = vmul.f32 %v2582, %v1085
    %v2615 = vmul.f32 %v2583, %v1085
    %v2616 = vmul.f32 %v2584, %v1085
    %v2617 = vmul.f32 %v2585, %v1085
    %v2618 = vmul.f32 %v2586, %v1085
    %v2619 = vmul.f32 %v2587, %v1085
    %v2620 = vmul.f32 %v2588, %v1085
    %v2621 = vmul.f32 %v2589, %v1085
    %v2622 = vmul.f32 %v2590, %v1085
    %v2623 = vmul.f32 %v2591, %v1085
    %v2624 = vmul.f32 %v2592, %v1085
    %v2625 = vmul.f32 %v2593, %v1085
    %v2626 = vmul.f32 %v2594, %v1085
    %v2627 = vmul.f32 %v2595, %v1085
    %v2628 = vmul.f32 %v2596, %v1085
    %v2629 = vmul.f32 %v2597, %v1085
    %v2630 = vmul.f32 %v2598, %v1085
    %v2631 = vmul.f32 %v2599, %v1085
    %v2632 = vmul.f32 %v2600, %v1085
    %2633 = vadd.xlane.f32.xlu0 %v2601
    %v2634 = vpop.xlane.xlu0 %2633
    %2635 = vadd.xlane.f32.xlu0 %v2602
    %v2636 = vpop.xlane.xlu0 %2635
    %2637 = vadd.xlane.f32.xlu0 %v2603
    %v2638 = vpop.xlane.xlu0 %2637
    %2639 = vadd.xlane.f32.xlu0 %v2604
    %v2640 = vpop.xlane.xlu0 %2639
    %2641 = vadd.xlane.f32.xlu0 %v2605
    %v2642 = vpop.xlane.xlu0 %2641
    %2643 = vadd.xlane.f32.xlu0 %v2606
    %v2644 = vpop.xlane.xlu0 %2643
    %2645 = vadd.xlane.f32.xlu0 %v2607
    %v2646 = vpop.xlane.xlu0 %2645
    %2647 = vadd.xlane.f32.xlu0 %v2608
    %v2648 = vpop.xlane.xlu0 %2647
    %2649 = vadd.xlane.f32.xlu0 %v2609
    %v2650 = vpop.xlane.xlu0 %2649
    %2651 = vadd.xlane.f32.xlu0 %v2610
    %v2652 = vpop.xlane.xlu0 %2651
    %2653 = vadd.xlane.f32.xlu0 %v2611
    %v2654 = vpop.xlane.xlu0 %2653
    %2655 = vadd.xlane.f32.xlu0 %v2612
    %v2656 = vpop.xlane.xlu0 %2655
    %2657 = vadd.xlane.f32.xlu0 %v2613
    %v2658 = vpop.xlane.xlu0 %2657
    %2659 = vadd.xlane.f32.xlu0 %v2614
    %v2660 = vpop.xlane.xlu0 %2659
    %2661 = vadd.xlane.f32.xlu0 %v2615
    %v2662 = vpop.xlane.xlu0 %2661
    %2663 = vadd.xlane.f32.xlu0 %v2616
    %v2664 = vpop.xlane.xlu0 %2663
    %2665 = vadd.xlane.f32.xlu0 %v2617
    %v2666 = vpop.xlane.xlu0 %2665
    %2667 = vadd.xlane.f32.xlu0 %v2618
    %v2668 = vpop.xlane.xlu0 %2667
    %2669 = vadd.xlane.f32.xlu0 %v2619
    %v2670 = vpop.xlane.xlu0 %2669
    %2671 = vadd.xlane.f32.xlu0 %v2620
    %v2672 = vpop.xlane.xlu0 %2671
    %2673 = vadd.xlane.f32.xlu0 %v2621
    %v2674 = vpop.xlane.xlu0 %2673
    %2675 = vadd.xlane.f32.xlu0 %v2622
    %v2676 = vpop.xlane.xlu0 %2675
    %2677 = vadd.xlane.f32.xlu0 %v2623
    %v2678 = vpop.xlane.xlu0 %2677
    %2679 = vadd.xlane.f32.xlu0 %v2624
    %v2680 = vpop.xlane.xlu0 %2679
    %2681 = vadd.xlane.f32.xlu0 %v2625
    %v2682 = vpop.xlane.xlu0 %2681
    %2683 = vadd.xlane.f32.xlu0 %v2626
    %v2684 = vpop.xlane.xlu0 %2683
    %2685 = vadd.xlane.f32.xlu0 %v2627
    %v2686 = vpop.xlane.xlu0 %2685
    %2687 = vadd.xlane.f32.xlu0 %v2628
    %v2688 = vpop.xlane.xlu0 %2687
    %2689 = vadd.xlane.f32.xlu0 %v2629
    %v2690 = vpop.xlane.xlu0 %2689
    %2691 = vadd.xlane.f32.xlu0 %v2630
    %v2692 = vpop.xlane.xlu0 %2691
    %2693 = vadd.xlane.f32.xlu0 %v2631
    %v2694 = vpop.xlane.xlu0 %2693
    %2695 = vadd.xlane.f32.xlu0 %v2632
    %v2696 = vpop.xlane.xlu0 %2695
    %v2697 = vmul.f32 %v2569, %v1182
    %v2698 = vmul.f32 %v2570, %v1182
    %v2699 = vmul.f32 %v2571, %v1182
    %v2700 = vmul.f32 %v2572, %v1182
    %v2701 = vmul.f32 %v2573, %v1182
    %v2702 = vmul.f32 %v2574, %v1182
    %v2703 = vmul.f32 %v2575, %v1182
    %v2704 = vmul.f32 %v2576, %v1182
    %v2705 = vmul.f32 %v2577, %v1182
    %v2706 = vmul.f32 %v2578, %v1182
    %v2707 = vmul.f32 %v2579, %v1182
    %v2708 = vmul.f32 %v2580, %v1182
    %v2709 = vmul.f32 %v2581, %v1182
    %v2710 = vmul.f32 %v2582, %v1182
    %v2711 = vmul.f32 %v2583, %v1182
    %v2712 = vmul.f32 %v2584, %v1182
    %v2713 = vmul.f32 %v2585, %v1182
    %v2714 = vmul.f32 %v2586, %v1182
    %v2715 = vmul.f32 %v2587, %v1182
    %v2716 = vmul.f32 %v2588, %v1182
    %v2717 = vmul.f32 %v2589, %v1182
    %v2718 = vmul.f32 %v2590, %v1182
    %v2719 = vmul.f32 %v2591, %v1182
    %v2720 = vmul.f32 %v2592, %v1182
    %v2721 = vmul.f32 %v2593, %v1182
    %v2722 = vmul.f32 %v2594, %v1182
    %v2723 = vmul.f32 %v2595, %v1182
    %v2724 = vmul.f32 %v2596, %v1182
    %v2725 = vmul.f32 %v2597, %v1182
    %v2726 = vmul.f32 %v2598, %v1182
    %v2727 = vmul.f32 %v2599, %v1182
    %v2728 = vmul.f32 %v2600, %v1182
    %2729 = vadd.xlane.f32.xlu0 %v2697
    %v2730 = vpop.xlane.xlu0 %2729
    %2731 = vadd.xlane.f32.xlu0 %v2698
    %v2732 = vpop.xlane.xlu0 %2731
    %2733 = vadd.xlane.f32.xlu0 %v2699
    %v2734 = vpop.xlane.xlu0 %2733
    %2735 = vadd.xlane.f32.xlu0 %v2700
    %v2736 = vpop.xlane.xlu0 %2735
    %2737 = vadd.xlane.f32.xlu0 %v2701
    %v2738 = vpop.xlane.xlu0 %2737
    %2739 = vadd.xlane.f32.xlu0 %v2702
    %v2740 = vpop.xlane.xlu0 %2739
    %2741 = vadd.xlane.f32.xlu0 %v2703
    %v2742 = vpop.xlane.xlu0 %2741
    %2743 = vadd.xlane.f32.xlu0 %v2704
    %v2744 = vpop.xlane.xlu0 %2743
    %2745 = vadd.xlane.f32.xlu0 %v2705
    %v2746 = vpop.xlane.xlu0 %2745
    %2747 = vadd.xlane.f32.xlu0 %v2706
    %v2748 = vpop.xlane.xlu0 %2747
    %2749 = vadd.xlane.f32.xlu0 %v2707
    %v2750 = vpop.xlane.xlu0 %2749
    %2751 = vadd.xlane.f32.xlu0 %v2708
    %v2752 = vpop.xlane.xlu0 %2751
    %2753 = vadd.xlane.f32.xlu0 %v2709
    %v2754 = vpop.xlane.xlu0 %2753
    %2755 = vadd.xlane.f32.xlu0 %v2710
    %v2756 = vpop.xlane.xlu0 %2755
    %2757 = vadd.xlane.f32.xlu0 %v2711
    %v2758 = vpop.xlane.xlu0 %2757
    %2759 = vadd.xlane.f32.xlu0 %v2712
    %v2760 = vpop.xlane.xlu0 %2759
    %2761 = vadd.xlane.f32.xlu0 %v2713
    %v2762 = vpop.xlane.xlu0 %2761
    %2763 = vadd.xlane.f32.xlu0 %v2714
    %v2764 = vpop.xlane.xlu0 %2763
    %2765 = vadd.xlane.f32.xlu0 %v2715
    %v2766 = vpop.xlane.xlu0 %2765
    %2767 = vadd.xlane.f32.xlu0 %v2716
    %v2768 = vpop.xlane.xlu0 %2767
    %2769 = vadd.xlane.f32.xlu0 %v2717
    %v2770 = vpop.xlane.xlu0 %2769
    %2771 = vadd.xlane.f32.xlu0 %v2718
    %v2772 = vpop.xlane.xlu0 %2771
    %2773 = vadd.xlane.f32.xlu0 %v2719
    %v2774 = vpop.xlane.xlu0 %2773
    %2775 = vadd.xlane.f32.xlu0 %v2720
    %v2776 = vpop.xlane.xlu0 %2775
    %2777 = vadd.xlane.f32.xlu0 %v2721
    %v2778 = vpop.xlane.xlu0 %2777
    %2779 = vadd.xlane.f32.xlu0 %v2722
    %v2780 = vpop.xlane.xlu0 %2779
    %2781 = vadd.xlane.f32.xlu0 %v2723
    %v2782 = vpop.xlane.xlu0 %2781
    %2783 = vadd.xlane.f32.xlu0 %v2724
    %v2784 = vpop.xlane.xlu0 %2783
    %2785 = vadd.xlane.f32.xlu0 %v2725
    %v2786 = vpop.xlane.xlu0 %2785
    %2787 = vadd.xlane.f32.xlu0 %v2726
    %v2788 = vpop.xlane.xlu0 %2787
    %2789 = vadd.xlane.f32.xlu0 %v2727
    %v2790 = vpop.xlane.xlu0 %2789
    %2791 = vadd.xlane.f32.xlu0 %v2728
    %v2792 = vpop.xlane.xlu0 %2791
    %v2793 = vmul.f32 %v2569, %v1279
    %v2794 = vmul.f32 %v2570, %v1279
    %v2795 = vmul.f32 %v2571, %v1279
    %v2796 = vmul.f32 %v2572, %v1279
    %v2797 = vmul.f32 %v2573, %v1279
    %v2798 = vmul.f32 %v2574, %v1279
    %v2799 = vmul.f32 %v2575, %v1279
    %v2800 = vmul.f32 %v2576, %v1279
    %v2801 = vmul.f32 %v2577, %v1279
    %v2802 = vmul.f32 %v2578, %v1279
    %v2803 = vmul.f32 %v2579, %v1279
    %v2804 = vmul.f32 %v2580, %v1279
    %v2805 = vmul.f32 %v2581, %v1279
    %v2806 = vmul.f32 %v2582, %v1279
    %v2807 = vmul.f32 %v2583, %v1279
    %v2808 = vmul.f32 %v2584, %v1279
    %v2809 = vmul.f32 %v2585, %v1279
    %v2810 = vmul.f32 %v2586, %v1279
    %v2811 = vmul.f32 %v2587, %v1279
    %v2812 = vmul.f32 %v2588, %v1279
    %v2813 = vmul.f32 %v2589, %v1279
    %v2814 = vmul.f32 %v2590, %v1279
    %v2815 = vmul.f32 %v2591, %v1279
    %v2816 = vmul.f32 %v2592, %v1279
    %v2817 = vmul.f32 %v2593, %v1279
    %v2818 = vmul.f32 %v2594, %v1279
    %v2819 = vmul.f32 %v2595, %v1279
    %v2820 = vmul.f32 %v2596, %v1279
    %v2821 = vmul.f32 %v2597, %v1279
    %v2822 = vmul.f32 %v2598, %v1279
    %v2823 = vmul.f32 %v2599, %v1279
    %v2824 = vmul.f32 %v2600, %v1279
    %2825 = vadd.xlane.f32.xlu0 %v2793
    %v2826 = vpop.xlane.xlu0 %2825
    %2827 = vadd.xlane.f32.xlu0 %v2794
    %v2828 = vpop.xlane.xlu0 %2827
    %2829 = vadd.xlane.f32.xlu0 %v2795
    %v2830 = vpop.xlane.xlu0 %2829
    %2831 = vadd.xlane.f32.xlu0 %v2796
    %v2832 = vpop.xlane.xlu0 %2831
    %2833 = vadd.xlane.f32.xlu0 %v2797
    %v2834 = vpop.xlane.xlu0 %2833
    %2835 = vadd.xlane.f32.xlu0 %v2798
    %v2836 = vpop.xlane.xlu0 %2835
    %2837 = vadd.xlane.f32.xlu0 %v2799
    %v2838 = vpop.xlane.xlu0 %2837
    %2839 = vadd.xlane.f32.xlu0 %v2800
    %v2840 = vpop.xlane.xlu0 %2839
    %2841 = vadd.xlane.f32.xlu0 %v2801
    %v2842 = vpop.xlane.xlu0 %2841
    %2843 = vadd.xlane.f32.xlu0 %v2802
    %v2844 = vpop.xlane.xlu0 %2843
    %2845 = vadd.xlane.f32.xlu0 %v2803
    %v2846 = vpop.xlane.xlu0 %2845
    %2847 = vadd.xlane.f32.xlu0 %v2804
    %v2848 = vpop.xlane.xlu0 %2847
    %2849 = vadd.xlane.f32.xlu0 %v2805
    %v2850 = vpop.xlane.xlu0 %2849
    %2851 = vadd.xlane.f32.xlu0 %v2806
    %v2852 = vpop.xlane.xlu0 %2851
    %2853 = vadd.xlane.f32.xlu0 %v2807
    %v2854 = vpop.xlane.xlu0 %2853
    %2855 = vadd.xlane.f32.xlu0 %v2808
    %v2856 = vpop.xlane.xlu0 %2855
    %2857 = vadd.xlane.f32.xlu0 %v2809
    %v2858 = vpop.xlane.xlu0 %2857
    %2859 = vadd.xlane.f32.xlu0 %v2810
    %v2860 = vpop.xlane.xlu0 %2859
    %2861 = vadd.xlane.f32.xlu0 %v2811
    %v2862 = vpop.xlane.xlu0 %2861
    %2863 = vadd.xlane.f32.xlu0 %v2812
    %v2864 = vpop.xlane.xlu0 %2863
    %2865 = vadd.xlane.f32.xlu0 %v2813
    %v2866 = vpop.xlane.xlu0 %2865
    %2867 = vadd.xlane.f32.xlu0 %v2814
    %v2868 = vpop.xlane.xlu0 %2867
    %2869 = vadd.xlane.f32.xlu0 %v2815
    %v2870 = vpop.xlane.xlu0 %2869
    %2871 = vadd.xlane.f32.xlu0 %v2816
    %v2872 = vpop.xlane.xlu0 %2871
    %2873 = vadd.xlane.f32.xlu0 %v2817
    %v2874 = vpop.xlane.xlu0 %2873
    %2875 = vadd.xlane.f32.xlu0 %v2818
    %v2876 = vpop.xlane.xlu0 %2875
    %2877 = vadd.xlane.f32.xlu0 %v2819
    %v2878 = vpop.xlane.xlu0 %2877
    %2879 = vadd.xlane.f32.xlu0 %v2820
    %v2880 = vpop.xlane.xlu0 %2879
    %2881 = vadd.xlane.f32.xlu0 %v2821
    %v2882 = vpop.xlane.xlu0 %2881
    %2883 = vadd.xlane.f32.xlu0 %v2822
    %v2884 = vpop.xlane.xlu0 %2883
    %2885 = vadd.xlane.f32.xlu0 %v2823
    %v2886 = vpop.xlane.xlu0 %2885
    %2887 = vadd.xlane.f32.xlu0 %v2824
    %v2888 = vpop.xlane.xlu0 %2887
    %v2889 = vmul.f32 %v2569, %v1376
    %v2890 = vmul.f32 %v2570, %v1376
    %v2891 = vmul.f32 %v2571, %v1376
    %v2892 = vmul.f32 %v2572, %v1376
    %v2893 = vmul.f32 %v2573, %v1376
    %v2894 = vmul.f32 %v2574, %v1376
    %v2895 = vmul.f32 %v2575, %v1376
    %v2896 = vmul.f32 %v2576, %v1376
    %v2897 = vmul.f32 %v2577, %v1376
    %v2898 = vmul.f32 %v2578, %v1376
    %v2899 = vmul.f32 %v2579, %v1376
    %v2900 = vmul.f32 %v2580, %v1376
    %v2901 = vmul.f32 %v2581, %v1376
    %v2902 = vmul.f32 %v2582, %v1376
    %v2903 = vmul.f32 %v2583, %v1376
    %v2904 = vmul.f32 %v2584, %v1376
    %v2905 = vmul.f32 %v2585, %v1376
    %v2906 = vmul.f32 %v2586, %v1376
    %v2907 = vmul.f32 %v2587, %v1376
    %v2908 = vmul.f32 %v2588, %v1376
    %v2909 = vmul.f32 %v2589, %v1376
    %v2910 = vmul.f32 %v2590, %v1376
    %v2911 = vmul.f32 %v2591, %v1376
    %v2912 = vmul.f32 %v2592, %v1376
    %v2913 = vmul.f32 %v2593, %v1376
    %v2914 = vmul.f32 %v2594, %v1376
    %v2915 = vmul.f32 %v2595, %v1376
    %v2916 = vmul.f32 %v2596, %v1376
    %v2917 = vmul.f32 %v2597, %v1376
    %v2918 = vmul.f32 %v2598, %v1376
    %v2919 = vmul.f32 %v2599, %v1376
    %v2920 = vmul.f32 %v2600, %v1376
    %2921 = vadd.xlane.f32.xlu0 %v2889
    %v2922 = vpop.xlane.xlu0 %2921
    %2923 = vadd.xlane.f32.xlu0 %v2890
    %v2924 = vpop.xlane.xlu0 %2923
    %2925 = vadd.xlane.f32.xlu0 %v2891
    %v2926 = vpop.xlane.xlu0 %2925
    %2927 = vadd.xlane.f32.xlu0 %v2892
    %v2928 = vpop.xlane.xlu0 %2927
    %2929 = vadd.xlane.f32.xlu0 %v2893
    %v2930 = vpop.xlane.xlu0 %2929
    %2931 = vadd.xlane.f32.xlu0 %v2894
    %v2932 = vpop.xlane.xlu0 %2931
    %2933 = vadd.xlane.f32.xlu0 %v2895
    %v2934 = vpop.xlane.xlu0 %2933
    %2935 = vadd.xlane.f32.xlu0 %v2896
    %v2936 = vpop.xlane.xlu0 %2935
    %2937 = vadd.xlane.f32.xlu0 %v2897
    %v2938 = vpop.xlane.xlu0 %2937
    %2939 = vadd.xlane.f32.xlu0 %v2898
    %v2940 = vpop.xlane.xlu0 %2939
    %2941 = vadd.xlane.f32.xlu0 %v2899
    %v2942 = vpop.xlane.xlu0 %2941
    %2943 = vadd.xlane.f32.xlu0 %v2900
    %v2944 = vpop.xlane.xlu0 %2943
    %2945 = vadd.xlane.f32.xlu0 %v2901
    %v2946 = vpop.xlane.xlu0 %2945
    %2947 = vadd.xlane.f32.xlu0 %v2902
    %v2948 = vpop.xlane.xlu0 %2947
    %2949 = vadd.xlane.f32.xlu0 %v2903
    %v2950 = vpop.xlane.xlu0 %2949
    %2951 = vadd.xlane.f32.xlu0 %v2904
    %v2952 = vpop.xlane.xlu0 %2951
    %2953 = vadd.xlane.f32.xlu0 %v2905
    %v2954 = vpop.xlane.xlu0 %2953
    %2955 = vadd.xlane.f32.xlu0 %v2906
    %v2956 = vpop.xlane.xlu0 %2955
    %2957 = vadd.xlane.f32.xlu0 %v2907
    %v2958 = vpop.xlane.xlu0 %2957
    %2959 = vadd.xlane.f32.xlu0 %v2908
    %v2960 = vpop.xlane.xlu0 %2959
    %2961 = vadd.xlane.f32.xlu0 %v2909
    %v2962 = vpop.xlane.xlu0 %2961
    %2963 = vadd.xlane.f32.xlu0 %v2910
    %v2964 = vpop.xlane.xlu0 %2963
    %2965 = vadd.xlane.f32.xlu0 %v2911
    %v2966 = vpop.xlane.xlu0 %2965
    %2967 = vadd.xlane.f32.xlu0 %v2912
    %v2968 = vpop.xlane.xlu0 %2967
    %2969 = vadd.xlane.f32.xlu0 %v2913
    %v2970 = vpop.xlane.xlu0 %2969
    %2971 = vadd.xlane.f32.xlu0 %v2914
    %v2972 = vpop.xlane.xlu0 %2971
    %2973 = vadd.xlane.f32.xlu0 %v2915
    %v2974 = vpop.xlane.xlu0 %2973
    %2975 = vadd.xlane.f32.xlu0 %v2916
    %v2976 = vpop.xlane.xlu0 %2975
    %2977 = vadd.xlane.f32.xlu0 %v2917
    %v2978 = vpop.xlane.xlu0 %2977
    %2979 = vadd.xlane.f32.xlu0 %v2918
    %v2980 = vpop.xlane.xlu0 %2979
    %2981 = vadd.xlane.f32.xlu0 %v2919
    %v2982 = vpop.xlane.xlu0 %2981
    %2983 = vadd.xlane.f32.xlu0 %v2920
    %v2984 = vpop.xlane.xlu0 %2983
    %v2985 = vld [vmem:[#allocation9] sm:$0x3]
    %v2986 = vld [vmem:[#allocation11] sm:$0x3]
    %v2987 = vld [vmem:[#allocation12] sm:$0x3]
    %v3020 = vlaneseq
    %v3021 = vand.u32 %v3020, 127
    %v3022 = vperm.slane %v1119, %v3021
    %v3023 = vadd.s32 %v3021, 4294967288
    %v3024 = vperm.slane %v1121, %v3023
    %vm3025 = vcmask 130112
    %v3026 = vsel %vm3025, %v3024, %v3022
    %v3027 = vadd.s32 %v3021, 4294967280
    %v3028 = vperm.slane %v1123, %v3027
    %vm3029 = vcmask 195712
    %v3030 = vsel %vm3029, %v3028, %v3026
    %v3031 = vadd.s32 %v3021, 4294967272
    %v3032 = vperm.slane %v1125, %v3031
    %vm3033 = vcmask 261312
    %v3034 = vsel %vm3033, %v3032, %v3030
    %v3035 = vperm.slane %v1127, %v3021
    %v3036 = vperm.slane %v1129, %v3023
    %v3037 = vsel %vm3025, %v3036, %v3035
    %v3038 = vperm.slane %v1131, %v3027
    %v3039 = vsel %vm3029, %v3038, %v3037
    %v3040 = vperm.slane %v1133, %v3031
    %v3041 = vsel %vm3033, %v3040, %v3039
    %v3042 = vperm.slane %v1135, %v3021
    %v3043 = vperm.slane %v1137, %v3023
    %v3044 = vsel %vm3025, %v3043, %v3042
    %v3045 = vperm.slane %v1139, %v3027
    %v3046 = vsel %vm3029, %v3045, %v3044
    %v3047 = vperm.slane %v1141, %v3031
    %v3048 = vsel %vm3033, %v3047, %v3046
    %v3049 = vperm.slane %v1143, %v3021
    %v3050 = vperm.slane %v1145, %v3023
    %v3051 = vsel %vm3025, %v3050, %v3049
    %v3052 = vperm.slane %v1147, %v3027
    %v3053 = vsel %vm3029, %v3052, %v3051
    %v3054 = vperm.slane %v1149, %v3031
    %v3055 = vsel %vm3033, %v3054, %v3053
    %v3056 = vperm.slane %v1151, %v3021
    %v3057 = vperm.slane %v1153, %v3023
    %v3058 = vsel %vm3025, %v3057, %v3056
    %v3059 = vperm.slane %v1155, %v3027
    %v3060 = vsel %vm3029, %v3059, %v3058
    %v3061 = vperm.slane %v1157, %v3031
    %v3062 = vsel %vm3033, %v3061, %v3060
    %v3063 = vperm.slane %v1159, %v3021
    %v3064 = vperm.slane %v1161, %v3023
    %v3065 = vsel %vm3025, %v3064, %v3063
    %v3066 = vperm.slane %v1163, %v3027
    %v3067 = vsel %vm3029, %v3066, %v3065
    %v3068 = vperm.slane %v1165, %v3031
    %v3069 = vsel %vm3033, %v3068, %v3067
    %v3070 = vperm.slane %v1167, %v3021
    %v3071 = vperm.slane %v1169, %v3023
    %v3072 = vsel %vm3025, %v3071, %v3070
    %v3073 = vperm.slane %v1171, %v3027
    %v3074 = vsel %vm3029, %v3073, %v3072
    %v3075 = vperm.slane %v1173, %v3031
    %v3076 = vsel %vm3033, %v3075, %v3074
    %v3077 = vperm.slane %v1175, %v3021
    %v3078 = vperm.slane %v1177, %v3023
    %v3079 = vsel %vm3025, %v3078, %v3077
    %v3080 = vperm.slane %v1179, %v3027
    %v3081 = vsel %vm3029, %v3080, %v3079
    %v3082 = vperm.slane %v1181, %v3031
    %v3083 = vsel %vm3033, %v3082, %v3081
    %vm3084 = vcmask 1041409
    %v3085 = vsel %vm3084, %v3041, %v3034
    %vm3086 = vcmask 1042434
    %v3087 = vsel %vm3086, %v3048, %v3085
    %vm3088 = vcmask 1043459
    %v3089 = vsel %vm3088, %v3055, %v3087
    %vm3090 = vcmask 1044484
    %v3091 = vsel %vm3090, %v3062, %v3089
    %vm3092 = vcmask 1045509
    %v3093 = vsel %vm3092, %v3069, %v3091
    %vm3094 = vcmask 1046534
    %v3095 = vsel %vm3094, %v3076, %v3093
    %vm3096 = vcmask 1047559
    %v3097 = vsel %vm3096, %v3083, %v3095
    %v3131 = vperm.slane %v1626, %v3021
    %v3132 = vperm.slane %v1628, %v3023
    %v3133 = vsel %vm3025, %v3132, %v3131
    %v3134 = vperm.slane %v1630, %v3027
    %v3135 = vsel %vm3029, %v3134, %v3133
    %v3136 = vperm.slane %v1632, %v3031
    %v3137 = vsel %vm3033, %v3136, %v3135
    %v3138 = vperm.slane %v1634, %v3021
    %v3139 = vperm.slane %v1636, %v3023
    %v3140 = vsel %vm3025, %v3139, %v3138
    %v3141 = vperm.slane %v1638, %v3027
    %v3142 = vsel %vm3029, %v3141, %v3140
    %v3143 = vperm.slane %v1640, %v3031
    %v3144 = vsel %vm3033, %v3143, %v3142
    %v3145 = vperm.slane %v1642, %v3021
    %v3146 = vperm.slane %v1644, %v3023
    %v3147 = vsel %vm3025, %v3146, %v3145
    %v3148 = vperm.slane %v1646, %v3027
    %v3149 = vsel %vm3029, %v3148, %v3147
    %v3150 = vperm.slane %v1648, %v3031
    %v3151 = vsel %vm3033, %v3150, %v3149
    %v3152 = vperm.slane %v1650, %v3021
    %v3153 = vperm.slane %v1652, %v3023
    %v3154 = vsel %vm3025, %v3153, %v3152
    %v3155 = vperm.slane %v1654, %v3027
    %v3156 = vsel %vm3029, %v3155, %v3154
    %v3157 = vperm.slane %v1656, %v3031
    %v3158 = vsel %vm3033, %v3157, %v3156
    %v3159 = vperm.slane %v1658, %v3021
    %v3160 = vperm.slane %v1660, %v3023
    %v3161 = vsel %vm3025, %v3160, %v3159
    %v3162 = vperm.slane %v1662, %v3027
    %v3163 = vsel %vm3029, %v3162, %v3161
    %v3164 = vperm.slane %v1664, %v3031
    %v3165 = vsel %vm3033, %v3164, %v3163
    %v3166 = vperm.slane %v1666, %v3021
    %v3167 = vperm.slane %v1668, %v3023
    %v3168 = vsel %vm3025, %v3167, %v3166
    %v3169 = vperm.slane %v1670, %v3027
    %v3170 = vsel %vm3029, %v3169, %v3168
    %v3171 = vperm.slane %v1672, %v3031
    %v3172 = vsel %vm3033, %v3171, %v3170
    %v3173 = vperm.slane %v1674, %v3021
    %v3174 = vperm.slane %v1676, %v3023
    %v3175 = vsel %vm3025, %v3174, %v3173
    %v3176 = vperm.slane %v1678, %v3027
    %v3177 = vsel %vm3029, %v3176, %v3175
    %v3178 = vperm.slane %v1680, %v3031
    %v3179 = vsel %vm3033, %v3178, %v3177
    %v3180 = vperm.slane %v1682, %v3021
    %v3181 = vperm.slane %v1684, %v3023
    %v3182 = vsel %vm3025, %v3181, %v3180
    %v3183 = vperm.slane %v1686, %v3027
    %v3184 = vsel %vm3029, %v3183, %v3182
    %v3185 = vperm.slane %v1688, %v3031
    %v3186 = vsel %vm3033, %v3185, %v3184
    %v3187 = vsel %vm3084, %v3144, %v3137
    %v3188 = vsel %vm3086, %v3151, %v3187
    %v3189 = vsel %vm3088, %v3158, %v3188
    %v3190 = vsel %vm3090, %v3165, %v3189
    %v3191 = vsel %vm3092, %v3172, %v3190
    %v3192 = vsel %vm3094, %v3179, %v3191
    %v3193 = vsel %vm3096, %v3186, %v3192
    %v3227 = vperm.slane %v2130, %v3021
    %v3228 = vperm.slane %v2132, %v3023
    %v3229 = vsel %vm3025, %v3228, %v3227
    %v3230 = vperm.slane %v2134, %v3027
    %v3231 = vsel %vm3029, %v3230, %v3229
    %v3232 = vperm.slane %v2136, %v3031
    %v3233 = vsel %vm3033, %v3232, %v3231
    %v3234 = vperm.slane %v2138, %v3021
    %v3235 = vperm.slane %v2140, %v3023
    %v3236 = vsel %vm3025, %v3235, %v3234
    %v3237 = vperm.slane %v2142, %v3027
    %v3238 = vsel %vm3029, %v3237, %v3236
    %v3239 = vperm.slane %v2144, %v3031
    %v3240 = vsel %vm3033, %v3239, %v3238
    %v3241 = vperm.slane %v2146, %v3021
    %v3242 = vperm.slane %v2148, %v3023
    %v3243 = vsel %vm3025, %v3242, %v3241
    %v3244 = vperm.slane %v2150, %v3027
    %v3245 = vsel %vm3029, %v3244, %v3243
    %v3246 = vperm.slane %v2152, %v3031
    %v3247 = vsel %vm3033, %v3246, %v3245
    %v3248 = vperm.slane %v2154, %v3021
    %v3249 = vperm.slane %v2156, %v3023
    %v3250 = vsel %vm3025, %v3249, %v3248
    %v3251 = vperm.slane %v2158, %v3027
    %v3252 = vsel %vm3029, %v3251, %v3250
    %v3253 = vperm.slane %v2160, %v3031
    %v3254 = vsel %vm3033, %v3253, %v3252
    %v3255 = vperm.slane %v2162, %v3021
    %v3256 = vperm.slane %v2164, %v3023
    %v3257 = vsel %vm3025, %v3256, %v3255
    %v3258 = vperm.slane %v2166, %v3027
    %v3259 = vsel %vm3029, %v3258, %v3257
    %v3260 = vperm.slane %v2168, %v3031
    %v3261 = vsel %vm3033, %v3260, %v3259
    %v3262 = vperm.slane %v2170, %v3021
    %v3263 = vperm.slane %v2172, %v3023
    %v3264 = vsel %vm3025, %v3263, %v3262
    %v3265 = vperm.slane %v2174, %v3027
    %v3266 = vsel %vm3029, %v3265, %v3264
    %v3267 = vperm.slane %v2176, %v3031
    %v3268 = vsel %vm3033, %v3267, %v3266
    %v3269 = vperm.slane %v2178, %v3021
    %v3270 = vperm.slane %v2180, %v3023
    %v3271 = vsel %vm3025, %v3270, %v3269
    %v3272 = vperm.slane %v2182, %v3027
    %v3273 = vsel %vm3029, %v3272, %v3271
    %v3274 = vperm.slane %v2184, %v3031
    %v3275 = vsel %vm3033, %v3274, %v3273
    %v3276 = vperm.slane %v2186, %v3021
    %v3277 = vperm.slane %v2188, %v3023
    %v3278 = vsel %vm3025, %v3277, %v3276
    %v3279 = vperm.slane %v2190, %v3027
    %v3280 = vsel %vm3029, %v3279, %v3278
    %v3281 = vperm.slane %v2192, %v3031
    %v3282 = vsel %vm3033, %v3281, %v3280
    %v3283 = vsel %vm3084, %v3240, %v3233
    %v3284 = vsel %vm3086, %v3247, %v3283
    %v3285 = vsel %vm3088, %v3254, %v3284
    %v3286 = vsel %vm3090, %v3261, %v3285
    %v3287 = vsel %vm3092, %v3268, %v3286
    %v3288 = vsel %vm3094, %v3275, %v3287
    %v3289 = vsel %vm3096, %v3282, %v3288
    %v3323 = vperm.slane %v2634, %v3021
    %v3324 = vperm.slane %v2636, %v3023
    %v3325 = vsel %vm3025, %v3324, %v3323
    %v3326 = vperm.slane %v2638, %v3027
    %v3327 = vsel %vm3029, %v3326, %v3325
    %v3328 = vperm.slane %v2640, %v3031
    %v3329 = vsel %vm3033, %v3328, %v3327
    %v3330 = vperm.slane %v2642, %v3021
    %v3331 = vperm.slane %v2644, %v3023
    %v3332 = vsel %vm3025, %v3331, %v3330
    %v3333 = vperm.slane %v2646, %v3027
    %v3334 = vsel %vm3029, %v3333, %v3332
    %v3335 = vperm.slane %v2648, %v3031
    %v3336 = vsel %vm3033, %v3335, %v3334
    %v3337 = vperm.slane %v2650, %v3021
    %v3338 = vperm.slane %v2652, %v3023
    %v3339 = vsel %vm3025, %v3338, %v3337
    %v3340 = vperm.slane %v2654, %v3027
    %v3341 = vsel %vm3029, %v3340, %v3339
    %v3342 = vperm.slane %v2656, %v3031
    %v3343 = vsel %vm3033, %v3342, %v3341
    %v3344 = vperm.slane %v2658, %v3021
    %v3345 = vperm.slane %v2660, %v3023
    %v3346 = vsel %vm3025, %v3345, %v3344
    %v3347 = vperm.slane %v2662, %v3027
    %v3348 = vsel %vm3029, %v3347, %v3346
    %v3349 = vperm.slane %v2664, %v3031
    %v3350 = vsel %vm3033, %v3349, %v3348
    %v3351 = vperm.slane %v2666, %v3021
    %v3352 = vperm.slane %v2668, %v3023
    %v3353 = vsel %vm3025, %v3352, %v3351
    %v3354 = vperm.slane %v2670, %v3027
    %v3355 = vsel %vm3029, %v3354, %v3353
    %v3356 = vperm.slane %v2672, %v3031
    %v3357 = vsel %vm3033, %v3356, %v3355
    %v3358 = vperm.slane %v2674, %v3021
    %v3359 = vperm.slane %v2676, %v3023
    %v3360 = vsel %vm3025, %v3359, %v3358
    %v3361 = vperm.slane %v2678, %v3027
    %v3362 = vsel %vm3029, %v3361, %v3360
    %v3363 = vperm.slane %v2680, %v3031
    %v3364 = vsel %vm3033, %v3363, %v3362
    %v3365 = vperm.slane %v2682, %v3021
    %v3366 = vperm.slane %v2684, %v3023
    %v3367 = vsel %vm3025, %v3366, %v3365
    %v3368 = vperm.slane %v2686, %v3027
    %v3369 = vsel %vm3029, %v3368, %v3367
    %v3370 = vperm.slane %v2688, %v3031
    %v3371 = vsel %vm3033, %v3370, %v3369
    %v3372 = vperm.slane %v2690, %v3021
    %v3373 = vperm.slane %v2692, %v3023
    %v3374 = vsel %vm3025, %v3373, %v3372
    %v3375 = vperm.slane %v2694, %v3027
    %v3376 = vsel %vm3029, %v3375, %v3374
    %v3377 = vperm.slane %v2696, %v3031
    %v3378 = vsel %vm3033, %v3377, %v3376
    %v3379 = vsel %vm3084, %v3336, %v3329
    %v3380 = vsel %vm3086, %v3343, %v3379
    %v3381 = vsel %vm3088, %v3350, %v3380
    %v3382 = vsel %vm3090, %v3357, %v3381
    %v3383 = vsel %vm3092, %v3364, %v3382
    %v3384 = vsel %vm3094, %v3371, %v3383
    %v3385 = vsel %vm3096, %v3378, %v3384
    %v3387 = vld [vmem:[%s1] sm:$0xff]
    %v3388 = vld [vmem:[%s1 + $0x8] sm:$0xff]
    %v3389 = vld [vmem:[%s1 + $0x10] sm:$0xff]
    %v3390 = vld [vmem:[%s1 + $0x18] sm:$0xff]
    %vm3391 = vcmp.gt.f32.partialorder %v3387, 0.0
    %vm3392 = vcmp.gt.f32.partialorder %v3388, 0.0
    %vm3393 = vcmp.gt.f32.partialorder %v3389, 0.0
    %vm3394 = vcmp.gt.f32.partialorder %v3390, 0.0
    %v3395 = vsel %vm3391, %v3097, -1e+30
    %v3396 = vsel %vm3392, %v3193, -1e+30
    %v3397 = vsel %vm3393, %v3289, -1e+30
    %v3398 = vsel %vm3394, %v3385, -1e+30
    %v3399 = vsel %vm284, %v3395, -inf
    %v3400 = vsel %vm284, %v3396, -inf
    %v3401 = vsel %vm284, %v3397, -inf
    %v3402 = vsel %vm284, %v3398, -inf
    %v3403 = vmax.f32 %v3399, %v3400
    %v3404 = vmax.f32 %v3401, %v3402
    %v3405 = vmax.f32 %v3403, %v3404
    %v3406 = vrot.slane %v3405, 4
    %v3407 = vmax.f32 %v3405, %v3406
    %v3408 = vrot.slane %v3407, 2
    %v3409 = vmax.f32 %v3407, %v3408
    %v3410 = vrot.slane %v3409, 1
    %v3411 = vmax.f32 %v3409, %v3410
    %v3412 = vsub.f32 %v3395, %v3411
    %v3413 = vsub.f32 %v3396, %v3411
    %v3414 = vsub.f32 %v3397, %v3411
    %v3415 = vsub.f32 %v3398, %v3411
    %v3416 = vmul.f32 %v3412, 1.442695
    %v3417 = vpow.pop %v3416
    %v3418 = vmul.f32 %v3413, 1.442695
    %v3419 = vpow.pop %v3418
    %v3420 = vmul.f32 %v3414, 1.442695
    %v3421 = vpow.pop %v3420
    %v3422 = vmul.f32 %v3415, 1.442695
    %v3423 = vpow.pop %v3422
    %v3424 = vmul.f32 %v3417, %v3387
    %v3425 = vmul.f32 %v3419, %v3388
    %v3426 = vmul.f32 %v3421, %v3389
    %v3427 = vmul.f32 %v3423, %v3390
    %v3428 = vsel %vm284, %v3424, 0.0
    %v3429 = vsel %vm284, %v3425, 0.0
    %v3430 = vadd.f32 %v3428, %v3429
    %v3431 = vsel %vm284, %v3426, 0.0
    %v3432 = vadd.f32 %v3430, %v3431
    %v3433 = vsel %vm284, %v3427, 0.0
    %v3434 = vadd.f32 %v3432, %v3433
    %v3435 = vrot.slane %v3434, 4
    %v3436 = vadd.f32 %v3434, %v3435
    %v3437 = vrot.slane %v3436, 2
    %v3438 = vadd.f32 %v3436, %v3437
    %v3439 = vrot.slane %v3438, 1
    %v3440 = vadd.f32 %v3438, %v3439
    %v3441 = vmax.f32 %v3440, 1e-30
    %v3442 = vrcp.pop %v3441
    %v3443 = vmul.f32 %v3424, %v3442
    %v3444 = vmul.f32 %v3425, %v3442
    %v3445 = vmul.f32 %v3426, %v3442
    %v3446 = vmul.f32 %v3427, %v3442
    %v3447 = vperm.slane %v2985, 0
    %3448 = vxpose.xlu0.b32.start [1/16] %v3443, 128
    %3449 = vxpose.xlu0.b32.cont [2/16] %v3444, 128
    %3450 = vxpose.xlu0.b32.cont [3/16] %v3445, 128
    %3451 = vxpose.xlu0.b32.cont [4/16] %v3446, 128
    %3452 = vxpose.xlu0.b32.cont [5/16] 0.0, 128
    %3453 = vxpose.xlu0.b32.cont [6/16] 0.0, 128
    %3454 = vxpose.xlu0.b32.cont [7/16] 0.0, 128
    %3455 = vxpose.xlu0.b32.cont [8/16] 0.0, 128
    %3456 = vxpose.xlu0.b32.cont [9/16] 0.0, 128
    %3457 = vxpose.xlu0.b32.cont [10/16] 0.0, 128
    %3458 = vxpose.xlu0.b32.cont [11/16] 0.0, 128
    %3459 = vxpose.xlu0.b32.cont [12/16] 0.0, 128
    %3460 = vxpose.xlu0.b32.cont [13/16] 0.0, 128
    %3461 = vxpose.xlu0.b32.cont [14/16] 0.0, 128
    %3462 = vxpose.xlu0.b32.cont [15/16] 0.0, 128
    %3463 = vxpose.xlu0.b32.end [16/16] 0.0, 128
    %v3464 = vpop.trf.xlu0
    %v3465 = vpop.trf.xlu0
    %v3466 = vpop.trf.xlu0
    %v3467 = vpop.trf.xlu0
    %v3468 = vpop.trf.xlu0
    %v3469 = vpop.trf.xlu0
    %v3470 = vpop.trf.xlu0
    %v3471 = vpop.trf.xlu0
    %v3472 = vpop.trf.xlu0
    %v3473 = vpop.trf.xlu0
    %v3474 = vpop.trf.xlu0
    %v3475 = vpop.trf.xlu0
    %v3476 = vpop.trf.xlu0
    %v3477 = vpop.trf.xlu0
    %v3478 = vpop.trf.xlu0
    %v3479 = vpop.trf.xlu0
    %v3481 = vsel %vm284, %v3464, 0
    %v3484 = vsel %vm284, %v3465, 0
    %v3487 = vsel %vm284, %v3466, 0
    %v3490 = vsel %vm284, %v3467, 0
    %3492 = vmatpush.msra.mxu0 0.0
    %3493 = vmatpush.msra.mxu0 0.0
    %3494 = vmatpush.msra.mxu0 0.0
    %3495 = vmatpush.msra.mxu0 0.0
    %3496 = vmatpush.msra.mxu0 0.0
    %3497 = vmatpush.msra.mxu0 0.0
    %3498 = vmatpush.msra.mxu0 0.0
    %3499 = vmatpush.msra.mxu0 0.0
    %3500 = vmatpush.msra.mxu0 0.0
    %3501 = vmatpush.msra.mxu0 0.0
    %3502 = vmatpush.msra.mxu0 0.0
    %3503 = vmatpush.msra.mxu0 0.0
    %3504 = vmatpush.msra.mxu0 %v943
    %3505 = vmatpush.msra.mxu0 %v942
    %3506 = vmatpush.msra.mxu0 %v941
    %3507 = vmatpush.msra.mxu0 %v940
    %3508 = vmatmul.f32.gmra.mxu0 %v3481
    %v3509 = vpop.f32.mrf.mxu0
    %v3510 = vadd.f32 %v3447, %v3509
    %3511 = vmatmul.f32.gmra.mxu0 %v3484
    %v3512 = vpop.f32.mrf.mxu0
    %v3513 = vadd.f32 %v3447, %v3512
    %3514 = vmatmul.f32.gmra.mxu0 %v3487
    %v3515 = vpop.f32.mrf.mxu0
    %v3516 = vadd.f32 %v3447, %v3515
    %3517 = vmatmul.f32.gmra.mxu0 %v3490
    %v3518 = vpop.f32.mrf.mxu0
    %v3519 = vadd.f32 %v3447, %v3518
    %3520 = vdwg.mxu0
    %3521 = vset.pattern.permute.xlu0 0
    %3522 = vperm.xlu0 %3521, %v215
    %v3523 = vpop.permute.xlu0 %3522
    %3525 = vset.pattern.permute.xlu0 0
    %3526 = vperm.xlu0 %3525, %v216
    %v3527 = vpop.permute.xlu0 %3526
    %3529 = vset.pattern.permute.xlu0 0
    %3530 = vperm.xlu0 %3529, %v217
    %v3531 = vpop.permute.xlu0 %3530
    %3533 = vset.pattern.permute.xlu0 0
    %3534 = vperm.xlu0 %3533, %v218
    %v3535 = vpop.permute.xlu0 %3534
    %v3537 = vmul.f32 %v3510, %v3523
    %v3538 = vmul.f32 %v3513, %v3527
    %v3539 = vmul.f32 %v3516, %v3531
    %v3540 = vmul.f32 %v3519, %v3535
    %v3541 = vsel %vm284, %v3537, 0.0
    %v3542 = vsel %vm284, %v3538, 0.0
    %v3543 = vadd.f32 %v3541, %v3542
    %v3544 = vsel %vm284, %v3539, 0.0
    %v3545 = vadd.f32 %v3543, %v3544
    %v3546 = vsel %vm284, %v3540, 0.0
    %v3547 = vadd.f32 %v3545, %v3546
    %3548 = vadd.xlane.f32.xlu0 %v3547
    %v3549 = vpop.xlane.xlu0 %3548
    %v3550 = vrot.slane %v3549, 4
    %v3551 = vadd.f32 %v3549, %v3550
    %v3552 = vrot.slane %v3551, 2
    %v3553 = vadd.f32 %v3551, %v3552
    %v3554 = vrot.slane %v3553, 1
    %v3555 = vadd.f32 %v3553, %v3554
    %s3556 = vtos %v3555
    %s3557 = smul.f32 %s243, 32.0
    %v3558 = vstv %s3557
    %v3559 = vrcp.pop %v3558
    %v3560 = vmul.f32 %v3558, %v3559
    %v3561 = vsub.f32 1.0, %v3560
    %v3562 = vmul.f32 %v3559, %v3561
    %v3563 = vadd.f32 %v3559, %v3562
    %vm3564 = vweird.f32 %v3558
    %vm3565 = vweird.f32 %v3559
    %vm3566 = vmor %vm3564, %vm3565
    %v3567 = vsel %vm3566, %v3559, %v3563
    %v3568 = vand.u32 2147483647, %v3558
    %vm3569 = vcmp.eq.f32.partialorder %v3568, 8.507059e+37
    %v3570 = vand.u32 %v3558, 2147483648
    %v3571 = vor.u32 1.1754944e-38, %v3570
    %v3572 = vsel %vm3569, %v3571, %v3567
    %s3573 = vtos %v3572
    %s3574 = smul.f32 %s3556, %s3573
    %v3575 = vstv %s3574
    %v3576 = vsub.f32 %v3510, %v3575
    %v3577 = vsub.f32 %v3513, %v3575
    %v3578 = vsub.f32 %v3516, %v3575
    %v3579 = vsub.f32 %v3519, %v3575
    %v3580 = vmul.f32 %v3576, %v3523
    %v3581 = vmul.f32 %v3577, %v3527
    %v3582 = vmul.f32 %v3578, %v3531
    %v3583 = vmul.f32 %v3579, %v3535
    %v3584 = vmul.f32 %v3580, %v3580
    %v3585 = vmul.f32 %v3581, %v3581
    %v3586 = vmul.f32 %v3582, %v3582
    %v3587 = vmul.f32 %v3583, %v3583
    %v3588 = vsel %vm284, %v3584, 0.0
    %v3589 = vsel %vm284, %v3585, 0.0
    %v3590 = vadd.f32 %v3588, %v3589
    %v3591 = vsel %vm284, %v3586, 0.0
    %v3592 = vadd.f32 %v3590, %v3591
    %v3593 = vsel %vm284, %v3587, 0.0
    %v3594 = vadd.f32 %v3592, %v3593
    %3595 = vadd.xlane.f32.xlu0 %v3594
    %v3596 = vpop.xlane.xlu0 %3595
    %v3597 = vrot.slane %v3596, 4
    %v3598 = vadd.f32 %v3596, %v3597
    %v3599 = vrot.slane %v3598, 2
    %v3600 = vadd.f32 %v3598, %v3599
    %v3601 = vrot.slane %v3600, 1
    %v3602 = vadd.f32 %v3600, %v3601
    %s3603 = vtos %v3602
    %v3604 = vstv %s3557
    %v3605 = vrcp.pop %v3604
    %v3606 = vmul.f32 %v3604, %v3605
    %v3607 = vsub.f32 1.0, %v3606
    %v3608 = vmul.f32 %v3605, %v3607
    %v3609 = vadd.f32 %v3605, %v3608
    %vm3610 = vweird.f32 %v3604
    %vm3611 = vweird.f32 %v3605
    %vm3612 = vmor %vm3610, %vm3611
    %v3613 = vsel %vm3612, %v3605, %v3609
    %v3614 = vand.u32 2147483647, %v3604
    %vm3615 = vcmp.eq.f32.partialorder %v3614, 8.507059e+37
    %v3616 = vand.u32 %v3604, 2147483648
    %v3617 = vor.u32 1.1754944e-38, %v3616
    %v3618 = vsel %vm3615, %v3617, %v3613
    %s3619 = vtos %v3618
    %s3620 = smul.f32 %s3603, %s3619
    %v3621 = vstv %s3620
    %v3622 = vrsqrt.pop %v3621
    %v3623 = vmul.f32 %v3622, %v3621
    %v3624 = vmul.f32 %v3623, %v3622
    %v3625 = vmul.f32 0.5, %v3624
    %v3626 = vsub.f32 1.5, %v3625
    %v3627 = vmul.f32 %v3622, %v3626
    %v3628 = vmul.f32 %v3621, %v3627
    %vm3629 = vcmp.eq.f32.partialorder %v3621, inf
    %v3630 = vsel %vm3629, %v3621, %v3628
    %vm3631 = vcmp.eq.f32.partialorder %v3621, 0.0
    %v3632 = vand.u32 %v3621, 2147483648
    %v3633 = vsel %vm3631, %v3632, %v3630
    %s3634 = vtos %v3633
    %s3635 = sadd.f32 %s3634, 1e-05
    %v3636 = vstv %s3635
    %v3637 = vrcp.pop %v3636
    %v3638 = vmul.f32 %v3636, %v3637
    %v3639 = vsub.f32 1.0, %v3638
    %v3640 = vmul.f32 %v3637, %v3639
    %v3641 = vadd.f32 %v3637, %v3640
    %vm3642 = vweird.f32 %v3636
    %vm3643 = vweird.f32 %v3637
    %vm3644 = vmor %vm3642, %vm3643
    %v3645 = vsel %vm3644, %v3637, %v3641
    %v3646 = vand.u32 2147483647, %v3636
    %vm3647 = vcmp.eq.f32.partialorder %v3646, 8.507059e+37
    %v3648 = vand.u32 %v3636, 2147483648
    %v3649 = vor.u32 1.1754944e-38, %v3648
    %v3650 = vsel %vm3647, %v3649, %v3645
    %v3651 = vmul.f32 %v3576, %v3650
    %v3652 = vmul.f32 %v3577, %v3650
    %v3653 = vmul.f32 %v3578, %v3650
    %v3654 = vmul.f32 %v3579, %v3650
    %v3655 = vperm.slane %v2986, 0
    %v3656 = vmul.f32 %v3651, %v3655
    %v3657 = vmul.f32 %v3652, %v3655
    %v3658 = vmul.f32 %v3653, %v3655
    %v3659 = vmul.f32 %v3654, %v3655
    %v3660 = vperm.slane %v2987, 0
    %v3661 = vadd.f32 %v3656, %v3660
    %v3662 = vadd.f32 %v3657, %v3660
    %v3663 = vadd.f32 %v3658, %v3660
    %v3664 = vadd.f32 %v3659, %v3660
    %v3665 = vmax.f32 %v3661, 0.0
    %v3666 = vmax.f32 %v3662, 0.0
    %v3667 = vmax.f32 %v3663, 0.0
    %v3668 = vmax.f32 %v3664, 0.0
    %v3669 = vadd.f32 %v3665, 0.0
    %v3670 = vadd.f32 %v3666, 0.0
    %v3671 = vadd.f32 %v3667, 0.0
    %v3672 = vadd.f32 %v3668, 0.0
    %v3705 = vperm.slane %v1216, %v3021
    %v3706 = vperm.slane %v1218, %v3023
    %v3707 = vsel %vm3025, %v3706, %v3705
    %v3708 = vperm.slane %v1220, %v3027
    %v3709 = vsel %vm3029, %v3708, %v3707
    %v3710 = vperm.slane %v1222, %v3031
    %v3711 = vsel %vm3033, %v3710, %v3709
    %v3712 = vperm.slane %v1224, %v3021
    %v3713 = vperm.slane %v1226, %v3023
    %v3714 = vsel %vm3025, %v3713, %v3712
    %v3715 = vperm.slane %v1228, %v3027
    %v3716 = vsel %vm3029, %v3715, %v3714
    %v3717 = vperm.slane %v1230, %v3031
    %v3718 = vsel %vm3033, %v3717, %v3716
    %v3719 = vperm.slane %v1232, %v3021
    %v3720 = vperm.slane %v1234, %v3023
    %v3721 = vsel %vm3025, %v3720, %v3719
    %v3722 = vperm.slane %v1236, %v3027
    %v3723 = vsel %vm3029, %v3722, %v3721
    %v3724 = vperm.slane %v1238, %v3031
    %v3725 = vsel %vm3033, %v3724, %v3723
    %v3726 = vperm.slane %v1240, %v3021
    %v3727 = vperm.slane %v1242, %v3023
    %v3728 = vsel %vm3025, %v3727, %v3726
    %v3729 = vperm.slane %v1244, %v3027
    %v3730 = vsel %vm3029, %v3729, %v3728
    %v3731 = vperm.slane %v1246, %v3031
    %v3732 = vsel %vm3033, %v3731, %v3730
    %v3733 = vperm.slane %v1248, %v3021
    %v3734 = vperm.slane %v1250, %v3023
    %v3735 = vsel %vm3025, %v3734, %v3733
    %v3736 = vperm.slane %v1252, %v3027
    %v3737 = vsel %vm3029, %v3736, %v3735
    %v3738 = vperm.slane %v1254, %v3031
    %v3739 = vsel %vm3033, %v3738, %v3737
    %v3740 = vperm.slane %v1256, %v3021
    %v3741 = vperm.slane %v1258, %v3023
    %v3742 = vsel %vm3025, %v3741, %v3740
    %v3743 = vperm.slane %v1260, %v3027
    %v3744 = vsel %vm3029, %v3743, %v3742
    %v3745 = vperm.slane %v1262, %v3031
    %v3746 = vsel %vm3033, %v3745, %v3744
    %v3747 = vperm.slane %v1264, %v3021
    %v3748 = vperm.slane %v1266, %v3023
    %v3749 = vsel %vm3025, %v3748, %v3747
    %v3750 = vperm.slane %v1268, %v3027
    %v3751 = vsel %vm3029, %v3750, %v3749
    %v3752 = vperm.slane %v1270, %v3031
    %v3753 = vsel %vm3033, %v3752, %v3751
    %v3754 = vperm.slane %v1272, %v3021
    %v3755 = vperm.slane %v1274, %v3023
    %v3756 = vsel %vm3025, %v3755, %v3754
    %v3757 = vperm.slane %v1276, %v3027
    %v3758 = vsel %vm3029, %v3757, %v3756
    %v3759 = vperm.slane %v1278, %v3031
    %v3760 = vsel %vm3033, %v3759, %v3758
    %v3761 = vsel %vm3084, %v3718, %v3711
    %v3762 = vsel %vm3086, %v3725, %v3761
    %v3763 = vsel %vm3088, %v3732, %v3762
    %v3764 = vsel %vm3090, %v3739, %v3763
    %v3765 = vsel %vm3092, %v3746, %v3764
    %v3766 = vsel %vm3094, %v3753, %v3765
    %v3767 = vsel %vm3096, %v3760, %v3766
    %v3801 = vperm.slane %v1722, %v3021
    %v3802 = vperm.slane %v1724, %v3023
    %v3803 = vsel %vm3025, %v3802, %v3801
    %v3804 = vperm.slane %v1726, %v3027
    %v3805 = vsel %vm3029, %v3804, %v3803
    %v3806 = vperm.slane %v1728, %v3031
    %v3807 = vsel %vm3033, %v3806, %v3805
    %v3808 = vperm.slane %v1730, %v3021
    %v3809 = vperm.slane %v1732, %v3023
    %v3810 = vsel %vm3025, %v3809, %v3808
    %v3811 = vperm.slane %v1734, %v3027
    %v3812 = vsel %vm3029, %v3811, %v3810
    %v3813 = vperm.slane %v1736, %v3031
    %v3814 = vsel %vm3033, %v3813, %v3812
    %v3815 = vperm.slane %v1738, %v3021
    %v3816 = vperm.slane %v1740, %v3023
    %v3817 = vsel %vm3025, %v3816, %v3815
    %v3818 = vperm.slane %v1742, %v3027
    %v3819 = vsel %vm3029, %v3818, %v3817
    %v3820 = vperm.slane %v1744, %v3031
    %v3821 = vsel %vm3033, %v3820, %v3819
    %v3822 = vperm.slane %v1746, %v3021
    %v3823 = vperm.slane %v1748, %v3023
    %v3824 = vsel %vm3025, %v3823, %v3822
    %v3825 = vperm.slane %v1750, %v3027
    %v3826 = vsel %vm3029, %v3825, %v3824
    %v3827 = vperm.slane %v1752, %v3031
    %v3828 = vsel %vm3033, %v3827, %v3826
    %v3829 = vperm.slane %v1754, %v3021
    %v3830 = vperm.slane %v1756, %v3023
    %v3831 = vsel %vm3025, %v3830, %v3829
    %v3832 = vperm.slane %v1758, %v3027
    %v3833 = vsel %vm3029, %v3832, %v3831
    %v3834 = vperm.slane %v1760, %v3031
    %v3835 = vsel %vm3033, %v3834, %v3833
    %v3836 = vperm.slane %v1762, %v3021
    %v3837 = vperm.slane %v1764, %v3023
    %v3838 = vsel %vm3025, %v3837, %v3836
    %v3839 = vperm.slane %v1766, %v3027
    %v3840 = vsel %vm3029, %v3839, %v3838
    %v3841 = vperm.slane %v1768, %v3031
    %v3842 = vsel %vm3033, %v3841, %v3840
    %v3843 = vperm.slane %v1770, %v3021
    %v3844 = vperm.slane %v1772, %v3023
    %v3845 = vsel %vm3025, %v3844, %v3843
    %v3846 = vperm.slane %v1774, %v3027
    %v3847 = vsel %vm3029, %v3846, %v3845
    %v3848 = vperm.slane %v1776, %v3031
    %v3849 = vsel %vm3033, %v3848, %v3847
    %v3850 = vperm.slane %v1778, %v3021
    %v3851 = vperm.slane %v1780, %v3023
    %v3852 = vsel %vm3025, %v3851, %v3850
    %v3853 = vperm.slane %v1782, %v3027
    %v3854 = vsel %vm3029, %v3853, %v3852
    %v3855 = vperm.slane %v1784, %v3031
    %v3856 = vsel %vm3033, %v3855, %v3854
    %v3857 = vsel %vm3084, %v3814, %v3807
    %v3858 = vsel %vm3086, %v3821, %v3857
    %v3859 = vsel %vm3088, %v3828, %v3858
    %v3860 = vsel %vm3090, %v3835, %v3859
    %v3861 = vsel %vm3092, %v3842, %v3860
    %v3862 = vsel %vm3094, %v3849, %v3861
    %v3863 = vsel %vm3096, %v3856, %v3862
    %v3897 = vperm.slane %v2226, %v3021
    %v3898 = vperm.slane %v2228, %v3023
    %v3899 = vsel %vm3025, %v3898, %v3897
    %v3900 = vperm.slane %v2230, %v3027
    %v3901 = vsel %vm3029, %v3900, %v3899
    %v3902 = vperm.slane %v2232, %v3031
    %v3903 = vsel %vm3033, %v3902, %v3901
    %v3904 = vperm.slane %v2234, %v3021
    %v3905 = vperm.slane %v2236, %v3023
    %v3906 = vsel %vm3025, %v3905, %v3904
    %v3907 = vperm.slane %v2238, %v3027
    %v3908 = vsel %vm3029, %v3907, %v3906
    %v3909 = vperm.slane %v2240, %v3031
    %v3910 = vsel %vm3033, %v3909, %v3908
    %v3911 = vperm.slane %v2242, %v3021
    %v3912 = vperm.slane %v2244, %v3023
    %v3913 = vsel %vm3025, %v3912, %v3911
    %v3914 = vperm.slane %v2246, %v3027
    %v3915 = vsel %vm3029, %v3914, %v3913
    %v3916 = vperm.slane %v2248, %v3031
    %v3917 = vsel %vm3033, %v3916, %v3915
    %v3918 = vperm.slane %v2250, %v3021
    %v3919 = vperm.slane %v2252, %v3023
    %v3920 = vsel %vm3025, %v3919, %v3918
    %v3921 = vperm.slane %v2254, %v3027
    %v3922 = vsel %vm3029, %v3921, %v3920
    %v3923 = vperm.slane %v2256, %v3031
    %v3924 = vsel %vm3033, %v3923, %v3922
    %v3925 = vperm.slane %v2258, %v3021
    %v3926 = vperm.slane %v2260, %v3023
    %v3927 = vsel %vm3025, %v3926, %v3925
    %v3928 = vperm.slane %v2262, %v3027
    %v3929 = vsel %vm3029, %v3928, %v3927
    %v3930 = vperm.slane %v2264, %v3031
    %v3931 = vsel %vm3033, %v3930, %v3929
    %v3932 = vperm.slane %v2266, %v3021
    %v3933 = vperm.slane %v2268, %v3023
    %v3934 = vsel %vm3025, %v3933, %v3932
    %v3935 = vperm.slane %v2270, %v3027
    %v3936 = vsel %vm3029, %v3935, %v3934
    %v3937 = vperm.slane %v2272, %v3031
    %v3938 = vsel %vm3033, %v3937, %v3936
    %v3939 = vperm.slane %v2274, %v3021
    %v3940 = vperm.slane %v2276, %v3023
    %v3941 = vsel %vm3025, %v3940, %v3939
    %v3942 = vperm.slane %v2278, %v3027
    %v3943 = vsel %vm3029, %v3942, %v3941
    %v3944 = vperm.slane %v2280, %v3031
    %v3945 = vsel %vm3033, %v3944, %v3943
    %v3946 = vperm.slane %v2282, %v3021
    %v3947 = vperm.slane %v2284, %v3023
    %v3948 = vsel %vm3025, %v3947, %v3946
    %v3949 = vperm.slane %v2286, %v3027
    %v3950 = vsel %vm3029, %v3949, %v3948
    %v3951 = vperm.slane %v2288, %v3031
    %v3952 = vsel %vm3033, %v3951, %v3950
    %v3953 = vsel %vm3084, %v3910, %v3903
    %v3954 = vsel %vm3086, %v3917, %v3953
    %v3955 = vsel %vm3088, %v3924, %v3954
    %v3956 = vsel %vm3090, %v3931, %v3955
    %v3957 = vsel %vm3092, %v3938, %v3956
    %v3958 = vsel %vm3094, %v3945, %v3957
    %v3959 = vsel %vm3096, %v3952, %v3958
    %v3993 = vperm.slane %v2730, %v3021
    %v3994 = vperm.slane %v2732, %v3023
    %v3995 = vsel %vm3025, %v3994, %v3993
    %v3996 = vperm.slane %v2734, %v3027
    %v3997 = vsel %vm3029, %v3996, %v3995
    %v3998 = vperm.slane %v2736, %v3031
    %v3999 = vsel %vm3033, %v3998, %v3997
    %v4000 = vperm.slane %v2738, %v3021
    %v4001 = vperm.slane %v2740, %v3023
    %v4002 = vsel %vm3025, %v4001, %v4000
    %v4003 = vperm.slane %v2742, %v3027
    %v4004 = vsel %vm3029, %v4003, %v4002
    %v4005 = vperm.slane %v2744, %v3031
    %v4006 = vsel %vm3033, %v4005, %v4004
    %v4007 = vperm.slane %v2746, %v3021
    %v4008 = vperm.slane %v2748, %v3023
    %v4009 = vsel %vm3025, %v4008, %v4007
    %v4010 = vperm.slane %v2750, %v3027
    %v4011 = vsel %vm3029, %v4010, %v4009
    %v4012 = vperm.slane %v2752, %v3031
    %v4013 = vsel %vm3033, %v4012, %v4011
    %v4014 = vperm.slane %v2754, %v3021
    %v4015 = vperm.slane %v2756, %v3023
    %v4016 = vsel %vm3025, %v4015, %v4014
    %v4017 = vperm.slane %v2758, %v3027
    %v4018 = vsel %vm3029, %v4017, %v4016
    %v4019 = vperm.slane %v2760, %v3031
    %v4020 = vsel %vm3033, %v4019, %v4018
    %v4021 = vperm.slane %v2762, %v3021
    %v4022 = vperm.slane %v2764, %v3023
    %v4023 = vsel %vm3025, %v4022, %v4021
    %v4024 = vperm.slane %v2766, %v3027
    %v4025 = vsel %vm3029, %v4024, %v4023
    %v4026 = vperm.slane %v2768, %v3031
    %v4027 = vsel %vm3033, %v4026, %v4025
    %v4028 = vperm.slane %v2770, %v3021
    %v4029 = vperm.slane %v2772, %v3023
    %v4030 = vsel %vm3025, %v4029, %v4028
    %v4031 = vperm.slane %v2774, %v3027
    %v4032 = vsel %vm3029, %v4031, %v4030
    %v4033 = vperm.slane %v2776, %v3031
    %v4034 = vsel %vm3033, %v4033, %v4032
    %v4035 = vperm.slane %v2778, %v3021
    %v4036 = vperm.slane %v2780, %v3023
    %v4037 = vsel %vm3025, %v4036, %v4035
    %v4038 = vperm.slane %v2782, %v3027
    %v4039 = vsel %vm3029, %v4038, %v4037
    %v4040 = vperm.slane %v2784, %v3031
    %v4041 = vsel %vm3033, %v4040, %v4039
    %v4042 = vperm.slane %v2786, %v3021
    %v4043 = vperm.slane %v2788, %v3023
    %v4044 = vsel %vm3025, %v4043, %v4042
    %v4045 = vperm.slane %v2790, %v3027
    %v4046 = vsel %vm3029, %v4045, %v4044
    %v4047 = vperm.slane %v2792, %v3031
    %v4048 = vsel %vm3033, %v4047, %v4046
    %v4049 = vsel %vm3084, %v4006, %v3999
    %v4050 = vsel %vm3086, %v4013, %v4049
    %v4051 = vsel %vm3088, %v4020, %v4050
    %v4052 = vsel %vm3090, %v4027, %v4051
    %v4053 = vsel %vm3092, %v4034, %v4052
    %v4054 = vsel %vm3094, %v4041, %v4053
    %v4055 = vsel %vm3096, %v4048, %v4054
    %s4057 = scalar_lea.vmem %s1, 32
    %v4058 = vld [vmem:[%s4057] sm:$0xff]
    %v4059 = vld [vmem:[%s4057 + $0x8] sm:$0xff]
    %v4060 = vld [vmem:[%s4057 + $0x10] sm:$0xff]
    %v4061 = vld [vmem:[%s4057 + $0x18] sm:$0xff]
    %vm4062 = vcmp.gt.f32.partialorder %v4058, 0.0
    %vm4063 = vcmp.gt.f32.partialorder %v4059, 0.0
    %vm4064 = vcmp.gt.f32.partialorder %v4060, 0.0
    %vm4065 = vcmp.gt.f32.partialorder %v4061, 0.0
    %v4066 = vsel %vm4062, %v3767, -1e+30
    %v4067 = vsel %vm4063, %v3863, -1e+30
    %v4068 = vsel %vm4064, %v3959, -1e+30
    %v4069 = vsel %vm4065, %v4055, -1e+30
    %v4070 = vsel %vm284, %v4066, -inf
    %v4071 = vsel %vm284, %v4067, -inf
    %v4072 = vsel %vm284, %v4068, -inf
    %v4073 = vsel %vm284, %v4069, -inf
    %v4074 = vmax.f32 %v4070, %v4071
    %v4075 = vmax.f32 %v4072, %v4073
    %v4076 = vmax.f32 %v4074, %v4075
    %v4077 = vrot.slane %v4076, 4
    %v4078 = vmax.f32 %v4076, %v4077
    %v4079 = vrot.slane %v4078, 2
    %v4080 = vmax.f32 %v4078, %v4079
    %v4081 = vrot.slane %v4080, 1
    %v4082 = vmax.f32 %v4080, %v4081
    %v4083 = vsub.f32 %v4066, %v4082
    %v4084 = vsub.f32 %v4067, %v4082
    %v4085 = vsub.f32 %v4068, %v4082
    %v4086 = vsub.f32 %v4069, %v4082
    %v4087 = vmul.f32 %v4083, 1.442695
    %v4088 = vpow.pop %v4087
    %v4089 = vmul.f32 %v4084, 1.442695
    %v4090 = vpow.pop %v4089
    %v4091 = vmul.f32 %v4085, 1.442695
    %v4092 = vpow.pop %v4091
    %v4093 = vmul.f32 %v4086, 1.442695
    %v4094 = vpow.pop %v4093
    %v4095 = vmul.f32 %v4088, %v4058
    %v4096 = vmul.f32 %v4090, %v4059
    %v4097 = vmul.f32 %v4092, %v4060
    %v4098 = vmul.f32 %v4094, %v4061
    %v4099 = vsel %vm284, %v4095, 0.0
    %v4100 = vsel %vm284, %v4096, 0.0
    %v4101 = vadd.f32 %v4099, %v4100
    %v4102 = vsel %vm284, %v4097, 0.0
    %v4103 = vadd.f32 %v4101, %v4102
    %v4104 = vsel %vm284, %v4098, 0.0
    %v4105 = vadd.f32 %v4103, %v4104
    %v4106 = vrot.slane %v4105, 4
    %v4107 = vadd.f32 %v4105, %v4106
    %v4108 = vrot.slane %v4107, 2
    %v4109 = vadd.f32 %v4107, %v4108
    %v4110 = vrot.slane %v4109, 1
    %v4111 = vadd.f32 %v4109, %v4110
    %v4112 = vmax.f32 %v4111, 1e-30
    %v4113 = vrcp.pop %v4112
    %v4114 = vmul.f32 %v4095, %v4113
    %v4115 = vmul.f32 %v4096, %v4113
    %v4116 = vmul.f32 %v4097, %v4113
    %v4117 = vmul.f32 %v4098, %v4113
    %v4118 = vperm.slane %v2985, 1
    %4119 = vxpose.xlu0.b32.start [1/16] %v4114, 128
    %4120 = vxpose.xlu0.b32.cont [2/16] %v4115, 128
    %4121 = vxpose.xlu0.b32.cont [3/16] %v4116, 128
    %4122 = vxpose.xlu0.b32.cont [4/16] %v4117, 128
    %4123 = vxpose.xlu0.b32.cont [5/16] 0.0, 128
    %4124 = vxpose.xlu0.b32.cont [6/16] 0.0, 128
    %4125 = vxpose.xlu0.b32.cont [7/16] 0.0, 128
    %4126 = vxpose.xlu0.b32.cont [8/16] 0.0, 128
    %4127 = vxpose.xlu0.b32.cont [9/16] 0.0, 128
    %4128 = vxpose.xlu0.b32.cont [10/16] 0.0, 128
    %4129 = vxpose.xlu0.b32.cont [11/16] 0.0, 128
    %4130 = vxpose.xlu0.b32.cont [12/16] 0.0, 128
    %4131 = vxpose.xlu0.b32.cont [13/16] 0.0, 128
    %4132 = vxpose.xlu0.b32.cont [14/16] 0.0, 128
    %4133 = vxpose.xlu0.b32.cont [15/16] 0.0, 128
    %4134 = vxpose.xlu0.b32.end [16/16] 0.0, 128
    %v4135 = vpop.trf.xlu0
    %v4136 = vpop.trf.xlu0
    %v4137 = vpop.trf.xlu0
    %v4138 = vpop.trf.xlu0
    %v4139 = vpop.trf.xlu0
    %v4140 = vpop.trf.xlu0
    %v4141 = vpop.trf.xlu0
    %v4142 = vpop.trf.xlu0
    %v4143 = vpop.trf.xlu0
    %v4144 = vpop.trf.xlu0
    %v4145 = vpop.trf.xlu0
    %v4146 = vpop.trf.xlu0
    %v4147 = vpop.trf.xlu0
    %v4148 = vpop.trf.xlu0
    %v4149 = vpop.trf.xlu0
    %v4150 = vpop.trf.xlu0
    %4151 = vrot.lane.b32.xlu0 %v940, 96
    %v4152 = vpop.permute.xlu0 %4151
    %4153 = vrot.lane.b32.xlu0 %v941, 96
    %v4154 = vpop.permute.xlu0 %4153
    %4155 = vrot.lane.b32.xlu0 %v942, 96
    %v4156 = vpop.permute.xlu0 %4155
    %4157 = vrot.lane.b32.xlu0 %v943, 96
    %v4158 = vpop.permute.xlu0 %4157
    %v4164 = vsel %vm284, %v4135, 0
    %v4167 = vsel %vm284, %v4136, 0
    %v4170 = vsel %vm284, %v4137, 0
    %v4173 = vsel %vm284, %v4138, 0
    %4175 = vmatpush.msra.mxu0 0.0
    %4176 = vmatpush.msra.mxu0 0.0
    %4177 = vmatpush.msra.mxu0 0.0
    %4178 = vmatpush.msra.mxu0 0.0
    %4179 = vmatpush.msra.mxu0 0.0
    %4180 = vmatpush.msra.mxu0 0.0
    %4181 = vmatpush.msra.mxu0 0.0
    %4182 = vmatpush.msra.mxu0 0.0
    %4183 = vmatpush.msra.mxu0 0.0
    %4184 = vmatpush.msra.mxu0 0.0
    %4185 = vmatpush.msra.mxu0 0.0
    %4186 = vmatpush.msra.mxu0 0.0
    %4187 = vmatpush.msra.mxu0 %v4158
    %4188 = vmatpush.msra.mxu0 %v4156
    %4189 = vmatpush.msra.mxu0 %v4154
    %4190 = vmatpush.msra.mxu0 %v4152
    %4191 = vmatmul.f32.gmra.mxu0 %v4164
    %v4192 = vpop.f32.mrf.mxu0
    %v4193 = vadd.f32 %v4118, %v4192
    %4194 = vmatmul.f32.gmra.mxu0 %v4167
    %v4195 = vpop.f32.mrf.mxu0
    %v4196 = vadd.f32 %v4118, %v4195
    %4197 = vmatmul.f32.gmra.mxu0 %v4170
    %v4198 = vpop.f32.mrf.mxu0
    %v4199 = vadd.f32 %v4118, %v4198
    %4200 = vmatmul.f32.gmra.mxu0 %v4173
    %v4201 = vpop.f32.mrf.mxu0
    %v4202 = vadd.f32 %v4118, %v4201
    %4203 = vdwg.mxu0
    %v4204 = vmul.f32 %v4193, %v3523
    %v4205 = vmul.f32 %v4196, %v3527
    %v4206 = vmul.f32 %v4199, %v3531
    %v4207 = vmul.f32 %v4202, %v3535
    %v4208 = vsel %vm284, %v4204, 0.0
    %v4209 = vsel %vm284, %v4205, 0.0
    %v4210 = vadd.f32 %v4208, %v4209
    %v4211 = vsel %vm284, %v4206, 0.0
    %v4212 = vadd.f32 %v4210, %v4211
    %v4213 = vsel %vm284, %v4207, 0.0
    %v4214 = vadd.f32 %v4212, %v4213
    %4215 = vadd.xlane.f32.xlu0 %v4214
    %v4216 = vpop.xlane.xlu0 %4215
    %v4217 = vrot.slane %v4216, 4
    %v4218 = vadd.f32 %v4216, %v4217
    %v4219 = vrot.slane %v4218, 2
    %v4220 = vadd.f32 %v4218, %v4219
    %v4221 = vrot.slane %v4220, 1
    %v4222 = vadd.f32 %v4220, %v4221
    %s4223 = vtos %v4222
    %v4224 = vstv %s3557
    %v4225 = vrcp.pop %v4224
    %v4226 = vmul.f32 %v4224, %v4225
    %v4227 = vsub.f32 1.0, %v4226
    %v4228 = vmul.f32 %v4225, %v4227
    %v4229 = vadd.f32 %v4225, %v4228
    %vm4230 = vweird.f32 %v4224
    %vm4231 = vweird.f32 %v4225
    %vm4232 = vmor %vm4230, %vm4231
    %v4233 = vsel %vm4232, %v4225, %v4229
    %v4234 = vand.u32 2147483647, %v4224
    %vm4235 = vcmp.eq.f32.partialorder %v4234, 8.507059e+37
    %v4236 = vand.u32 %v4224, 2147483648
    %v4237 = vor.u32 1.1754944e-38, %v4236
    %v4238 = vsel %vm4235, %v4237, %v4233
    %s4239 = vtos %v4238
    %s4240 = smul.f32 %s4223, %s4239
    %v4241 = vstv %s4240
    %v4242 = vsub.f32 %v4193, %v4241
    %v4243 = vsub.f32 %v4196, %v4241
    %v4244 = vsub.f32 %v4199, %v4241
    %v4245 = vsub.f32 %v4202, %v4241
    %v4246 = vmul.f32 %v4242, %v3523
    %v4247 = vmul.f32 %v4243, %v3527
    %v4248 = vmul.f32 %v4244, %v3531
    %v4249 = vmul.f32 %v4245, %v3535
    %v4250 = vmul.f32 %v4246, %v4246
    %v4251 = vmul.f32 %v4247, %v4247
    %v4252 = vmul.f32 %v4248, %v4248
    %v4253 = vmul.f32 %v4249, %v4249
    %v4254 = vsel %vm284, %v4250, 0.0
    %v4255 = vsel %vm284, %v4251, 0.0
    %v4256 = vadd.f32 %v4254, %v4255
    %v4257 = vsel %vm284, %v4252, 0.0
    %v4258 = vadd.f32 %v4256, %v4257
    %v4259 = vsel %vm284, %v4253, 0.0
    %v4260 = vadd.f32 %v4258, %v4259
    %4261 = vadd.xlane.f32.xlu0 %v4260
    %v4262 = vpop.xlane.xlu0 %4261
    %v4263 = vrot.slane %v4262, 4
    %v4264 = vadd.f32 %v4262, %v4263
    %v4265 = vrot.slane %v4264, 2
    %v4266 = vadd.f32 %v4264, %v4265
    %v4267 = vrot.slane %v4266, 1
    %v4268 = vadd.f32 %v4266, %v4267
    %s4269 = vtos %v4268
    %v4270 = vstv %s3557
    %v4271 = vrcp.pop %v4270
    %v4272 = vmul.f32 %v4270, %v4271
    %v4273 = vsub.f32 1.0, %v4272
    %v4274 = vmul.f32 %v4271, %v4273
    %v4275 = vadd.f32 %v4271, %v4274
    %vm4276 = vweird.f32 %v4270
    %vm4277 = vweird.f32 %v4271
    %vm4278 = vmor %vm4276, %vm4277
    %v4279 = vsel %vm4278, %v4271, %v4275
    %v4280 = vand.u32 2147483647, %v4270
    %vm4281 = vcmp.eq.f32.partialorder %v4280, 8.507059e+37
    %v4282 = vand.u32 %v4270, 2147483648
    %v4283 = vor.u32 1.1754944e-38, %v4282
    %v4284 = vsel %vm4281, %v4283, %v4279
    %s4285 = vtos %v4284
    %s4286 = smul.f32 %s4269, %s4285
    %v4287 = vstv %s4286
    %v4288 = vrsqrt.pop %v4287
    %v4289 = vmul.f32 %v4288, %v4287
    %v4290 = vmul.f32 %v4289, %v4288
    %v4291 = vmul.f32 0.5, %v4290
    %v4292 = vsub.f32 1.5, %v4291
    %v4293 = vmul.f32 %v4288, %v4292
    %v4294 = vmul.f32 %v4287, %v4293
    %vm4295 = vcmp.eq.f32.partialorder %v4287, inf
    %v4296 = vsel %vm4295, %v4287, %v4294
    %vm4297 = vcmp.eq.f32.partialorder %v4287, 0.0
    %v4298 = vand.u32 %v4287, 2147483648
    %v4299 = vsel %vm4297, %v4298, %v4296
    %s4300 = vtos %v4299
    %s4301 = sadd.f32 %s4300, 1e-05
    %v4302 = vstv %s4301
    %v4303 = vrcp.pop %v4302
    %v4304 = vmul.f32 %v4302, %v4303
    %v4305 = vsub.f32 1.0, %v4304
    %v4306 = vmul.f32 %v4303, %v4305
    %v4307 = vadd.f32 %v4303, %v4306
    %vm4308 = vweird.f32 %v4302
    %vm4309 = vweird.f32 %v4303
    %vm4310 = vmor %vm4308, %vm4309
    %v4311 = vsel %vm4310, %v4303, %v4307
    %v4312 = vand.u32 2147483647, %v4302
    %vm4313 = vcmp.eq.f32.partialorder %v4312, 8.507059e+37
    %v4314 = vand.u32 %v4302, 2147483648
    %v4315 = vor.u32 1.1754944e-38, %v4314
    %v4316 = vsel %vm4313, %v4315, %v4311
    %v4317 = vmul.f32 %v4242, %v4316
    %v4318 = vmul.f32 %v4243, %v4316
    %v4319 = vmul.f32 %v4244, %v4316
    %v4320 = vmul.f32 %v4245, %v4316
    %v4321 = vperm.slane %v2986, 1
    %v4322 = vmul.f32 %v4317, %v4321
    %v4323 = vmul.f32 %v4318, %v4321
    %v4324 = vmul.f32 %v4319, %v4321
    %v4325 = vmul.f32 %v4320, %v4321
    %v4326 = vperm.slane %v2987, 1
    %v4327 = vadd.f32 %v4322, %v4326
    %v4328 = vadd.f32 %v4323, %v4326
    %v4329 = vadd.f32 %v4324, %v4326
    %v4330 = vadd.f32 %v4325, %v4326
    %v4331 = vmax.f32 %v4327, 0.0
    %v4332 = vmax.f32 %v4328, 0.0
    %v4333 = vmax.f32 %v4329, 0.0
    %v4334 = vmax.f32 %v4330, 0.0
    %v4335 = vadd.f32 %v3669, %v4331
    %v4336 = vadd.f32 %v3670, %v4332
    %v4337 = vadd.f32 %v3671, %v4333
    %v4338 = vadd.f32 %v3672, %v4334
    %v4371 = vperm.slane %v1313, %v3021
    %v4372 = vperm.slane %v1315, %v3023
    %v4373 = vsel %vm3025, %v4372, %v4371
    %v4374 = vperm.slane %v1317, %v3027
    %v4375 = vsel %vm3029, %v4374, %v4373
    %v4376 = vperm.slane %v1319, %v3031
    %v4377 = vsel %vm3033, %v4376, %v4375
    %v4378 = vperm.slane %v1321, %v3021
    %v4379 = vperm.slane %v1323, %v3023
    %v4380 = vsel %vm3025, %v4379, %v4378
    %v4381 = vperm.slane %v1325, %v3027
    %v4382 = vsel %vm3029, %v4381, %v4380
    %v4383 = vperm.slane %v1327, %v3031
    %v4384 = vsel %vm3033, %v4383, %v4382
    %v4385 = vperm.slane %v1329, %v3021
    %v4386 = vperm.slane %v1331, %v3023
    %v4387 = vsel %vm3025, %v4386, %v4385
    %v4388 = vperm.slane %v1333, %v3027
    %v4389 = vsel %vm3029, %v4388, %v4387
    %v4390 = vperm.slane %v1335, %v3031
    %v4391 = vsel %vm3033, %v4390, %v4389
    %v4392 = vperm.slane %v1337, %v3021
    %v4393 = vperm.slane %v1339, %v3023
    %v4394 = vsel %vm3025, %v4393, %v4392
    %v4395 = vperm.slane %v1341, %v3027
    %v4396 = vsel %vm3029, %v4395, %v4394
    %v4397 = vperm.slane %v1343, %v3031
    %v4398 = vsel %vm3033, %v4397, %v4396
    %v4399 = vperm.slane %v1345, %v3021
    %v4400 = vperm.slane %v1347, %v3023
    %v4401 = vsel %vm3025, %v4400, %v4399
    %v4402 = vperm.slane %v1349, %v3027
    %v4403 = vsel %vm3029, %v4402, %v4401
    %v4404 = vperm.slane %v1351, %v3031
    %v4405 = vsel %vm3033, %v4404, %v4403
    %v4406 = vperm.slane %v1353, %v3021
    %v4407 = vperm.slane %v1355, %v3023
    %v4408 = vsel %vm3025, %v4407, %v4406
    %v4409 = vperm.slane %v1357, %v3027
    %v4410 = vsel %vm3029, %v4409, %v4408
    %v4411 = vperm.slane %v1359, %v3031
    %v4412 = vsel %vm3033, %v4411, %v4410
    %v4413 = vperm.slane %v1361, %v3021
    %v4414 = vperm.slane %v1363, %v3023
    %v4415 = vsel %vm3025, %v4414, %v4413
    %v4416 = vperm.slane %v1365, %v3027
    %v4417 = vsel %vm3029, %v4416, %v4415
    %v4418 = vperm.slane %v1367, %v3031
    %v4419 = vsel %vm3033, %v4418, %v4417
    %v4420 = vperm.slane %v1369, %v3021
    %v4421 = vperm.slane %v1371, %v3023
    %v4422 = vsel %vm3025, %v4421, %v4420
    %v4423 = vperm.slane %v1373, %v3027
    %v4424 = vsel %vm3029, %v4423, %v4422
    %v4425 = vperm.slane %v1375, %v3031
    %v4426 = vsel %vm3033, %v4425, %v4424
    %v4427 = vsel %vm3084, %v4384, %v4377
    %v4428 = vsel %vm3086, %v4391, %v4427
    %v4429 = vsel %vm3088, %v4398, %v4428
    %v4430 = vsel %vm3090, %v4405, %v4429
    %v4431 = vsel %vm3092, %v4412, %v4430
    %v4432 = vsel %vm3094, %v4419, %v4431
    %v4433 = vsel %vm3096, %v4426, %v4432
    %v4467 = vperm.slane %v1818, %v3021
    %v4468 = vperm.slane %v1820, %v3023
    %v4469 = vsel %vm3025, %v4468, %v4467
    %v4470 = vperm.slane %v1822, %v3027
    %v4471 = vsel %vm3029, %v4470, %v4469
    %v4472 = vperm.slane %v1824, %v3031
    %v4473 = vsel %vm3033, %v4472, %v4471
    %v4474 = vperm.slane %v1826, %v3021
    %v4475 = vperm.slane %v1828, %v3023
    %v4476 = vsel %vm3025, %v4475, %v4474
    %v4477 = vperm.slane %v1830, %v3027
    %v4478 = vsel %vm3029, %v4477, %v4476
    %v4479 = vperm.slane %v1832, %v3031
    %v4480 = vsel %vm3033, %v4479, %v4478
    %v4481 = vperm.slane %v1834, %v3021
    %v4482 = vperm.slane %v1836, %v3023
    %v4483 = vsel %vm3025, %v4482, %v4481
    %v4484 = vperm.slane %v1838, %v3027
    %v4485 = vsel %vm3029, %v4484, %v4483
    %v4486 = vperm.slane %v1840, %v3031
    %v4487 = vsel %vm3033, %v4486, %v4485
    %v4488 = vperm.slane %v1842, %v3021
    %v4489 = vperm.slane %v1844, %v3023
    %v4490 = vsel %vm3025, %v4489, %v4488
    %v4491 = vperm.slane %v1846, %v3027
    %v4492 = vsel %vm3029, %v4491, %v4490
    %v4493 = vperm.slane %v1848, %v3031
    %v4494 = vsel %vm3033, %v4493, %v4492
    %v4495 = vperm.slane %v1850, %v3021
    %v4496 = vperm.slane %v1852, %v3023
    %v4497 = vsel %vm3025, %v4496, %v4495
    %v4498 = vperm.slane %v1854, %v3027
    %v4499 = vsel %vm3029, %v4498, %v4497
    %v4500 = vperm.slane %v1856, %v3031
    %v4501 = vsel %vm3033, %v4500, %v4499
    %v4502 = vperm.slane %v1858, %v3021
    %v4503 = vperm.slane %v1860, %v3023
    %v4504 = vsel %vm3025, %v4503, %v4502
    %v4505 = vperm.slane %v1862, %v3027
    %v4506 = vsel %vm3029, %v4505, %v4504
    %v4507 = vperm.slane %v1864, %v3031
    %v4508 = vsel %vm3033, %v4507, %v4506
    %v4509 = vperm.slane %v1866, %v3021
    %v4510 = vperm.slane %v1868, %v3023
    %v4511 = vsel %vm3025, %v4510, %v4509
    %v4512 = vperm.slane %v1870, %v3027
    %v4513 = vsel %vm3029, %v4512, %v4511
    %v4514 = vperm.slane %v1872, %v3031
    %v4515 = vsel %vm3033, %v4514, %v4513
    %v4516 = vperm.slane %v1874, %v3021
    %v4517 = vperm.slane %v1876, %v3023
    %v4518 = vsel %vm3025, %v4517, %v4516
    %v4519 = vperm.slane %v1878, %v3027
    %v4520 = vsel %vm3029, %v4519, %v4518
    %v4521 = vperm.slane %v1880, %v3031
    %v4522 = vsel %vm3033, %v4521, %v4520
    %v4523 = vsel %vm3084, %v4480, %v4473
    %v4524 = vsel %vm3086, %v4487, %v4523
    %v4525 = vsel %vm3088, %v4494, %v4524
    %v4526 = vsel %vm3090, %v4501, %v4525
    %v4527 = vsel %vm3092, %v4508, %v4526
    %v4528 = vsel %vm3094, %v4515, %v4527
    %v4529 = vsel %vm3096, %v4522, %v4528
    %v4563 = vperm.slane %v2322, %v3021
    %v4564 = vperm.slane %v2324, %v3023
    %v4565 = vsel %vm3025, %v4564, %v4563
    %v4566 = vperm.slane %v2326, %v3027
    %v4567 = vsel %vm3029, %v4566, %v4565
    %v4568 = vperm.slane %v2328, %v3031
    %v4569 = vsel %vm3033, %v4568, %v4567
    %v4570 = vperm.slane %v2330, %v3021
    %v4571 = vperm.slane %v2332, %v3023
    %v4572 = vsel %vm3025, %v4571, %v4570
    %v4573 = vperm.slane %v2334, %v3027
    %v4574 = vsel %vm3029, %v4573, %v4572
    %v4575 = vperm.slane %v2336, %v3031
    %v4576 = vsel %vm3033, %v4575, %v4574
    %v4577 = vperm.slane %v2338, %v3021
    %v4578 = vperm.slane %v2340, %v3023
    %v4579 = vsel %vm3025, %v4578, %v4577
    %v4580 = vperm.slane %v2342, %v3027
    %v4581 = vsel %vm3029, %v4580, %v4579
    %v4582 = vperm.slane %v2344, %v3031
    %v4583 = vsel %vm3033, %v4582, %v4581
    %v4584 = vperm.slane %v2346, %v3021
    %v4585 = vperm.slane %v2348, %v3023
    %v4586 = vsel %vm3025, %v4585, %v4584
    %v4587 = vperm.slane %v2350, %v3027
    %v4588 = vsel %vm3029, %v4587, %v4586
    %v4589 = vperm.slane %v2352, %v3031
    %v4590 = vsel %vm3033, %v4589, %v4588
    %v4591 = vperm.slane %v2354, %v3021
    %v4592 = vperm.slane %v2356, %v3023
    %v4593 = vsel %vm3025, %v4592, %v4591
    %v4594 = vperm.slane %v2358, %v3027
    %v4595 = vsel %vm3029, %v4594, %v4593
    %v4596 = vperm.slane %v2360, %v3031
    %v4597 = vsel %vm3033, %v4596, %v4595
    %v4598 = vperm.slane %v2362, %v3021
    %v4599 = vperm.slane %v2364, %v3023
    %v4600 = vsel %vm3025, %v4599, %v4598
    %v4601 = vperm.slane %v2366, %v3027
    %v4602 = vsel %vm3029, %v4601, %v4600
    %v4603 = vperm.slane %v2368, %v3031
    %v4604 = vsel %vm3033, %v4603, %v4602
    %v4605 = vperm.slane %v2370, %v3021
    %v4606 = vperm.slane %v2372, %v3023
    %v4607 = vsel %vm3025, %v4606, %v4605
    %v4608 = vperm.slane %v2374, %v3027
    %v4609 = vsel %vm3029, %v4608, %v4607
    %v4610 = vperm.slane %v2376, %v3031
    %v4611 = vsel %vm3033, %v4610, %v4609
    %v4612 = vperm.slane %v2378, %v3021
    %v4613 = vperm.slane %v2380, %v3023
    %v4614 = vsel %vm3025, %v4613, %v4612
    %v4615 = vperm.slane %v2382, %v3027
    %v4616 = vsel %vm3029, %v4615, %v4614
    %v4617 = vperm.slane %v2384, %v3031
    %v4618 = vsel %vm3033, %v4617, %v4616
    %v4619 = vsel %vm3084, %v4576, %v4569
    %v4620 = vsel %vm3086, %v4583, %v4619
    %v4621 = vsel %vm3088, %v4590, %v4620
    %v4622 = vsel %vm3090, %v4597, %v4621
    %v4623 = vsel %vm3092, %v4604, %v4622
    %v4624 = vsel %vm3094, %v4611, %v4623
    %v4625 = vsel %vm3096, %v4618, %v4624
    %v4659 = vperm.slane %v2826, %v3021
    %v4660 = vperm.slane %v2828, %v3023
    %v4661 = vsel %vm3025, %v4660, %v4659
    %v4662 = vperm.slane %v2830, %v3027
    %v4663 = vsel %vm3029, %v4662, %v4661
    %v4664 = vperm.slane %v2832, %v3031
    %v4665 = vsel %vm3033, %v4664, %v4663
    %v4666 = vperm.slane %v2834, %v3021
    %v4667 = vperm.slane %v2836, %v3023
    %v4668 = vsel %vm3025, %v4667, %v4666
    %v4669 = vperm.slane %v2838, %v3027
    %v4670 = vsel %vm3029, %v4669, %v4668
    %v4671 = vperm.slane %v2840, %v3031
    %v4672 = vsel %vm3033, %v4671, %v4670
    %v4673 = vperm.slane %v2842, %v3021
    %v4674 = vperm.slane %v2844, %v3023
    %v4675 = vsel %vm3025, %v4674, %v4673
    %v4676 = vperm.slane %v2846, %v3027
    %v4677 = vsel %vm3029, %v4676, %v4675
    %v4678 = vperm.slane %v2848, %v3031
    %v4679 = vsel %vm3033, %v4678, %v4677
    %v4680 = vperm.slane %v2850, %v3021
    %v4681 = vperm.slane %v2852, %v3023
    %v4682 = vsel %vm3025, %v4681, %v4680
    %v4683 = vperm.slane %v2854, %v3027
    %v4684 = vsel %vm3029, %v4683, %v4682
    %v4685 = vperm.slane %v2856, %v3031
    %v4686 = vsel %vm3033, %v4685, %v4684
    %v4687 = vperm.slane %v2858, %v3021
    %v4688 = vperm.slane %v2860, %v3023
    %v4689 = vsel %vm3025, %v4688, %v4687
    %v4690 = vperm.slane %v2862, %v3027
    %v4691 = vsel %vm3029, %v4690, %v4689
    %v4692 = vperm.slane %v2864, %v3031
    %v4693 = vsel %vm3033, %v4692, %v4691
    %v4694 = vperm.slane %v2866, %v3021
    %v4695 = vperm.slane %v2868, %v3023
    %v4696 = vsel %vm3025, %v4695, %v4694
    %v4697 = vperm.slane %v2870, %v3027
    %v4698 = vsel %vm3029, %v4697, %v4696
    %v4699 = vperm.slane %v2872, %v3031
    %v4700 = vsel %vm3033, %v4699, %v4698
    %v4701 = vperm.slane %v2874, %v3021
    %v4702 = vperm.slane %v2876, %v3023
    %v4703 = vsel %vm3025, %v4702, %v4701
    %v4704 = vperm.slane %v2878, %v3027
    %v4705 = vsel %vm3029, %v4704, %v4703
    %v4706 = vperm.slane %v2880, %v3031
    %v4707 = vsel %vm3033, %v4706, %v4705
    %v4708 = vperm.slane %v2882, %v3021
    %v4709 = vperm.slane %v2884, %v3023
    %v4710 = vsel %vm3025, %v4709, %v4708
    %v4711 = vperm.slane %v2886, %v3027
    %v4712 = vsel %vm3029, %v4711, %v4710
    %v4713 = vperm.slane %v2888, %v3031
    %v4714 = vsel %vm3033, %v4713, %v4712
    %v4715 = vsel %vm3084, %v4672, %v4665
    %v4716 = vsel %vm3086, %v4679, %v4715
    %v4717 = vsel %vm3088, %v4686, %v4716
    %v4718 = vsel %vm3090, %v4693, %v4717
    %v4719 = vsel %vm3092, %v4700, %v4718
    %v4720 = vsel %vm3094, %v4707, %v4719
    %v4721 = vsel %vm3096, %v4714, %v4720
    %s4723 = scalar_lea.vmem %s1, 64
    %v4724 = vld [vmem:[%s4723] sm:$0xff]
    %v4725 = vld [vmem:[%s4723 + $0x8] sm:$0xff]
    %v4726 = vld [vmem:[%s4723 + $0x10] sm:$0xff]
    %v4727 = vld [vmem:[%s4723 + $0x18] sm:$0xff]
    %vm4728 = vcmp.gt.f32.partialorder %v4724, 0.0
    %vm4729 = vcmp.gt.f32.partialorder %v4725, 0.0
    %vm4730 = vcmp.gt.f32.partialorder %v4726, 0.0
    %vm4731 = vcmp.gt.f32.partialorder %v4727, 0.0
    %v4732 = vsel %vm4728, %v4433, -1e+30
    %v4733 = vsel %vm4729, %v4529, -1e+30
    %v4734 = vsel %vm4730, %v4625, -1e+30
    %v4735 = vsel %vm4731, %v4721, -1e+30
    %v4736 = vsel %vm284, %v4732, -inf
    %v4737 = vsel %vm284, %v4733, -inf
    %v4738 = vsel %vm284, %v4734, -inf
    %v4739 = vsel %vm284, %v4735, -inf
    %v4740 = vmax.f32 %v4736, %v4737
    %v4741 = vmax.f32 %v4738, %v4739
    %v4742 = vmax.f32 %v4740, %v4741
    %v4743 = vrot.slane %v4742, 4
    %v4744 = vmax.f32 %v4742, %v4743
    %v4745 = vrot.slane %v4744, 2
    %v4746 = vmax.f32 %v4744, %v4745
    %v4747 = vrot.slane %v4746, 1
    %v4748 = vmax.f32 %v4746, %v4747
    %v4749 = vsub.f32 %v4732, %v4748
    %v4750 = vsub.f32 %v4733, %v4748
    %v4751 = vsub.f32 %v4734, %v4748
    %v4752 = vsub.f32 %v4735, %v4748
    %v4753 = vmul.f32 %v4749, 1.442695
    %v4754 = vpow.pop %v4753
    %v4755 = vmul.f32 %v4750, 1.442695
    %v4756 = vpow.pop %v4755
    %v4757 = vmul.f32 %v4751, 1.442695
    %v4758 = vpow.pop %v4757
    %v4759 = vmul.f32 %v4752, 1.442695
    %v4760 = vpow.pop %v4759
    %v4761 = vmul.f32 %v4754, %v4724
    %v4762 = vmul.f32 %v4756, %v4725
    %v4763 = vmul.f32 %v4758, %v4726
    %v4764 = vmul.f32 %v4760, %v4727
    %v4765 = vsel %vm284, %v4761, 0.0
    %v4766 = vsel %vm284, %v4762, 0.0
    %v4767 = vadd.f32 %v4765, %v4766
    %v4768 = vsel %vm284, %v4763, 0.0
    %v4769 = vadd.f32 %v4767, %v4768
    %v4770 = vsel %vm284, %v4764, 0.0
    %v4771 = vadd.f32 %v4769, %v4770
    %v4772 = vrot.slane %v4771, 4
    %v4773 = vadd.f32 %v4771, %v4772
    %v4774 = vrot.slane %v4773, 2
    %v4775 = vadd.f32 %v4773, %v4774
    %v4776 = vrot.slane %v4775, 1
    %v4777 = vadd.f32 %v4775, %v4776
    %v4778 = vmax.f32 %v4777, 1e-30
    %v4779 = vrcp.pop %v4778
    %v4780 = vmul.f32 %v4761, %v4779
    %v4781 = vmul.f32 %v4762, %v4779
    %v4782 = vmul.f32 %v4763, %v4779
    %v4783 = vmul.f32 %v4764, %v4779
    %4784 = vxpose.xlu0.b32.start [1/16] %v4780, 128
    %4785 = vxpose.xlu0.b32.cont [2/16] %v4781, 128
    %4786 = vxpose.xlu0.b32.cont [3/16] %v4782, 128
    %4787 = vxpose.xlu0.b32.cont [4/16] %v4783, 128
    %4788 = vxpose.xlu0.b32.cont [5/16] 0.0, 128
    %4789 = vxpose.xlu0.b32.cont [6/16] 0.0, 128
    %4790 = vxpose.xlu0.b32.cont [7/16] 0.0, 128
    %4791 = vxpose.xlu0.b32.cont [8/16] 0.0, 128
    %4792 = vxpose.xlu0.b32.cont [9/16] 0.0, 128
    %4793 = vxpose.xlu0.b32.cont [10/16] 0.0, 128
    %4794 = vxpose.xlu0.b32.cont [11/16] 0.0, 128
    %4795 = vxpose.xlu0.b32.cont [12/16] 0.0, 128
    %4796 = vxpose.xlu0.b32.cont [13/16] 0.0, 128
    %4797 = vxpose.xlu0.b32.cont [14/16] 0.0, 128
    %4798 = vxpose.xlu0.b32.cont [15/16] 0.0, 128
    %4799 = vxpose.xlu0.b32.end [16/16] 0.0, 128
    %v4800 = vpop.trf.xlu0
    %v4801 = vpop.trf.xlu0
    %v4802 = vpop.trf.xlu0
    %v4803 = vpop.trf.xlu0
    %v4804 = vpop.trf.xlu0
    %v4805 = vpop.trf.xlu0
    %v4806 = vpop.trf.xlu0
    %v4807 = vpop.trf.xlu0
    %v4808 = vpop.trf.xlu0
    %v4809 = vpop.trf.xlu0
    %v4810 = vpop.trf.xlu0
    %v4811 = vpop.trf.xlu0
    %v4812 = vpop.trf.xlu0
    %v4813 = vpop.trf.xlu0
    %v4814 = vpop.trf.xlu0
    %v4815 = vpop.trf.xlu0
    %4816 = vrot.lane.b32.xlu0 %v940, 64
    %v4817 = vpop.permute.xlu0 %4816
    %4818 = vrot.lane.b32.xlu0 %v941, 64
    %v4819 = vpop.permute.xlu0 %4818
    %4820 = vrot.lane.b32.xlu0 %v942, 64
    %v4821 = vpop.permute.xlu0 %4820
    %4822 = vrot.lane.b32.xlu0 %v943, 64
    %v4823 = vpop.permute.xlu0 %4822
    %v4829 = vsel %vm284, %v4800, 0
    %v4832 = vsel %vm284, %v4801, 0
    %v4835 = vsel %vm284, %v4802, 0
    %v4838 = vsel %vm284, %v4803, 0
    %4840 = vmatpush.msra.mxu0 0.0
    %4841 = vmatpush.msra.mxu0 0.0
    %4842 = vmatpush.msra.mxu0 0.0
    %4843 = vmatpush.msra.mxu0 0.0
    %4844 = vmatpush.msra.mxu0 0.0
    %4845 = vmatpush.msra.mxu0 0.0
    %4846 = vmatpush.msra.mxu0 0.0
    %4847 = vmatpush.msra.mxu0 0.0
    %4848 = vmatpush.msra.mxu0 0.0
    %4849 = vmatpush.msra.mxu0 0.0
    %4850 = vmatpush.msra.mxu0 0.0
    %4851 = vmatpush.msra.mxu0 0.0
    %4852 = vmatpush.msra.mxu0 %v4823
    %4853 = vmatpush.msra.mxu0 %v4821
    %4854 = vmatpush.msra.mxu0 %v4819
    %4855 = vmatpush.msra.mxu0 %v4817
    %4856 = vmatmul.f32.gmra.mxu0 %v4829
    %v4857 = vpop.f32.mrf.mxu0
    %v4858 = vadd.f32 %v3447, %v4857
    %4859 = vmatmul.f32.gmra.mxu0 %v4832
    %v4860 = vpop.f32.mrf.mxu0
    %v4861 = vadd.f32 %v3447, %v4860
    %4862 = vmatmul.f32.gmra.mxu0 %v4835
    %v4863 = vpop.f32.mrf.mxu0
    %v4864 = vadd.f32 %v3447, %v4863
    %4865 = vmatmul.f32.gmra.mxu0 %v4838
    %v4866 = vpop.f32.mrf.mxu0
    %v4867 = vadd.f32 %v3447, %v4866
    %4868 = vdwg.mxu0
    %4869 = vset.pattern.permute.xlu0 1
    %4870 = vperm.xlu0 %4869, %v215
    %v4871 = vpop.permute.xlu0 %4870
    %4873 = vset.pattern.permute.xlu0 1
    %4874 = vperm.xlu0 %4873, %v216
    %v4875 = vpop.permute.xlu0 %4874
    %4877 = vset.pattern.permute.xlu0 1
    %4878 = vperm.xlu0 %4877, %v217
    %v4879 = vpop.permute.xlu0 %4878
    %4881 = vset.pattern.permute.xlu0 1
    %4882 = vperm.xlu0 %4881, %v218
    %v4883 = vpop.permute.xlu0 %4882
    %v4885 = vmul.f32 %v4858, %v4871
    %v4886 = vmul.f32 %v4861, %v4875
    %v4887 = vmul.f32 %v4864, %v4879
    %v4888 = vmul.f32 %v4867, %v4883
    %v4889 = vsel %vm284, %v4885, 0.0
    %v4890 = vsel %vm284, %v4886, 0.0
    %v4891 = vadd.f32 %v4889, %v4890
    %v4892 = vsel %vm284, %v4887, 0.0
    %v4893 = vadd.f32 %v4891, %v4892
    %v4894 = vsel %vm284, %v4888, 0.0
    %v4895 = vadd.f32 %v4893, %v4894
    %4896 = vadd.xlane.f32.xlu0 %v4895
    %v4897 = vpop.xlane.xlu0 %4896
    %v4898 = vrot.slane %v4897, 4
    %v4899 = vadd.f32 %v4897, %v4898
    %v4900 = vrot.slane %v4899, 2
    %v4901 = vadd.f32 %v4899, %v4900
    %v4902 = vrot.slane %v4901, 1
    %v4903 = vadd.f32 %v4901, %v4902
    %s4904 = vtos %v4903
    %s4905 = smul.f32 %s275, 32.0
    %v4906 = vstv %s4905
    %v4907 = vrcp.pop %v4906
    %v4908 = vmul.f32 %v4906, %v4907
    %v4909 = vsub.f32 1.0, %v4908
    %v4910 = vmul.f32 %v4907, %v4909
    %v4911 = vadd.f32 %v4907, %v4910
    %vm4912 = vweird.f32 %v4906
    %vm4913 = vweird.f32 %v4907
    %vm4914 = vmor %vm4912, %vm4913
    %v4915 = vsel %vm4914, %v4907, %v4911
    %v4916 = vand.u32 2147483647, %v4906
    %vm4917 = vcmp.eq.f32.partialorder %v4916, 8.507059e+37
    %v4918 = vand.u32 %v4906, 2147483648
    %v4919 = vor.u32 1.1754944e-38, %v4918
    %v4920 = vsel %vm4917, %v4919, %v4915
    %s4921 = vtos %v4920
    %s4922 = smul.f32 %s4904, %s4921
    %v4923 = vstv %s4922
    %v4924 = vsub.f32 %v4858, %v4923
    %v4925 = vsub.f32 %v4861, %v4923
    %v4926 = vsub.f32 %v4864, %v4923
    %v4927 = vsub.f32 %v4867, %v4923
    %v4928 = vmul.f32 %v4924, %v4871
    %v4929 = vmul.f32 %v4925, %v4875
    %v4930 = vmul.f32 %v4926, %v4879
    %v4931 = vmul.f32 %v4927, %v4883
    %v4932 = vmul.f32 %v4928, %v4928
    %v4933 = vmul.f32 %v4929, %v4929
    %v4934 = vmul.f32 %v4930, %v4930
    %v4935 = vmul.f32 %v4931, %v4931
    %v4936 = vsel %vm284, %v4932, 0.0
    %v4937 = vsel %vm284, %v4933, 0.0
    %v4938 = vadd.f32 %v4936, %v4937
    %v4939 = vsel %vm284, %v4934, 0.0
    %v4940 = vadd.f32 %v4938, %v4939
    %v4941 = vsel %vm284, %v4935, 0.0
    %v4942 = vadd.f32 %v4940, %v4941
    %4943 = vadd.xlane.f32.xlu0 %v4942
    %v4944 = vpop.xlane.xlu0 %4943
    %v4945 = vrot.slane %v4944, 4
    %v4946 = vadd.f32 %v4944, %v4945
    %v4947 = vrot.slane %v4946, 2
    %v4948 = vadd.f32 %v4946, %v4947
    %v4949 = vrot.slane %v4948, 1
    %v4950 = vadd.f32 %v4948, %v4949
    %s4951 = vtos %v4950
    %v4952 = vstv %s4905
    %v4953 = vrcp.pop %v4952
    %v4954 = vmul.f32 %v4952, %v4953
    %v4955 = vsub.f32 1.0, %v4954
    %v4956 = vmul.f32 %v4953, %v4955
    %v4957 = vadd.f32 %v4953, %v4956
    %vm4958 = vweird.f32 %v4952
    %vm4959 = vweird.f32 %v4953
    %vm4960 = vmor %vm4958, %vm4959
    %v4961 = vsel %vm4960, %v4953, %v4957
    %v4962 = vand.u32 2147483647, %v4952
    %vm4963 = vcmp.eq.f32.partialorder %v4962, 8.507059e+37
    %v4964 = vand.u32 %v4952, 2147483648
    %v4965 = vor.u32 1.1754944e-38, %v4964
    %v4966 = vsel %vm4963, %v4965, %v4961
    %s4967 = vtos %v4966
    %s4968 = smul.f32 %s4951, %s4967
    %v4969 = vstv %s4968
    %v4970 = vrsqrt.pop %v4969
    %v4971 = vmul.f32 %v4970, %v4969
    %v4972 = vmul.f32 %v4971, %v4970
    %v4973 = vmul.f32 0.5, %v4972
    %v4974 = vsub.f32 1.5, %v4973
    %v4975 = vmul.f32 %v4970, %v4974
    %v4976 = vmul.f32 %v4969, %v4975
    %vm4977 = vcmp.eq.f32.partialorder %v4969, inf
    %v4978 = vsel %vm4977, %v4969, %v4976
    %vm4979 = vcmp.eq.f32.partialorder %v4969, 0.0
    %v4980 = vand.u32 %v4969, 2147483648
    %v4981 = vsel %vm4979, %v4980, %v4978
    %s4982 = vtos %v4981
    %s4983 = sadd.f32 %s4982, 1e-05
    %v4984 = vstv %s4983
    %v4985 = vrcp.pop %v4984
    %v4986 = vmul.f32 %v4984, %v4985
    %v4987 = vsub.f32 1.0, %v4986
    %v4988 = vmul.f32 %v4985, %v4987
    %v4989 = vadd.f32 %v4985, %v4988
    %vm4990 = vweird.f32 %v4984
    %vm4991 = vweird.f32 %v4985
    %vm4992 = vmor %vm4990, %vm4991
    %v4993 = vsel %vm4992, %v4985, %v4989
    %v4994 = vand.u32 2147483647, %v4984
    %vm4995 = vcmp.eq.f32.partialorder %v4994, 8.507059e+37
    %v4996 = vand.u32 %v4984, 2147483648
    %v4997 = vor.u32 1.1754944e-38, %v4996
    %v4998 = vsel %vm4995, %v4997, %v4993
    %v4999 = vmul.f32 %v4924, %v4998
    %v5000 = vmul.f32 %v4925, %v4998
    %v5001 = vmul.f32 %v4926, %v4998
    %v5002 = vmul.f32 %v4927, %v4998
    %v5003 = vmul.f32 %v4999, %v3655
    %v5004 = vmul.f32 %v5000, %v3655
    %v5005 = vmul.f32 %v5001, %v3655
    %v5006 = vmul.f32 %v5002, %v3655
    %v5007 = vadd.f32 %v5003, %v3660
    %v5008 = vadd.f32 %v5004, %v3660
    %v5009 = vadd.f32 %v5005, %v3660
    %v5010 = vadd.f32 %v5006, %v3660
    %v5011 = vmax.f32 %v5007, 0.0
    %v5012 = vmax.f32 %v5008, 0.0
    %v5013 = vmax.f32 %v5009, 0.0
    %v5014 = vmax.f32 %v5010, 0.0
    %v5015 = vadd.f32 %v5011, 0.0
    %v5016 = vadd.f32 %v5012, 0.0
    %v5017 = vadd.f32 %v5013, 0.0
    %v5018 = vadd.f32 %v5014, 0.0
    %v5051 = vperm.slane %v1410, %v3021
    %v5052 = vperm.slane %v1412, %v3023
    %v5053 = vsel %vm3025, %v5052, %v5051
    %v5054 = vperm.slane %v1414, %v3027
    %v5055 = vsel %vm3029, %v5054, %v5053
    %v5056 = vperm.slane %v1416, %v3031
    %v5057 = vsel %vm3033, %v5056, %v5055
    %v5058 = vperm.slane %v1418, %v3021
    %v5059 = vperm.slane %v1420, %v3023
    %v5060 = vsel %vm3025, %v5059, %v5058
    %v5061 = vperm.slane %v1422, %v3027
    %v5062 = vsel %vm3029, %v5061, %v5060
    %v5063 = vperm.slane %v1424, %v3031
    %v5064 = vsel %vm3033, %v5063, %v5062
    %v5065 = vperm.slane %v1426, %v3021
    %v5066 = vperm.slane %v1428, %v3023
    %v5067 = vsel %vm3025, %v5066, %v5065
    %v5068 = vperm.slane %v1430, %v3027
    %v5069 = vsel %vm3029, %v5068, %v5067
    %v5070 = vperm.slane %v1432, %v3031
    %v5071 = vsel %vm3033, %v5070, %v5069
    %v5072 = vperm.slane %v1434, %v3021
    %v5073 = vperm.slane %v1436, %v3023
    %v5074 = vsel %vm3025, %v5073, %v5072
    %v5075 = vperm.slane %v1438, %v3027
    %v5076 = vsel %vm3029, %v5075, %v5074
    %v5077 = vperm.slane %v1440, %v3031
    %v5078 = vsel %vm3033, %v5077, %v5076
    %v5079 = vperm.slane %v1442, %v3021
    %v5080 = vperm.slane %v1444, %v3023
    %v5081 = vsel %vm3025, %v5080, %v5079
    %v5082 = vperm.slane %v1446, %v3027
    %v5083 = vsel %vm3029, %v5082, %v5081
    %v5084 = vperm.slane %v1448, %v3031
    %v5085 = vsel %vm3033, %v5084, %v5083
    %v5086 = vperm.slane %v1450, %v3021
    %v5087 = vperm.slane %v1452, %v3023
    %v5088 = vsel %vm3025, %v5087, %v5086
    %v5089 = vperm.slane %v1454, %v3027
    %v5090 = vsel %vm3029, %v5089, %v5088
    %v5091 = vperm.slane %v1456, %v3031
    %v5092 = vsel %vm3033, %v5091, %v5090
    %v5093 = vperm.slane %v1458, %v3021
    %v5094 = vperm.slane %v1460, %v3023
    %v5095 = vsel %vm3025, %v5094, %v5093
    %v5096 = vperm.slane %v1462, %v3027
    %v5097 = vsel %vm3029, %v5096, %v5095
    %v5098 = vperm.slane %v1464, %v3031
    %v5099 = vsel %vm3033, %v5098, %v5097
    %v5100 = vperm.slane %v1466, %v3021
    %v5101 = vperm.slane %v1468, %v3023
    %v5102 = vsel %vm3025, %v5101, %v5100
    %v5103 = vperm.slane %v1470, %v3027
    %v5104 = vsel %vm3029, %v5103, %v5102
    %v5105 = vperm.slane %v1472, %v3031
    %v5106 = vsel %vm3033, %v5105, %v5104
    %v5107 = vsel %vm3084, %v5064, %v5057
    %v5108 = vsel %vm3086, %v5071, %v5107
    %v5109 = vsel %vm3088, %v5078, %v5108
    %v5110 = vsel %vm3090, %v5085, %v5109
    %v5111 = vsel %vm3092, %v5092, %v5110
    %v5112 = vsel %vm3094, %v5099, %v5111
    %v5113 = vsel %vm3096, %v5106, %v5112
    %v5147 = vperm.slane %v1914, %v3021
    %v5148 = vperm.slane %v1916, %v3023
    %v5149 = vsel %vm3025, %v5148, %v5147
    %v5150 = vperm.slane %v1918, %v3027
    %v5151 = vsel %vm3029, %v5150, %v5149
    %v5152 = vperm.slane %v1920, %v3031
    %v5153 = vsel %vm3033, %v5152, %v5151
    %v5154 = vperm.slane %v1922, %v3021
    %v5155 = vperm.slane %v1924, %v3023
    %v5156 = vsel %vm3025, %v5155, %v5154
    %v5157 = vperm.slane %v1926, %v3027
    %v5158 = vsel %vm3029, %v5157, %v5156
    %v5159 = vperm.slane %v1928, %v3031
    %v5160 = vsel %vm3033, %v5159, %v5158
    %v5161 = vperm.slane %v1930, %v3021
    %v5162 = vperm.slane %v1932, %v3023
    %v5163 = vsel %vm3025, %v5162, %v5161
    %v5164 = vperm.slane %v1934, %v3027
    %v5165 = vsel %vm3029, %v5164, %v5163
    %v5166 = vperm.slane %v1936, %v3031
    %v5167 = vsel %vm3033, %v5166, %v5165
    %v5168 = vperm.slane %v1938, %v3021
    %v5169 = vperm.slane %v1940, %v3023
    %v5170 = vsel %vm3025, %v5169, %v5168
    %v5171 = vperm.slane %v1942, %v3027
    %v5172 = vsel %vm3029, %v5171, %v5170
    %v5173 = vperm.slane %v1944, %v3031
    %v5174 = vsel %vm3033, %v5173, %v5172
    %v5175 = vperm.slane %v1946, %v3021
    %v5176 = vperm.slane %v1948, %v3023
    %v5177 = vsel %vm3025, %v5176, %v5175
    %v5178 = vperm.slane %v1950, %v3027
    %v5179 = vsel %vm3029, %v5178, %v5177
    %v5180 = vperm.slane %v1952, %v3031
    %v5181 = vsel %vm3033, %v5180, %v5179
    %v5182 = vperm.slane %v1954, %v3021
    %v5183 = vperm.slane %v1956, %v3023
    %v5184 = vsel %vm3025, %v5183, %v5182
    %v5185 = vperm.slane %v1958, %v3027
    %v5186 = vsel %vm3029, %v5185, %v5184
    %v5187 = vperm.slane %v1960, %v3031
    %v5188 = vsel %vm3033, %v5187, %v5186
    %v5189 = vperm.slane %v1962, %v3021
    %v5190 = vperm.slane %v1964, %v3023
    %v5191 = vsel %vm3025, %v5190, %v5189
    %v5192 = vperm.slane %v1966, %v3027
    %v5193 = vsel %vm3029, %v5192, %v5191
    %v5194 = vperm.slane %v1968, %v3031
    %v5195 = vsel %vm3033, %v5194, %v5193
    %v5196 = vperm.slane %v1970, %v3021
    %v5197 = vperm.slane %v1972, %v3023
    %v5198 = vsel %vm3025, %v5197, %v5196
    %v5199 = vperm.slane %v1974, %v3027
    %v5200 = vsel %vm3029, %v5199, %v5198
    %v5201 = vperm.slane %v1976, %v3031
    %v5202 = vsel %vm3033, %v5201, %v5200
    %v5203 = vsel %vm3084, %v5160, %v5153
    %v5204 = vsel %vm3086, %v5167, %v5203
    %v5205 = vsel %vm3088, %v5174, %v5204
    %v5206 = vsel %vm3090, %v5181, %v5205
    %v5207 = vsel %vm3092, %v5188, %v5206
    %v5208 = vsel %vm3094, %v5195, %v5207
    %v5209 = vsel %vm3096, %v5202, %v5208
    %v5243 = vperm.slane %v2418, %v3021
    %v5244 = vperm.slane %v2420, %v3023
    %v5245 = vsel %vm3025, %v5244, %v5243
    %v5246 = vperm.slane %v2422, %v3027
    %v5247 = vsel %vm3029, %v5246, %v5245
    %v5248 = vperm.slane %v2424, %v3031
    %v5249 = vsel %vm3033, %v5248, %v5247
    %v5250 = vperm.slane %v2426, %v3021
    %v5251 = vperm.slane %v2428, %v3023
    %v5252 = vsel %vm3025, %v5251, %v5250
    %v5253 = vperm.slane %v2430, %v3027
    %v5254 = vsel %vm3029, %v5253, %v5252
    %v5255 = vperm.slane %v2432, %v3031
    %v5256 = vsel %vm3033, %v5255, %v5254
    %v5257 = vperm.slane %v2434, %v3021
    %v5258 = vperm.slane %v2436, %v3023
    %v5259 = vsel %vm3025, %v5258, %v5257
    %v5260 = vperm.slane %v2438, %v3027
    %v5261 = vsel %vm3029, %v5260, %v5259
    %v5262 = vperm.slane %v2440, %v3031
    %v5263 = vsel %vm3033, %v5262, %v5261
    %v5264 = vperm.slane %v2442, %v3021
    %v5265 = vperm.slane %v2444, %v3023
    %v5266 = vsel %vm3025, %v5265, %v5264
    %v5267 = vperm.slane %v2446, %v3027
    %v5268 = vsel %vm3029, %v5267, %v5266
    %v5269 = vperm.slane %v2448, %v3031
    %v5270 = vsel %vm3033, %v5269, %v5268
    %v5271 = vperm.slane %v2450, %v3021
    %v5272 = vperm.slane %v2452, %v3023
    %v5273 = vsel %vm3025, %v5272, %v5271
    %v5274 = vperm.slane %v2454, %v3027
    %v5275 = vsel %vm3029, %v5274, %v5273
    %v5276 = vperm.slane %v2456, %v3031
    %v5277 = vsel %vm3033, %v5276, %v5275
    %v5278 = vperm.slane %v2458, %v3021
    %v5279 = vperm.slane %v2460, %v3023
    %v5280 = vsel %vm3025, %v5279, %v5278
    %v5281 = vperm.slane %v2462, %v3027
    %v5282 = vsel %vm3029, %v5281, %v5280
    %v5283 = vperm.slane %v2464, %v3031
    %v5284 = vsel %vm3033, %v5283, %v5282
    %v5285 = vperm.slane %v2466, %v3021
    %v5286 = vperm.slane %v2468, %v3023
    %v5287 = vsel %vm3025, %v5286, %v5285
    %v5288 = vperm.slane %v2470, %v3027
    %v5289 = vsel %vm3029, %v5288, %v5287
    %v5290 = vperm.slane %v2472, %v3031
    %v5291 = vsel %vm3033, %v5290, %v5289
    %v5292 = vperm.slane %v2474, %v3021
    %v5293 = vperm.slane %v2476, %v3023
    %v5294 = vsel %vm3025, %v5293, %v5292
    %v5295 = vperm.slane %v2478, %v3027
    %v5296 = vsel %vm3029, %v5295, %v5294
    %v5297 = vperm.slane %v2480, %v3031
    %v5298 = vsel %vm3033, %v5297, %v5296
    %v5299 = vsel %vm3084, %v5256, %v5249
    %v5300 = vsel %vm3086, %v5263, %v5299
    %v5301 = vsel %vm3088, %v5270, %v5300
    %v5302 = vsel %vm3090, %v5277, %v5301
    %v5303 = vsel %vm3092, %v5284, %v5302
    %v5304 = vsel %vm3094, %v5291, %v5303
    %v5305 = vsel %vm3096, %v5298, %v5304
    %v5339 = vperm.slane %v2922, %v3021
    %v5340 = vperm.slane %v2924, %v3023
    %v5341 = vsel %vm3025, %v5340, %v5339
    %v5342 = vperm.slane %v2926, %v3027
    %v5343 = vsel %vm3029, %v5342, %v5341
    %v5344 = vperm.slane %v2928, %v3031
    %v5345 = vsel %vm3033, %v5344, %v5343
    %v5346 = vperm.slane %v2930, %v3021
    %v5347 = vperm.slane %v2932, %v3023
    %v5348 = vsel %vm3025, %v5347, %v5346
    %v5349 = vperm.slane %v2934, %v3027
    %v5350 = vsel %vm3029, %v5349, %v5348
    %v5351 = vperm.slane %v2936, %v3031
    %v5352 = vsel %vm3033, %v5351, %v5350
    %v5353 = vperm.slane %v2938, %v3021
    %v5354 = vperm.slane %v2940, %v3023
    %v5355 = vsel %vm3025, %v5354, %v5353
    %v5356 = vperm.slane %v2942, %v3027
    %v5357 = vsel %vm3029, %v5356, %v5355
    %v5358 = vperm.slane %v2944, %v3031
    %v5359 = vsel %vm3033, %v5358, %v5357
    %v5360 = vperm.slane %v2946, %v3021
    %v5361 = vperm.slane %v2948, %v3023
    %v5362 = vsel %vm3025, %v5361, %v5360
    %v5363 = vperm.slane %v2950, %v3027
    %v5364 = vsel %vm3029, %v5363, %v5362
    %v5365 = vperm.slane %v2952, %v3031
    %v5366 = vsel %vm3033, %v5365, %v5364
    %v5367 = vperm.slane %v2954, %v3021
    %v5368 = vperm.slane %v2956, %v3023
    %v5369 = vsel %vm3025, %v5368, %v5367
    %v5370 = vperm.slane %v2958, %v3027
    %v5371 = vsel %vm3029, %v5370, %v5369
    %v5372 = vperm.slane %v2960, %v3031
    %v5373 = vsel %vm3033, %v5372, %v5371
    %v5374 = vperm.slane %v2962, %v3021
    %v5375 = vperm.slane %v2964, %v3023
    %v5376 = vsel %vm3025, %v5375, %v5374
    %v5377 = vperm.slane %v2966, %v3027
    %v5378 = vsel %vm3029, %v5377, %v5376
    %v5379 = vperm.slane %v2968, %v3031
    %v5380 = vsel %vm3033, %v5379, %v5378
    %v5381 = vperm.slane %v2970, %v3021
    %v5382 = vperm.slane %v2972, %v3023
    %v5383 = vsel %vm3025, %v5382, %v5381
    %v5384 = vperm.slane %v2974, %v3027
    %v5385 = vsel %vm3029, %v5384, %v5383
    %v5386 = vperm.slane %v2976, %v3031
    %v5387 = vsel %vm3033, %v5386, %v5385
    %v5388 = vperm.slane %v2978, %v3021
    %v5389 = vperm.slane %v2980, %v3023
    %v5390 = vsel %vm3025, %v5389, %v5388
    %v5391 = vperm.slane %v2982, %v3027
    %v5392 = vsel %vm3029, %v5391, %v5390
    %v5393 = vperm.slane %v2984, %v3031
    %v5394 = vsel %vm3033, %v5393, %v5392
    %v5395 = vsel %vm3084, %v5352, %v5345
    %v5396 = vsel %vm3086, %v5359, %v5395
    %v5397 = vsel %vm3088, %v5366, %v5396
    %v5398 = vsel %vm3090, %v5373, %v5397
    %v5399 = vsel %vm3092, %v5380, %v5398
    %v5400 = vsel %vm3094, %v5387, %v5399
    %v5401 = vsel %vm3096, %v5394, %v5400
    %s5403 = scalar_lea.vmem %s1, 96
    %v5404 = vld [vmem:[%s5403] sm:$0xff]
    %v5405 = vld [vmem:[%s5403 + $0x8] sm:$0xff]
    %v5406 = vld [vmem:[%s5403 + $0x10] sm:$0xff]
    %v5407 = vld [vmem:[%s5403 + $0x18] sm:$0xff]
    %vm5408 = vcmp.gt.f32.partialorder %v5404, 0.0
    %vm5409 = vcmp.gt.f32.partialorder %v5405, 0.0
    %vm5410 = vcmp.gt.f32.partialorder %v5406, 0.0
    %vm5411 = vcmp.gt.f32.partialorder %v5407, 0.0
    %v5412 = vsel %vm5408, %v5113, -1e+30
    %v5413 = vsel %vm5409, %v5209, -1e+30
    %v5414 = vsel %vm5410, %v5305, -1e+30
    %v5415 = vsel %vm5411, %v5401, -1e+30
    %v5416 = vsel %vm284, %v5412, -inf
    %v5417 = vsel %vm284, %v5413, -inf
    %v5418 = vsel %vm284, %v5414, -inf
    %v5419 = vsel %vm284, %v5415, -inf
    %v5420 = vmax.f32 %v5416, %v5417
    %v5421 = vmax.f32 %v5418, %v5419
    %v5422 = vmax.f32 %v5420, %v5421
    %v5423 = vrot.slane %v5422, 4
    %v5424 = vmax.f32 %v5422, %v5423
    %v5425 = vrot.slane %v5424, 2
    %v5426 = vmax.f32 %v5424, %v5425
    %v5427 = vrot.slane %v5426, 1
    %v5428 = vmax.f32 %v5426, %v5427
    %v5429 = vsub.f32 %v5412, %v5428
    %v5430 = vsub.f32 %v5413, %v5428
    %v5431 = vsub.f32 %v5414, %v5428
    %v5432 = vsub.f32 %v5415, %v5428
    %v5433 = vmul.f32 %v5429, 1.442695
    %v5434 = vpow.pop %v5433
    %v5435 = vmul.f32 %v5430, 1.442695
    %v5436 = vpow.pop %v5435
    %v5437 = vmul.f32 %v5431, 1.442695
    %v5438 = vpow.pop %v5437
    %v5439 = vmul.f32 %v5432, 1.442695
    %v5440 = vpow.pop %v5439
    %v5441 = vmul.f32 %v5434, %v5404
    %v5442 = vmul.f32 %v5436, %v5405
    %v5443 = vmul.f32 %v5438, %v5406
    %v5444 = vmul.f32 %v5440, %v5407
    %v5445 = vsel %vm284, %v5441, 0.0
    %v5446 = vsel %vm284, %v5442, 0.0
    %v5447 = vadd.f32 %v5445, %v5446
    %v5448 = vsel %vm284, %v5443, 0.0
    %v5449 = vadd.f32 %v5447, %v5448
    %v5450 = vsel %vm284, %v5444, 0.0
    %v5451 = vadd.f32 %v5449, %v5450
    %v5452 = vrot.slane %v5451, 4
    %v5453 = vadd.f32 %v5451, %v5452
    %v5454 = vrot.slane %v5453, 2
    %v5455 = vadd.f32 %v5453, %v5454
    %v5456 = vrot.slane %v5455, 1
    %v5457 = vadd.f32 %v5455, %v5456
    %v5458 = vmax.f32 %v5457, 1e-30
    %v5459 = vrcp.pop %v5458
    %v5460 = vmul.f32 %v5441, %v5459
    %v5461 = vmul.f32 %v5442, %v5459
    %v5462 = vmul.f32 %v5443, %v5459
    %v5463 = vmul.f32 %v5444, %v5459
    %5464 = vxpose.xlu0.b32.start [1/16] %v5460, 128
    %5465 = vxpose.xlu0.b32.cont [2/16] %v5461, 128
    %5466 = vxpose.xlu0.b32.cont [3/16] %v5462, 128
    %5467 = vxpose.xlu0.b32.cont [4/16] %v5463, 128
    %5468 = vxpose.xlu0.b32.cont [5/16] 0.0, 128
    %5469 = vxpose.xlu0.b32.cont [6/16] 0.0, 128
    %5470 = vxpose.xlu0.b32.cont [7/16] 0.0, 128
    %5471 = vxpose.xlu0.b32.cont [8/16] 0.0, 128
    %5472 = vxpose.xlu0.b32.cont [9/16] 0.0, 128
    %5473 = vxpose.xlu0.b32.cont [10/16] 0.0, 128
    %5474 = vxpose.xlu0.b32.cont [11/16] 0.0, 128
    %5475 = vxpose.xlu0.b32.cont [12/16] 0.0, 128
    %5476 = vxpose.xlu0.b32.cont [13/16] 0.0, 128
    %5477 = vxpose.xlu0.b32.cont [14/16] 0.0, 128
    %5478 = vxpose.xlu0.b32.cont [15/16] 0.0, 128
    %5479 = vxpose.xlu0.b32.end [16/16] 0.0, 128
    %v5480 = vpop.trf.xlu0
    %v5481 = vpop.trf.xlu0
    %v5482 = vpop.trf.xlu0
    %v5483 = vpop.trf.xlu0
    %v5484 = vpop.trf.xlu0
    %v5485 = vpop.trf.xlu0
    %v5486 = vpop.trf.xlu0
    %v5487 = vpop.trf.xlu0
    %v5488 = vpop.trf.xlu0
    %v5489 = vpop.trf.xlu0
    %v5490 = vpop.trf.xlu0
    %v5491 = vpop.trf.xlu0
    %v5492 = vpop.trf.xlu0
    %v5493 = vpop.trf.xlu0
    %v5494 = vpop.trf.xlu0
    %v5495 = vpop.trf.xlu0
    %5496 = vrot.lane.b32.xlu0 %v940, 32
    %v5497 = vpop.permute.xlu0 %5496
    %5498 = vrot.lane.b32.xlu0 %v941, 32
    %v5499 = vpop.permute.xlu0 %5498
    %5500 = vrot.lane.b32.xlu0 %v942, 32
    %v5501 = vpop.permute.xlu0 %5500
    %5502 = vrot.lane.b32.xlu0 %v943, 32
    %v5503 = vpop.permute.xlu0 %5502
    %v5509 = vsel %vm284, %v5480, 0
    %v5512 = vsel %vm284, %v5481, 0
    %v5515 = vsel %vm284, %v5482, 0
    %v5518 = vsel %vm284, %v5483, 0
    %5520 = vmatpush.msra.mxu0 0.0
    %5521 = vmatpush.msra.mxu0 0.0
    %5522 = vmatpush.msra.mxu0 0.0
    %5523 = vmatpush.msra.mxu0 0.0
    %5524 = vmatpush.msra.mxu0 0.0
    %5525 = vmatpush.msra.mxu0 0.0
    %5526 = vmatpush.msra.mxu0 0.0
    %5527 = vmatpush.msra.mxu0 0.0
    %5528 = vmatpush.msra.mxu0 0.0
    %5529 = vmatpush.msra.mxu0 0.0
    %5530 = vmatpush.msra.mxu0 0.0
    %5531 = vmatpush.msra.mxu0 0.0
    %5532 = vmatpush.msra.mxu0 %v5503
    %5533 = vmatpush.msra.mxu0 %v5501
    %5534 = vmatpush.msra.mxu0 %v5499
    %5535 = vmatpush.msra.mxu0 %v5497
    %5536 = vmatmul.f32.gmra.mxu0 %v5509
    %v5537 = vpop.f32.mrf.mxu0
    %v5538 = vadd.f32 %v4118, %v5537
    %5539 = vmatmul.f32.gmra.mxu0 %v5512
    %v5540 = vpop.f32.mrf.mxu0
    %v5541 = vadd.f32 %v4118, %v5540
    %5542 = vmatmul.f32.gmra.mxu0 %v5515
    %v5543 = vpop.f32.mrf.mxu0
    %v5544 = vadd.f32 %v4118, %v5543
    %5545 = vmatmul.f32.gmra.mxu0 %v5518
    %v5546 = vpop.f32.mrf.mxu0
    %v5547 = vadd.f32 %v4118, %v5546
    %5548 = vdwg.mxu0
    %v5549 = vmul.f32 %v5538, %v4871
    %v5550 = vmul.f32 %v5541, %v4875
    %v5551 = vmul.f32 %v5544, %v4879
    %v5552 = vmul.f32 %v5547, %v4883
    %v5553 = vsel %vm284, %v5549, 0.0
    %v5554 = vsel %vm284, %v5550, 0.0
    %v5555 = vadd.f32 %v5553, %v5554
    %v5556 = vsel %vm284, %v5551, 0.0
    %v5557 = vadd.f32 %v5555, %v5556
    %v5558 = vsel %vm284, %v5552, 0.0
    %v5559 = vadd.f32 %v5557, %v5558
    %5560 = vadd.xlane.f32.xlu0 %v5559
    %v5561 = vpop.xlane.xlu0 %5560
    %v5562 = vrot.slane %v5561, 4
    %v5563 = vadd.f32 %v5561, %v5562
    %v5564 = vrot.slane %v5563, 2
    %v5565 = vadd.f32 %v5563, %v5564
    %v5566 = vrot.slane %v5565, 1
    %v5567 = vadd.f32 %v5565, %v5566
    %s5568 = vtos %v5567
    %v5569 = vstv %s4905
    %v5570 = vrcp.pop %v5569
    %v5571 = vmul.f32 %v5569, %v5570
    %v5572 = vsub.f32 1.0, %v5571
    %v5573 = vmul.f32 %v5570, %v5572
    %v5574 = vadd.f32 %v5570, %v5573
    %vm5575 = vweird.f32 %v5569
    %vm5576 = vweird.f32 %v5570
    %vm5577 = vmor %vm5575, %vm5576
    %v5578 = vsel %vm5577, %v5570, %v5574
    %v5579 = vand.u32 2147483647, %v5569
    %vm5580 = vcmp.eq.f32.partialorder %v5579, 8.507059e+37
    %v5581 = vand.u32 %v5569, 2147483648
    %v5582 = vor.u32 1.1754944e-38, %v5581
    %v5583 = vsel %vm5580, %v5582, %v5578
    %s5584 = vtos %v5583
    %s5585 = smul.f32 %s5568, %s5584
    %v5586 = vstv %s5585
    %v5587 = vsub.f32 %v5538, %v5586
    %v5588 = vsub.f32 %v5541, %v5586
    %v5589 = vsub.f32 %v5544, %v5586
    %v5590 = vsub.f32 %v5547, %v5586
    %v5591 = vmul.f32 %v5587, %v4871
    %v5592 = vmul.f32 %v5588, %v4875
    %v5593 = vmul.f32 %v5589, %v4879
    %v5594 = vmul.f32 %v5590, %v4883
    %v5595 = vmul.f32 %v5591, %v5591
    %v5596 = vmul.f32 %v5592, %v5592
    %v5597 = vmul.f32 %v5593, %v5593
    %v5598 = vmul.f32 %v5594, %v5594
    %v5599 = vsel %vm284, %v5595, 0.0
    %v5600 = vsel %vm284, %v5596, 0.0
    %v5601 = vadd.f32 %v5599, %v5600
    %v5602 = vsel %vm284, %v5597, 0.0
    %v5603 = vadd.f32 %v5601, %v5602
    %v5604 = vsel %vm284, %v5598, 0.0
    %v5605 = vadd.f32 %v5603, %v5604
    %5606 = vadd.xlane.f32.xlu0 %v5605
    %v5607 = vpop.xlane.xlu0 %5606
    %v5608 = vrot.slane %v5607, 4
    %v5609 = vadd.f32 %v5607, %v5608
    %v5610 = vrot.slane %v5609, 2
    %v5611 = vadd.f32 %v5609, %v5610
    %v5612 = vrot.slane %v5611, 1
    %v5613 = vadd.f32 %v5611, %v5612
    %s5614 = vtos %v5613
    %v5615 = vstv %s4905
    %v5616 = vrcp.pop %v5615
    %v5617 = vmul.f32 %v5615, %v5616
    %v5618 = vsub.f32 1.0, %v5617
    %v5619 = vmul.f32 %v5616, %v5618
    %v5620 = vadd.f32 %v5616, %v5619
    %vm5621 = vweird.f32 %v5615
    %vm5622 = vweird.f32 %v5616
    %vm5623 = vmor %vm5621, %vm5622
    %v5624 = vsel %vm5623, %v5616, %v5620
    %v5625 = vand.u32 2147483647, %v5615
    %vm5626 = vcmp.eq.f32.partialorder %v5625, 8.507059e+37
    %v5627 = vand.u32 %v5615, 2147483648
    %v5628 = vor.u32 1.1754944e-38, %v5627
    %v5629 = vsel %vm5626, %v5628, %v5624
    %s5630 = vtos %v5629
    %s5631 = smul.f32 %s5614, %s5630
    %v5632 = vstv %s5631
    %v5633 = vrsqrt.pop %v5632
    %v5634 = vmul.f32 %v5633, %v5632
    %v5635 = vmul.f32 %v5634, %v5633
    %v5636 = vmul.f32 0.5, %v5635
    %v5637 = vsub.f32 1.5, %v5636
    %v5638 = vmul.f32 %v5633, %v5637
    %v5639 = vmul.f32 %v5632, %v5638
    %vm5640 = vcmp.eq.f32.partialorder %v5632, inf
    %v5641 = vsel %vm5640, %v5632, %v5639
    %vm5642 = vcmp.eq.f32.partialorder %v5632, 0.0
    %v5643 = vand.u32 %v5632, 2147483648
    %v5644 = vsel %vm5642, %v5643, %v5641
    %s5645 = vtos %v5644
    %s5646 = sadd.f32 %s5645, 1e-05
    %v5647 = vstv %s5646
    %v5648 = vrcp.pop %v5647
    %v5649 = vmul.f32 %v5647, %v5648
    %v5650 = vsub.f32 1.0, %v5649
    %v5651 = vmul.f32 %v5648, %v5650
    %v5652 = vadd.f32 %v5648, %v5651
    %vm5653 = vweird.f32 %v5647
    %vm5654 = vweird.f32 %v5648
    %vm5655 = vmor %vm5653, %vm5654
    %v5656 = vsel %vm5655, %v5648, %v5652
    %v5657 = vand.u32 2147483647, %v5647
    %vm5658 = vcmp.eq.f32.partialorder %v5657, 8.507059e+37
    %v5659 = vand.u32 %v5647, 2147483648
    %v5660 = vor.u32 1.1754944e-38, %v5659
    %v5661 = vsel %vm5658, %v5660, %v5656
    %v5662 = vmul.f32 %v5587, %v5661
    %v5663 = vmul.f32 %v5588, %v5661
    %v5664 = vmul.f32 %v5589, %v5661
    %v5665 = vmul.f32 %v5590, %v5661
    %v5666 = vmul.f32 %v5662, %v4321
    %v5667 = vmul.f32 %v5663, %v4321
    %v5668 = vmul.f32 %v5664, %v4321
    %v5669 = vmul.f32 %v5665, %v4321
    %v5670 = vadd.f32 %v5666, %v4326
    %v5671 = vadd.f32 %v5667, %v4326
    %v5672 = vadd.f32 %v5668, %v4326
    %v5673 = vadd.f32 %v5669, %v4326
    %v5674 = vmax.f32 %v5670, 0.0
    %v5675 = vmax.f32 %v5671, 0.0
    %v5676 = vmax.f32 %v5672, 0.0
    %v5677 = vmax.f32 %v5673, 0.0
    %v5678 = vadd.f32 %v5015, %v5674
    %v5679 = vadd.f32 %v5016, %v5675
    %v5680 = vadd.f32 %v5017, %v5676
    %v5681 = vadd.f32 %v5018, %v5677
    %s5682 = scalar_lea.vmem [#allocation3], 32
    %v5683 = vld [vmem:[%s5682] sm:$0xff]
    %v5684 = vld [vmem:[%s5682 + $0x8] sm:$0xff]
    %v5685 = vld [vmem:[%s5682 + $0x10] sm:$0xff]
    %v5686 = vld [vmem:[%s5682 + $0x18] sm:$0xff]
    %s5687 = scalar_lea.vmem [#allocation6], 1
    %v5688 = vld [vmem:[%s5687] sm:$0x1]
    %v5690 = vperm.slane %v5688, 0
    %v5693 = vsel %vm284, %v4335, 0
    %v5696 = vsel %vm284, %v4336, 0
    %v5699 = vsel %vm284, %v4337, 0
    %v5702 = vsel %vm284, %v4338, 0
    %v5705 = vsel %vm284, %v5678, 0
    %v5708 = vsel %vm284, %v5679, 0
    %v5711 = vsel %vm284, %v5680, 0
    %v5714 = vsel %vm284, %v5681, 0
    %5716 = vmatpush.msra.mxu0 0.0
    %5717 = vmatpush.msra.mxu0 0.0
    %5718 = vmatpush.msra.mxu0 0.0
    %5719 = vmatpush.msra.mxu0 0.0
    %5720 = vmatpush.msra.mxu0 0.0
    %5721 = vmatpush.msra.mxu0 0.0
    %5722 = vmatpush.msra.mxu0 0.0
    %5723 = vmatpush.msra.mxu0 0.0
    %5724 = vmatpush.msra.mxu0 0.0
    %5725 = vmatpush.msra.mxu0 0.0
    %5726 = vmatpush.msra.mxu0 0.0
    %5727 = vmatpush.msra.mxu0 0.0
    %5728 = vmatpush.msra.mxu0 %v5686
    %5729 = vmatpush.msra.mxu0 %v5685
    %5730 = vmatpush.msra.mxu0 %v5684
    %5731 = vmatpush.msra.mxu0 %v5683
    %5732 = vmatmul.f32.gmra.mxu0 %v5693
    %v5733 = vpop.f32.mrf.mxu0
    %v5734 = vadd.f32 %v5690, %v5733
    %5735 = vmatmul.f32.gmra.mxu0 %v5696
    %v5736 = vpop.f32.mrf.mxu0
    %v5737 = vadd.f32 %v5690, %v5736
    %5738 = vmatmul.f32.gmra.mxu0 %v5699
    %v5739 = vpop.f32.mrf.mxu0
    %v5740 = vadd.f32 %v5690, %v5739
    %5741 = vmatmul.f32.gmra.mxu0 %v5702
    %v5742 = vpop.f32.mrf.mxu0
    %v5743 = vadd.f32 %v5690, %v5742
    %5744 = vmatmul.f32.gmra.mxu0 %v5705
    %v5745 = vpop.f32.mrf.mxu0
    %v5746 = vadd.f32 %v5690, %v5745
    %5747 = vmatmul.f32.gmra.mxu0 %v5708
    %v5748 = vpop.f32.mrf.mxu0
    %v5749 = vadd.f32 %v5690, %v5748
    %5750 = vmatmul.f32.gmra.mxu0 %v5711
    %v5751 = vpop.f32.mrf.mxu0
    %v5752 = vadd.f32 %v5690, %v5751
    %5753 = vmatmul.f32.gmra.mxu0 %v5714
    %v5754 = vpop.f32.mrf.mxu0
    %v5755 = vadd.f32 %v5690, %v5754
    %5756 = vdwg.mxu0
    %5761 = vrot.lane.b32.xlu0 %v5746, 64
    %v5762 = vpop.permute.xlu0 %5761
    %5763 = vrot.lane.b32.xlu0 %v5749, 64
    %v5764 = vpop.permute.xlu0 %5763
    %5765 = vrot.lane.b32.xlu0 %v5752, 64
    %v5766 = vpop.permute.xlu0 %5765
    %5767 = vrot.lane.b32.xlu0 %v5755, 64
    %v5768 = vpop.permute.xlu0 %5767
    %v5773 = vsel %vm939, %v5734, %v5762
    %v5774 = vsel %vm939, %v5737, %v5764
    %v5775 = vsel %vm939, %v5740, %v5766
    %v5776 = vsel %vm939, %v5743, %v5768
    %5781 = vrot.lane.b32.xlu0 %v5734, 64
    %v5782 = vpop.permute.xlu0 %5781
    %5783 = vrot.lane.b32.xlu0 %v5737, 64
    %v5784 = vpop.permute.xlu0 %5783
    %5785 = vrot.lane.b32.xlu0 %v5740, 64
    %v5786 = vpop.permute.xlu0 %5785
    %5787 = vrot.lane.b32.xlu0 %v5743, 64
    %v5788 = vpop.permute.xlu0 %5787
    %v5793 = vsel %vm939, %v5782, %v5746
    %v5794 = vsel %vm939, %v5784, %v5749
    %v5795 = vsel %vm939, %v5786, %v5752
    %v5796 = vsel %vm939, %v5788, %v5755
    %s5797 = scalar_lea.vmem [#allocation8], 4
    %v5798 = vld [vmem:[%s5797] sm:$0xf]
    %v5800 = vrot.slane %v5773, 1
    %v5801 = vrot.slane %v5773, 2
    %v5802 = vrot.slane %v5773, 3
    %v5803 = vrot.slane %v5773, 4
    %v5804 = vrot.slane %v5773, 5
    %v5805 = vrot.slane %v5773, 6
    %v5806 = vrot.slane %v5773, 7
    %v5807 = vperm.slane %v5773, 0
    %v5808 = vperm.slane %v5800, 0
    %v5809 = vperm.slane %v5801, 0
    %v5810 = vperm.slane %v5802, 0
    %v5811 = vperm.slane %v5803, 0
    %v5812 = vperm.slane %v5804, 0
    %v5813 = vperm.slane %v5805, 0
    %v5814 = vperm.slane %v5806, 0
    %v5823 = vadd.f32 %v5807, %v5793
    %v5824 = vadd.f32 %v5807, %v5794
    %v5825 = vadd.f32 %v5807, %v5795
    %v5826 = vadd.f32 %v5807, %v5796
    %v5827 = vadd.f32 %v5808, %v5793
    %v5828 = vadd.f32 %v5808, %v5794
    %v5829 = vadd.f32 %v5808, %v5795
    %v5830 = vadd.f32 %v5808, %v5796
    %v5831 = vadd.f32 %v5809, %v5793
    %v5832 = vadd.f32 %v5809, %v5794
    %v5833 = vadd.f32 %v5809, %v5795
    %v5834 = vadd.f32 %v5809, %v5796
    %v5835 = vadd.f32 %v5810, %v5793
    %v5836 = vadd.f32 %v5810, %v5794
    %v5837 = vadd.f32 %v5810, %v5795
    %v5838 = vadd.f32 %v5810, %v5796
    %v5839 = vadd.f32 %v5811, %v5793
    %v5840 = vadd.f32 %v5811, %v5794
    %v5841 = vadd.f32 %v5811, %v5795
    %v5842 = vadd.f32 %v5811, %v5796
    %v5843 = vadd.f32 %v5812, %v5793
    %v5844 = vadd.f32 %v5812, %v5794
    %v5845 = vadd.f32 %v5812, %v5795
    %v5846 = vadd.f32 %v5812, %v5796
    %v5847 = vadd.f32 %v5813, %v5793
    %v5848 = vadd.f32 %v5813, %v5794
    %v5849 = vadd.f32 %v5813, %v5795
    %v5850 = vadd.f32 %v5813, %v5796
    %v5851 = vadd.f32 %v5814, %v5793
    %v5852 = vadd.f32 %v5814, %v5794
    %v5853 = vadd.f32 %v5814, %v5795
    %v5854 = vadd.f32 %v5814, %v5796
    %v5855 = vmul.f32 %v5823, 0.2
    %v5856 = vmul.f32 %v5824, 0.2
    %v5857 = vmul.f32 %v5825, 0.2
    %v5858 = vmul.f32 %v5826, 0.2
    %v5859 = vmul.f32 %v5827, 0.2
    %v5860 = vmul.f32 %v5828, 0.2
    %v5861 = vmul.f32 %v5829, 0.2
    %v5862 = vmul.f32 %v5830, 0.2
    %v5863 = vmul.f32 %v5831, 0.2
    %v5864 = vmul.f32 %v5832, 0.2
    %v5865 = vmul.f32 %v5833, 0.2
    %v5866 = vmul.f32 %v5834, 0.2
    %v5867 = vmul.f32 %v5835, 0.2
    %v5868 = vmul.f32 %v5836, 0.2
    %v5869 = vmul.f32 %v5837, 0.2
    %v5870 = vmul.f32 %v5838, 0.2
    %v5871 = vmul.f32 %v5839, 0.2
    %v5872 = vmul.f32 %v5840, 0.2
    %v5873 = vmul.f32 %v5841, 0.2
    %v5874 = vmul.f32 %v5842, 0.2
    %v5875 = vmul.f32 %v5843, 0.2
    %v5876 = vmul.f32 %v5844, 0.2
    %v5877 = vmul.f32 %v5845, 0.2
    %v5878 = vmul.f32 %v5846, 0.2
    %v5879 = vmul.f32 %v5847, 0.2
    %v5880 = vmul.f32 %v5848, 0.2
    %v5881 = vmul.f32 %v5849, 0.2
    %v5882 = vmul.f32 %v5850, 0.2
    %v5883 = vmul.f32 %v5851, 0.2
    %v5884 = vmul.f32 %v5852, 0.2
    %v5885 = vmul.f32 %v5853, 0.2
    %v5886 = vmul.f32 %v5854, 0.2
    %v5887 = vmax.f32 %v5823, %v5855
    %v5888 = vmax.f32 %v5824, %v5856
    %v5889 = vmax.f32 %v5825, %v5857
    %v5890 = vmax.f32 %v5826, %v5858
    %v5891 = vmax.f32 %v5827, %v5859
    %v5892 = vmax.f32 %v5828, %v5860
    %v5893 = vmax.f32 %v5829, %v5861
    %v5894 = vmax.f32 %v5830, %v5862
    %v5895 = vmax.f32 %v5831, %v5863
    %v5896 = vmax.f32 %v5832, %v5864
    %v5897 = vmax.f32 %v5833, %v5865
    %v5898 = vmax.f32 %v5834, %v5866
    %v5899 = vmax.f32 %v5835, %v5867
    %v5900 = vmax.f32 %v5836, %v5868
    %v5901 = vmax.f32 %v5837, %v5869
    %v5902 = vmax.f32 %v5838, %v5870
    %v5903 = vmax.f32 %v5839, %v5871
    %v5904 = vmax.f32 %v5840, %v5872
    %v5905 = vmax.f32 %v5841, %v5873
    %v5906 = vmax.f32 %v5842, %v5874
    %v5907 = vmax.f32 %v5843, %v5875
    %v5908 = vmax.f32 %v5844, %v5876
    %v5909 = vmax.f32 %v5845, %v5877
    %v5910 = vmax.f32 %v5846, %v5878
    %v5911 = vmax.f32 %v5847, %v5879
    %v5912 = vmax.f32 %v5848, %v5880
    %v5913 = vmax.f32 %v5849, %v5881
    %v5914 = vmax.f32 %v5850, %v5882
    %v5915 = vmax.f32 %v5851, %v5883
    %v5916 = vmax.f32 %v5852, %v5884
    %v5917 = vmax.f32 %v5853, %v5885
    %v5918 = vmax.f32 %v5854, %v5886
    %v5919 = vperm.slane %v5798, 0
    %v5920 = vmul.f32 %v5887, %v5919
    %v5921 = vmul.f32 %v5888, %v5919
    %v5922 = vmul.f32 %v5889, %v5919
    %v5923 = vmul.f32 %v5890, %v5919
    %v5924 = vmul.f32 %v5891, %v5919
    %v5925 = vmul.f32 %v5892, %v5919
    %v5926 = vmul.f32 %v5893, %v5919
    %v5927 = vmul.f32 %v5894, %v5919
    %v5928 = vmul.f32 %v5895, %v5919
    %v5929 = vmul.f32 %v5896, %v5919
    %v5930 = vmul.f32 %v5897, %v5919
    %v5931 = vmul.f32 %v5898, %v5919
    %v5932 = vmul.f32 %v5899, %v5919
    %v5933 = vmul.f32 %v5900, %v5919
    %v5934 = vmul.f32 %v5901, %v5919
    %v5935 = vmul.f32 %v5902, %v5919
    %v5936 = vmul.f32 %v5903, %v5919
    %v5937 = vmul.f32 %v5904, %v5919
    %v5938 = vmul.f32 %v5905, %v5919
    %v5939 = vmul.f32 %v5906, %v5919
    %v5940 = vmul.f32 %v5907, %v5919
    %v5941 = vmul.f32 %v5908, %v5919
    %v5942 = vmul.f32 %v5909, %v5919
    %v5943 = vmul.f32 %v5910, %v5919
    %v5944 = vmul.f32 %v5911, %v5919
    %v5945 = vmul.f32 %v5912, %v5919
    %v5946 = vmul.f32 %v5913, %v5919
    %v5947 = vmul.f32 %v5914, %v5919
    %v5948 = vmul.f32 %v5915, %v5919
    %v5949 = vmul.f32 %v5916, %v5919
    %v5950 = vmul.f32 %v5917, %v5919
    %v5951 = vmul.f32 %v5918, %v5919
    %5952 = vadd.xlane.f32.xlu0 %v5920
    %v5953 = vpop.xlane.xlu0 %5952
    %5954 = vadd.xlane.f32.xlu0 %v5921
    %v5955 = vpop.xlane.xlu0 %5954
    %5956 = vadd.xlane.f32.xlu0 %v5922
    %v5957 = vpop.xlane.xlu0 %5956
    %5958 = vadd.xlane.f32.xlu0 %v5923
    %v5959 = vpop.xlane.xlu0 %5958
    %5960 = vadd.xlane.f32.xlu0 %v5924
    %v5961 = vpop.xlane.xlu0 %5960
    %5962 = vadd.xlane.f32.xlu0 %v5925
    %v5963 = vpop.xlane.xlu0 %5962
    %5964 = vadd.xlane.f32.xlu0 %v5926
    %v5965 = vpop.xlane.xlu0 %5964
    %5966 = vadd.xlane.f32.xlu0 %v5927
    %v5967 = vpop.xlane.xlu0 %5966
    %5968 = vadd.xlane.f32.xlu0 %v5928
    %v5969 = vpop.xlane.xlu0 %5968
    %5970 = vadd.xlane.f32.xlu0 %v5929
    %v5971 = vpop.xlane.xlu0 %5970
    %5972 = vadd.xlane.f32.xlu0 %v5930
    %v5973 = vpop.xlane.xlu0 %5972
    %5974 = vadd.xlane.f32.xlu0 %v5931
    %v5975 = vpop.xlane.xlu0 %5974
    %5976 = vadd.xlane.f32.xlu0 %v5932
    %v5977 = vpop.xlane.xlu0 %5976
    %5978 = vadd.xlane.f32.xlu0 %v5933
    %v5979 = vpop.xlane.xlu0 %5978
    %5980 = vadd.xlane.f32.xlu0 %v5934
    %v5981 = vpop.xlane.xlu0 %5980
    %5982 = vadd.xlane.f32.xlu0 %v5935
    %v5983 = vpop.xlane.xlu0 %5982
    %5984 = vadd.xlane.f32.xlu0 %v5936
    %v5985 = vpop.xlane.xlu0 %5984
    %5986 = vadd.xlane.f32.xlu0 %v5937
    %v5987 = vpop.xlane.xlu0 %5986
    %5988 = vadd.xlane.f32.xlu0 %v5938
    %v5989 = vpop.xlane.xlu0 %5988
    %5990 = vadd.xlane.f32.xlu0 %v5939
    %v5991 = vpop.xlane.xlu0 %5990
    %5992 = vadd.xlane.f32.xlu0 %v5940
    %v5993 = vpop.xlane.xlu0 %5992
    %5994 = vadd.xlane.f32.xlu0 %v5941
    %v5995 = vpop.xlane.xlu0 %5994
    %5996 = vadd.xlane.f32.xlu0 %v5942
    %v5997 = vpop.xlane.xlu0 %5996
    %5998 = vadd.xlane.f32.xlu0 %v5943
    %v5999 = vpop.xlane.xlu0 %5998
    %6000 = vadd.xlane.f32.xlu0 %v5944
    %v6001 = vpop.xlane.xlu0 %6000
    %6002 = vadd.xlane.f32.xlu0 %v5945
    %v6003 = vpop.xlane.xlu0 %6002
    %6004 = vadd.xlane.f32.xlu0 %v5946
    %v6005 = vpop.xlane.xlu0 %6004
    %6006 = vadd.xlane.f32.xlu0 %v5947
    %v6007 = vpop.xlane.xlu0 %6006
    %6008 = vadd.xlane.f32.xlu0 %v5948
    %v6009 = vpop.xlane.xlu0 %6008
    %6010 = vadd.xlane.f32.xlu0 %v5949
    %v6011 = vpop.xlane.xlu0 %6010
    %6012 = vadd.xlane.f32.xlu0 %v5950
    %v6013 = vpop.xlane.xlu0 %6012
    %6014 = vadd.xlane.f32.xlu0 %v5951
    %v6015 = vpop.xlane.xlu0 %6014
    %v6016 = vperm.slane %v5798, 1
    %v6017 = vmul.f32 %v5887, %v6016
    %v6018 = vmul.f32 %v5888, %v6016
    %v6019 = vmul.f32 %v5889, %v6016
    %v6020 = vmul.f32 %v5890, %v6016
    %v6021 = vmul.f32 %v5891, %v6016
    %v6022 = vmul.f32 %v5892, %v6016
    %v6023 = vmul.f32 %v5893, %v6016
    %v6024 = vmul.f32 %v5894, %v6016
    %v6025 = vmul.f32 %v5895, %v6016
    %v6026 = vmul.f32 %v5896, %v6016
    %v6027 = vmul.f32 %v5897, %v6016
    %v6028 = vmul.f32 %v5898, %v6016
    %v6029 = vmul.f32 %v5899, %v6016
    %v6030 = vmul.f32 %v5900, %v6016
    %v6031 = vmul.f32 %v5901, %v6016
    %v6032 = vmul.f32 %v5902, %v6016
    %v6033 = vmul.f32 %v5903, %v6016
    %v6034 = vmul.f32 %v5904, %v6016
    %v6035 = vmul.f32 %v5905, %v6016
    %v6036 = vmul.f32 %v5906, %v6016
    %v6037 = vmul.f32 %v5907, %v6016
    %v6038 = vmul.f32 %v5908, %v6016
    %v6039 = vmul.f32 %v5909, %v6016
    %v6040 = vmul.f32 %v5910, %v6016
    %v6041 = vmul.f32 %v5911, %v6016
    %v6042 = vmul.f32 %v5912, %v6016
    %v6043 = vmul.f32 %v5913, %v6016
    %v6044 = vmul.f32 %v5914, %v6016
    %v6045 = vmul.f32 %v5915, %v6016
    %v6046 = vmul.f32 %v5916, %v6016
    %v6047 = vmul.f32 %v5917, %v6016
    %v6048 = vmul.f32 %v5918, %v6016
    %6049 = vadd.xlane.f32.xlu0 %v6017
    %v6050 = vpop.xlane.xlu0 %6049
    %6051 = vadd.xlane.f32.xlu0 %v6018
    %v6052 = vpop.xlane.xlu0 %6051
    %6053 = vadd.xlane.f32.xlu0 %v6019
    %v6054 = vpop.xlane.xlu0 %6053
    %6055 = vadd.xlane.f32.xlu0 %v6020
    %v6056 = vpop.xlane.xlu0 %6055
    %6057 = vadd.xlane.f32.xlu0 %v6021
    %v6058 = vpop.xlane.xlu0 %6057
    %6059 = vadd.xlane.f32.xlu0 %v6022
    %v6060 = vpop.xlane.xlu0 %6059
    %6061 = vadd.xlane.f32.xlu0 %v6023
    %v6062 = vpop.xlane.xlu0 %6061
    %6063 = vadd.xlane.f32.xlu0 %v6024
    %v6064 = vpop.xlane.xlu0 %6063
    %6065 = vadd.xlane.f32.xlu0 %v6025
    %v6066 = vpop.xlane.xlu0 %6065
    %6067 = vadd.xlane.f32.xlu0 %v6026
    %v6068 = vpop.xlane.xlu0 %6067
    %6069 = vadd.xlane.f32.xlu0 %v6027
    %v6070 = vpop.xlane.xlu0 %6069
    %6071 = vadd.xlane.f32.xlu0 %v6028
    %v6072 = vpop.xlane.xlu0 %6071
    %6073 = vadd.xlane.f32.xlu0 %v6029
    %v6074 = vpop.xlane.xlu0 %6073
    %6075 = vadd.xlane.f32.xlu0 %v6030
    %v6076 = vpop.xlane.xlu0 %6075
    %6077 = vadd.xlane.f32.xlu0 %v6031
    %v6078 = vpop.xlane.xlu0 %6077
    %6079 = vadd.xlane.f32.xlu0 %v6032
    %v6080 = vpop.xlane.xlu0 %6079
    %6081 = vadd.xlane.f32.xlu0 %v6033
    %v6082 = vpop.xlane.xlu0 %6081
    %6083 = vadd.xlane.f32.xlu0 %v6034
    %v6084 = vpop.xlane.xlu0 %6083
    %6085 = vadd.xlane.f32.xlu0 %v6035
    %v6086 = vpop.xlane.xlu0 %6085
    %6087 = vadd.xlane.f32.xlu0 %v6036
    %v6088 = vpop.xlane.xlu0 %6087
    %6089 = vadd.xlane.f32.xlu0 %v6037
    %v6090 = vpop.xlane.xlu0 %6089
    %6091 = vadd.xlane.f32.xlu0 %v6038
    %v6092 = vpop.xlane.xlu0 %6091
    %6093 = vadd.xlane.f32.xlu0 %v6039
    %v6094 = vpop.xlane.xlu0 %6093
    %6095 = vadd.xlane.f32.xlu0 %v6040
    %v6096 = vpop.xlane.xlu0 %6095
    %6097 = vadd.xlane.f32.xlu0 %v6041
    %v6098 = vpop.xlane.xlu0 %6097
    %6099 = vadd.xlane.f32.xlu0 %v6042
    %v6100 = vpop.xlane.xlu0 %6099
    %6101 = vadd.xlane.f32.xlu0 %v6043
    %v6102 = vpop.xlane.xlu0 %6101
    %6103 = vadd.xlane.f32.xlu0 %v6044
    %v6104 = vpop.xlane.xlu0 %6103
    %6105 = vadd.xlane.f32.xlu0 %v6045
    %v6106 = vpop.xlane.xlu0 %6105
    %6107 = vadd.xlane.f32.xlu0 %v6046
    %v6108 = vpop.xlane.xlu0 %6107
    %6109 = vadd.xlane.f32.xlu0 %v6047
    %v6110 = vpop.xlane.xlu0 %6109
    %6111 = vadd.xlane.f32.xlu0 %v6048
    %v6112 = vpop.xlane.xlu0 %6111
    %v6113 = vperm.slane %v5798, 2
    %v6114 = vmul.f32 %v5887, %v6113
    %v6115 = vmul.f32 %v5888, %v6113
    %v6116 = vmul.f32 %v5889, %v6113
    %v6117 = vmul.f32 %v5890, %v6113
    %v6118 = vmul.f32 %v5891, %v6113
    %v6119 = vmul.f32 %v5892, %v6113
    %v6120 = vmul.f32 %v5893, %v6113
    %v6121 = vmul.f32 %v5894, %v6113
    %v6122 = vmul.f32 %v5895, %v6113
    %v6123 = vmul.f32 %v5896, %v6113
    %v6124 = vmul.f32 %v5897, %v6113
    %v6125 = vmul.f32 %v5898, %v6113
    %v6126 = vmul.f32 %v5899, %v6113
    %v6127 = vmul.f32 %v5900, %v6113
    %v6128 = vmul.f32 %v5901, %v6113
    %v6129 = vmul.f32 %v5902, %v6113
    %v6130 = vmul.f32 %v5903, %v6113
    %v6131 = vmul.f32 %v5904, %v6113
    %v6132 = vmul.f32 %v5905, %v6113
    %v6133 = vmul.f32 %v5906, %v6113
    %v6134 = vmul.f32 %v5907, %v6113
    %v6135 = vmul.f32 %v5908, %v6113
    %v6136 = vmul.f32 %v5909, %v6113
    %v6137 = vmul.f32 %v5910, %v6113
    %v6138 = vmul.f32 %v5911, %v6113
    %v6139 = vmul.f32 %v5912, %v6113
    %v6140 = vmul.f32 %v5913, %v6113
    %v6141 = vmul.f32 %v5914, %v6113
    %v6142 = vmul.f32 %v5915, %v6113
    %v6143 = vmul.f32 %v5916, %v6113
    %v6144 = vmul.f32 %v5917, %v6113
    %v6145 = vmul.f32 %v5918, %v6113
    %6146 = vadd.xlane.f32.xlu0 %v6114
    %v6147 = vpop.xlane.xlu0 %6146
    %6148 = vadd.xlane.f32.xlu0 %v6115
    %v6149 = vpop.xlane.xlu0 %6148
    %6150 = vadd.xlane.f32.xlu0 %v6116
    %v6151 = vpop.xlane.xlu0 %6150
    %6152 = vadd.xlane.f32.xlu0 %v6117
    %v6153 = vpop.xlane.xlu0 %6152
    %6154 = vadd.xlane.f32.xlu0 %v6118
    %v6155 = vpop.xlane.xlu0 %6154
    %6156 = vadd.xlane.f32.xlu0 %v6119
    %v6157 = vpop.xlane.xlu0 %6156
    %6158 = vadd.xlane.f32.xlu0 %v6120
    %v6159 = vpop.xlane.xlu0 %6158
    %6160 = vadd.xlane.f32.xlu0 %v6121
    %v6161 = vpop.xlane.xlu0 %6160
    %6162 = vadd.xlane.f32.xlu0 %v6122
    %v6163 = vpop.xlane.xlu0 %6162
    %6164 = vadd.xlane.f32.xlu0 %v6123
    %v6165 = vpop.xlane.xlu0 %6164
    %6166 = vadd.xlane.f32.xlu0 %v6124
    %v6167 = vpop.xlane.xlu0 %6166
    %6168 = vadd.xlane.f32.xlu0 %v6125
    %v6169 = vpop.xlane.xlu0 %6168
    %6170 = vadd.xlane.f32.xlu0 %v6126
    %v6171 = vpop.xlane.xlu0 %6170
    %6172 = vadd.xlane.f32.xlu0 %v6127
    %v6173 = vpop.xlane.xlu0 %6172
    %6174 = vadd.xlane.f32.xlu0 %v6128
    %v6175 = vpop.xlane.xlu0 %6174
    %6176 = vadd.xlane.f32.xlu0 %v6129
    %v6177 = vpop.xlane.xlu0 %6176
    %6178 = vadd.xlane.f32.xlu0 %v6130
    %v6179 = vpop.xlane.xlu0 %6178
    %6180 = vadd.xlane.f32.xlu0 %v6131
    %v6181 = vpop.xlane.xlu0 %6180
    %6182 = vadd.xlane.f32.xlu0 %v6132
    %v6183 = vpop.xlane.xlu0 %6182
    %6184 = vadd.xlane.f32.xlu0 %v6133
    %v6185 = vpop.xlane.xlu0 %6184
    %6186 = vadd.xlane.f32.xlu0 %v6134
    %v6187 = vpop.xlane.xlu0 %6186
    %6188 = vadd.xlane.f32.xlu0 %v6135
    %v6189 = vpop.xlane.xlu0 %6188
    %6190 = vadd.xlane.f32.xlu0 %v6136
    %v6191 = vpop.xlane.xlu0 %6190
    %6192 = vadd.xlane.f32.xlu0 %v6137
    %v6193 = vpop.xlane.xlu0 %6192
    %6194 = vadd.xlane.f32.xlu0 %v6138
    %v6195 = vpop.xlane.xlu0 %6194
    %6196 = vadd.xlane.f32.xlu0 %v6139
    %v6197 = vpop.xlane.xlu0 %6196
    %6198 = vadd.xlane.f32.xlu0 %v6140
    %v6199 = vpop.xlane.xlu0 %6198
    %6200 = vadd.xlane.f32.xlu0 %v6141
    %v6201 = vpop.xlane.xlu0 %6200
    %6202 = vadd.xlane.f32.xlu0 %v6142
    %v6203 = vpop.xlane.xlu0 %6202
    %6204 = vadd.xlane.f32.xlu0 %v6143
    %v6205 = vpop.xlane.xlu0 %6204
    %6206 = vadd.xlane.f32.xlu0 %v6144
    %v6207 = vpop.xlane.xlu0 %6206
    %6208 = vadd.xlane.f32.xlu0 %v6145
    %v6209 = vpop.xlane.xlu0 %6208
    %v6210 = vperm.slane %v5798, 3
    %v6211 = vmul.f32 %v5887, %v6210
    %v6212 = vmul.f32 %v5888, %v6210
    %v6213 = vmul.f32 %v5889, %v6210
    %v6214 = vmul.f32 %v5890, %v6210
    %v6215 = vmul.f32 %v5891, %v6210
    %v6216 = vmul.f32 %v5892, %v6210
    %v6217 = vmul.f32 %v5893, %v6210
    %v6218 = vmul.f32 %v5894, %v6210
    %v6219 = vmul.f32 %v5895, %v6210
    %v6220 = vmul.f32 %v5896, %v6210
    %v6221 = vmul.f32 %v5897, %v6210
    %v6222 = vmul.f32 %v5898, %v6210
    %v6223 = vmul.f32 %v5899, %v6210
    %v6224 = vmul.f32 %v5900, %v6210
    %v6225 = vmul.f32 %v5901, %v6210
    %v6226 = vmul.f32 %v5902, %v6210
    %v6227 = vmul.f32 %v5903, %v6210
    %v6228 = vmul.f32 %v5904, %v6210
    %v6229 = vmul.f32 %v5905, %v6210
    %v6230 = vmul.f32 %v5906, %v6210
    %v6231 = vmul.f32 %v5907, %v6210
    %v6232 = vmul.f32 %v5908, %v6210
    %v6233 = vmul.f32 %v5909, %v6210
    %v6234 = vmul.f32 %v5910, %v6210
    %v6235 = vmul.f32 %v5911, %v6210
    %v6236 = vmul.f32 %v5912, %v6210
    %v6237 = vmul.f32 %v5913, %v6210
    %v6238 = vmul.f32 %v5914, %v6210
    %v6239 = vmul.f32 %v5915, %v6210
    %v6240 = vmul.f32 %v5916, %v6210
    %v6241 = vmul.f32 %v5917, %v6210
    %v6242 = vmul.f32 %v5918, %v6210
    %6243 = vadd.xlane.f32.xlu0 %v6211
    %v6244 = vpop.xlane.xlu0 %6243
    %6245 = vadd.xlane.f32.xlu0 %v6212
    %v6246 = vpop.xlane.xlu0 %6245
    %6247 = vadd.xlane.f32.xlu0 %v6213
    %v6248 = vpop.xlane.xlu0 %6247
    %6249 = vadd.xlane.f32.xlu0 %v6214
    %v6250 = vpop.xlane.xlu0 %6249
    %6251 = vadd.xlane.f32.xlu0 %v6215
    %v6252 = vpop.xlane.xlu0 %6251
    %6253 = vadd.xlane.f32.xlu0 %v6216
    %v6254 = vpop.xlane.xlu0 %6253
    %6255 = vadd.xlane.f32.xlu0 %v6217
    %v6256 = vpop.xlane.xlu0 %6255
    %6257 = vadd.xlane.f32.xlu0 %v6218
    %v6258 = vpop.xlane.xlu0 %6257
    %6259 = vadd.xlane.f32.xlu0 %v6219
    %v6260 = vpop.xlane.xlu0 %6259
    %6261 = vadd.xlane.f32.xlu0 %v6220
    %v6262 = vpop.xlane.xlu0 %6261
    %6263 = vadd.xlane.f32.xlu0 %v6221
    %v6264 = vpop.xlane.xlu0 %6263
    %6265 = vadd.xlane.f32.xlu0 %v6222
    %v6266 = vpop.xlane.xlu0 %6265
    %6267 = vadd.xlane.f32.xlu0 %v6223
    %v6268 = vpop.xlane.xlu0 %6267
    %6269 = vadd.xlane.f32.xlu0 %v6224
    %v6270 = vpop.xlane.xlu0 %6269
    %6271 = vadd.xlane.f32.xlu0 %v6225
    %v6272 = vpop.xlane.xlu0 %6271
    %6273 = vadd.xlane.f32.xlu0 %v6226
    %v6274 = vpop.xlane.xlu0 %6273
    %6275 = vadd.xlane.f32.xlu0 %v6227
    %v6276 = vpop.xlane.xlu0 %6275
    %6277 = vadd.xlane.f32.xlu0 %v6228
    %v6278 = vpop.xlane.xlu0 %6277
    %6279 = vadd.xlane.f32.xlu0 %v6229
    %v6280 = vpop.xlane.xlu0 %6279
    %6281 = vadd.xlane.f32.xlu0 %v6230
    %v6282 = vpop.xlane.xlu0 %6281
    %6283 = vadd.xlane.f32.xlu0 %v6231
    %v6284 = vpop.xlane.xlu0 %6283
    %6285 = vadd.xlane.f32.xlu0 %v6232
    %v6286 = vpop.xlane.xlu0 %6285
    %6287 = vadd.xlane.f32.xlu0 %v6233
    %v6288 = vpop.xlane.xlu0 %6287
    %6289 = vadd.xlane.f32.xlu0 %v6234
    %v6290 = vpop.xlane.xlu0 %6289
    %6291 = vadd.xlane.f32.xlu0 %v6235
    %v6292 = vpop.xlane.xlu0 %6291
    %6293 = vadd.xlane.f32.xlu0 %v6236
    %v6294 = vpop.xlane.xlu0 %6293
    %6295 = vadd.xlane.f32.xlu0 %v6237
    %v6296 = vpop.xlane.xlu0 %6295
    %6297 = vadd.xlane.f32.xlu0 %v6238
    %v6298 = vpop.xlane.xlu0 %6297
    %6299 = vadd.xlane.f32.xlu0 %v6239
    %v6300 = vpop.xlane.xlu0 %6299
    %6301 = vadd.xlane.f32.xlu0 %v6240
    %v6302 = vpop.xlane.xlu0 %6301
    %6303 = vadd.xlane.f32.xlu0 %v6241
    %v6304 = vpop.xlane.xlu0 %6303
    %6305 = vadd.xlane.f32.xlu0 %v6242
    %v6306 = vpop.xlane.xlu0 %6305
    %v6308 = vrot.slane %v5774, 1
    %v6309 = vrot.slane %v5774, 2
    %v6310 = vrot.slane %v5774, 3
    %v6311 = vrot.slane %v5774, 4
    %v6312 = vrot.slane %v5774, 5
    %v6313 = vrot.slane %v5774, 6
    %v6314 = vrot.slane %v5774, 7
    %v6315 = vperm.slane %v5774, 0
    %v6316 = vperm.slane %v6308, 0
    %v6317 = vperm.slane %v6309, 0
    %v6318 = vperm.slane %v6310, 0
    %v6319 = vperm.slane %v6311, 0
    %v6320 = vperm.slane %v6312, 0
    %v6321 = vperm.slane %v6313, 0
    %v6322 = vperm.slane %v6314, 0
    %v6331 = vadd.f32 %v6315, %v5793
    %v6332 = vadd.f32 %v6315, %v5794
    %v6333 = vadd.f32 %v6315, %v5795
    %v6334 = vadd.f32 %v6315, %v5796
    %v6335 = vadd.f32 %v6316, %v5793
    %v6336 = vadd.f32 %v6316, %v5794
    %v6337 = vadd.f32 %v6316, %v5795
    %v6338 = vadd.f32 %v6316, %v5796
    %v6339 = vadd.f32 %v6317, %v5793
    %v6340 = vadd.f32 %v6317, %v5794
    %v6341 = vadd.f32 %v6317, %v5795
    %v6342 = vadd.f32 %v6317, %v5796
    %v6343 = vadd.f32 %v6318, %v5793
    %v6344 = vadd.f32 %v6318, %v5794
    %v6345 = vadd.f32 %v6318, %v5795
    %v6346 = vadd.f32 %v6318, %v5796
    %v6347 = vadd.f32 %v6319, %v5793
    %v6348 = vadd.f32 %v6319, %v5794
    %v6349 = vadd.f32 %v6319, %v5795
    %v6350 = vadd.f32 %v6319, %v5796
    %v6351 = vadd.f32 %v6320, %v5793
    %v6352 = vadd.f32 %v6320, %v5794
    %v6353 = vadd.f32 %v6320, %v5795
    %v6354 = vadd.f32 %v6320, %v5796
    %v6355 = vadd.f32 %v6321, %v5793
    %v6356 = vadd.f32 %v6321, %v5794
    %v6357 = vadd.f32 %v6321, %v5795
    %v6358 = vadd.f32 %v6321, %v5796
    %v6359 = vadd.f32 %v6322, %v5793
    %v6360 = vadd.f32 %v6322, %v5794
    %v6361 = vadd.f32 %v6322, %v5795
    %v6362 = vadd.f32 %v6322, %v5796
    %v6363 = vmul.f32 %v6331, 0.2
    %v6364 = vmul.f32 %v6332, 0.2
    %v6365 = vmul.f32 %v6333, 0.2
    %v6366 = vmul.f32 %v6334, 0.2
    %v6367 = vmul.f32 %v6335, 0.2
    %v6368 = vmul.f32 %v6336, 0.2
    %v6369 = vmul.f32 %v6337, 0.2
    %v6370 = vmul.f32 %v6338, 0.2
    %v6371 = vmul.f32 %v6339, 0.2
    %v6372 = vmul.f32 %v6340, 0.2
    %v6373 = vmul.f32 %v6341, 0.2
    %v6374 = vmul.f32 %v6342, 0.2
    %v6375 = vmul.f32 %v6343, 0.2
    %v6376 = vmul.f32 %v6344, 0.2
    %v6377 = vmul.f32 %v6345, 0.2
    %v6378 = vmul.f32 %v6346, 0.2
    %v6379 = vmul.f32 %v6347, 0.2
    %v6380 = vmul.f32 %v6348, 0.2
    %v6381 = vmul.f32 %v6349, 0.2
    %v6382 = vmul.f32 %v6350, 0.2
    %v6383 = vmul.f32 %v6351, 0.2
    %v6384 = vmul.f32 %v6352, 0.2
    %v6385 = vmul.f32 %v6353, 0.2
    %v6386 = vmul.f32 %v6354, 0.2
    %v6387 = vmul.f32 %v6355, 0.2
    %v6388 = vmul.f32 %v6356, 0.2
    %v6389 = vmul.f32 %v6357, 0.2
    %v6390 = vmul.f32 %v6358, 0.2
    %v6391 = vmul.f32 %v6359, 0.2
    %v6392 = vmul.f32 %v6360, 0.2
    %v6393 = vmul.f32 %v6361, 0.2
    %v6394 = vmul.f32 %v6362, 0.2
    %v6395 = vmax.f32 %v6331, %v6363
    %v6396 = vmax.f32 %v6332, %v6364
    %v6397 = vmax.f32 %v6333, %v6365
    %v6398 = vmax.f32 %v6334, %v6366
    %v6399 = vmax.f32 %v6335, %v6367
    %v6400 = vmax.f32 %v6336, %v6368
    %v6401 = vmax.f32 %v6337, %v6369
    %v6402 = vmax.f32 %v6338, %v6370
    %v6403 = vmax.f32 %v6339, %v6371
    %v6404 = vmax.f32 %v6340, %v6372
    %v6405 = vmax.f32 %v6341, %v6373
    %v6406 = vmax.f32 %v6342, %v6374
    %v6407 = vmax.f32 %v6343, %v6375
    %v6408 = vmax.f32 %v6344, %v6376
    %v6409 = vmax.f32 %v6345, %v6377
    %v6410 = vmax.f32 %v6346, %v6378
    %v6411 = vmax.f32 %v6347, %v6379
    %v6412 = vmax.f32 %v6348, %v6380
    %v6413 = vmax.f32 %v6349, %v6381
    %v6414 = vmax.f32 %v6350, %v6382
    %v6415 = vmax.f32 %v6351, %v6383
    %v6416 = vmax.f32 %v6352, %v6384
    %v6417 = vmax.f32 %v6353, %v6385
    %v6418 = vmax.f32 %v6354, %v6386
    %v6419 = vmax.f32 %v6355, %v6387
    %v6420 = vmax.f32 %v6356, %v6388
    %v6421 = vmax.f32 %v6357, %v6389
    %v6422 = vmax.f32 %v6358, %v6390
    %v6423 = vmax.f32 %v6359, %v6391
    %v6424 = vmax.f32 %v6360, %v6392
    %v6425 = vmax.f32 %v6361, %v6393
    %v6426 = vmax.f32 %v6362, %v6394
    %v6427 = vmul.f32 %v6395, %v5919
    %v6428 = vmul.f32 %v6396, %v5919
    %v6429 = vmul.f32 %v6397, %v5919
    %v6430 = vmul.f32 %v6398, %v5919
    %v6431 = vmul.f32 %v6399, %v5919
    %v6432 = vmul.f32 %v6400, %v5919
    %v6433 = vmul.f32 %v6401, %v5919
    %v6434 = vmul.f32 %v6402, %v5919
    %v6435 = vmul.f32 %v6403, %v5919
    %v6436 = vmul.f32 %v6404, %v5919
    %v6437 = vmul.f32 %v6405, %v5919
    %v6438 = vmul.f32 %v6406, %v5919
    %v6439 = vmul.f32 %v6407, %v5919
    %v6440 = vmul.f32 %v6408, %v5919
    %v6441 = vmul.f32 %v6409, %v5919
    %v6442 = vmul.f32 %v6410, %v5919
    %v6443 = vmul.f32 %v6411, %v5919
    %v6444 = vmul.f32 %v6412, %v5919
    %v6445 = vmul.f32 %v6413, %v5919
    %v6446 = vmul.f32 %v6414, %v5919
    %v6447 = vmul.f32 %v6415, %v5919
    %v6448 = vmul.f32 %v6416, %v5919
    %v6449 = vmul.f32 %v6417, %v5919
    %v6450 = vmul.f32 %v6418, %v5919
    %v6451 = vmul.f32 %v6419, %v5919
    %v6452 = vmul.f32 %v6420, %v5919
    %v6453 = vmul.f32 %v6421, %v5919
    %v6454 = vmul.f32 %v6422, %v5919
    %v6455 = vmul.f32 %v6423, %v5919
    %v6456 = vmul.f32 %v6424, %v5919
    %v6457 = vmul.f32 %v6425, %v5919
    %v6458 = vmul.f32 %v6426, %v5919
    %6459 = vadd.xlane.f32.xlu0 %v6427
    %v6460 = vpop.xlane.xlu0 %6459
    %6461 = vadd.xlane.f32.xlu0 %v6428
    %v6462 = vpop.xlane.xlu0 %6461
    %6463 = vadd.xlane.f32.xlu0 %v6429
    %v6464 = vpop.xlane.xlu0 %6463
    %6465 = vadd.xlane.f32.xlu0 %v6430
    %v6466 = vpop.xlane.xlu0 %6465
    %6467 = vadd.xlane.f32.xlu0 %v6431
    %v6468 = vpop.xlane.xlu0 %6467
    %6469 = vadd.xlane.f32.xlu0 %v6432
    %v6470 = vpop.xlane.xlu0 %6469
    %6471 = vadd.xlane.f32.xlu0 %v6433
    %v6472 = vpop.xlane.xlu0 %6471
    %6473 = vadd.xlane.f32.xlu0 %v6434
    %v6474 = vpop.xlane.xlu0 %6473
    %6475 = vadd.xlane.f32.xlu0 %v6435
    %v6476 = vpop.xlane.xlu0 %6475
    %6477 = vadd.xlane.f32.xlu0 %v6436
    %v6478 = vpop.xlane.xlu0 %6477
    %6479 = vadd.xlane.f32.xlu0 %v6437
    %v6480 = vpop.xlane.xlu0 %6479
    %6481 = vadd.xlane.f32.xlu0 %v6438
    %v6482 = vpop.xlane.xlu0 %6481
    %6483 = vadd.xlane.f32.xlu0 %v6439
    %v6484 = vpop.xlane.xlu0 %6483
    %6485 = vadd.xlane.f32.xlu0 %v6440
    %v6486 = vpop.xlane.xlu0 %6485
    %6487 = vadd.xlane.f32.xlu0 %v6441
    %v6488 = vpop.xlane.xlu0 %6487
    %6489 = vadd.xlane.f32.xlu0 %v6442
    %v6490 = vpop.xlane.xlu0 %6489
    %6491 = vadd.xlane.f32.xlu0 %v6443
    %v6492 = vpop.xlane.xlu0 %6491
    %6493 = vadd.xlane.f32.xlu0 %v6444
    %v6494 = vpop.xlane.xlu0 %6493
    %6495 = vadd.xlane.f32.xlu0 %v6445
    %v6496 = vpop.xlane.xlu0 %6495
    %6497 = vadd.xlane.f32.xlu0 %v6446
    %v6498 = vpop.xlane.xlu0 %6497
    %6499 = vadd.xlane.f32.xlu0 %v6447
    %v6500 = vpop.xlane.xlu0 %6499
    %6501 = vadd.xlane.f32.xlu0 %v6448
    %v6502 = vpop.xlane.xlu0 %6501
    %6503 = vadd.xlane.f32.xlu0 %v6449
    %v6504 = vpop.xlane.xlu0 %6503
    %6505 = vadd.xlane.f32.xlu0 %v6450
    %v6506 = vpop.xlane.xlu0 %6505
    %6507 = vadd.xlane.f32.xlu0 %v6451
    %v6508 = vpop.xlane.xlu0 %6507
    %6509 = vadd.xlane.f32.xlu0 %v6452
    %v6510 = vpop.xlane.xlu0 %6509
    %6511 = vadd.xlane.f32.xlu0 %v6453
    %v6512 = vpop.xlane.xlu0 %6511
    %6513 = vadd.xlane.f32.xlu0 %v6454
    %v6514 = vpop.xlane.xlu0 %6513
    %6515 = vadd.xlane.f32.xlu0 %v6455
    %v6516 = vpop.xlane.xlu0 %6515
    %6517 = vadd.xlane.f32.xlu0 %v6456
    %v6518 = vpop.xlane.xlu0 %6517
    %6519 = vadd.xlane.f32.xlu0 %v6457
    %v6520 = vpop.xlane.xlu0 %6519
    %6521 = vadd.xlane.f32.xlu0 %v6458
    %v6522 = vpop.xlane.xlu0 %6521
    %v6523 = vmul.f32 %v6395, %v6016
    %v6524 = vmul.f32 %v6396, %v6016
    %v6525 = vmul.f32 %v6397, %v6016
    %v6526 = vmul.f32 %v6398, %v6016
    %v6527 = vmul.f32 %v6399, %v6016
    %v6528 = vmul.f32 %v6400, %v6016
    %v6529 = vmul.f32 %v6401, %v6016
    %v6530 = vmul.f32 %v6402, %v6016
    %v6531 = vmul.f32 %v6403, %v6016
    %v6532 = vmul.f32 %v6404, %v6016
    %v6533 = vmul.f32 %v6405, %v6016
    %v6534 = vmul.f32 %v6406, %v6016
    %v6535 = vmul.f32 %v6407, %v6016
    %v6536 = vmul.f32 %v6408, %v6016
    %v6537 = vmul.f32 %v6409, %v6016
    %v6538 = vmul.f32 %v6410, %v6016
    %v6539 = vmul.f32 %v6411, %v6016
    %v6540 = vmul.f32 %v6412, %v6016
    %v6541 = vmul.f32 %v6413, %v6016
    %v6542 = vmul.f32 %v6414, %v6016
    %v6543 = vmul.f32 %v6415, %v6016
    %v6544 = vmul.f32 %v6416, %v6016
    %v6545 = vmul.f32 %v6417, %v6016
    %v6546 = vmul.f32 %v6418, %v6016
    %v6547 = vmul.f32 %v6419, %v6016
    %v6548 = vmul.f32 %v6420, %v6016
    %v6549 = vmul.f32 %v6421, %v6016
    %v6550 = vmul.f32 %v6422, %v6016
    %v6551 = vmul.f32 %v6423, %v6016
    %v6552 = vmul.f32 %v6424, %v6016
    %v6553 = vmul.f32 %v6425, %v6016
    %v6554 = vmul.f32 %v6426, %v6016
    %6555 = vadd.xlane.f32.xlu0 %v6523
    %v6556 = vpop.xlane.xlu0 %6555
    %6557 = vadd.xlane.f32.xlu0 %v6524
    %v6558 = vpop.xlane.xlu0 %6557
    %6559 = vadd.xlane.f32.xlu0 %v6525
    %v6560 = vpop.xlane.xlu0 %6559
    %6561 = vadd.xlane.f32.xlu0 %v6526
    %v6562 = vpop.xlane.xlu0 %6561
    %6563 = vadd.xlane.f32.xlu0 %v6527
    %v6564 = vpop.xlane.xlu0 %6563
    %6565 = vadd.xlane.f32.xlu0 %v6528
    %v6566 = vpop.xlane.xlu0 %6565
    %6567 = vadd.xlane.f32.xlu0 %v6529
    %v6568 = vpop.xlane.xlu0 %6567
    %6569 = vadd.xlane.f32.xlu0 %v6530
    %v6570 = vpop.xlane.xlu0 %6569
    %6571 = vadd.xlane.f32.xlu0 %v6531
    %v6572 = vpop.xlane.xlu0 %6571
    %6573 = vadd.xlane.f32.xlu0 %v6532
    %v6574 = vpop.xlane.xlu0 %6573
    %6575 = vadd.xlane.f32.xlu0 %v6533
    %v6576 = vpop.xlane.xlu0 %6575
    %6577 = vadd.xlane.f32.xlu0 %v6534
    %v6578 = vpop.xlane.xlu0 %6577
    %6579 = vadd.xlane.f32.xlu0 %v6535
    %v6580 = vpop.xlane.xlu0 %6579
    %6581 = vadd.xlane.f32.xlu0 %v6536
    %v6582 = vpop.xlane.xlu0 %6581
    %6583 = vadd.xlane.f32.xlu0 %v6537
    %v6584 = vpop.xlane.xlu0 %6583
    %6585 = vadd.xlane.f32.xlu0 %v6538
    %v6586 = vpop.xlane.xlu0 %6585
    %6587 = vadd.xlane.f32.xlu0 %v6539
    %v6588 = vpop.xlane.xlu0 %6587
    %6589 = vadd.xlane.f32.xlu0 %v6540
    %v6590 = vpop.xlane.xlu0 %6589
    %6591 = vadd.xlane.f32.xlu0 %v6541
    %v6592 = vpop.xlane.xlu0 %6591
    %6593 = vadd.xlane.f32.xlu0 %v6542
    %v6594 = vpop.xlane.xlu0 %6593
    %6595 = vadd.xlane.f32.xlu0 %v6543
    %v6596 = vpop.xlane.xlu0 %6595
    %6597 = vadd.xlane.f32.xlu0 %v6544
    %v6598 = vpop.xlane.xlu0 %6597
    %6599 = vadd.xlane.f32.xlu0 %v6545
    %v6600 = vpop.xlane.xlu0 %6599
    %6601 = vadd.xlane.f32.xlu0 %v6546
    %v6602 = vpop.xlane.xlu0 %6601
    %6603 = vadd.xlane.f32.xlu0 %v6547
    %v6604 = vpop.xlane.xlu0 %6603
    %6605 = vadd.xlane.f32.xlu0 %v6548
    %v6606 = vpop.xlane.xlu0 %6605
    %6607 = vadd.xlane.f32.xlu0 %v6549
    %v6608 = vpop.xlane.xlu0 %6607
    %6609 = vadd.xlane.f32.xlu0 %v6550
    %v6610 = vpop.xlane.xlu0 %6609
    %6611 = vadd.xlane.f32.xlu0 %v6551
    %v6612 = vpop.xlane.xlu0 %6611
    %6613 = vadd.xlane.f32.xlu0 %v6552
    %v6614 = vpop.xlane.xlu0 %6613
    %6615 = vadd.xlane.f32.xlu0 %v6553
    %v6616 = vpop.xlane.xlu0 %6615
    %6617 = vadd.xlane.f32.xlu0 %v6554
    %v6618 = vpop.xlane.xlu0 %6617
    %v6619 = vmul.f32 %v6395, %v6113
    %v6620 = vmul.f32 %v6396, %v6113
    %v6621 = vmul.f32 %v6397, %v6113
    %v6622 = vmul.f32 %v6398, %v6113
    %v6623 = vmul.f32 %v6399, %v6113
    %v6624 = vmul.f32 %v6400, %v6113
    %v6625 = vmul.f32 %v6401, %v6113
    %v6626 = vmul.f32 %v6402, %v6113
    %v6627 = vmul.f32 %v6403, %v6113
    %v6628 = vmul.f32 %v6404, %v6113
    %v6629 = vmul.f32 %v6405, %v6113
    %v6630 = vmul.f32 %v6406, %v6113
    %v6631 = vmul.f32 %v6407, %v6113
    %v6632 = vmul.f32 %v6408, %v6113
    %v6633 = vmul.f32 %v6409, %v6113
    %v6634 = vmul.f32 %v6410, %v6113
    %v6635 = vmul.f32 %v6411, %v6113
    %v6636 = vmul.f32 %v6412, %v6113
    %v6637 = vmul.f32 %v6413, %v6113
    %v6638 = vmul.f32 %v6414, %v6113
    %v6639 = vmul.f32 %v6415, %v6113
    %v6640 = vmul.f32 %v6416, %v6113
    %v6641 = vmul.f32 %v6417, %v6113
    %v6642 = vmul.f32 %v6418, %v6113
    %v6643 = vmul.f32 %v6419, %v6113
    %v6644 = vmul.f32 %v6420, %v6113
    %v6645 = vmul.f32 %v6421, %v6113
    %v6646 = vmul.f32 %v6422, %v6113
    %v6647 = vmul.f32 %v6423, %v6113
    %v6648 = vmul.f32 %v6424, %v6113
    %v6649 = vmul.f32 %v6425, %v6113
    %v6650 = vmul.f32 %v6426, %v6113
    %6651 = vadd.xlane.f32.xlu0 %v6619
    %v6652 = vpop.xlane.xlu0 %6651
    %6653 = vadd.xlane.f32.xlu0 %v6620
    %v6654 = vpop.xlane.xlu0 %6653
    %6655 = vadd.xlane.f32.xlu0 %v6621
    %v6656 = vpop.xlane.xlu0 %6655
    %6657 = vadd.xlane.f32.xlu0 %v6622
    %v6658 = vpop.xlane.xlu0 %6657
    %6659 = vadd.xlane.f32.xlu0 %v6623
    %v6660 = vpop.xlane.xlu0 %6659
    %6661 = vadd.xlane.f32.xlu0 %v6624
    %v6662 = vpop.xlane.xlu0 %6661
    %6663 = vadd.xlane.f32.xlu0 %v6625
    %v6664 = vpop.xlane.xlu0 %6663
    %6665 = vadd.xlane.f32.xlu0 %v6626
    %v6666 = vpop.xlane.xlu0 %6665
    %6667 = vadd.xlane.f32.xlu0 %v6627
    %v6668 = vpop.xlane.xlu0 %6667
    %6669 = vadd.xlane.f32.xlu0 %v6628
    %v6670 = vpop.xlane.xlu0 %6669
    %6671 = vadd.xlane.f32.xlu0 %v6629
    %v6672 = vpop.xlane.xlu0 %6671
    %6673 = vadd.xlane.f32.xlu0 %v6630
    %v6674 = vpop.xlane.xlu0 %6673
    %6675 = vadd.xlane.f32.xlu0 %v6631
    %v6676 = vpop.xlane.xlu0 %6675
    %6677 = vadd.xlane.f32.xlu0 %v6632
    %v6678 = vpop.xlane.xlu0 %6677
    %6679 = vadd.xlane.f32.xlu0 %v6633
    %v6680 = vpop.xlane.xlu0 %6679
    %6681 = vadd.xlane.f32.xlu0 %v6634
    %v6682 = vpop.xlane.xlu0 %6681
    %6683 = vadd.xlane.f32.xlu0 %v6635
    %v6684 = vpop.xlane.xlu0 %6683
    %6685 = vadd.xlane.f32.xlu0 %v6636
    %v6686 = vpop.xlane.xlu0 %6685
    %6687 = vadd.xlane.f32.xlu0 %v6637
    %v6688 = vpop.xlane.xlu0 %6687
    %6689 = vadd.xlane.f32.xlu0 %v6638
    %v6690 = vpop.xlane.xlu0 %6689
    %6691 = vadd.xlane.f32.xlu0 %v6639
    %v6692 = vpop.xlane.xlu0 %6691
    %6693 = vadd.xlane.f32.xlu0 %v6640
    %v6694 = vpop.xlane.xlu0 %6693
    %6695 = vadd.xlane.f32.xlu0 %v6641
    %v6696 = vpop.xlane.xlu0 %6695
    %6697 = vadd.xlane.f32.xlu0 %v6642
    %v6698 = vpop.xlane.xlu0 %6697
    %6699 = vadd.xlane.f32.xlu0 %v6643
    %v6700 = vpop.xlane.xlu0 %6699
    %6701 = vadd.xlane.f32.xlu0 %v6644
    %v6702 = vpop.xlane.xlu0 %6701
    %6703 = vadd.xlane.f32.xlu0 %v6645
    %v6704 = vpop.xlane.xlu0 %6703
    %6705 = vadd.xlane.f32.xlu0 %v6646
    %v6706 = vpop.xlane.xlu0 %6705
    %6707 = vadd.xlane.f32.xlu0 %v6647
    %v6708 = vpop.xlane.xlu0 %6707
    %6709 = vadd.xlane.f32.xlu0 %v6648
    %v6710 = vpop.xlane.xlu0 %6709
    %6711 = vadd.xlane.f32.xlu0 %v6649
    %v6712 = vpop.xlane.xlu0 %6711
    %6713 = vadd.xlane.f32.xlu0 %v6650
    %v6714 = vpop.xlane.xlu0 %6713
    %v6715 = vmul.f32 %v6395, %v6210
    %v6716 = vmul.f32 %v6396, %v6210
    %v6717 = vmul.f32 %v6397, %v6210
    %v6718 = vmul.f32 %v6398, %v6210
    %v6719 = vmul.f32 %v6399, %v6210
    %v6720 = vmul.f32 %v6400, %v6210
    %v6721 = vmul.f32 %v6401, %v6210
    %v6722 = vmul.f32 %v6402, %v6210
    %v6723 = vmul.f32 %v6403, %v6210
    %v6724 = vmul.f32 %v6404, %v6210
    %v6725 = vmul.f32 %v6405, %v6210
    %v6726 = vmul.f32 %v6406, %v6210
    %v6727 = vmul.f32 %v6407, %v6210
    %v6728 = vmul.f32 %v6408, %v6210
    %v6729 = vmul.f32 %v6409, %v6210
    %v6730 = vmul.f32 %v6410, %v6210
    %v6731 = vmul.f32 %v6411, %v6210
    %v6732 = vmul.f32 %v6412, %v6210
    %v6733 = vmul.f32 %v6413, %v6210
    %v6734 = vmul.f32 %v6414, %v6210
    %v6735 = vmul.f32 %v6415, %v6210
    %v6736 = vmul.f32 %v6416, %v6210
    %v6737 = vmul.f32 %v6417, %v6210
    %v6738 = vmul.f32 %v6418, %v6210
    %v6739 = vmul.f32 %v6419, %v6210
    %v6740 = vmul.f32 %v6420, %v6210
    %v6741 = vmul.f32 %v6421, %v6210
    %v6742 = vmul.f32 %v6422, %v6210
    %v6743 = vmul.f32 %v6423, %v6210
    %v6744 = vmul.f32 %v6424, %v6210
    %v6745 = vmul.f32 %v6425, %v6210
    %v6746 = vmul.f32 %v6426, %v6210
    %6747 = vadd.xlane.f32.xlu0 %v6715
    %v6748 = vpop.xlane.xlu0 %6747
    %6749 = vadd.xlane.f32.xlu0 %v6716
    %v6750 = vpop.xlane.xlu0 %6749
    %6751 = vadd.xlane.f32.xlu0 %v6717
    %v6752 = vpop.xlane.xlu0 %6751
    %6753 = vadd.xlane.f32.xlu0 %v6718
    %v6754 = vpop.xlane.xlu0 %6753
    %6755 = vadd.xlane.f32.xlu0 %v6719
    %v6756 = vpop.xlane.xlu0 %6755
    %6757 = vadd.xlane.f32.xlu0 %v6720
    %v6758 = vpop.xlane.xlu0 %6757
    %6759 = vadd.xlane.f32.xlu0 %v6721
    %v6760 = vpop.xlane.xlu0 %6759
    %6761 = vadd.xlane.f32.xlu0 %v6722
    %v6762 = vpop.xlane.xlu0 %6761
    %6763 = vadd.xlane.f32.xlu0 %v6723
    %v6764 = vpop.xlane.xlu0 %6763
    %6765 = vadd.xlane.f32.xlu0 %v6724
    %v6766 = vpop.xlane.xlu0 %6765
    %6767 = vadd.xlane.f32.xlu0 %v6725
    %v6768 = vpop.xlane.xlu0 %6767
    %6769 = vadd.xlane.f32.xlu0 %v6726
    %v6770 = vpop.xlane.xlu0 %6769
    %6771 = vadd.xlane.f32.xlu0 %v6727
    %v6772 = vpop.xlane.xlu0 %6771
    %6773 = vadd.xlane.f32.xlu0 %v6728
    %v6774 = vpop.xlane.xlu0 %6773
    %6775 = vadd.xlane.f32.xlu0 %v6729
    %v6776 = vpop.xlane.xlu0 %6775
    %6777 = vadd.xlane.f32.xlu0 %v6730
    %v6778 = vpop.xlane.xlu0 %6777
    %6779 = vadd.xlane.f32.xlu0 %v6731
    %v6780 = vpop.xlane.xlu0 %6779
    %6781 = vadd.xlane.f32.xlu0 %v6732
    %v6782 = vpop.xlane.xlu0 %6781
    %6783 = vadd.xlane.f32.xlu0 %v6733
    %v6784 = vpop.xlane.xlu0 %6783
    %6785 = vadd.xlane.f32.xlu0 %v6734
    %v6786 = vpop.xlane.xlu0 %6785
    %6787 = vadd.xlane.f32.xlu0 %v6735
    %v6788 = vpop.xlane.xlu0 %6787
    %6789 = vadd.xlane.f32.xlu0 %v6736
    %v6790 = vpop.xlane.xlu0 %6789
    %6791 = vadd.xlane.f32.xlu0 %v6737
    %v6792 = vpop.xlane.xlu0 %6791
    %6793 = vadd.xlane.f32.xlu0 %v6738
    %v6794 = vpop.xlane.xlu0 %6793
    %6795 = vadd.xlane.f32.xlu0 %v6739
    %v6796 = vpop.xlane.xlu0 %6795
    %6797 = vadd.xlane.f32.xlu0 %v6740
    %v6798 = vpop.xlane.xlu0 %6797
    %6799 = vadd.xlane.f32.xlu0 %v6741
    %v6800 = vpop.xlane.xlu0 %6799
    %6801 = vadd.xlane.f32.xlu0 %v6742
    %v6802 = vpop.xlane.xlu0 %6801
    %6803 = vadd.xlane.f32.xlu0 %v6743
    %v6804 = vpop.xlane.xlu0 %6803
    %6805 = vadd.xlane.f32.xlu0 %v6744
    %v6806 = vpop.xlane.xlu0 %6805
    %6807 = vadd.xlane.f32.xlu0 %v6745
    %v6808 = vpop.xlane.xlu0 %6807
    %6809 = vadd.xlane.f32.xlu0 %v6746
    %v6810 = vpop.xlane.xlu0 %6809
    %v6812 = vrot.slane %v5775, 1
    %v6813 = vrot.slane %v5775, 2
    %v6814 = vrot.slane %v5775, 3
    %v6815 = vrot.slane %v5775, 4
    %v6816 = vrot.slane %v5775, 5
    %v6817 = vrot.slane %v5775, 6
    %v6818 = vrot.slane %v5775, 7
    %v6819 = vperm.slane %v5775, 0
    %v6820 = vperm.slane %v6812, 0
    %v6821 = vperm.slane %v6813, 0
    %v6822 = vperm.slane %v6814, 0
    %v6823 = vperm.slane %v6815, 0
    %v6824 = vperm.slane %v6816, 0
    %v6825 = vperm.slane %v6817, 0
    %v6826 = vperm.slane %v6818, 0
    %v6835 = vadd.f32 %v6819, %v5793
    %v6836 = vadd.f32 %v6819, %v5794
    %v6837 = vadd.f32 %v6819, %v5795
    %v6838 = vadd.f32 %v6819, %v5796
    %v6839 = vadd.f32 %v6820, %v5793
    %v6840 = vadd.f32 %v6820, %v5794
    %v6841 = vadd.f32 %v6820, %v5795
    %v6842 = vadd.f32 %v6820, %v5796
    %v6843 = vadd.f32 %v6821, %v5793
    %v6844 = vadd.f32 %v6821, %v5794
    %v6845 = vadd.f32 %v6821, %v5795
    %v6846 = vadd.f32 %v6821, %v5796
    %v6847 = vadd.f32 %v6822, %v5793
    %v6848 = vadd.f32 %v6822, %v5794
    %v6849 = vadd.f32 %v6822, %v5795
    %v6850 = vadd.f32 %v6822, %v5796
    %v6851 = vadd.f32 %v6823, %v5793
    %v6852 = vadd.f32 %v6823, %v5794
    %v6853 = vadd.f32 %v6823, %v5795
    %v6854 = vadd.f32 %v6823, %v5796
    %v6855 = vadd.f32 %v6824, %v5793
    %v6856 = vadd.f32 %v6824, %v5794
    %v6857 = vadd.f32 %v6824, %v5795
    %v6858 = vadd.f32 %v6824, %v5796
    %v6859 = vadd.f32 %v6825, %v5793
    %v6860 = vadd.f32 %v6825, %v5794
    %v6861 = vadd.f32 %v6825, %v5795
    %v6862 = vadd.f32 %v6825, %v5796
    %v6863 = vadd.f32 %v6826, %v5793
    %v6864 = vadd.f32 %v6826, %v5794
    %v6865 = vadd.f32 %v6826, %v5795
    %v6866 = vadd.f32 %v6826, %v5796
    %v6867 = vmul.f32 %v6835, 0.2
    %v6868 = vmul.f32 %v6836, 0.2
    %v6869 = vmul.f32 %v6837, 0.2
    %v6870 = vmul.f32 %v6838, 0.2
    %v6871 = vmul.f32 %v6839, 0.2
    %v6872 = vmul.f32 %v6840, 0.2
    %v6873 = vmul.f32 %v6841, 0.2
    %v6874 = vmul.f32 %v6842, 0.2
    %v6875 = vmul.f32 %v6843, 0.2
    %v6876 = vmul.f32 %v6844, 0.2
    %v6877 = vmul.f32 %v6845, 0.2
    %v6878 = vmul.f32 %v6846, 0.2
    %v6879 = vmul.f32 %v6847, 0.2
    %v6880 = vmul.f32 %v6848, 0.2
    %v6881 = vmul.f32 %v6849, 0.2
    %v6882 = vmul.f32 %v6850, 0.2
    %v6883 = vmul.f32 %v6851, 0.2
    %v6884 = vmul.f32 %v6852, 0.2
    %v6885 = vmul.f32 %v6853, 0.2
    %v6886 = vmul.f32 %v6854, 0.2
    %v6887 = vmul.f32 %v6855, 0.2
    %v6888 = vmul.f32 %v6856, 0.2
    %v6889 = vmul.f32 %v6857, 0.2
    %v6890 = vmul.f32 %v6858, 0.2
    %v6891 = vmul.f32 %v6859, 0.2
    %v6892 = vmul.f32 %v6860, 0.2
    %v6893 = vmul.f32 %v6861, 0.2
    %v6894 = vmul.f32 %v6862, 0.2
    %v6895 = vmul.f32 %v6863, 0.2
    %v6896 = vmul.f32 %v6864, 0.2
    %v6897 = vmul.f32 %v6865, 0.2
    %v6898 = vmul.f32 %v6866, 0.2
    %v6899 = vmax.f32 %v6835, %v6867
    %v6900 = vmax.f32 %v6836, %v6868
    %v6901 = vmax.f32 %v6837, %v6869
    %v6902 = vmax.f32 %v6838, %v6870
    %v6903 = vmax.f32 %v6839, %v6871
    %v6904 = vmax.f32 %v6840, %v6872
    %v6905 = vmax.f32 %v6841, %v6873
    %v6906 = vmax.f32 %v6842, %v6874
    %v6907 = vmax.f32 %v6843, %v6875
    %v6908 = vmax.f32 %v6844, %v6876
    %v6909 = vmax.f32 %v6845, %v6877
    %v6910 = vmax.f32 %v6846, %v6878
    %v6911 = vmax.f32 %v6847, %v6879
    %v6912 = vmax.f32 %v6848, %v6880
    %v6913 = vmax.f32 %v6849, %v6881
    %v6914 = vmax.f32 %v6850, %v6882
    %v6915 = vmax.f32 %v6851, %v6883
    %v6916 = vmax.f32 %v6852, %v6884
    %v6917 = vmax.f32 %v6853, %v6885
    %v6918 = vmax.f32 %v6854, %v6886
    %v6919 = vmax.f32 %v6855, %v6887
    %v6920 = vmax.f32 %v6856, %v6888
    %v6921 = vmax.f32 %v6857, %v6889
    %v6922 = vmax.f32 %v6858, %v6890
    %v6923 = vmax.f32 %v6859, %v6891
    %v6924 = vmax.f32 %v6860, %v6892
    %v6925 = vmax.f32 %v6861, %v6893
    %v6926 = vmax.f32 %v6862, %v6894
    %v6927 = vmax.f32 %v6863, %v6895
    %v6928 = vmax.f32 %v6864, %v6896
    %v6929 = vmax.f32 %v6865, %v6897
    %v6930 = vmax.f32 %v6866, %v6898
    %v6931 = vmul.f32 %v6899, %v5919
    %v6932 = vmul.f32 %v6900, %v5919
    %v6933 = vmul.f32 %v6901, %v5919
    %v6934 = vmul.f32 %v6902, %v5919
    %v6935 = vmul.f32 %v6903, %v5919
    %v6936 = vmul.f32 %v6904, %v5919
    %v6937 = vmul.f32 %v6905, %v5919
    %v6938 = vmul.f32 %v6906, %v5919
    %v6939 = vmul.f32 %v6907, %v5919
    %v6940 = vmul.f32 %v6908, %v5919
    %v6941 = vmul.f32 %v6909, %v5919
    %v6942 = vmul.f32 %v6910, %v5919
    %v6943 = vmul.f32 %v6911, %v5919
    %v6944 = vmul.f32 %v6912, %v5919
    %v6945 = vmul.f32 %v6913, %v5919
    %v6946 = vmul.f32 %v6914, %v5919
    %v6947 = vmul.f32 %v6915, %v5919
    %v6948 = vmul.f32 %v6916, %v5919
    %v6949 = vmul.f32 %v6917, %v5919
    %v6950 = vmul.f32 %v6918, %v5919
    %v6951 = vmul.f32 %v6919, %v5919
    %v6952 = vmul.f32 %v6920, %v5919
    %v6953 = vmul.f32 %v6921, %v5919
    %v6954 = vmul.f32 %v6922, %v5919
    %v6955 = vmul.f32 %v6923, %v5919
    %v6956 = vmul.f32 %v6924, %v5919
    %v6957 = vmul.f32 %v6925, %v5919
    %v6958 = vmul.f32 %v6926, %v5919
    %v6959 = vmul.f32 %v6927, %v5919
    %v6960 = vmul.f32 %v6928, %v5919
    %v6961 = vmul.f32 %v6929, %v5919
    %v6962 = vmul.f32 %v6930, %v5919
    %6963 = vadd.xlane.f32.xlu0 %v6931
    %v6964 = vpop.xlane.xlu0 %6963
    %6965 = vadd.xlane.f32.xlu0 %v6932
    %v6966 = vpop.xlane.xlu0 %6965
    %6967 = vadd.xlane.f32.xlu0 %v6933
    %v6968 = vpop.xlane.xlu0 %6967
    %6969 = vadd.xlane.f32.xlu0 %v6934
    %v6970 = vpop.xlane.xlu0 %6969
    %6971 = vadd.xlane.f32.xlu0 %v6935
    %v6972 = vpop.xlane.xlu0 %6971
    %6973 = vadd.xlane.f32.xlu0 %v6936
    %v6974 = vpop.xlane.xlu0 %6973
    %6975 = vadd.xlane.f32.xlu0 %v6937
    %v6976 = vpop.xlane.xlu0 %6975
    %6977 = vadd.xlane.f32.xlu0 %v6938
    %v6978 = vpop.xlane.xlu0 %6977
    %6979 = vadd.xlane.f32.xlu0 %v6939
    %v6980 = vpop.xlane.xlu0 %6979
    %6981 = vadd.xlane.f32.xlu0 %v6940
    %v6982 = vpop.xlane.xlu0 %6981
    %6983 = vadd.xlane.f32.xlu0 %v6941
    %v6984 = vpop.xlane.xlu0 %6983
    %6985 = vadd.xlane.f32.xlu0 %v6942
    %v6986 = vpop.xlane.xlu0 %6985
    %6987 = vadd.xlane.f32.xlu0 %v6943
    %v6988 = vpop.xlane.xlu0 %6987
    %6989 = vadd.xlane.f32.xlu0 %v6944
    %v6990 = vpop.xlane.xlu0 %6989
    %6991 = vadd.xlane.f32.xlu0 %v6945
    %v6992 = vpop.xlane.xlu0 %6991
    %6993 = vadd.xlane.f32.xlu0 %v6946
    %v6994 = vpop.xlane.xlu0 %6993
    %6995 = vadd.xlane.f32.xlu0 %v6947
    %v6996 = vpop.xlane.xlu0 %6995
    %6997 = vadd.xlane.f32.xlu0 %v6948
    %v6998 = vpop.xlane.xlu0 %6997
    %6999 = vadd.xlane.f32.xlu0 %v6949
    %v7000 = vpop.xlane.xlu0 %6999
    %7001 = vadd.xlane.f32.xlu0 %v6950
    %v7002 = vpop.xlane.xlu0 %7001
    %7003 = vadd.xlane.f32.xlu0 %v6951
    %v7004 = vpop.xlane.xlu0 %7003
    %7005 = vadd.xlane.f32.xlu0 %v6952
    %v7006 = vpop.xlane.xlu0 %7005
    %7007 = vadd.xlane.f32.xlu0 %v6953
    %v7008 = vpop.xlane.xlu0 %7007
    %7009 = vadd.xlane.f32.xlu0 %v6954
    %v7010 = vpop.xlane.xlu0 %7009
    %7011 = vadd.xlane.f32.xlu0 %v6955
    %v7012 = vpop.xlane.xlu0 %7011
    %7013 = vadd.xlane.f32.xlu0 %v6956
    %v7014 = vpop.xlane.xlu0 %7013
    %7015 = vadd.xlane.f32.xlu0 %v6957
    %v7016 = vpop.xlane.xlu0 %7015
    %7017 = vadd.xlane.f32.xlu0 %v6958
    %v7018 = vpop.xlane.xlu0 %7017
    %7019 = vadd.xlane.f32.xlu0 %v6959
    %v7020 = vpop.xlane.xlu0 %7019
    %7021 = vadd.xlane.f32.xlu0 %v6960
    %v7022 = vpop.xlane.xlu0 %7021
    %7023 = vadd.xlane.f32.xlu0 %v6961
    %v7024 = vpop.xlane.xlu0 %7023
    %7025 = vadd.xlane.f32.xlu0 %v6962
    %v7026 = vpop.xlane.xlu0 %7025
    %v7027 = vmul.f32 %v6899, %v6016
    %v7028 = vmul.f32 %v6900, %v6016
    %v7029 = vmul.f32 %v6901, %v6016
    %v7030 = vmul.f32 %v6902, %v6016
    %v7031 = vmul.f32 %v6903, %v6016
    %v7032 = vmul.f32 %v6904, %v6016
    %v7033 = vmul.f32 %v6905, %v6016
    %v7034 = vmul.f32 %v6906, %v6016
    %v7035 = vmul.f32 %v6907, %v6016
    %v7036 = vmul.f32 %v6908, %v6016
    %v7037 = vmul.f32 %v6909, %v6016
    %v7038 = vmul.f32 %v6910, %v6016
    %v7039 = vmul.f32 %v6911, %v6016
    %v7040 = vmul.f32 %v6912, %v6016
    %v7041 = vmul.f32 %v6913, %v6016
    %v7042 = vmul.f32 %v6914, %v6016
    %v7043 = vmul.f32 %v6915, %v6016
    %v7044 = vmul.f32 %v6916, %v6016
    %v7045 = vmul.f32 %v6917, %v6016
    %v7046 = vmul.f32 %v6918, %v6016
    %v7047 = vmul.f32 %v6919, %v6016
    %v7048 = vmul.f32 %v6920, %v6016
    %v7049 = vmul.f32 %v6921, %v6016
    %v7050 = vmul.f32 %v6922, %v6016
    %v7051 = vmul.f32 %v6923, %v6016
    %v7052 = vmul.f32 %v6924, %v6016
    %v7053 = vmul.f32 %v6925, %v6016
    %v7054 = vmul.f32 %v6926, %v6016
    %v7055 = vmul.f32 %v6927, %v6016
    %v7056 = vmul.f32 %v6928, %v6016
    %v7057 = vmul.f32 %v6929, %v6016
    %v7058 = vmul.f32 %v6930, %v6016
    %7059 = vadd.xlane.f32.xlu0 %v7027
    %v7060 = vpop.xlane.xlu0 %7059
    %7061 = vadd.xlane.f32.xlu0 %v7028
    %v7062 = vpop.xlane.xlu0 %7061
    %7063 = vadd.xlane.f32.xlu0 %v7029
    %v7064 = vpop.xlane.xlu0 %7063
    %7065 = vadd.xlane.f32.xlu0 %v7030
    %v7066 = vpop.xlane.xlu0 %7065
    %7067 = vadd.xlane.f32.xlu0 %v7031
    %v7068 = vpop.xlane.xlu0 %7067
    %7069 = vadd.xlane.f32.xlu0 %v7032
    %v7070 = vpop.xlane.xlu0 %7069
    %7071 = vadd.xlane.f32.xlu0 %v7033
    %v7072 = vpop.xlane.xlu0 %7071
    %7073 = vadd.xlane.f32.xlu0 %v7034
    %v7074 = vpop.xlane.xlu0 %7073
    %7075 = vadd.xlane.f32.xlu0 %v7035
    %v7076 = vpop.xlane.xlu0 %7075
    %7077 = vadd.xlane.f32.xlu0 %v7036
    %v7078 = vpop.xlane.xlu0 %7077
    %7079 = vadd.xlane.f32.xlu0 %v7037
    %v7080 = vpop.xlane.xlu0 %7079
    %7081 = vadd.xlane.f32.xlu0 %v7038
    %v7082 = vpop.xlane.xlu0 %7081
    %7083 = vadd.xlane.f32.xlu0 %v7039
    %v7084 = vpop.xlane.xlu0 %7083
    %7085 = vadd.xlane.f32.xlu0 %v7040
    %v7086 = vpop.xlane.xlu0 %7085
    %7087 = vadd.xlane.f32.xlu0 %v7041
    %v7088 = vpop.xlane.xlu0 %7087
    %7089 = vadd.xlane.f32.xlu0 %v7042
    %v7090 = vpop.xlane.xlu0 %7089
    %7091 = vadd.xlane.f32.xlu0 %v7043
    %v7092 = vpop.xlane.xlu0 %7091
    %7093 = vadd.xlane.f32.xlu0 %v7044
    %v7094 = vpop.xlane.xlu0 %7093
    %7095 = vadd.xlane.f32.xlu0 %v7045
    %v7096 = vpop.xlane.xlu0 %7095
    %7097 = vadd.xlane.f32.xlu0 %v7046
    %v7098 = vpop.xlane.xlu0 %7097
    %7099 = vadd.xlane.f32.xlu0 %v7047
    %v7100 = vpop.xlane.xlu0 %7099
    %7101 = vadd.xlane.f32.xlu0 %v7048
    %v7102 = vpop.xlane.xlu0 %7101
    %7103 = vadd.xlane.f32.xlu0 %v7049
    %v7104 = vpop.xlane.xlu0 %7103
    %7105 = vadd.xlane.f32.xlu0 %v7050
    %v7106 = vpop.xlane.xlu0 %7105
    %7107 = vadd.xlane.f32.xlu0 %v7051
    %v7108 = vpop.xlane.xlu0 %7107
    %7109 = vadd.xlane.f32.xlu0 %v7052
    %v7110 = vpop.xlane.xlu0 %7109
    %7111 = vadd.xlane.f32.xlu0 %v7053
    %v7112 = vpop.xlane.xlu0 %7111
    %7113 = vadd.xlane.f32.xlu0 %v7054
    %v7114 = vpop.xlane.xlu0 %7113
    %7115 = vadd.xlane.f32.xlu0 %v7055
    %v7116 = vpop.xlane.xlu0 %7115
    %7117 = vadd.xlane.f32.xlu0 %v7056
    %v7118 = vpop.xlane.xlu0 %7117
    %7119 = vadd.xlane.f32.xlu0 %v7057
    %v7120 = vpop.xlane.xlu0 %7119
    %7121 = vadd.xlane.f32.xlu0 %v7058
    %v7122 = vpop.xlane.xlu0 %7121
    %v7123 = vmul.f32 %v6899, %v6113
    %v7124 = vmul.f32 %v6900, %v6113
    %v7125 = vmul.f32 %v6901, %v6113
    %v7126 = vmul.f32 %v6902, %v6113
    %v7127 = vmul.f32 %v6903, %v6113
    %v7128 = vmul.f32 %v6904, %v6113
    %v7129 = vmul.f32 %v6905, %v6113
    %v7130 = vmul.f32 %v6906, %v6113
    %v7131 = vmul.f32 %v6907, %v6113
    %v7132 = vmul.f32 %v6908, %v6113
    %v7133 = vmul.f32 %v6909, %v6113
    %v7134 = vmul.f32 %v6910, %v6113
    %v7135 = vmul.f32 %v6911, %v6113
    %v7136 = vmul.f32 %v6912, %v6113
    %v7137 = vmul.f32 %v6913, %v6113
    %v7138 = vmul.f32 %v6914, %v6113
    %v7139 = vmul.f32 %v6915, %v6113
    %v7140 = vmul.f32 %v6916, %v6113
    %v7141 = vmul.f32 %v6917, %v6113
    %v7142 = vmul.f32 %v6918, %v6113
    %v7143 = vmul.f32 %v6919, %v6113
    %v7144 = vmul.f32 %v6920, %v6113
    %v7145 = vmul.f32 %v6921, %v6113
    %v7146 = vmul.f32 %v6922, %v6113
    %v7147 = vmul.f32 %v6923, %v6113
    %v7148 = vmul.f32 %v6924, %v6113
    %v7149 = vmul.f32 %v6925, %v6113
    %v7150 = vmul.f32 %v6926, %v6113
    %v7151 = vmul.f32 %v6927, %v6113
    %v7152 = vmul.f32 %v6928, %v6113
    %v7153 = vmul.f32 %v6929, %v6113
    %v7154 = vmul.f32 %v6930, %v6113
    %7155 = vadd.xlane.f32.xlu0 %v7123
    %v7156 = vpop.xlane.xlu0 %7155
    %7157 = vadd.xlane.f32.xlu0 %v7124
    %v7158 = vpop.xlane.xlu0 %7157
    %7159 = vadd.xlane.f32.xlu0 %v7125
    %v7160 = vpop.xlane.xlu0 %7159
    %7161 = vadd.xlane.f32.xlu0 %v7126
    %v7162 = vpop.xlane.xlu0 %7161
    %7163 = vadd.xlane.f32.xlu0 %v7127
    %v7164 = vpop.xlane.xlu0 %7163
    %7165 = vadd.xlane.f32.xlu0 %v7128
    %v7166 = vpop.xlane.xlu0 %7165
    %7167 = vadd.xlane.f32.xlu0 %v7129
    %v7168 = vpop.xlane.xlu0 %7167
    %7169 = vadd.xlane.f32.xlu0 %v7130
    %v7170 = vpop.xlane.xlu0 %7169
    %7171 = vadd.xlane.f32.xlu0 %v7131
    %v7172 = vpop.xlane.xlu0 %7171
    %7173 = vadd.xlane.f32.xlu0 %v7132
    %v7174 = vpop.xlane.xlu0 %7173
    %7175 = vadd.xlane.f32.xlu0 %v7133
    %v7176 = vpop.xlane.xlu0 %7175
    %7177 = vadd.xlane.f32.xlu0 %v7134
    %v7178 = vpop.xlane.xlu0 %7177
    %7179 = vadd.xlane.f32.xlu0 %v7135
    %v7180 = vpop.xlane.xlu0 %7179
    %7181 = vadd.xlane.f32.xlu0 %v7136
    %v7182 = vpop.xlane.xlu0 %7181
    %7183 = vadd.xlane.f32.xlu0 %v7137
    %v7184 = vpop.xlane.xlu0 %7183
    %7185 = vadd.xlane.f32.xlu0 %v7138
    %v7186 = vpop.xlane.xlu0 %7185
    %7187 = vadd.xlane.f32.xlu0 %v7139
    %v7188 = vpop.xlane.xlu0 %7187
    %7189 = vadd.xlane.f32.xlu0 %v7140
    %v7190 = vpop.xlane.xlu0 %7189
    %7191 = vadd.xlane.f32.xlu0 %v7141
    %v7192 = vpop.xlane.xlu0 %7191
    %7193 = vadd.xlane.f32.xlu0 %v7142
    %v7194 = vpop.xlane.xlu0 %7193
    %7195 = vadd.xlane.f32.xlu0 %v7143
    %v7196 = vpop.xlane.xlu0 %7195
    %7197 = vadd.xlane.f32.xlu0 %v7144
    %v7198 = vpop.xlane.xlu0 %7197
    %7199 = vadd.xlane.f32.xlu0 %v7145
    %v7200 = vpop.xlane.xlu0 %7199
    %7201 = vadd.xlane.f32.xlu0 %v7146
    %v7202 = vpop.xlane.xlu0 %7201
    %7203 = vadd.xlane.f32.xlu0 %v7147
    %v7204 = vpop.xlane.xlu0 %7203
    %7205 = vadd.xlane.f32.xlu0 %v7148
    %v7206 = vpop.xlane.xlu0 %7205
    %7207 = vadd.xlane.f32.xlu0 %v7149
    %v7208 = vpop.xlane.xlu0 %7207
    %7209 = vadd.xlane.f32.xlu0 %v7150
    %v7210 = vpop.xlane.xlu0 %7209
    %7211 = vadd.xlane.f32.xlu0 %v7151
    %v7212 = vpop.xlane.xlu0 %7211
    %7213 = vadd.xlane.f32.xlu0 %v7152
    %v7214 = vpop.xlane.xlu0 %7213
    %7215 = vadd.xlane.f32.xlu0 %v7153
    %v7216 = vpop.xlane.xlu0 %7215
    %7217 = vadd.xlane.f32.xlu0 %v7154
    %v7218 = vpop.xlane.xlu0 %7217
    %v7219 = vmul.f32 %v6899, %v6210
    %v7220 = vmul.f32 %v6900, %v6210
    %v7221 = vmul.f32 %v6901, %v6210
    %v7222 = vmul.f32 %v6902, %v6210
    %v7223 = vmul.f32 %v6903, %v6210
    %v7224 = vmul.f32 %v6904, %v6210
    %v7225 = vmul.f32 %v6905, %v6210
    %v7226 = vmul.f32 %v6906, %v6210
    %v7227 = vmul.f32 %v6907, %v6210
    %v7228 = vmul.f32 %v6908, %v6210
    %v7229 = vmul.f32 %v6909, %v6210
    %v7230 = vmul.f32 %v6910, %v6210
    %v7231 = vmul.f32 %v6911, %v6210
    %v7232 = vmul.f32 %v6912, %v6210
    %v7233 = vmul.f32 %v6913, %v6210
    %v7234 = vmul.f32 %v6914, %v6210
    %v7235 = vmul.f32 %v6915, %v6210
    %v7236 = vmul.f32 %v6916, %v6210
    %v7237 = vmul.f32 %v6917, %v6210
    %v7238 = vmul.f32 %v6918, %v6210
    %v7239 = vmul.f32 %v6919, %v6210
    %v7240 = vmul.f32 %v6920, %v6210
    %v7241 = vmul.f32 %v6921, %v6210
    %v7242 = vmul.f32 %v6922, %v6210
    %v7243 = vmul.f32 %v6923, %v6210
    %v7244 = vmul.f32 %v6924, %v6210
    %v7245 = vmul.f32 %v6925, %v6210
    %v7246 = vmul.f32 %v6926, %v6210
    %v7247 = vmul.f32 %v6927, %v6210
    %v7248 = vmul.f32 %v6928, %v6210
    %v7249 = vmul.f32 %v6929, %v6210
    %v7250 = vmul.f32 %v6930, %v6210
    %7251 = vadd.xlane.f32.xlu0 %v7219
    %v7252 = vpop.xlane.xlu0 %7251
    %7253 = vadd.xlane.f32.xlu0 %v7220
    %v7254 = vpop.xlane.xlu0 %7253
    %7255 = vadd.xlane.f32.xlu0 %v7221
    %v7256 = vpop.xlane.xlu0 %7255
    %7257 = vadd.xlane.f32.xlu0 %v7222
    %v7258 = vpop.xlane.xlu0 %7257
    %7259 = vadd.xlane.f32.xlu0 %v7223
    %v7260 = vpop.xlane.xlu0 %7259
    %7261 = vadd.xlane.f32.xlu0 %v7224
    %v7262 = vpop.xlane.xlu0 %7261
    %7263 = vadd.xlane.f32.xlu0 %v7225
    %v7264 = vpop.xlane.xlu0 %7263
    %7265 = vadd.xlane.f32.xlu0 %v7226
    %v7266 = vpop.xlane.xlu0 %7265
    %7267 = vadd.xlane.f32.xlu0 %v7227
    %v7268 = vpop.xlane.xlu0 %7267
    %7269 = vadd.xlane.f32.xlu0 %v7228
    %v7270 = vpop.xlane.xlu0 %7269
    %7271 = vadd.xlane.f32.xlu0 %v7229
    %v7272 = vpop.xlane.xlu0 %7271
    %7273 = vadd.xlane.f32.xlu0 %v7230
    %v7274 = vpop.xlane.xlu0 %7273
    %7275 = vadd.xlane.f32.xlu0 %v7231
    %v7276 = vpop.xlane.xlu0 %7275
    %7277 = vadd.xlane.f32.xlu0 %v7232
    %v7278 = vpop.xlane.xlu0 %7277
    %7279 = vadd.xlane.f32.xlu0 %v7233
    %v7280 = vpop.xlane.xlu0 %7279
    %7281 = vadd.xlane.f32.xlu0 %v7234
    %v7282 = vpop.xlane.xlu0 %7281
    %7283 = vadd.xlane.f32.xlu0 %v7235
    %v7284 = vpop.xlane.xlu0 %7283
    %7285 = vadd.xlane.f32.xlu0 %v7236
    %v7286 = vpop.xlane.xlu0 %7285
    %7287 = vadd.xlane.f32.xlu0 %v7237
    %v7288 = vpop.xlane.xlu0 %7287
    %7289 = vadd.xlane.f32.xlu0 %v7238
    %v7290 = vpop.xlane.xlu0 %7289
    %7291 = vadd.xlane.f32.xlu0 %v7239
    %v7292 = vpop.xlane.xlu0 %7291
    %7293 = vadd.xlane.f32.xlu0 %v7240
    %v7294 = vpop.xlane.xlu0 %7293
    %7295 = vadd.xlane.f32.xlu0 %v7241
    %v7296 = vpop.xlane.xlu0 %7295
    %7297 = vadd.xlane.f32.xlu0 %v7242
    %v7298 = vpop.xlane.xlu0 %7297
    %7299 = vadd.xlane.f32.xlu0 %v7243
    %v7300 = vpop.xlane.xlu0 %7299
    %7301 = vadd.xlane.f32.xlu0 %v7244
    %v7302 = vpop.xlane.xlu0 %7301
    %7303 = vadd.xlane.f32.xlu0 %v7245
    %v7304 = vpop.xlane.xlu0 %7303
    %7305 = vadd.xlane.f32.xlu0 %v7246
    %v7306 = vpop.xlane.xlu0 %7305
    %7307 = vadd.xlane.f32.xlu0 %v7247
    %v7308 = vpop.xlane.xlu0 %7307
    %7309 = vadd.xlane.f32.xlu0 %v7248
    %v7310 = vpop.xlane.xlu0 %7309
    %7311 = vadd.xlane.f32.xlu0 %v7249
    %v7312 = vpop.xlane.xlu0 %7311
    %7313 = vadd.xlane.f32.xlu0 %v7250
    %v7314 = vpop.xlane.xlu0 %7313
    %v7316 = vrot.slane %v5776, 1
    %v7317 = vrot.slane %v5776, 2
    %v7318 = vrot.slane %v5776, 3
    %v7319 = vrot.slane %v5776, 4
    %v7320 = vrot.slane %v5776, 5
    %v7321 = vrot.slane %v5776, 6
    %v7322 = vrot.slane %v5776, 7
    %v7323 = vperm.slane %v5776, 0
    %v7324 = vperm.slane %v7316, 0
    %v7325 = vperm.slane %v7317, 0
    %v7326 = vperm.slane %v7318, 0
    %v7327 = vperm.slane %v7319, 0
    %v7328 = vperm.slane %v7320, 0
    %v7329 = vperm.slane %v7321, 0
    %v7330 = vperm.slane %v7322, 0
    %v7339 = vadd.f32 %v7323, %v5793
    %v7340 = vadd.f32 %v7323, %v5794
    %v7341 = vadd.f32 %v7323, %v5795
    %v7342 = vadd.f32 %v7323, %v5796
    %v7343 = vadd.f32 %v7324, %v5793
    %v7344 = vadd.f32 %v7324, %v5794
    %v7345 = vadd.f32 %v7324, %v5795
    %v7346 = vadd.f32 %v7324, %v5796
    %v7347 = vadd.f32 %v7325, %v5793
    %v7348 = vadd.f32 %v7325, %v5794
    %v7349 = vadd.f32 %v7325, %v5795
    %v7350 = vadd.f32 %v7325, %v5796
    %v7351 = vadd.f32 %v7326, %v5793
    %v7352 = vadd.f32 %v7326, %v5794
    %v7353 = vadd.f32 %v7326, %v5795
    %v7354 = vadd.f32 %v7326, %v5796
    %v7355 = vadd.f32 %v7327, %v5793
    %v7356 = vadd.f32 %v7327, %v5794
    %v7357 = vadd.f32 %v7327, %v5795
    %v7358 = vadd.f32 %v7327, %v5796
    %v7359 = vadd.f32 %v7328, %v5793
    %v7360 = vadd.f32 %v7328, %v5794
    %v7361 = vadd.f32 %v7328, %v5795
    %v7362 = vadd.f32 %v7328, %v5796
    %v7363 = vadd.f32 %v7329, %v5793
    %v7364 = vadd.f32 %v7329, %v5794
    %v7365 = vadd.f32 %v7329, %v5795
    %v7366 = vadd.f32 %v7329, %v5796
    %v7367 = vadd.f32 %v7330, %v5793
    %v7368 = vadd.f32 %v7330, %v5794
    %v7369 = vadd.f32 %v7330, %v5795
    %v7370 = vadd.f32 %v7330, %v5796
    %v7371 = vmul.f32 %v7339, 0.2
    %v7372 = vmul.f32 %v7340, 0.2
    %v7373 = vmul.f32 %v7341, 0.2
    %v7374 = vmul.f32 %v7342, 0.2
    %v7375 = vmul.f32 %v7343, 0.2
    %v7376 = vmul.f32 %v7344, 0.2
    %v7377 = vmul.f32 %v7345, 0.2
    %v7378 = vmul.f32 %v7346, 0.2
    %v7379 = vmul.f32 %v7347, 0.2
    %v7380 = vmul.f32 %v7348, 0.2
    %v7381 = vmul.f32 %v7349, 0.2
    %v7382 = vmul.f32 %v7350, 0.2
    %v7383 = vmul.f32 %v7351, 0.2
    %v7384 = vmul.f32 %v7352, 0.2
    %v7385 = vmul.f32 %v7353, 0.2
    %v7386 = vmul.f32 %v7354, 0.2
    %v7387 = vmul.f32 %v7355, 0.2
    %v7388 = vmul.f32 %v7356, 0.2
    %v7389 = vmul.f32 %v7357, 0.2
    %v7390 = vmul.f32 %v7358, 0.2
    %v7391 = vmul.f32 %v7359, 0.2
    %v7392 = vmul.f32 %v7360, 0.2
    %v7393 = vmul.f32 %v7361, 0.2
    %v7394 = vmul.f32 %v7362, 0.2
    %v7395 = vmul.f32 %v7363, 0.2
    %v7396 = vmul.f32 %v7364, 0.2
    %v7397 = vmul.f32 %v7365, 0.2
    %v7398 = vmul.f32 %v7366, 0.2
    %v7399 = vmul.f32 %v7367, 0.2
    %v7400 = vmul.f32 %v7368, 0.2
    %v7401 = vmul.f32 %v7369, 0.2
    %v7402 = vmul.f32 %v7370, 0.2
    %v7403 = vmax.f32 %v7339, %v7371
    %v7404 = vmax.f32 %v7340, %v7372
    %v7405 = vmax.f32 %v7341, %v7373
    %v7406 = vmax.f32 %v7342, %v7374
    %v7407 = vmax.f32 %v7343, %v7375
    %v7408 = vmax.f32 %v7344, %v7376
    %v7409 = vmax.f32 %v7345, %v7377
    %v7410 = vmax.f32 %v7346, %v7378
    %v7411 = vmax.f32 %v7347, %v7379
    %v7412 = vmax.f32 %v7348, %v7380
    %v7413 = vmax.f32 %v7349, %v7381
    %v7414 = vmax.f32 %v7350, %v7382
    %v7415 = vmax.f32 %v7351, %v7383
    %v7416 = vmax.f32 %v7352, %v7384
    %v7417 = vmax.f32 %v7353, %v7385
    %v7418 = vmax.f32 %v7354, %v7386
    %v7419 = vmax.f32 %v7355, %v7387
    %v7420 = vmax.f32 %v7356, %v7388
    %v7421 = vmax.f32 %v7357, %v7389
    %v7422 = vmax.f32 %v7358, %v7390
    %v7423 = vmax.f32 %v7359, %v7391
    %v7424 = vmax.f32 %v7360, %v7392
    %v7425 = vmax.f32 %v7361, %v7393
    %v7426 = vmax.f32 %v7362, %v7394
    %v7427 = vmax.f32 %v7363, %v7395
    %v7428 = vmax.f32 %v7364, %v7396
    %v7429 = vmax.f32 %v7365, %v7397
    %v7430 = vmax.f32 %v7366, %v7398
    %v7431 = vmax.f32 %v7367, %v7399
    %v7432 = vmax.f32 %v7368, %v7400
    %v7433 = vmax.f32 %v7369, %v7401
    %v7434 = vmax.f32 %v7370, %v7402
    %v7435 = vmul.f32 %v7403, %v5919
    %v7436 = vmul.f32 %v7404, %v5919
    %v7437 = vmul.f32 %v7405, %v5919
    %v7438 = vmul.f32 %v7406, %v5919
    %v7439 = vmul.f32 %v7407, %v5919
    %v7440 = vmul.f32 %v7408, %v5919
    %v7441 = vmul.f32 %v7409, %v5919
    %v7442 = vmul.f32 %v7410, %v5919
    %v7443 = vmul.f32 %v7411, %v5919
    %v7444 = vmul.f32 %v7412, %v5919
    %v7445 = vmul.f32 %v7413, %v5919
    %v7446 = vmul.f32 %v7414, %v5919
    %v7447 = vmul.f32 %v7415, %v5919
    %v7448 = vmul.f32 %v7416, %v5919
    %v7449 = vmul.f32 %v7417, %v5919
    %v7450 = vmul.f32 %v7418, %v5919
    %v7451 = vmul.f32 %v7419, %v5919
    %v7452 = vmul.f32 %v7420, %v5919
    %v7453 = vmul.f32 %v7421, %v5919
    %v7454 = vmul.f32 %v7422, %v5919
    %v7455 = vmul.f32 %v7423, %v5919
    %v7456 = vmul.f32 %v7424, %v5919
    %v7457 = vmul.f32 %v7425, %v5919
    %v7458 = vmul.f32 %v7426, %v5919
    %v7459 = vmul.f32 %v7427, %v5919
    %v7460 = vmul.f32 %v7428, %v5919
    %v7461 = vmul.f32 %v7429, %v5919
    %v7462 = vmul.f32 %v7430, %v5919
    %v7463 = vmul.f32 %v7431, %v5919
    %v7464 = vmul.f32 %v7432, %v5919
    %v7465 = vmul.f32 %v7433, %v5919
    %v7466 = vmul.f32 %v7434, %v5919
    %7467 = vadd.xlane.f32.xlu0 %v7435
    %v7468 = vpop.xlane.xlu0 %7467
    %7469 = vadd.xlane.f32.xlu0 %v7436
    %v7470 = vpop.xlane.xlu0 %7469
    %7471 = vadd.xlane.f32.xlu0 %v7437
    %v7472 = vpop.xlane.xlu0 %7471
    %7473 = vadd.xlane.f32.xlu0 %v7438
    %v7474 = vpop.xlane.xlu0 %7473
    %7475 = vadd.xlane.f32.xlu0 %v7439
    %v7476 = vpop.xlane.xlu0 %7475
    %7477 = vadd.xlane.f32.xlu0 %v7440
    %v7478 = vpop.xlane.xlu0 %7477
    %7479 = vadd.xlane.f32.xlu0 %v7441
    %v7480 = vpop.xlane.xlu0 %7479
    %7481 = vadd.xlane.f32.xlu0 %v7442
    %v7482 = vpop.xlane.xlu0 %7481
    %7483 = vadd.xlane.f32.xlu0 %v7443
    %v7484 = vpop.xlane.xlu0 %7483
    %7485 = vadd.xlane.f32.xlu0 %v7444
    %v7486 = vpop.xlane.xlu0 %7485
    %7487 = vadd.xlane.f32.xlu0 %v7445
    %v7488 = vpop.xlane.xlu0 %7487
    %7489 = vadd.xlane.f32.xlu0 %v7446
    %v7490 = vpop.xlane.xlu0 %7489
    %7491 = vadd.xlane.f32.xlu0 %v7447
    %v7492 = vpop.xlane.xlu0 %7491
    %7493 = vadd.xlane.f32.xlu0 %v7448
    %v7494 = vpop.xlane.xlu0 %7493
    %7495 = vadd.xlane.f32.xlu0 %v7449
    %v7496 = vpop.xlane.xlu0 %7495
    %7497 = vadd.xlane.f32.xlu0 %v7450
    %v7498 = vpop.xlane.xlu0 %7497
    %7499 = vadd.xlane.f32.xlu0 %v7451
    %v7500 = vpop.xlane.xlu0 %7499
    %7501 = vadd.xlane.f32.xlu0 %v7452
    %v7502 = vpop.xlane.xlu0 %7501
    %7503 = vadd.xlane.f32.xlu0 %v7453
    %v7504 = vpop.xlane.xlu0 %7503
    %7505 = vadd.xlane.f32.xlu0 %v7454
    %v7506 = vpop.xlane.xlu0 %7505
    %7507 = vadd.xlane.f32.xlu0 %v7455
    %v7508 = vpop.xlane.xlu0 %7507
    %7509 = vadd.xlane.f32.xlu0 %v7456
    %v7510 = vpop.xlane.xlu0 %7509
    %7511 = vadd.xlane.f32.xlu0 %v7457
    %v7512 = vpop.xlane.xlu0 %7511
    %7513 = vadd.xlane.f32.xlu0 %v7458
    %v7514 = vpop.xlane.xlu0 %7513
    %7515 = vadd.xlane.f32.xlu0 %v7459
    %v7516 = vpop.xlane.xlu0 %7515
    %7517 = vadd.xlane.f32.xlu0 %v7460
    %v7518 = vpop.xlane.xlu0 %7517
    %7519 = vadd.xlane.f32.xlu0 %v7461
    %v7520 = vpop.xlane.xlu0 %7519
    %7521 = vadd.xlane.f32.xlu0 %v7462
    %v7522 = vpop.xlane.xlu0 %7521
    %7523 = vadd.xlane.f32.xlu0 %v7463
    %v7524 = vpop.xlane.xlu0 %7523
    %7525 = vadd.xlane.f32.xlu0 %v7464
    %v7526 = vpop.xlane.xlu0 %7525
    %7527 = vadd.xlane.f32.xlu0 %v7465
    %v7528 = vpop.xlane.xlu0 %7527
    %7529 = vadd.xlane.f32.xlu0 %v7466
    %v7530 = vpop.xlane.xlu0 %7529
    %v7531 = vmul.f32 %v7403, %v6016
    %v7532 = vmul.f32 %v7404, %v6016
    %v7533 = vmul.f32 %v7405, %v6016
    %v7534 = vmul.f32 %v7406, %v6016
    %v7535 = vmul.f32 %v7407, %v6016
    %v7536 = vmul.f32 %v7408, %v6016
    %v7537 = vmul.f32 %v7409, %v6016
    %v7538 = vmul.f32 %v7410, %v6016
    %v7539 = vmul.f32 %v7411, %v6016
    %v7540 = vmul.f32 %v7412, %v6016
    %v7541 = vmul.f32 %v7413, %v6016
    %v7542 = vmul.f32 %v7414, %v6016
    %v7543 = vmul.f32 %v7415, %v6016
    %v7544 = vmul.f32 %v7416, %v6016
    %v7545 = vmul.f32 %v7417, %v6016
    %v7546 = vmul.f32 %v7418, %v6016
    %v7547 = vmul.f32 %v7419, %v6016
    %v7548 = vmul.f32 %v7420, %v6016
    %v7549 = vmul.f32 %v7421, %v6016
    %v7550 = vmul.f32 %v7422, %v6016
    %v7551 = vmul.f32 %v7423, %v6016
    %v7552 = vmul.f32 %v7424, %v6016
    %v7553 = vmul.f32 %v7425, %v6016
    %v7554 = vmul.f32 %v7426, %v6016
    %v7555 = vmul.f32 %v7427, %v6016
    %v7556 = vmul.f32 %v7428, %v6016
    %v7557 = vmul.f32 %v7429, %v6016
    %v7558 = vmul.f32 %v7430, %v6016
    %v7559 = vmul.f32 %v7431, %v6016
    %v7560 = vmul.f32 %v7432, %v6016
    %v7561 = vmul.f32 %v7433, %v6016
    %v7562 = vmul.f32 %v7434, %v6016
    %7563 = vadd.xlane.f32.xlu0 %v7531
    %v7564 = vpop.xlane.xlu0 %7563
    %7565 = vadd.xlane.f32.xlu0 %v7532
    %v7566 = vpop.xlane.xlu0 %7565
    %7567 = vadd.xlane.f32.xlu0 %v7533
    %v7568 = vpop.xlane.xlu0 %7567
    %7569 = vadd.xlane.f32.xlu0 %v7534
    %v7570 = vpop.xlane.xlu0 %7569
    %7571 = vadd.xlane.f32.xlu0 %v7535
    %v7572 = vpop.xlane.xlu0 %7571
    %7573 = vadd.xlane.f32.xlu0 %v7536
    %v7574 = vpop.xlane.xlu0 %7573
    %7575 = vadd.xlane.f32.xlu0 %v7537
    %v7576 = vpop.xlane.xlu0 %7575
    %7577 = vadd.xlane.f32.xlu0 %v7538
    %v7578 = vpop.xlane.xlu0 %7577
    %7579 = vadd.xlane.f32.xlu0 %v7539
    %v7580 = vpop.xlane.xlu0 %7579
    %7581 = vadd.xlane.f32.xlu0 %v7540
    %v7582 = vpop.xlane.xlu0 %7581
    %7583 = vadd.xlane.f32.xlu0 %v7541
    %v7584 = vpop.xlane.xlu0 %7583
    %7585 = vadd.xlane.f32.xlu0 %v7542
    %v7586 = vpop.xlane.xlu0 %7585
    %7587 = vadd.xlane.f32.xlu0 %v7543
    %v7588 = vpop.xlane.xlu0 %7587
    %7589 = vadd.xlane.f32.xlu0 %v7544
    %v7590 = vpop.xlane.xlu0 %7589
    %7591 = vadd.xlane.f32.xlu0 %v7545
    %v7592 = vpop.xlane.xlu0 %7591
    %7593 = vadd.xlane.f32.xlu0 %v7546
    %v7594 = vpop.xlane.xlu0 %7593
    %7595 = vadd.xlane.f32.xlu0 %v7547
    %v7596 = vpop.xlane.xlu0 %7595
    %7597 = vadd.xlane.f32.xlu0 %v7548
    %v7598 = vpop.xlane.xlu0 %7597
    %7599 = vadd.xlane.f32.xlu0 %v7549
    %v7600 = vpop.xlane.xlu0 %7599
    %7601 = vadd.xlane.f32.xlu0 %v7550
    %v7602 = vpop.xlane.xlu0 %7601
    %7603 = vadd.xlane.f32.xlu0 %v7551
    %v7604 = vpop.xlane.xlu0 %7603
    %7605 = vadd.xlane.f32.xlu0 %v7552
    %v7606 = vpop.xlane.xlu0 %7605
    %7607 = vadd.xlane.f32.xlu0 %v7553
    %v7608 = vpop.xlane.xlu0 %7607
    %7609 = vadd.xlane.f32.xlu0 %v7554
    %v7610 = vpop.xlane.xlu0 %7609
    %7611 = vadd.xlane.f32.xlu0 %v7555
    %v7612 = vpop.xlane.xlu0 %7611
    %7613 = vadd.xlane.f32.xlu0 %v7556
    %v7614 = vpop.xlane.xlu0 %7613
    %7615 = vadd.xlane.f32.xlu0 %v7557
    %v7616 = vpop.xlane.xlu0 %7615
    %7617 = vadd.xlane.f32.xlu0 %v7558
    %v7618 = vpop.xlane.xlu0 %7617
    %7619 = vadd.xlane.f32.xlu0 %v7559
    %v7620 = vpop.xlane.xlu0 %7619
    %7621 = vadd.xlane.f32.xlu0 %v7560
    %v7622 = vpop.xlane.xlu0 %7621
    %7623 = vadd.xlane.f32.xlu0 %v7561
    %v7624 = vpop.xlane.xlu0 %7623
    %7625 = vadd.xlane.f32.xlu0 %v7562
    %v7626 = vpop.xlane.xlu0 %7625
    %v7627 = vmul.f32 %v7403, %v6113
    %v7628 = vmul.f32 %v7404, %v6113
    %v7629 = vmul.f32 %v7405, %v6113
    %v7630 = vmul.f32 %v7406, %v6113
    %v7631 = vmul.f32 %v7407, %v6113
    %v7632 = vmul.f32 %v7408, %v6113
    %v7633 = vmul.f32 %v7409, %v6113
    %v7634 = vmul.f32 %v7410, %v6113
    %v7635 = vmul.f32 %v7411, %v6113
    %v7636 = vmul.f32 %v7412, %v6113
    %v7637 = vmul.f32 %v7413, %v6113
    %v7638 = vmul.f32 %v7414, %v6113
    %v7639 = vmul.f32 %v7415, %v6113
    %v7640 = vmul.f32 %v7416, %v6113
    %v7641 = vmul.f32 %v7417, %v6113
    %v7642 = vmul.f32 %v7418, %v6113
    %v7643 = vmul.f32 %v7419, %v6113
    %v7644 = vmul.f32 %v7420, %v6113
    %v7645 = vmul.f32 %v7421, %v6113
    %v7646 = vmul.f32 %v7422, %v6113
    %v7647 = vmul.f32 %v7423, %v6113
    %v7648 = vmul.f32 %v7424, %v6113
    %v7649 = vmul.f32 %v7425, %v6113
    %v7650 = vmul.f32 %v7426, %v6113
    %v7651 = vmul.f32 %v7427, %v6113
    %v7652 = vmul.f32 %v7428, %v6113
    %v7653 = vmul.f32 %v7429, %v6113
    %v7654 = vmul.f32 %v7430, %v6113
    %v7655 = vmul.f32 %v7431, %v6113
    %v7656 = vmul.f32 %v7432, %v6113
    %v7657 = vmul.f32 %v7433, %v6113
    %v7658 = vmul.f32 %v7434, %v6113
    %7659 = vadd.xlane.f32.xlu0 %v7627
    %v7660 = vpop.xlane.xlu0 %7659
    %7661 = vadd.xlane.f32.xlu0 %v7628
    %v7662 = vpop.xlane.xlu0 %7661
    %7663 = vadd.xlane.f32.xlu0 %v7629
    %v7664 = vpop.xlane.xlu0 %7663
    %7665 = vadd.xlane.f32.xlu0 %v7630
    %v7666 = vpop.xlane.xlu0 %7665
    %7667 = vadd.xlane.f32.xlu0 %v7631
    %v7668 = vpop.xlane.xlu0 %7667
    %7669 = vadd.xlane.f32.xlu0 %v7632
    %v7670 = vpop.xlane.xlu0 %7669
    %7671 = vadd.xlane.f32.xlu0 %v7633
    %v7672 = vpop.xlane.xlu0 %7671
    %7673 = vadd.xlane.f32.xlu0 %v7634
    %v7674 = vpop.xlane.xlu0 %7673
    %7675 = vadd.xlane.f32.xlu0 %v7635
    %v7676 = vpop.xlane.xlu0 %7675
    %7677 = vadd.xlane.f32.xlu0 %v7636
    %v7678 = vpop.xlane.xlu0 %7677
    %7679 = vadd.xlane.f32.xlu0 %v7637
    %v7680 = vpop.xlane.xlu0 %7679
    %7681 = vadd.xlane.f32.xlu0 %v7638
    %v7682 = vpop.xlane.xlu0 %7681
    %7683 = vadd.xlane.f32.xlu0 %v7639
    %v7684 = vpop.xlane.xlu0 %7683
    %7685 = vadd.xlane.f32.xlu0 %v7640
    %v7686 = vpop.xlane.xlu0 %7685
    %7687 = vadd.xlane.f32.xlu0 %v7641
    %v7688 = vpop.xlane.xlu0 %7687
    %7689 = vadd.xlane.f32.xlu0 %v7642
    %v7690 = vpop.xlane.xlu0 %7689
    %7691 = vadd.xlane.f32.xlu0 %v7643
    %v7692 = vpop.xlane.xlu0 %7691
    %7693 = vadd.xlane.f32.xlu0 %v7644
    %v7694 = vpop.xlane.xlu0 %7693
    %7695 = vadd.xlane.f32.xlu0 %v7645
    %v7696 = vpop.xlane.xlu0 %7695
    %7697 = vadd.xlane.f32.xlu0 %v7646
    %v7698 = vpop.xlane.xlu0 %7697
    %7699 = vadd.xlane.f32.xlu0 %v7647
    %v7700 = vpop.xlane.xlu0 %7699
    %7701 = vadd.xlane.f32.xlu0 %v7648
    %v7702 = vpop.xlane.xlu0 %7701
    %7703 = vadd.xlane.f32.xlu0 %v7649
    %v7704 = vpop.xlane.xlu0 %7703
    %7705 = vadd.xlane.f32.xlu0 %v7650
    %v7706 = vpop.xlane.xlu0 %7705
    %7707 = vadd.xlane.f32.xlu0 %v7651
    %v7708 = vpop.xlane.xlu0 %7707
    %7709 = vadd.xlane.f32.xlu0 %v7652
    %v7710 = vpop.xlane.xlu0 %7709
    %7711 = vadd.xlane.f32.xlu0 %v7653
    %v7712 = vpop.xlane.xlu0 %7711
    %7713 = vadd.xlane.f32.xlu0 %v7654
    %v7714 = vpop.xlane.xlu0 %7713
    %7715 = vadd.xlane.f32.xlu0 %v7655
    %v7716 = vpop.xlane.xlu0 %7715
    %7717 = vadd.xlane.f32.xlu0 %v7656
    %v7718 = vpop.xlane.xlu0 %7717
    %7719 = vadd.xlane.f32.xlu0 %v7657
    %v7720 = vpop.xlane.xlu0 %7719
    %7721 = vadd.xlane.f32.xlu0 %v7658
    %v7722 = vpop.xlane.xlu0 %7721
    %v7723 = vmul.f32 %v7403, %v6210
    %v7724 = vmul.f32 %v7404, %v6210
    %v7725 = vmul.f32 %v7405, %v6210
    %v7726 = vmul.f32 %v7406, %v6210
    %v7727 = vmul.f32 %v7407, %v6210
    %v7728 = vmul.f32 %v7408, %v6210
    %v7729 = vmul.f32 %v7409, %v6210
    %v7730 = vmul.f32 %v7410, %v6210
    %v7731 = vmul.f32 %v7411, %v6210
    %v7732 = vmul.f32 %v7412, %v6210
    %v7733 = vmul.f32 %v7413, %v6210
    %v7734 = vmul.f32 %v7414, %v6210
    %v7735 = vmul.f32 %v7415, %v6210
    %v7736 = vmul.f32 %v7416, %v6210
    %v7737 = vmul.f32 %v7417, %v6210
    %v7738 = vmul.f32 %v7418, %v6210
    %v7739 = vmul.f32 %v7419, %v6210
    %v7740 = vmul.f32 %v7420, %v6210
    %v7741 = vmul.f32 %v7421, %v6210
    %v7742 = vmul.f32 %v7422, %v6210
    %v7743 = vmul.f32 %v7423, %v6210
    %v7744 = vmul.f32 %v7424, %v6210
    %v7745 = vmul.f32 %v7425, %v6210
    %v7746 = vmul.f32 %v7426, %v6210
    %v7747 = vmul.f32 %v7427, %v6210
    %v7748 = vmul.f32 %v7428, %v6210
    %v7749 = vmul.f32 %v7429, %v6210
    %v7750 = vmul.f32 %v7430, %v6210
    %v7751 = vmul.f32 %v7431, %v6210
    %v7752 = vmul.f32 %v7432, %v6210
    %v7753 = vmul.f32 %v7433, %v6210
    %v7754 = vmul.f32 %v7434, %v6210
    %7755 = vadd.xlane.f32.xlu0 %v7723
    %v7756 = vpop.xlane.xlu0 %7755
    %7757 = vadd.xlane.f32.xlu0 %v7724
    %v7758 = vpop.xlane.xlu0 %7757
    %7759 = vadd.xlane.f32.xlu0 %v7725
    %v7760 = vpop.xlane.xlu0 %7759
    %7761 = vadd.xlane.f32.xlu0 %v7726
    %v7762 = vpop.xlane.xlu0 %7761
    %7763 = vadd.xlane.f32.xlu0 %v7727
    %v7764 = vpop.xlane.xlu0 %7763
    %7765 = vadd.xlane.f32.xlu0 %v7728
    %v7766 = vpop.xlane.xlu0 %7765
    %7767 = vadd.xlane.f32.xlu0 %v7729
    %v7768 = vpop.xlane.xlu0 %7767
    %7769 = vadd.xlane.f32.xlu0 %v7730
    %v7770 = vpop.xlane.xlu0 %7769
    %7771 = vadd.xlane.f32.xlu0 %v7731
    %v7772 = vpop.xlane.xlu0 %7771
    %7773 = vadd.xlane.f32.xlu0 %v7732
    %v7774 = vpop.xlane.xlu0 %7773
    %7775 = vadd.xlane.f32.xlu0 %v7733
    %v7776 = vpop.xlane.xlu0 %7775
    %7777 = vadd.xlane.f32.xlu0 %v7734
    %v7778 = vpop.xlane.xlu0 %7777
    %7779 = vadd.xlane.f32.xlu0 %v7735
    %v7780 = vpop.xlane.xlu0 %7779
    %7781 = vadd.xlane.f32.xlu0 %v7736
    %v7782 = vpop.xlane.xlu0 %7781
    %7783 = vadd.xlane.f32.xlu0 %v7737
    %v7784 = vpop.xlane.xlu0 %7783
    %7785 = vadd.xlane.f32.xlu0 %v7738
    %v7786 = vpop.xlane.xlu0 %7785
    %7787 = vadd.xlane.f32.xlu0 %v7739
    %v7788 = vpop.xlane.xlu0 %7787
    %7789 = vadd.xlane.f32.xlu0 %v7740
    %v7790 = vpop.xlane.xlu0 %7789
    %7791 = vadd.xlane.f32.xlu0 %v7741
    %v7792 = vpop.xlane.xlu0 %7791
    %7793 = vadd.xlane.f32.xlu0 %v7742
    %v7794 = vpop.xlane.xlu0 %7793
    %7795 = vadd.xlane.f32.xlu0 %v7743
    %v7796 = vpop.xlane.xlu0 %7795
    %7797 = vadd.xlane.f32.xlu0 %v7744
    %v7798 = vpop.xlane.xlu0 %7797
    %7799 = vadd.xlane.f32.xlu0 %v7745
    %v7800 = vpop.xlane.xlu0 %7799
    %7801 = vadd.xlane.f32.xlu0 %v7746
    %v7802 = vpop.xlane.xlu0 %7801
    %7803 = vadd.xlane.f32.xlu0 %v7747
    %v7804 = vpop.xlane.xlu0 %7803
    %7805 = vadd.xlane.f32.xlu0 %v7748
    %v7806 = vpop.xlane.xlu0 %7805
    %7807 = vadd.xlane.f32.xlu0 %v7749
    %v7808 = vpop.xlane.xlu0 %7807
    %7809 = vadd.xlane.f32.xlu0 %v7750
    %v7810 = vpop.xlane.xlu0 %7809
    %7811 = vadd.xlane.f32.xlu0 %v7751
    %v7812 = vpop.xlane.xlu0 %7811
    %7813 = vadd.xlane.f32.xlu0 %v7752
    %v7814 = vpop.xlane.xlu0 %7813
    %7815 = vadd.xlane.f32.xlu0 %v7753
    %v7816 = vpop.xlane.xlu0 %7815
    %7817 = vadd.xlane.f32.xlu0 %v7754
    %v7818 = vpop.xlane.xlu0 %7817
    %s7819 = scalar_lea.vmem [#allocation9], 2
    %v7820 = vld [vmem:[%s7819] sm:$0x3]
    %s7821 = scalar_lea.vmem [#allocation11], 2
    %v7822 = vld [vmem:[%s7821] sm:$0x3]
    %s7823 = scalar_lea.vmem [#allocation12], 2
    %v7824 = vld [vmem:[%s7823] sm:$0x3]
    %v7857 = vperm.slane %v5953, %v3021
    %v7858 = vperm.slane %v5955, %v3023
    %v7859 = vsel %vm3025, %v7858, %v7857
    %v7860 = vperm.slane %v5957, %v3027
    %v7861 = vsel %vm3029, %v7860, %v7859
    %v7862 = vperm.slane %v5959, %v3031
    %v7863 = vsel %vm3033, %v7862, %v7861
    %v7864 = vperm.slane %v5961, %v3021
    %v7865 = vperm.slane %v5963, %v3023
    %v7866 = vsel %vm3025, %v7865, %v7864
    %v7867 = vperm.slane %v5965, %v3027
    %v7868 = vsel %vm3029, %v7867, %v7866
    %v7869 = vperm.slane %v5967, %v3031
    %v7870 = vsel %vm3033, %v7869, %v7868
    %v7871 = vperm.slane %v5969, %v3021
    %v7872 = vperm.slane %v5971, %v3023
    %v7873 = vsel %vm3025, %v7872, %v7871
    %v7874 = vperm.slane %v5973, %v3027
    %v7875 = vsel %vm3029, %v7874, %v7873
    %v7876 = vperm.slane %v5975, %v3031
    %v7877 = vsel %vm3033, %v7876, %v7875
    %v7878 = vperm.slane %v5977, %v3021
    %v7879 = vperm.slane %v5979, %v3023
    %v7880 = vsel %vm3025, %v7879, %v7878
    %v7881 = vperm.slane %v5981, %v3027
    %v7882 = vsel %vm3029, %v7881, %v7880
    %v7883 = vperm.slane %v5983, %v3031
    %v7884 = vsel %vm3033, %v7883, %v7882
    %v7885 = vperm.slane %v5985, %v3021
    %v7886 = vperm.slane %v5987, %v3023
    %v7887 = vsel %vm3025, %v7886, %v7885
    %v7888 = vperm.slane %v5989, %v3027
    %v7889 = vsel %vm3029, %v7888, %v7887
    %v7890 = vperm.slane %v5991, %v3031
    %v7891 = vsel %vm3033, %v7890, %v7889
    %v7892 = vperm.slane %v5993, %v3021
    %v7893 = vperm.slane %v5995, %v3023
    %v7894 = vsel %vm3025, %v7893, %v7892
    %v7895 = vperm.slane %v5997, %v3027
    %v7896 = vsel %vm3029, %v7895, %v7894
    %v7897 = vperm.slane %v5999, %v3031
    %v7898 = vsel %vm3033, %v7897, %v7896
    %v7899 = vperm.slane %v6001, %v3021
    %v7900 = vperm.slane %v6003, %v3023
    %v7901 = vsel %vm3025, %v7900, %v7899
    %v7902 = vperm.slane %v6005, %v3027
    %v7903 = vsel %vm3029, %v7902, %v7901
    %v7904 = vperm.slane %v6007, %v3031
    %v7905 = vsel %vm3033, %v7904, %v7903
    %v7906 = vperm.slane %v6009, %v3021
    %v7907 = vperm.slane %v6011, %v3023
    %v7908 = vsel %vm3025, %v7907, %v7906
    %v7909 = vperm.slane %v6013, %v3027
    %v7910 = vsel %vm3029, %v7909, %v7908
    %v7911 = vperm.slane %v6015, %v3031
    %v7912 = vsel %vm3033, %v7911, %v7910
    %v7913 = vsel %vm3084, %v7870, %v7863
    %v7914 = vsel %vm3086, %v7877, %v7913
    %v7915 = vsel %vm3088, %v7884, %v7914
    %v7916 = vsel %vm3090, %v7891, %v7915
    %v7917 = vsel %vm3092, %v7898, %v7916
    %v7918 = vsel %vm3094, %v7905, %v7917
    %v7919 = vsel %vm3096, %v7912, %v7918
    %v7953 = vperm.slane %v6460, %v3021
    %v7954 = vperm.slane %v6462, %v3023
    %v7955 = vsel %vm3025, %v7954, %v7953
    %v7956 = vperm.slane %v6464, %v3027
    %v7957 = vsel %vm3029, %v7956, %v7955
    %v7958 = vperm.slane %v6466, %v3031
    %v7959 = vsel %vm3033, %v7958, %v7957
    %v7960 = vperm.slane %v6468, %v3021
    %v7961 = vperm.slane %v6470, %v3023
    %v7962 = vsel %vm3025, %v7961, %v7960
    %v7963 = vperm.slane %v6472, %v3027
    %v7964 = vsel %vm3029, %v7963, %v7962
    %v7965 = vperm.slane %v6474, %v3031
    %v7966 = vsel %vm3033, %v7965, %v7964
    %v7967 = vperm.slane %v6476, %v3021
    %v7968 = vperm.slane %v6478, %v3023
    %v7969 = vsel %vm3025, %v7968, %v7967
    %v7970 = vperm.slane %v6480, %v3027
    %v7971 = vsel %vm3029, %v7970, %v7969
    %v7972 = vperm.slane %v6482, %v3031
    %v7973 = vsel %vm3033, %v7972, %v7971
    %v7974 = vperm.slane %v6484, %v3021
    %v7975 = vperm.slane %v6486, %v3023
    %v7976 = vsel %vm3025, %v7975, %v7974
    %v7977 = vperm.slane %v6488, %v3027
    %v7978 = vsel %vm3029, %v7977, %v7976
    %v7979 = vperm.slane %v6490, %v3031
    %v7980 = vsel %vm3033, %v7979, %v7978
    %v7981 = vperm.slane %v6492, %v3021
    %v7982 = vperm.slane %v6494, %v3023
    %v7983 = vsel %vm3025, %v7982, %v7981
    %v7984 = vperm.slane %v6496, %v3027
    %v7985 = vsel %vm3029, %v7984, %v7983
    %v7986 = vperm.slane %v6498, %v3031
    %v7987 = vsel %vm3033, %v7986, %v7985
    %v7988 = vperm.slane %v6500, %v3021
    %v7989 = vperm.slane %v6502, %v3023
    %v7990 = vsel %vm3025, %v7989, %v7988
    %v7991 = vperm.slane %v6504, %v3027
    %v7992 = vsel %vm3029, %v7991, %v7990
    %v7993 = vperm.slane %v6506, %v3031
    %v7994 = vsel %vm3033, %v7993, %v7992
    %v7995 = vperm.slane %v6508, %v3021
    %v7996 = vperm.slane %v6510, %v3023
    %v7997 = vsel %vm3025, %v7996, %v7995
    %v7998 = vperm.slane %v6512, %v3027
    %v7999 = vsel %vm3029, %v7998, %v7997
    %v8000 = vperm.slane %v6514, %v3031
    %v8001 = vsel %vm3033, %v8000, %v7999
    %v8002 = vperm.slane %v6516, %v3021
    %v8003 = vperm.slane %v6518, %v3023
    %v8004 = vsel %vm3025, %v8003, %v8002
    %v8005 = vperm.slane %v6520, %v3027
    %v8006 = vsel %vm3029, %v8005, %v8004
    %v8007 = vperm.slane %v6522, %v3031
    %v8008 = vsel %vm3033, %v8007, %v8006
    %v8009 = vsel %vm3084, %v7966, %v7959
    %v8010 = vsel %vm3086, %v7973, %v8009
    %v8011 = vsel %vm3088, %v7980, %v8010
    %v8012 = vsel %vm3090, %v7987, %v8011
    %v8013 = vsel %vm3092, %v7994, %v8012
    %v8014 = vsel %vm3094, %v8001, %v8013
    %v8015 = vsel %vm3096, %v8008, %v8014
    %v8049 = vperm.slane %v6964, %v3021
    %v8050 = vperm.slane %v6966, %v3023
    %v8051 = vsel %vm3025, %v8050, %v8049
    %v8052 = vperm.slane %v6968, %v3027
    %v8053 = vsel %vm3029, %v8052, %v8051
    %v8054 = vperm.slane %v6970, %v3031
    %v8055 = vsel %vm3033, %v8054, %v8053
    %v8056 = vperm.slane %v6972, %v3021
    %v8057 = vperm.slane %v6974, %v3023
    %v8058 = vsel %vm3025, %v8057, %v8056
    %v8059 = vperm.slane %v6976, %v3027
    %v8060 = vsel %vm3029, %v8059, %v8058
    %v8061 = vperm.slane %v6978, %v3031
    %v8062 = vsel %vm3033, %v8061, %v8060
    %v8063 = vperm.slane %v6980, %v3021
    %v8064 = vperm.slane %v6982, %v3023
    %v8065 = vsel %vm3025, %v8064, %v8063
    %v8066 = vperm.slane %v6984, %v3027
    %v8067 = vsel %vm3029, %v8066, %v8065
    %v8068 = vperm.slane %v6986, %v3031
    %v8069 = vsel %vm3033, %v8068, %v8067
    %v8070 = vperm.slane %v6988, %v3021
    %v8071 = vperm.slane %v6990, %v3023
    %v8072 = vsel %vm3025, %v8071, %v8070
    %v8073 = vperm.slane %v6992, %v3027
    %v8074 = vsel %vm3029, %v8073, %v8072
    %v8075 = vperm.slane %v6994, %v3031
    %v8076 = vsel %vm3033, %v8075, %v8074
    %v8077 = vperm.slane %v6996, %v3021
    %v8078 = vperm.slane %v6998, %v3023
    %v8079 = vsel %vm3025, %v8078, %v8077
    %v8080 = vperm.slane %v7000, %v3027
    %v8081 = vsel %vm3029, %v8080, %v8079
    %v8082 = vperm.slane %v7002, %v3031
    %v8083 = vsel %vm3033, %v8082, %v8081
    %v8084 = vperm.slane %v7004, %v3021
    %v8085 = vperm.slane %v7006, %v3023
    %v8086 = vsel %vm3025, %v8085, %v8084
    %v8087 = vperm.slane %v7008, %v3027
    %v8088 = vsel %vm3029, %v8087, %v8086
    %v8089 = vperm.slane %v7010, %v3031
    %v8090 = vsel %vm3033, %v8089, %v8088
    %v8091 = vperm.slane %v7012, %v3021
    %v8092 = vperm.slane %v7014, %v3023
    %v8093 = vsel %vm3025, %v8092, %v8091
    %v8094 = vperm.slane %v7016, %v3027
    %v8095 = vsel %vm3029, %v8094, %v8093
    %v8096 = vperm.slane %v7018, %v3031
    %v8097 = vsel %vm3033, %v8096, %v8095
    %v8098 = vperm.slane %v7020, %v3021
    %v8099 = vperm.slane %v7022, %v3023
    %v8100 = vsel %vm3025, %v8099, %v8098
    %v8101 = vperm.slane %v7024, %v3027
    %v8102 = vsel %vm3029, %v8101, %v8100
    %v8103 = vperm.slane %v7026, %v3031
    %v8104 = vsel %vm3033, %v8103, %v8102
    %v8105 = vsel %vm3084, %v8062, %v8055
    %v8106 = vsel %vm3086, %v8069, %v8105
    %v8107 = vsel %vm3088, %v8076, %v8106
    %v8108 = vsel %vm3090, %v8083, %v8107
    %v8109 = vsel %vm3092, %v8090, %v8108
    %v8110 = vsel %vm3094, %v8097, %v8109
    %v8111 = vsel %vm3096, %v8104, %v8110
    %v8145 = vperm.slane %v7468, %v3021
    %v8146 = vperm.slane %v7470, %v3023
    %v8147 = vsel %vm3025, %v8146, %v8145
    %v8148 = vperm.slane %v7472, %v3027
    %v8149 = vsel %vm3029, %v8148, %v8147
    %v8150 = vperm.slane %v7474, %v3031
    %v8151 = vsel %vm3033, %v8150, %v8149
    %v8152 = vperm.slane %v7476, %v3021
    %v8153 = vperm.slane %v7478, %v3023
    %v8154 = vsel %vm3025, %v8153, %v8152
    %v8155 = vperm.slane %v7480, %v3027
    %v8156 = vsel %vm3029, %v8155, %v8154
    %v8157 = vperm.slane %v7482, %v3031
    %v8158 = vsel %vm3033, %v8157, %v8156
    %v8159 = vperm.slane %v7484, %v3021
    %v8160 = vperm.slane %v7486, %v3023
    %v8161 = vsel %vm3025, %v8160, %v8159
    %v8162 = vperm.slane %v7488, %v3027
    %v8163 = vsel %vm3029, %v8162, %v8161
    %v8164 = vperm.slane %v7490, %v3031
    %v8165 = vsel %vm3033, %v8164, %v8163
    %v8166 = vperm.slane %v7492, %v3021
    %v8167 = vperm.slane %v7494, %v3023
    %v8168 = vsel %vm3025, %v8167, %v8166
    %v8169 = vperm.slane %v7496, %v3027
    %v8170 = vsel %vm3029, %v8169, %v8168
    %v8171 = vperm.slane %v7498, %v3031
    %v8172 = vsel %vm3033, %v8171, %v8170
    %v8173 = vperm.slane %v7500, %v3021
    %v8174 = vperm.slane %v7502, %v3023
    %v8175 = vsel %vm3025, %v8174, %v8173
    %v8176 = vperm.slane %v7504, %v3027
    %v8177 = vsel %vm3029, %v8176, %v8175
    %v8178 = vperm.slane %v7506, %v3031
    %v8179 = vsel %vm3033, %v8178, %v8177
    %v8180 = vperm.slane %v7508, %v3021
    %v8181 = vperm.slane %v7510, %v3023
    %v8182 = vsel %vm3025, %v8181, %v8180
    %v8183 = vperm.slane %v7512, %v3027
    %v8184 = vsel %vm3029, %v8183, %v8182
    %v8185 = vperm.slane %v7514, %v3031
    %v8186 = vsel %vm3033, %v8185, %v8184
    %v8187 = vperm.slane %v7516, %v3021
    %v8188 = vperm.slane %v7518, %v3023
    %v8189 = vsel %vm3025, %v8188, %v8187
    %v8190 = vperm.slane %v7520, %v3027
    %v8191 = vsel %vm3029, %v8190, %v8189
    %v8192 = vperm.slane %v7522, %v3031
    %v8193 = vsel %vm3033, %v8192, %v8191
    %v8194 = vperm.slane %v7524, %v3021
    %v8195 = vperm.slane %v7526, %v3023
    %v8196 = vsel %vm3025, %v8195, %v8194
    %v8197 = vperm.slane %v7528, %v3027
    %v8198 = vsel %vm3029, %v8197, %v8196
    %v8199 = vperm.slane %v7530, %v3031
    %v8200 = vsel %vm3033, %v8199, %v8198
    %v8201 = vsel %vm3084, %v8158, %v8151
    %v8202 = vsel %vm3086, %v8165, %v8201
    %v8203 = vsel %vm3088, %v8172, %v8202
    %v8204 = vsel %vm3090, %v8179, %v8203
    %v8205 = vsel %vm3092, %v8186, %v8204
    %v8206 = vsel %vm3094, %v8193, %v8205
    %v8207 = vsel %vm3096, %v8200, %v8206
    %v8209 = vsel %vm3391, %v7919, -1e+30
    %v8210 = vsel %vm3392, %v8015, -1e+30
    %v8211 = vsel %vm3393, %v8111, -1e+30
    %v8212 = vsel %vm3394, %v8207, -1e+30
    %v8213 = vsel %vm284, %v8209, -inf
    %v8214 = vsel %vm284, %v8210, -inf
    %v8215 = vsel %vm284, %v8211, -inf
    %v8216 = vsel %vm284, %v8212, -inf
    %v8217 = vmax.f32 %v8213, %v8214
    %v8218 = vmax.f32 %v8215, %v8216
    %v8219 = vmax.f32 %v8217, %v8218
    %v8220 = vrot.slane %v8219, 4
    %v8221 = vmax.f32 %v8219, %v8220
    %v8222 = vrot.slane %v8221, 2
    %v8223 = vmax.f32 %v8221, %v8222
    %v8224 = vrot.slane %v8223, 1
    %v8225 = vmax.f32 %v8223, %v8224
    %v8226 = vsub.f32 %v8209, %v8225
    %v8227 = vsub.f32 %v8210, %v8225
    %v8228 = vsub.f32 %v8211, %v8225
    %v8229 = vsub.f32 %v8212, %v8225
    %v8230 = vmul.f32 %v8226, 1.442695
    %v8231 = vpow.pop %v8230
    %v8232 = vmul.f32 %v8227, 1.442695
    %v8233 = vpow.pop %v8232
    %v8234 = vmul.f32 %v8228, 1.442695
    %v8235 = vpow.pop %v8234
    %v8236 = vmul.f32 %v8229, 1.442695
    %v8237 = vpow.pop %v8236
    %v8238 = vmul.f32 %v8231, %v3387
    %v8239 = vmul.f32 %v8233, %v3388
    %v8240 = vmul.f32 %v8235, %v3389
    %v8241 = vmul.f32 %v8237, %v3390
    %v8242 = vsel %vm284, %v8238, 0.0
    %v8243 = vsel %vm284, %v8239, 0.0
    %v8244 = vadd.f32 %v8242, %v8243
    %v8245 = vsel %vm284, %v8240, 0.0
    %v8246 = vadd.f32 %v8244, %v8245
    %v8247 = vsel %vm284, %v8241, 0.0
    %v8248 = vadd.f32 %v8246, %v8247
    %v8249 = vrot.slane %v8248, 4
    %v8250 = vadd.f32 %v8248, %v8249
    %v8251 = vrot.slane %v8250, 2
    %v8252 = vadd.f32 %v8250, %v8251
    %v8253 = vrot.slane %v8252, 1
    %v8254 = vadd.f32 %v8252, %v8253
    %v8255 = vmax.f32 %v8254, 1e-30
    %v8256 = vrcp.pop %v8255
    %v8257 = vmul.f32 %v8238, %v8256
    %v8258 = vmul.f32 %v8239, %v8256
    %v8259 = vmul.f32 %v8240, %v8256
    %v8260 = vmul.f32 %v8241, %v8256
    %v8261 = vperm.slane %v7820, 0
    %8262 = vxpose.xlu0.b32.start [1/16] %v8257, 128
    %8263 = vxpose.xlu0.b32.cont [2/16] %v8258, 128
    %8264 = vxpose.xlu0.b32.cont [3/16] %v8259, 128
    %8265 = vxpose.xlu0.b32.cont [4/16] %v8260, 128
    %8266 = vxpose.xlu0.b32.cont [5/16] 0.0, 128
    %8267 = vxpose.xlu0.b32.cont [6/16] 0.0, 128
    %8268 = vxpose.xlu0.b32.cont [7/16] 0.0, 128
    %8269 = vxpose.xlu0.b32.cont [8/16] 0.0, 128
    %8270 = vxpose.xlu0.b32.cont [9/16] 0.0, 128
    %8271 = vxpose.xlu0.b32.cont [10/16] 0.0, 128
    %8272 = vxpose.xlu0.b32.cont [11/16] 0.0, 128
    %8273 = vxpose.xlu0.b32.cont [12/16] 0.0, 128
    %8274 = vxpose.xlu0.b32.cont [13/16] 0.0, 128
    %8275 = vxpose.xlu0.b32.cont [14/16] 0.0, 128
    %8276 = vxpose.xlu0.b32.cont [15/16] 0.0, 128
    %8277 = vxpose.xlu0.b32.end [16/16] 0.0, 128
    %v8278 = vpop.trf.xlu0
    %v8279 = vpop.trf.xlu0
    %v8280 = vpop.trf.xlu0
    %v8281 = vpop.trf.xlu0
    %v8282 = vpop.trf.xlu0
    %v8283 = vpop.trf.xlu0
    %v8284 = vpop.trf.xlu0
    %v8285 = vpop.trf.xlu0
    %v8286 = vpop.trf.xlu0
    %v8287 = vpop.trf.xlu0
    %v8288 = vpop.trf.xlu0
    %v8289 = vpop.trf.xlu0
    %v8290 = vpop.trf.xlu0
    %v8291 = vpop.trf.xlu0
    %v8292 = vpop.trf.xlu0
    %v8293 = vpop.trf.xlu0
    %v8295 = vsel %vm284, %v8278, 0
    %v8298 = vsel %vm284, %v8279, 0
    %v8301 = vsel %vm284, %v8280, 0
    %v8304 = vsel %vm284, %v8281, 0
    %8306 = vmatpush.msra.mxu0 0.0
    %8307 = vmatpush.msra.mxu0 0.0
    %8308 = vmatpush.msra.mxu0 0.0
    %8309 = vmatpush.msra.mxu0 0.0
    %8310 = vmatpush.msra.mxu0 0.0
    %8311 = vmatpush.msra.mxu0 0.0
    %8312 = vmatpush.msra.mxu0 0.0
    %8313 = vmatpush.msra.mxu0 0.0
    %8314 = vmatpush.msra.mxu0 0.0
    %8315 = vmatpush.msra.mxu0 0.0
    %8316 = vmatpush.msra.mxu0 0.0
    %8317 = vmatpush.msra.mxu0 0.0
    %8318 = vmatpush.msra.mxu0 %v5776
    %8319 = vmatpush.msra.mxu0 %v5775
    %8320 = vmatpush.msra.mxu0 %v5774
    %8321 = vmatpush.msra.mxu0 %v5773
    %8322 = vmatmul.f32.gmra.mxu0 %v8295
    %v8323 = vpop.f32.mrf.mxu0
    %v8324 = vadd.f32 %v8261, %v8323
    %8325 = vmatmul.f32.gmra.mxu0 %v8298
    %v8326 = vpop.f32.mrf.mxu0
    %v8327 = vadd.f32 %v8261, %v8326
    %8328 = vmatmul.f32.gmra.mxu0 %v8301
    %v8329 = vpop.f32.mrf.mxu0
    %v8330 = vadd.f32 %v8261, %v8329
    %8331 = vmatmul.f32.gmra.mxu0 %v8304
    %v8332 = vpop.f32.mrf.mxu0
    %v8333 = vadd.f32 %v8261, %v8332
    %8334 = vdwg.mxu0
    %v8335 = vmul.f32 %v8324, %v3523
    %v8336 = vmul.f32 %v8327, %v3527
    %v8337 = vmul.f32 %v8330, %v3531
    %v8338 = vmul.f32 %v8333, %v3535
    %v8339 = vsel %vm284, %v8335, 0.0
    %v8340 = vsel %vm284, %v8336, 0.0
    %v8341 = vadd.f32 %v8339, %v8340
    %v8342 = vsel %vm284, %v8337, 0.0
    %v8343 = vadd.f32 %v8341, %v8342
    %v8344 = vsel %vm284, %v8338, 0.0
    %v8345 = vadd.f32 %v8343, %v8344
    %8346 = vadd.xlane.f32.xlu0 %v8345
    %v8347 = vpop.xlane.xlu0 %8346
    %v8348 = vrot.slane %v8347, 4
    %v8349 = vadd.f32 %v8347, %v8348
    %v8350 = vrot.slane %v8349, 2
    %v8351 = vadd.f32 %v8349, %v8350
    %v8352 = vrot.slane %v8351, 1
    %v8353 = vadd.f32 %v8351, %v8352
    %s8354 = vtos %v8353
    %v8355 = vstv %s3557
    %v8356 = vrcp.pop %v8355
    %v8357 = vmul.f32 %v8355, %v8356
    %v8358 = vsub.f32 1.0, %v8357
    %v8359 = vmul.f32 %v8356, %v8358
    %v8360 = vadd.f32 %v8356, %v8359
    %vm8361 = vweird.f32 %v8355
    %vm8362 = vweird.f32 %v8356
    %vm8363 = vmor %vm8361, %vm8362
    %v8364 = vsel %vm8363, %v8356, %v8360
    %v8365 = vand.u32 2147483647, %v8355
    %vm8366 = vcmp.eq.f32.partialorder %v8365, 8.507059e+37
    %v8367 = vand.u32 %v8355, 2147483648
    %v8368 = vor.u32 1.1754944e-38, %v8367
    %v8369 = vsel %vm8366, %v8368, %v8364
    %s8370 = vtos %v8369
    %s8371 = smul.f32 %s8354, %s8370
    %v8372 = vstv %s8371
    %v8373 = vsub.f32 %v8324, %v8372
    %v8374 = vsub.f32 %v8327, %v8372
    %v8375 = vsub.f32 %v8330, %v8372
    %v8376 = vsub.f32 %v8333, %v8372
    %v8377 = vmul.f32 %v8373, %v3523
    %v8378 = vmul.f32 %v8374, %v3527
    %v8379 = vmul.f32 %v8375, %v3531
    %v8380 = vmul.f32 %v8376, %v3535
    %v8381 = vmul.f32 %v8377, %v8377
    %v8382 = vmul.f32 %v8378, %v8378
    %v8383 = vmul.f32 %v8379, %v8379
    %v8384 = vmul.f32 %v8380, %v8380
    %v8385 = vsel %vm284, %v8381, 0.0
    %v8386 = vsel %vm284, %v8382, 0.0
    %v8387 = vadd.f32 %v8385, %v8386
    %v8388 = vsel %vm284, %v8383, 0.0
    %v8389 = vadd.f32 %v8387, %v8388
    %v8390 = vsel %vm284, %v8384, 0.0
    %v8391 = vadd.f32 %v8389, %v8390
    %8392 = vadd.xlane.f32.xlu0 %v8391
    %v8393 = vpop.xlane.xlu0 %8392
    %v8394 = vrot.slane %v8393, 4
    %v8395 = vadd.f32 %v8393, %v8394
    %v8396 = vrot.slane %v8395, 2
    %v8397 = vadd.f32 %v8395, %v8396
    %v8398 = vrot.slane %v8397, 1
    %v8399 = vadd.f32 %v8397, %v8398
    %s8400 = vtos %v8399
    %v8401 = vstv %s3557
    %v8402 = vrcp.pop %v8401
    %v8403 = vmul.f32 %v8401, %v8402
    %v8404 = vsub.f32 1.0, %v8403
    %v8405 = vmul.f32 %v8402, %v8404
    %v8406 = vadd.f32 %v8402, %v8405
    %vm8407 = vweird.f32 %v8401
    %vm8408 = vweird.f32 %v8402
    %vm8409 = vmor %vm8407, %vm8408
    %v8410 = vsel %vm8409, %v8402, %v8406
    %v8411 = vand.u32 2147483647, %v8401
    %vm8412 = vcmp.eq.f32.partialorder %v8411, 8.507059e+37
    %v8413 = vand.u32 %v8401, 2147483648
    %v8414 = vor.u32 1.1754944e-38, %v8413
    %v8415 = vsel %vm8412, %v8414, %v8410
    %s8416 = vtos %v8415
    %s8417 = smul.f32 %s8400, %s8416
    %v8418 = vstv %s8417
    %v8419 = vrsqrt.pop %v8418
    %v8420 = vmul.f32 %v8419, %v8418
    %v8421 = vmul.f32 %v8420, %v8419
    %v8422 = vmul.f32 0.5, %v8421
    %v8423 = vsub.f32 1.5, %v8422
    %v8424 = vmul.f32 %v8419, %v8423
    %v8425 = vmul.f32 %v8418, %v8424
    %vm8426 = vcmp.eq.f32.partialorder %v8418, inf
    %v8427 = vsel %vm8426, %v8418, %v8425
    %vm8428 = vcmp.eq.f32.partialorder %v8418, 0.0
    %v8429 = vand.u32 %v8418, 2147483648
    %v8430 = vsel %vm8428, %v8429, %v8427
    %s8431 = vtos %v8430
    %s8432 = sadd.f32 %s8431, 1e-05
    %v8433 = vstv %s8432
    %v8434 = vrcp.pop %v8433
    %v8435 = vmul.f32 %v8433, %v8434
    %v8436 = vsub.f32 1.0, %v8435
    %v8437 = vmul.f32 %v8434, %v8436
    %v8438 = vadd.f32 %v8434, %v8437
    %vm8439 = vweird.f32 %v8433
    %vm8440 = vweird.f32 %v8434
    %vm8441 = vmor %vm8439, %vm8440
    %v8442 = vsel %vm8441, %v8434, %v8438
    %v8443 = vand.u32 2147483647, %v8433
    %vm8444 = vcmp.eq.f32.partialorder %v8443, 8.507059e+37
    %v8445 = vand.u32 %v8433, 2147483648
    %v8446 = vor.u32 1.1754944e-38, %v8445
    %v8447 = vsel %vm8444, %v8446, %v8442
    %v8448 = vmul.f32 %v8373, %v8447
    %v8449 = vmul.f32 %v8374, %v8447
    %v8450 = vmul.f32 %v8375, %v8447
    %v8451 = vmul.f32 %v8376, %v8447
    %v8452 = vperm.slane %v7822, 0
    %v8453 = vmul.f32 %v8448, %v8452
    %v8454 = vmul.f32 %v8449, %v8452
    %v8455 = vmul.f32 %v8450, %v8452
    %v8456 = vmul.f32 %v8451, %v8452
    %v8457 = vperm.slane %v7824, 0
    %v8458 = vadd.f32 %v8453, %v8457
    %v8459 = vadd.f32 %v8454, %v8457
    %v8460 = vadd.f32 %v8455, %v8457
    %v8461 = vadd.f32 %v8456, %v8457
    %v8462 = vmax.f32 %v8458, 0.0
    %v8463 = vmax.f32 %v8459, 0.0
    %v8464 = vmax.f32 %v8460, 0.0
    %v8465 = vmax.f32 %v8461, 0.0
    %v8466 = vadd.f32 %v8462, 0.0
    %v8467 = vadd.f32 %v8463, 0.0
    %v8468 = vadd.f32 %v8464, 0.0
    %v8469 = vadd.f32 %v8465, 0.0
    %v8502 = vperm.slane %v6050, %v3021
    %v8503 = vperm.slane %v6052, %v3023
    %v8504 = vsel %vm3025, %v8503, %v8502
    %v8505 = vperm.slane %v6054, %v3027
    %v8506 = vsel %vm3029, %v8505, %v8504
    %v8507 = vperm.slane %v6056, %v3031
    %v8508 = vsel %vm3033, %v8507, %v8506
    %v8509 = vperm.slane %v6058, %v3021
    %v8510 = vperm.slane %v6060, %v3023
    %v8511 = vsel %vm3025, %v8510, %v8509
    %v8512 = vperm.slane %v6062, %v3027
    %v8513 = vsel %vm3029, %v8512, %v8511
    %v8514 = vperm.slane %v6064, %v3031
    %v8515 = vsel %vm3033, %v8514, %v8513
    %v8516 = vperm.slane %v6066, %v3021
    %v8517 = vperm.slane %v6068, %v3023
    %v8518 = vsel %vm3025, %v8517, %v8516
    %v8519 = vperm.slane %v6070, %v3027
    %v8520 = vsel %vm3029, %v8519, %v8518
    %v8521 = vperm.slane %v6072, %v3031
    %v8522 = vsel %vm3033, %v8521, %v8520
    %v8523 = vperm.slane %v6074, %v3021
    %v8524 = vperm.slane %v6076, %v3023
    %v8525 = vsel %vm3025, %v8524, %v8523
    %v8526 = vperm.slane %v6078, %v3027
    %v8527 = vsel %vm3029, %v8526, %v8525
    %v8528 = vperm.slane %v6080, %v3031
    %v8529 = vsel %vm3033, %v8528, %v8527
    %v8530 = vperm.slane %v6082, %v3021
    %v8531 = vperm.slane %v6084, %v3023
    %v8532 = vsel %vm3025, %v8531, %v8530
    %v8533 = vperm.slane %v6086, %v3027
    %v8534 = vsel %vm3029, %v8533, %v8532
    %v8535 = vperm.slane %v6088, %v3031
    %v8536 = vsel %vm3033, %v8535, %v8534
    %v8537 = vperm.slane %v6090, %v3021
    %v8538 = vperm.slane %v6092, %v3023
    %v8539 = vsel %vm3025, %v8538, %v8537
    %v8540 = vperm.slane %v6094, %v3027
    %v8541 = vsel %vm3029, %v8540, %v8539
    %v8542 = vperm.slane %v6096, %v3031
    %v8543 = vsel %vm3033, %v8542, %v8541
    %v8544 = vperm.slane %v6098, %v3021
    %v8545 = vperm.slane %v6100, %v3023
    %v8546 = vsel %vm3025, %v8545, %v8544
    %v8547 = vperm.slane %v6102, %v3027
    %v8548 = vsel %vm3029, %v8547, %v8546
    %v8549 = vperm.slane %v6104, %v3031
    %v8550 = vsel %vm3033, %v8549, %v8548
    %v8551 = vperm.slane %v6106, %v3021
    %v8552 = vperm.slane %v6108, %v3023
    %v8553 = vsel %vm3025, %v8552, %v8551
    %v8554 = vperm.slane %v6110, %v3027
    %v8555 = vsel %vm3029, %v8554, %v8553
    %v8556 = vperm.slane %v6112, %v3031
    %v8557 = vsel %vm3033, %v8556, %v8555
    %v8558 = vsel %vm3084, %v8515, %v8508
    %v8559 = vsel %vm3086, %v8522, %v8558
    %v8560 = vsel %vm3088, %v8529, %v8559
    %v8561 = vsel %vm3090, %v8536, %v8560
    %v8562 = vsel %vm3092, %v8543, %v8561
    %v8563 = vsel %vm3094, %v8550, %v8562
    %v8564 = vsel %vm3096, %v8557, %v8563
    %v8598 = vperm.slane %v6556, %v3021
    %v8599 = vperm.slane %v6558, %v3023
    %v8600 = vsel %vm3025, %v8599, %v8598
    %v8601 = vperm.slane %v6560, %v3027
    %v8602 = vsel %vm3029, %v8601, %v8600
    %v8603 = vperm.slane %v6562, %v3031
    %v8604 = vsel %vm3033, %v8603, %v8602
    %v8605 = vperm.slane %v6564, %v3021
    %v8606 = vperm.slane %v6566, %v3023
    %v8607 = vsel %vm3025, %v8606, %v8605
    %v8608 = vperm.slane %v6568, %v3027
    %v8609 = vsel %vm3029, %v8608, %v8607
    %v8610 = vperm.slane %v6570, %v3031
    %v8611 = vsel %vm3033, %v8610, %v8609
    %v8612 = vperm.slane %v6572, %v3021
    %v8613 = vperm.slane %v6574, %v3023
    %v8614 = vsel %vm3025, %v8613, %v8612
    %v8615 = vperm.slane %v6576, %v3027
    %v8616 = vsel %vm3029, %v8615, %v8614
    %v8617 = vperm.slane %v6578, %v3031
    %v8618 = vsel %vm3033, %v8617, %v8616
    %v8619 = vperm.slane %v6580, %v3021
    %v8620 = vperm.slane %v6582, %v3023
    %v8621 = vsel %vm3025, %v8620, %v8619
    %v8622 = vperm.slane %v6584, %v3027
    %v8623 = vsel %vm3029, %v8622, %v8621
    %v8624 = vperm.slane %v6586, %v3031
    %v8625 = vsel %vm3033, %v8624, %v8623
    %v8626 = vperm.slane %v6588, %v3021
    %v8627 = vperm.slane %v6590, %v3023
    %v8628 = vsel %vm3025, %v8627, %v8626
    %v8629 = vperm.slane %v6592, %v3027
    %v8630 = vsel %vm3029, %v8629, %v8628
    %v8631 = vperm.slane %v6594, %v3031
    %v8632 = vsel %vm3033, %v8631, %v8630
    %v8633 = vperm.slane %v6596, %v3021
    %v8634 = vperm.slane %v6598, %v3023
    %v8635 = vsel %vm3025, %v8634, %v8633
    %v8636 = vperm.slane %v6600, %v3027
    %v8637 = vsel %vm3029, %v8636, %v8635
    %v8638 = vperm.slane %v6602, %v3031
    %v8639 = vsel %vm3033, %v8638, %v8637
    %v8640 = vperm.slane %v6604, %v3021
    %v8641 = vperm.slane %v6606, %v3023
    %v8642 = vsel %vm3025, %v8641, %v8640
    %v8643 = vperm.slane %v6608, %v3027
    %v8644 = vsel %vm3029, %v8643, %v8642
    %v8645 = vperm.slane %v6610, %v3031
    %v8646 = vsel %vm3033, %v8645, %v8644
    %v8647 = vperm.slane %v6612, %v3021
    %v8648 = vperm.slane %v6614, %v3023
    %v8649 = vsel %vm3025, %v8648, %v8647
    %v8650 = vperm.slane %v6616, %v3027
    %v8651 = vsel %vm3029, %v8650, %v8649
    %v8652 = vperm.slane %v6618, %v3031
    %v8653 = vsel %vm3033, %v8652, %v8651
    %v8654 = vsel %vm3084, %v8611, %v8604
    %v8655 = vsel %vm3086, %v8618, %v8654
    %v8656 = vsel %vm3088, %v8625, %v8655
    %v8657 = vsel %vm3090, %v8632, %v8656
    %v8658 = vsel %vm3092, %v8639, %v8657
    %v8659 = vsel %vm3094, %v8646, %v8658
    %v8660 = vsel %vm3096, %v8653, %v8659
    %v8694 = vperm.slane %v7060, %v3021
    %v8695 = vperm.slane %v7062, %v3023
    %v8696 = vsel %vm3025, %v8695, %v8694
    %v8697 = vperm.slane %v7064, %v3027
    %v8698 = vsel %vm3029, %v8697, %v8696
    %v8699 = vperm.slane %v7066, %v3031
    %v8700 = vsel %vm3033, %v8699, %v8698
    %v8701 = vperm.slane %v7068, %v3021
    %v8702 = vperm.slane %v7070, %v3023
    %v8703 = vsel %vm3025, %v8702, %v8701
    %v8704 = vperm.slane %v7072, %v3027
    %v8705 = vsel %vm3029, %v8704, %v8703
    %v8706 = vperm.slane %v7074, %v3031
    %v8707 = vsel %vm3033, %v8706, %v8705
    %v8708 = vperm.slane %v7076, %v3021
    %v8709 = vperm.slane %v7078, %v3023
    %v8710 = vsel %vm3025, %v8709, %v8708
    %v8711 = vperm.slane %v7080, %v3027
    %v8712 = vsel %vm3029, %v8711, %v8710
    %v8713 = vperm.slane %v7082, %v3031
    %v8714 = vsel %vm3033, %v8713, %v8712
    %v8715 = vperm.slane %v7084, %v3021
    %v8716 = vperm.slane %v7086, %v3023
    %v8717 = vsel %vm3025, %v8716, %v8715
    %v8718 = vperm.slane %v7088, %v3027
    %v8719 = vsel %vm3029, %v8718, %v8717
    %v8720 = vperm.slane %v7090, %v3031
    %v8721 = vsel %vm3033, %v8720, %v8719
    %v8722 = vperm.slane %v7092, %v3021
    %v8723 = vperm.slane %v7094, %v3023
    %v8724 = vsel %vm3025, %v8723, %v8722
    %v8725 = vperm.slane %v7096, %v3027
    %v8726 = vsel %vm3029, %v8725, %v8724
    %v8727 = vperm.slane %v7098, %v3031
    %v8728 = vsel %vm3033, %v8727, %v8726
    %v8729 = vperm.slane %v7100, %v3021
    %v8730 = vperm.slane %v7102, %v3023
    %v8731 = vsel %vm3025, %v8730, %v8729
    %v8732 = vperm.slane %v7104, %v3027
    %v8733 = vsel %vm3029, %v8732, %v8731
    %v8734 = vperm.slane %v7106, %v3031
    %v8735 = vsel %vm3033, %v8734, %v8733
    %v8736 = vperm.slane %v7108, %v3021
    %v8737 = vperm.slane %v7110, %v3023
    %v8738 = vsel %vm3025, %v8737, %v8736
    %v8739 = vperm.slane %v7112, %v3027
    %v8740 = vsel %vm3029, %v8739, %v8738
    %v8741 = vperm.slane %v7114, %v3031
    %v8742 = vsel %vm3033, %v8741, %v8740
    %v8743 = vperm.slane %v7116, %v3021
    %v8744 = vperm.slane %v7118, %v3023
    %v8745 = vsel %vm3025, %v8744, %v8743
    %v8746 = vperm.slane %v7120, %v3027
    %v8747 = vsel %vm3029, %v8746, %v8745
    %v8748 = vperm.slane %v7122, %v3031
    %v8749 = vsel %vm3033, %v8748, %v8747
    %v8750 = vsel %vm3084, %v8707, %v8700
    %v8751 = vsel %vm3086, %v8714, %v8750
    %v8752 = vsel %vm3088, %v8721, %v8751
    %v8753 = vsel %vm3090, %v8728, %v8752
    %v8754 = vsel %vm3092, %v8735, %v8753
    %v8755 = vsel %vm3094, %v8742, %v8754
    %v8756 = vsel %vm3096, %v8749, %v8755
    %v8790 = vperm.slane %v7564, %v3021
    %v8791 = vperm.slane %v7566, %v3023
    %v8792 = vsel %vm3025, %v8791, %v8790
    %v8793 = vperm.slane %v7568, %v3027
    %v8794 = vsel %vm3029, %v8793, %v8792
    %v8795 = vperm.slane %v7570, %v3031
    %v8796 = vsel %vm3033, %v8795, %v8794
    %v8797 = vperm.slane %v7572, %v3021
    %v8798 = vperm.slane %v7574, %v3023
    %v8799 = vsel %vm3025, %v8798, %v8797
    %v8800 = vperm.slane %v7576, %v3027
    %v8801 = vsel %vm3029, %v8800, %v8799
    %v8802 = vperm.slane %v7578, %v3031
    %v8803 = vsel %vm3033, %v8802, %v8801
    %v8804 = vperm.slane %v7580, %v3021
    %v8805 = vperm.slane %v7582, %v3023
    %v8806 = vsel %vm3025, %v8805, %v8804
    %v8807 = vperm.slane %v7584, %v3027
    %v8808 = vsel %vm3029, %v8807, %v8806
    %v8809 = vperm.slane %v7586, %v3031
    %v8810 = vsel %vm3033, %v8809, %v8808
    %v8811 = vperm.slane %v7588, %v3021
    %v8812 = vperm.slane %v7590, %v3023
    %v8813 = vsel %vm3025, %v8812, %v8811
    %v8814 = vperm.slane %v7592, %v3027
    %v8815 = vsel %vm3029, %v8814, %v8813
    %v8816 = vperm.slane %v7594, %v3031
    %v8817 = vsel %vm3033, %v8816, %v8815
    %v8818 = vperm.slane %v7596, %v3021
    %v8819 = vperm.slane %v7598, %v3023
    %v8820 = vsel %vm3025, %v8819, %v8818
    %v8821 = vperm.slane %v7600, %v3027
    %v8822 = vsel %vm3029, %v8821, %v8820
    %v8823 = vperm.slane %v7602, %v3031
    %v8824 = vsel %vm3033, %v8823, %v8822
    %v8825 = vperm.slane %v7604, %v3021
    %v8826 = vperm.slane %v7606, %v3023
    %v8827 = vsel %vm3025, %v8826, %v8825
    %v8828 = vperm.slane %v7608, %v3027
    %v8829 = vsel %vm3029, %v8828, %v8827
    %v8830 = vperm.slane %v7610, %v3031
    %v8831 = vsel %vm3033, %v8830, %v8829
    %v8832 = vperm.slane %v7612, %v3021
    %v8833 = vperm.slane %v7614, %v3023
    %v8834 = vsel %vm3025, %v8833, %v8832
    %v8835 = vperm.slane %v7616, %v3027
    %v8836 = vsel %vm3029, %v8835, %v8834
    %v8837 = vperm.slane %v7618, %v3031
    %v8838 = vsel %vm3033, %v8837, %v8836
    %v8839 = vperm.slane %v7620, %v3021
    %v8840 = vperm.slane %v7622, %v3023
    %v8841 = vsel %vm3025, %v8840, %v8839
    %v8842 = vperm.slane %v7624, %v3027
    %v8843 = vsel %vm3029, %v8842, %v8841
    %v8844 = vperm.slane %v7626, %v3031
    %v8845 = vsel %vm3033, %v8844, %v8843
    %v8846 = vsel %vm3084, %v8803, %v8796
    %v8847 = vsel %vm3086, %v8810, %v8846
    %v8848 = vsel %vm3088, %v8817, %v8847
    %v8849 = vsel %vm3090, %v8824, %v8848
    %v8850 = vsel %vm3092, %v8831, %v8849
    %v8851 = vsel %vm3094, %v8838, %v8850
    %v8852 = vsel %vm3096, %v8845, %v8851
    %v8854 = vsel %vm4062, %v8564, -1e+30
    %v8855 = vsel %vm4063, %v8660, -1e+30
    %v8856 = vsel %vm4064, %v8756, -1e+30
    %v8857 = vsel %vm4065, %v8852, -1e+30
    %v8858 = vsel %vm284, %v8854, -inf
    %v8859 = vsel %vm284, %v8855, -inf
    %v8860 = vsel %vm284, %v8856, -inf
    %v8861 = vsel %vm284, %v8857, -inf
    %v8862 = vmax.f32 %v8858, %v8859
    %v8863 = vmax.f32 %v8860, %v8861
    %v8864 = vmax.f32 %v8862, %v8863
    %v8865 = vrot.slane %v8864, 4
    %v8866 = vmax.f32 %v8864, %v8865
    %v8867 = vrot.slane %v8866, 2
    %v8868 = vmax.f32 %v8866, %v8867
    %v8869 = vrot.slane %v8868, 1
    %v8870 = vmax.f32 %v8868, %v8869
    %v8871 = vsub.f32 %v8854, %v8870
    %v8872 = vsub.f32 %v8855, %v8870
    %v8873 = vsub.f32 %v8856, %v8870
    %v8874 = vsub.f32 %v8857, %v8870
    %v8875 = vmul.f32 %v8871, 1.442695
    %v8876 = vpow.pop %v8875
    %v8877 = vmul.f32 %v8872, 1.442695
    %v8878 = vpow.pop %v8877
    %v8879 = vmul.f32 %v8873, 1.442695
    %v8880 = vpow.pop %v8879
    %v8881 = vmul.f32 %v8874, 1.442695
    %v8882 = vpow.pop %v8881
    %v8883 = vmul.f32 %v8876, %v4058
    %v8884 = vmul.f32 %v8878, %v4059
    %v8885 = vmul.f32 %v8880, %v4060
    %v8886 = vmul.f32 %v8882, %v4061
    %v8887 = vsel %vm284, %v8883, 0.0
    %v8888 = vsel %vm284, %v8884, 0.0
    %v8889 = vadd.f32 %v8887, %v8888
    %v8890 = vsel %vm284, %v8885, 0.0
    %v8891 = vadd.f32 %v8889, %v8890
    %v8892 = vsel %vm284, %v8886, 0.0
    %v8893 = vadd.f32 %v8891, %v8892
    %v8894 = vrot.slane %v8893, 4
    %v8895 = vadd.f32 %v8893, %v8894
    %v8896 = vrot.slane %v8895, 2
    %v8897 = vadd.f32 %v8895, %v8896
    %v8898 = vrot.slane %v8897, 1
    %v8899 = vadd.f32 %v8897, %v8898
    %v8900 = vmax.f32 %v8899, 1e-30
    %v8901 = vrcp.pop %v8900
    %v8902 = vmul.f32 %v8883, %v8901
    %v8903 = vmul.f32 %v8884, %v8901
    %v8904 = vmul.f32 %v8885, %v8901
    %v8905 = vmul.f32 %v8886, %v8901
    %v8906 = vperm.slane %v7820, 1
    %8907 = vxpose.xlu0.b32.start [1/16] %v8902, 128
    %8908 = vxpose.xlu0.b32.cont [2/16] %v8903, 128
    %8909 = vxpose.xlu0.b32.cont [3/16] %v8904, 128
    %8910 = vxpose.xlu0.b32.cont [4/16] %v8905, 128
    %8911 = vxpose.xlu0.b32.cont [5/16] 0.0, 128
    %8912 = vxpose.xlu0.b32.cont [6/16] 0.0, 128
    %8913 = vxpose.xlu0.b32.cont [7/16] 0.0, 128
    %8914 = vxpose.xlu0.b32.cont [8/16] 0.0, 128
    %8915 = vxpose.xlu0.b32.cont [9/16] 0.0, 128
    %8916 = vxpose.xlu0.b32.cont [10/16] 0.0, 128
    %8917 = vxpose.xlu0.b32.cont [11/16] 0.0, 128
    %8918 = vxpose.xlu0.b32.cont [12/16] 0.0, 128
    %8919 = vxpose.xlu0.b32.cont [13/16] 0.0, 128
    %8920 = vxpose.xlu0.b32.cont [14/16] 0.0, 128
    %8921 = vxpose.xlu0.b32.cont [15/16] 0.0, 128
    %8922 = vxpose.xlu0.b32.end [16/16] 0.0, 128
    %v8923 = vpop.trf.xlu0
    %v8924 = vpop.trf.xlu0
    %v8925 = vpop.trf.xlu0
    %v8926 = vpop.trf.xlu0
    %v8927 = vpop.trf.xlu0
    %v8928 = vpop.trf.xlu0
    %v8929 = vpop.trf.xlu0
    %v8930 = vpop.trf.xlu0
    %v8931 = vpop.trf.xlu0
    %v8932 = vpop.trf.xlu0
    %v8933 = vpop.trf.xlu0
    %v8934 = vpop.trf.xlu0
    %v8935 = vpop.trf.xlu0
    %v8936 = vpop.trf.xlu0
    %v8937 = vpop.trf.xlu0
    %v8938 = vpop.trf.xlu0
    %8939 = vrot.lane.b32.xlu0 %v5773, 96
    %v8940 = vpop.permute.xlu0 %8939
    %8941 = vrot.lane.b32.xlu0 %v5774, 96
    %v8942 = vpop.permute.xlu0 %8941
    %8943 = vrot.lane.b32.xlu0 %v5775, 96
    %v8944 = vpop.permute.xlu0 %8943
    %8945 = vrot.lane.b32.xlu0 %v5776, 96
    %v8946 = vpop.permute.xlu0 %8945
    %v8952 = vsel %vm284, %v8923, 0
    %v8955 = vsel %vm284, %v8924, 0
    %v8958 = vsel %vm284, %v8925, 0
    %v8961 = vsel %vm284, %v8926, 0
    %8963 = vmatpush.msra.mxu0 0.0
    %8964 = vmatpush.msra.mxu0 0.0
    %8965 = vmatpush.msra.mxu0 0.0
    %8966 = vmatpush.msra.mxu0 0.0
    %8967 = vmatpush.msra.mxu0 0.0
    %8968 = vmatpush.msra.mxu0 0.0
    %8969 = vmatpush.msra.mxu0 0.0
    %8970 = vmatpush.msra.mxu0 0.0
    %8971 = vmatpush.msra.mxu0 0.0
    %8972 = vmatpush.msra.mxu0 0.0
    %8973 = vmatpush.msra.mxu0 0.0
    %8974 = vmatpush.msra.mxu0 0.0
    %8975 = vmatpush.msra.mxu0 %v8946
    %8976 = vmatpush.msra.mxu0 %v8944
    %8977 = vmatpush.msra.mxu0 %v8942
    %8978 = vmatpush.msra.mxu0 %v8940
    %8979 = vmatmul.f32.gmra.mxu0 %v8952
    %v8980 = vpop.f32.mrf.mxu0
    %v8981 = vadd.f32 %v8906, %v8980
    %8982 = vmatmul.f32.gmra.mxu0 %v8955
    %v8983 = vpop.f32.mrf.mxu0
    %v8984 = vadd.f32 %v8906, %v8983
    %8985 = vmatmul.f32.gmra.mxu0 %v8958
    %v8986 = vpop.f32.mrf.mxu0
    %v8987 = vadd.f32 %v8906, %v8986
    %8988 = vmatmul.f32.gmra.mxu0 %v8961
    %v8989 = vpop.f32.mrf.mxu0
    %v8990 = vadd.f32 %v8906, %v8989
    %8991 = vdwg.mxu0
    %v8992 = vmul.f32 %v8981, %v3523
    %v8993 = vmul.f32 %v8984, %v3527
    %v8994 = vmul.f32 %v8987, %v3531
    %v8995 = vmul.f32 %v8990, %v3535
    %v8996 = vsel %vm284, %v8992, 0.0
    %v8997 = vsel %vm284, %v8993, 0.0
    %v8998 = vadd.f32 %v8996, %v8997
    %v8999 = vsel %vm284, %v8994, 0.0
    %v9000 = vadd.f32 %v8998, %v8999
    %v9001 = vsel %vm284, %v8995, 0.0
    %v9002 = vadd.f32 %v9000, %v9001
    %9003 = vadd.xlane.f32.xlu0 %v9002
    %v9004 = vpop.xlane.xlu0 %9003
    %v9005 = vrot.slane %v9004, 4
    %v9006 = vadd.f32 %v9004, %v9005
    %v9007 = vrot.slane %v9006, 2
    %v9008 = vadd.f32 %v9006, %v9007
    %v9009 = vrot.slane %v9008, 1
    %v9010 = vadd.f32 %v9008, %v9009
    %s9011 = vtos %v9010
    %v9012 = vstv %s3557
    %v9013 = vrcp.pop %v9012
    %v9014 = vmul.f32 %v9012, %v9013
    %v9015 = vsub.f32 1.0, %v9014
    %v9016 = vmul.f32 %v9013, %v9015
    %v9017 = vadd.f32 %v9013, %v9016
    %vm9018 = vweird.f32 %v9012
    %vm9019 = vweird.f32 %v9013
    %vm9020 = vmor %vm9018, %vm9019
    %v9021 = vsel %vm9020, %v9013, %v9017
    %v9022 = vand.u32 2147483647, %v9012
    %vm9023 = vcmp.eq.f32.partialorder %v9022, 8.507059e+37
    %v9024 = vand.u32 %v9012, 2147483648
    %v9025 = vor.u32 1.1754944e-38, %v9024
    %v9026 = vsel %vm9023, %v9025, %v9021
    %s9027 = vtos %v9026
    %s9028 = smul.f32 %s9011, %s9027
    %v9029 = vstv %s9028
    %v9030 = vsub.f32 %v8981, %v9029
    %v9031 = vsub.f32 %v8984, %v9029
    %v9032 = vsub.f32 %v8987, %v9029
    %v9033 = vsub.f32 %v8990, %v9029
    %v9034 = vmul.f32 %v9030, %v3523
    %v9035 = vmul.f32 %v9031, %v3527
    %v9036 = vmul.f32 %v9032, %v3531
    %v9037 = vmul.f32 %v9033, %v3535
    %v9038 = vmul.f32 %v9034, %v9034
    %v9039 = vmul.f32 %v9035, %v9035
    %v9040 = vmul.f32 %v9036, %v9036
    %v9041 = vmul.f32 %v9037, %v9037
    %v9042 = vsel %vm284, %v9038, 0.0
    %v9043 = vsel %vm284, %v9039, 0.0
    %v9044 = vadd.f32 %v9042, %v9043
    %v9045 = vsel %vm284, %v9040, 0.0
    %v9046 = vadd.f32 %v9044, %v9045
    %v9047 = vsel %vm284, %v9041, 0.0
    %v9048 = vadd.f32 %v9046, %v9047
    %9049 = vadd.xlane.f32.xlu0 %v9048
    %v9050 = vpop.xlane.xlu0 %9049
    %v9051 = vrot.slane %v9050, 4
    %v9052 = vadd.f32 %v9050, %v9051
    %v9053 = vrot.slane %v9052, 2
    %v9054 = vadd.f32 %v9052, %v9053
    %v9055 = vrot.slane %v9054, 1
    %v9056 = vadd.f32 %v9054, %v9055
    %s9057 = vtos %v9056
    %v9058 = vstv %s3557
    %v9059 = vrcp.pop %v9058
    %v9060 = vmul.f32 %v9058, %v9059
    %v9061 = vsub.f32 1.0, %v9060
    %v9062 = vmul.f32 %v9059, %v9061
    %v9063 = vadd.f32 %v9059, %v9062
    %vm9064 = vweird.f32 %v9058
    %vm9065 = vweird.f32 %v9059
    %vm9066 = vmor %vm9064, %vm9065
    %v9067 = vsel %vm9066, %v9059, %v9063
    %v9068 = vand.u32 2147483647, %v9058
    %vm9069 = vcmp.eq.f32.partialorder %v9068, 8.507059e+37
    %v9070 = vand.u32 %v9058, 2147483648
    %v9071 = vor.u32 1.1754944e-38, %v9070
    %v9072 = vsel %vm9069, %v9071, %v9067
    %s9073 = vtos %v9072
    %s9074 = smul.f32 %s9057, %s9073
    %v9075 = vstv %s9074
    %v9076 = vrsqrt.pop %v9075
    %v9077 = vmul.f32 %v9076, %v9075
    %v9078 = vmul.f32 %v9077, %v9076
    %v9079 = vmul.f32 0.5, %v9078
    %v9080 = vsub.f32 1.5, %v9079
    %v9081 = vmul.f32 %v9076, %v9080
    %v9082 = vmul.f32 %v9075, %v9081
    %vm9083 = vcmp.eq.f32.partialorder %v9075, inf
    %v9084 = vsel %vm9083, %v9075, %v9082
    %vm9085 = vcmp.eq.f32.partialorder %v9075, 0.0
    %v9086 = vand.u32 %v9075, 2147483648
    %v9087 = vsel %vm9085, %v9086, %v9084
    %s9088 = vtos %v9087
    %s9089 = sadd.f32 %s9088, 1e-05
    %v9090 = vstv %s9089
    %v9091 = vrcp.pop %v9090
    %v9092 = vmul.f32 %v9090, %v9091
    %v9093 = vsub.f32 1.0, %v9092
    %v9094 = vmul.f32 %v9091, %v9093
    %v9095 = vadd.f32 %v9091, %v9094
    %vm9096 = vweird.f32 %v9090
    %vm9097 = vweird.f32 %v9091
    %vm9098 = vmor %vm9096, %vm9097
    %v9099 = vsel %vm9098, %v9091, %v9095
    %v9100 = vand.u32 2147483647, %v9090
    %vm9101 = vcmp.eq.f32.partialorder %v9100, 8.507059e+37
    %v9102 = vand.u32 %v9090, 2147483648
    %v9103 = vor.u32 1.1754944e-38, %v9102
    %v9104 = vsel %vm9101, %v9103, %v9099
    %v9105 = vmul.f32 %v9030, %v9104
    %v9106 = vmul.f32 %v9031, %v9104
    %v9107 = vmul.f32 %v9032, %v9104
    %v9108 = vmul.f32 %v9033, %v9104
    %v9109 = vperm.slane %v7822, 1
    %v9110 = vmul.f32 %v9105, %v9109
    %v9111 = vmul.f32 %v9106, %v9109
    %v9112 = vmul.f32 %v9107, %v9109
    %v9113 = vmul.f32 %v9108, %v9109
    %v9114 = vperm.slane %v7824, 1
    %v9115 = vadd.f32 %v9110, %v9114
    %v9116 = vadd.f32 %v9111, %v9114
    %v9117 = vadd.f32 %v9112, %v9114
    %v9118 = vadd.f32 %v9113, %v9114
    %v9119 = vmax.f32 %v9115, 0.0
    %v9120 = vmax.f32 %v9116, 0.0
    %v9121 = vmax.f32 %v9117, 0.0
    %v9122 = vmax.f32 %v9118, 0.0
    %v9123 = vadd.f32 %v8466, %v9119
    %v9124 = vadd.f32 %v8467, %v9120
    %v9125 = vadd.f32 %v8468, %v9121
    %v9126 = vadd.f32 %v8469, %v9122
    %v9159 = vperm.slane %v6147, %v3021
    %v9160 = vperm.slane %v6149, %v3023
    %v9161 = vsel %vm3025, %v9160, %v9159
    %v9162 = vperm.slane %v6151, %v3027
    %v9163 = vsel %vm3029, %v9162, %v9161
    %v9164 = vperm.slane %v6153, %v3031
    %v9165 = vsel %vm3033, %v9164, %v9163
    %v9166 = vperm.slane %v6155, %v3021
    %v9167 = vperm.slane %v6157, %v3023
    %v9168 = vsel %vm3025, %v9167, %v9166
    %v9169 = vperm.slane %v6159, %v3027
    %v9170 = vsel %vm3029, %v9169, %v9168
    %v9171 = vperm.slane %v6161, %v3031
    %v9172 = vsel %vm3033, %v9171, %v9170
    %v9173 = vperm.slane %v6163, %v3021
    %v9174 = vperm.slane %v6165, %v3023
    %v9175 = vsel %vm3025, %v9174, %v9173
    %v9176 = vperm.slane %v6167, %v3027
    %v9177 = vsel %vm3029, %v9176, %v9175
    %v9178 = vperm.slane %v6169, %v3031
    %v9179 = vsel %vm3033, %v9178, %v9177
    %v9180 = vperm.slane %v6171, %v3021
    %v9181 = vperm.slane %v6173, %v3023
    %v9182 = vsel %vm3025, %v9181, %v9180
    %v9183 = vperm.slane %v6175, %v3027
    %v9184 = vsel %vm3029, %v9183, %v9182
    %v9185 = vperm.slane %v6177, %v3031
    %v9186 = vsel %vm3033, %v9185, %v9184
    %v9187 = vperm.slane %v6179, %v3021
    %v9188 = vperm.slane %v6181, %v3023
    %v9189 = vsel %vm3025, %v9188, %v9187
    %v9190 = vperm.slane %v6183, %v3027
    %v9191 = vsel %vm3029, %v9190, %v9189
    %v9192 = vperm.slane %v6185, %v3031
    %v9193 = vsel %vm3033, %v9192, %v9191
    %v9194 = vperm.slane %v6187, %v3021
    %v9195 = vperm.slane %v6189, %v3023
    %v9196 = vsel %vm3025, %v9195, %v9194
    %v9197 = vperm.slane %v6191, %v3027
    %v9198 = vsel %vm3029, %v9197, %v9196
    %v9199 = vperm.slane %v6193, %v3031
    %v9200 = vsel %vm3033, %v9199, %v9198
    %v9201 = vperm.slane %v6195, %v3021
    %v9202 = vperm.slane %v6197, %v3023
    %v9203 = vsel %vm3025, %v9202, %v9201
    %v9204 = vperm.slane %v6199, %v3027
    %v9205 = vsel %vm3029, %v9204, %v9203
    %v9206 = vperm.slane %v6201, %v3031
    %v9207 = vsel %vm3033, %v9206, %v9205
    %v9208 = vperm.slane %v6203, %v3021
    %v9209 = vperm.slane %v6205, %v3023
    %v9210 = vsel %vm3025, %v9209, %v9208
    %v9211 = vperm.slane %v6207, %v3027
    %v9212 = vsel %vm3029, %v9211, %v9210
    %v9213 = vperm.slane %v6209, %v3031
    %v9214 = vsel %vm3033, %v9213, %v9212
    %v9215 = vsel %vm3084, %v9172, %v9165
    %v9216 = vsel %vm3086, %v9179, %v9215
    %v9217 = vsel %vm3088, %v9186, %v9216
    %v9218 = vsel %vm3090, %v9193, %v9217
    %v9219 = vsel %vm3092, %v9200, %v9218
    %v9220 = vsel %vm3094, %v9207, %v9219
    %v9221 = vsel %vm3096, %v9214, %v9220
    %v9255 = vperm.slane %v6652, %v3021
    %v9256 = vperm.slane %v6654, %v3023
    %v9257 = vsel %vm3025, %v9256, %v9255
    %v9258 = vperm.slane %v6656, %v3027
    %v9259 = vsel %vm3029, %v9258, %v9257
    %v9260 = vperm.slane %v6658, %v3031
    %v9261 = vsel %vm3033, %v9260, %v9259
    %v9262 = vperm.slane %v6660, %v3021
    %v9263 = vperm.slane %v6662, %v3023
    %v9264 = vsel %vm3025, %v9263, %v9262
    %v9265 = vperm.slane %v6664, %v3027
    %v9266 = vsel %vm3029, %v9265, %v9264
    %v9267 = vperm.slane %v6666, %v3031
    %v9268 = vsel %vm3033, %v9267, %v9266
    %v9269 = vperm.slane %v6668, %v3021
    %v9270 = vperm.slane %v6670, %v3023
    %v9271 = vsel %vm3025, %v9270, %v9269
    %v9272 = vperm.slane %v6672, %v3027
    %v9273 = vsel %vm3029, %v9272, %v9271
    %v9274 = vperm.slane %v6674, %v3031
    %v9275 = vsel %vm3033, %v9274, %v9273
    %v9276 = vperm.slane %v6676, %v3021
    %v9277 = vperm.slane %v6678, %v3023
    %v9278 = vsel %vm3025, %v9277, %v9276
    %v9279 = vperm.slane %v6680, %v3027
    %v9280 = vsel %vm3029, %v9279, %v9278
    %v9281 = vperm.slane %v6682, %v3031
    %v9282 = vsel %vm3033, %v9281, %v9280
    %v9283 = vperm.slane %v6684, %v3021
    %v9284 = vperm.slane %v6686, %v3023
    %v9285 = vsel %vm3025, %v9284, %v9283
    %v9286 = vperm.slane %v6688, %v3027
    %v9287 = vsel %vm3029, %v9286, %v9285
    %v9288 = vperm.slane %v6690, %v3031
    %v9289 = vsel %vm3033, %v9288, %v9287
    %v9290 = vperm.slane %v6692, %v3021
    %v9291 = vperm.slane %v6694, %v3023
    %v9292 = vsel %vm3025, %v9291, %v9290
    %v9293 = vperm.slane %v6696, %v3027
    %v9294 = vsel %vm3029, %v9293, %v9292
    %v9295 = vperm.slane %v6698, %v3031
    %v9296 = vsel %vm3033, %v9295, %v9294
    %v9297 = vperm.slane %v6700, %v3021
    %v9298 = vperm.slane %v6702, %v3023
    %v9299 = vsel %vm3025, %v9298, %v9297
    %v9300 = vperm.slane %v6704, %v3027
    %v9301 = vsel %vm3029, %v9300, %v9299
    %v9302 = vperm.slane %v6706, %v3031
    %v9303 = vsel %vm3033, %v9302, %v9301
    %v9304 = vperm.slane %v6708, %v3021
    %v9305 = vperm.slane %v6710, %v3023
    %v9306 = vsel %vm3025, %v9305, %v9304
    %v9307 = vperm.slane %v6712, %v3027
    %v9308 = vsel %vm3029, %v9307, %v9306
    %v9309 = vperm.slane %v6714, %v3031
    %v9310 = vsel %vm3033, %v9309, %v9308
    %v9311 = vsel %vm3084, %v9268, %v9261
    %v9312 = vsel %vm3086, %v9275, %v9311
    %v9313 = vsel %vm3088, %v9282, %v9312
    %v9314 = vsel %vm3090, %v9289, %v9313
    %v9315 = vsel %vm3092, %v9296, %v9314
    %v9316 = vsel %vm3094, %v9303, %v9315
    %v9317 = vsel %vm3096, %v9310, %v9316
    %v9351 = vperm.slane %v7156, %v3021
    %v9352 = vperm.slane %v7158, %v3023
    %v9353 = vsel %vm3025, %v9352, %v9351
    %v9354 = vperm.slane %v7160, %v3027
    %v9355 = vsel %vm3029, %v9354, %v9353
    %v9356 = vperm.slane %v7162, %v3031
    %v9357 = vsel %vm3033, %v9356, %v9355
    %v9358 = vperm.slane %v7164, %v3021
    %v9359 = vperm.slane %v7166, %v3023
    %v9360 = vsel %vm3025, %v9359, %v9358
    %v9361 = vperm.slane %v7168, %v3027
    %v9362 = vsel %vm3029, %v9361, %v9360
    %v9363 = vperm.slane %v7170, %v3031
    %v9364 = vsel %vm3033, %v9363, %v9362
    %v9365 = vperm.slane %v7172, %v3021
    %v9366 = vperm.slane %v7174, %v3023
    %v9367 = vsel %vm3025, %v9366, %v9365
    %v9368 = vperm.slane %v7176, %v3027
    %v9369 = vsel %vm3029, %v9368, %v9367
    %v9370 = vperm.slane %v7178, %v3031
    %v9371 = vsel %vm3033, %v9370, %v9369
    %v9372 = vperm.slane %v7180, %v3021
    %v9373 = vperm.slane %v7182, %v3023
    %v9374 = vsel %vm3025, %v9373, %v9372
    %v9375 = vperm.slane %v7184, %v3027
    %v9376 = vsel %vm3029, %v9375, %v9374
    %v9377 = vperm.slane %v7186, %v3031
    %v9378 = vsel %vm3033, %v9377, %v9376
    %v9379 = vperm.slane %v7188, %v3021
    %v9380 = vperm.slane %v7190, %v3023
    %v9381 = vsel %vm3025, %v9380, %v9379
    %v9382 = vperm.slane %v7192, %v3027
    %v9383 = vsel %vm3029, %v9382, %v9381
    %v9384 = vperm.slane %v7194, %v3031
    %v9385 = vsel %vm3033, %v9384, %v9383
    %v9386 = vperm.slane %v7196, %v3021
    %v9387 = vperm.slane %v7198, %v3023
    %v9388 = vsel %vm3025, %v9387, %v9386
    %v9389 = vperm.slane %v7200, %v3027
    %v9390 = vsel %vm3029, %v9389, %v9388
    %v9391 = vperm.slane %v7202, %v3031
    %v9392 = vsel %vm3033, %v9391, %v9390
    %v9393 = vperm.slane %v7204, %v3021
    %v9394 = vperm.slane %v7206, %v3023
    %v9395 = vsel %vm3025, %v9394, %v9393
    %v9396 = vperm.slane %v7208, %v3027
    %v9397 = vsel %vm3029, %v9396, %v9395
    %v9398 = vperm.slane %v7210, %v3031
    %v9399 = vsel %vm3033, %v9398, %v9397
    %v9400 = vperm.slane %v7212, %v3021
    %v9401 = vperm.slane %v7214, %v3023
    %v9402 = vsel %vm3025, %v9401, %v9400
    %v9403 = vperm.slane %v7216, %v3027
    %v9404 = vsel %vm3029, %v9403, %v9402
    %v9405 = vperm.slane %v7218, %v3031
    %v9406 = vsel %vm3033, %v9405, %v9404
    %v9407 = vsel %vm3084, %v9364, %v9357
    %v9408 = vsel %vm3086, %v9371, %v9407
    %v9409 = vsel %vm3088, %v9378, %v9408
    %v9410 = vsel %vm3090, %v9385, %v9409
    %v9411 = vsel %vm3092, %v9392, %v9410
    %v9412 = vsel %vm3094, %v9399, %v9411
    %v9413 = vsel %vm3096, %v9406, %v9412
    %v9447 = vperm.slane %v7660, %v3021
    %v9448 = vperm.slane %v7662, %v3023
    %v9449 = vsel %vm3025, %v9448, %v9447
    %v9450 = vperm.slane %v7664, %v3027
    %v9451 = vsel %vm3029, %v9450, %v9449
    %v9452 = vperm.slane %v7666, %v3031
    %v9453 = vsel %vm3033, %v9452, %v9451
    %v9454 = vperm.slane %v7668, %v3021
    %v9455 = vperm.slane %v7670, %v3023
    %v9456 = vsel %vm3025, %v9455, %v9454
    %v9457 = vperm.slane %v7672, %v3027
    %v9458 = vsel %vm3029, %v9457, %v9456
    %v9459 = vperm.slane %v7674, %v3031
    %v9460 = vsel %vm3033, %v9459, %v9458
    %v9461 = vperm.slane %v7676, %v3021
    %v9462 = vperm.slane %v7678, %v3023
    %v9463 = vsel %vm3025, %v9462, %v9461
    %v9464 = vperm.slane %v7680, %v3027
    %v9465 = vsel %vm3029, %v9464, %v9463
    %v9466 = vperm.slane %v7682, %v3031
    %v9467 = vsel %vm3033, %v9466, %v9465
    %v9468 = vperm.slane %v7684, %v3021
    %v9469 = vperm.slane %v7686, %v3023
    %v9470 = vsel %vm3025, %v9469, %v9468
    %v9471 = vperm.slane %v7688, %v3027
    %v9472 = vsel %vm3029, %v9471, %v9470
    %v9473 = vperm.slane %v7690, %v3031
    %v9474 = vsel %vm3033, %v9473, %v9472
    %v9475 = vperm.slane %v7692, %v3021
    %v9476 = vperm.slane %v7694, %v3023
    %v9477 = vsel %vm3025, %v9476, %v9475
    %v9478 = vperm.slane %v7696, %v3027
    %v9479 = vsel %vm3029, %v9478, %v9477
    %v9480 = vperm.slane %v7698, %v3031
    %v9481 = vsel %vm3033, %v9480, %v9479
    %v9482 = vperm.slane %v7700, %v3021
    %v9483 = vperm.slane %v7702, %v3023
    %v9484 = vsel %vm3025, %v9483, %v9482
    %v9485 = vperm.slane %v7704, %v3027
    %v9486 = vsel %vm3029, %v9485, %v9484
    %v9487 = vperm.slane %v7706, %v3031
    %v9488 = vsel %vm3033, %v9487, %v9486
    %v9489 = vperm.slane %v7708, %v3021
    %v9490 = vperm.slane %v7710, %v3023
    %v9491 = vsel %vm3025, %v9490, %v9489
    %v9492 = vperm.slane %v7712, %v3027
    %v9493 = vsel %vm3029, %v9492, %v9491
    %v9494 = vperm.slane %v7714, %v3031
    %v9495 = vsel %vm3033, %v9494, %v9493
    %v9496 = vperm.slane %v7716, %v3021
    %v9497 = vperm.slane %v7718, %v3023
    %v9498 = vsel %vm3025, %v9497, %v9496
    %v9499 = vperm.slane %v7720, %v3027
    %v9500 = vsel %vm3029, %v9499, %v9498
    %v9501 = vperm.slane %v7722, %v3031
    %v9502 = vsel %vm3033, %v9501, %v9500
    %v9503 = vsel %vm3084, %v9460, %v9453
    %v9504 = vsel %vm3086, %v9467, %v9503
    %v9505 = vsel %vm3088, %v9474, %v9504
    %v9506 = vsel %vm3090, %v9481, %v9505
    %v9507 = vsel %vm3092, %v9488, %v9506
    %v9508 = vsel %vm3094, %v9495, %v9507
    %v9509 = vsel %vm3096, %v9502, %v9508
    %v9511 = vsel %vm4728, %v9221, -1e+30
    %v9512 = vsel %vm4729, %v9317, -1e+30
    %v9513 = vsel %vm4730, %v9413, -1e+30
    %v9514 = vsel %vm4731, %v9509, -1e+30
    %v9515 = vsel %vm284, %v9511, -inf
    %v9516 = vsel %vm284, %v9512, -inf
    %v9517 = vsel %vm284, %v9513, -inf
    %v9518 = vsel %vm284, %v9514, -inf
    %v9519 = vmax.f32 %v9515, %v9516
    %v9520 = vmax.f32 %v9517, %v9518
    %v9521 = vmax.f32 %v9519, %v9520
    %v9522 = vrot.slane %v9521, 4
    %v9523 = vmax.f32 %v9521, %v9522
    %v9524 = vrot.slane %v9523, 2
    %v9525 = vmax.f32 %v9523, %v9524
    %v9526 = vrot.slane %v9525, 1
    %v9527 = vmax.f32 %v9525, %v9526
    %v9528 = vsub.f32 %v9511, %v9527
    %v9529 = vsub.f32 %v9512, %v9527
    %v9530 = vsub.f32 %v9513, %v9527
    %v9531 = vsub.f32 %v9514, %v9527
    %v9532 = vmul.f32 %v9528, 1.442695
    %v9533 = vpow.pop %v9532
    %v9534 = vmul.f32 %v9529, 1.442695
    %v9535 = vpow.pop %v9534
    %v9536 = vmul.f32 %v9530, 1.442695
    %v9537 = vpow.pop %v9536
    %v9538 = vmul.f32 %v9531, 1.442695
    %v9539 = vpow.pop %v9538
    %v9540 = vmul.f32 %v9533, %v4724
    %v9541 = vmul.f32 %v9535, %v4725
    %v9542 = vmul.f32 %v9537, %v4726
    %v9543 = vmul.f32 %v9539, %v4727
    %v9544 = vsel %vm284, %v9540, 0.0
    %v9545 = vsel %vm284, %v9541, 0.0
    %v9546 = vadd.f32 %v9544, %v9545
    %v9547 = vsel %vm284, %v9542, 0.0
    %v9548 = vadd.f32 %v9546, %v9547
    %v9549 = vsel %vm284, %v9543, 0.0
    %v9550 = vadd.f32 %v9548, %v9549
    %v9551 = vrot.slane %v9550, 4
    %v9552 = vadd.f32 %v9550, %v9551
    %v9553 = vrot.slane %v9552, 2
    %v9554 = vadd.f32 %v9552, %v9553
    %v9555 = vrot.slane %v9554, 1
    %v9556 = vadd.f32 %v9554, %v9555
    %v9557 = vmax.f32 %v9556, 1e-30
    %v9558 = vrcp.pop %v9557
    %v9559 = vmul.f32 %v9540, %v9558
    %v9560 = vmul.f32 %v9541, %v9558
    %v9561 = vmul.f32 %v9542, %v9558
    %v9562 = vmul.f32 %v9543, %v9558
    %9563 = vxpose.xlu0.b32.start [1/16] %v9559, 128
    %9564 = vxpose.xlu0.b32.cont [2/16] %v9560, 128
    %9565 = vxpose.xlu0.b32.cont [3/16] %v9561, 128
    %9566 = vxpose.xlu0.b32.cont [4/16] %v9562, 128
    %9567 = vxpose.xlu0.b32.cont [5/16] 0.0, 128
    %9568 = vxpose.xlu0.b32.cont [6/16] 0.0, 128
    %9569 = vxpose.xlu0.b32.cont [7/16] 0.0, 128
    %9570 = vxpose.xlu0.b32.cont [8/16] 0.0, 128
    %9571 = vxpose.xlu0.b32.cont [9/16] 0.0, 128
    %9572 = vxpose.xlu0.b32.cont [10/16] 0.0, 128
    %9573 = vxpose.xlu0.b32.cont [11/16] 0.0, 128
    %9574 = vxpose.xlu0.b32.cont [12/16] 0.0, 128
    %9575 = vxpose.xlu0.b32.cont [13/16] 0.0, 128
    %9576 = vxpose.xlu0.b32.cont [14/16] 0.0, 128
    %9577 = vxpose.xlu0.b32.cont [15/16] 0.0, 128
    %9578 = vxpose.xlu0.b32.end [16/16] 0.0, 128
    %v9579 = vpop.trf.xlu0
    %v9580 = vpop.trf.xlu0
    %v9581 = vpop.trf.xlu0
    %v9582 = vpop.trf.xlu0
    %v9583 = vpop.trf.xlu0
    %v9584 = vpop.trf.xlu0
    %v9585 = vpop.trf.xlu0
    %v9586 = vpop.trf.xlu0
    %v9587 = vpop.trf.xlu0
    %v9588 = vpop.trf.xlu0
    %v9589 = vpop.trf.xlu0
    %v9590 = vpop.trf.xlu0
    %v9591 = vpop.trf.xlu0
    %v9592 = vpop.trf.xlu0
    %v9593 = vpop.trf.xlu0
    %v9594 = vpop.trf.xlu0
    %9595 = vrot.lane.b32.xlu0 %v5773, 64
    %v9596 = vpop.permute.xlu0 %9595
    %9597 = vrot.lane.b32.xlu0 %v5774, 64
    %v9598 = vpop.permute.xlu0 %9597
    %9599 = vrot.lane.b32.xlu0 %v5775, 64
    %v9600 = vpop.permute.xlu0 %9599
    %9601 = vrot.lane.b32.xlu0 %v5776, 64
    %v9602 = vpop.permute.xlu0 %9601
    %v9608 = vsel %vm284, %v9579, 0
    %v9611 = vsel %vm284, %v9580, 0
    %v9614 = vsel %vm284, %v9581, 0
    %v9617 = vsel %vm284, %v9582, 0
    %9619 = vmatpush.msra.mxu0 0.0
    %9620 = vmatpush.msra.mxu0 0.0
    %9621 = vmatpush.msra.mxu0 0.0
    %9622 = vmatpush.msra.mxu0 0.0
    %9623 = vmatpush.msra.mxu0 0.0
    %9624 = vmatpush.msra.mxu0 0.0
    %9625 = vmatpush.msra.mxu0 0.0
    %9626 = vmatpush.msra.mxu0 0.0
    %9627 = vmatpush.msra.mxu0 0.0
    %9628 = vmatpush.msra.mxu0 0.0
    %9629 = vmatpush.msra.mxu0 0.0
    %9630 = vmatpush.msra.mxu0 0.0
    %9631 = vmatpush.msra.mxu0 %v9602
    %9632 = vmatpush.msra.mxu0 %v9600
    %9633 = vmatpush.msra.mxu0 %v9598
    %9634 = vmatpush.msra.mxu0 %v9596
    %9635 = vmatmul.f32.gmra.mxu0 %v9608
    %v9636 = vpop.f32.mrf.mxu0
    %v9637 = vadd.f32 %v8261, %v9636
    %9638 = vmatmul.f32.gmra.mxu0 %v9611
    %v9639 = vpop.f32.mrf.mxu0
    %v9640 = vadd.f32 %v8261, %v9639
    %9641 = vmatmul.f32.gmra.mxu0 %v9614
    %v9642 = vpop.f32.mrf.mxu0
    %v9643 = vadd.f32 %v8261, %v9642
    %9644 = vmatmul.f32.gmra.mxu0 %v9617
    %v9645 = vpop.f32.mrf.mxu0
    %v9646 = vadd.f32 %v8261, %v9645
    %9647 = vdwg.mxu0
    %v9648 = vmul.f32 %v9637, %v4871
    %v9649 = vmul.f32 %v9640, %v4875
    %v9650 = vmul.f32 %v9643, %v4879
    %v9651 = vmul.f32 %v9646, %v4883
    %v9652 = vsel %vm284, %v9648, 0.0
    %v9653 = vsel %vm284, %v9649, 0.0
    %v9654 = vadd.f32 %v9652, %v9653
    %v9655 = vsel %vm284, %v9650, 0.0
    %v9656 = vadd.f32 %v9654, %v9655
    %v9657 = vsel %vm284, %v9651, 0.0
    %v9658 = vadd.f32 %v9656, %v9657
    %9659 = vadd.xlane.f32.xlu0 %v9658
    %v9660 = vpop.xlane.xlu0 %9659
    %v9661 = vrot.slane %v9660, 4
    %v9662 = vadd.f32 %v9660, %v9661
    %v9663 = vrot.slane %v9662, 2
    %v9664 = vadd.f32 %v9662, %v9663
    %v9665 = vrot.slane %v9664, 1
    %v9666 = vadd.f32 %v9664, %v9665
    %s9667 = vtos %v9666
    %v9668 = vstv %s4905
    %v9669 = vrcp.pop %v9668
    %v9670 = vmul.f32 %v9668, %v9669
    %v9671 = vsub.f32 1.0, %v9670
    %v9672 = vmul.f32 %v9669, %v9671
    %v9673 = vadd.f32 %v9669, %v9672
    %vm9674 = vweird.f32 %v9668
    %vm9675 = vweird.f32 %v9669
    %vm9676 = vmor %vm9674, %vm9675
    %v9677 = vsel %vm9676, %v9669, %v9673
    %v9678 = vand.u32 2147483647, %v9668
    %vm9679 = vcmp.eq.f32.partialorder %v9678, 8.507059e+37
    %v9680 = vand.u32 %v9668, 2147483648
    %v9681 = vor.u32 1.1754944e-38, %v9680
    %v9682 = vsel %vm9679, %v9681, %v9677
    %s9683 = vtos %v9682
    %s9684 = smul.f32 %s9667, %s9683
    %v9685 = vstv %s9684
    %v9686 = vsub.f32 %v9637, %v9685
    %v9687 = vsub.f32 %v9640, %v9685
    %v9688 = vsub.f32 %v9643, %v9685
    %v9689 = vsub.f32 %v9646, %v9685
    %v9690 = vmul.f32 %v9686, %v4871
    %v9691 = vmul.f32 %v9687, %v4875
    %v9692 = vmul.f32 %v9688, %v4879
    %v9693 = vmul.f32 %v9689, %v4883
    %v9694 = vmul.f32 %v9690, %v9690
    %v9695 = vmul.f32 %v9691, %v9691
    %v9696 = vmul.f32 %v9692, %v9692
    %v9697 = vmul.f32 %v9693, %v9693
    %v9698 = vsel %vm284, %v9694, 0.0
    %v9699 = vsel %vm284, %v9695, 0.0
    %v9700 = vadd.f32 %v9698, %v9699
    %v9701 = vsel %vm284, %v9696, 0.0
    %v9702 = vadd.f32 %v9700, %v9701
    %v9703 = vsel %vm284, %v9697, 0.0
    %v9704 = vadd.f32 %v9702, %v9703
    %9705 = vadd.xlane.f32.xlu0 %v9704
    %v9706 = vpop.xlane.xlu0 %9705
    %v9707 = vrot.slane %v9706, 4
    %v9708 = vadd.f32 %v9706, %v9707
    %v9709 = vrot.slane %v9708, 2
    %v9710 = vadd.f32 %v9708, %v9709
    %v9711 = vrot.slane %v9710, 1
    %v9712 = vadd.f32 %v9710, %v9711
    %s9713 = vtos %v9712
    %v9714 = vstv %s4905
    %v9715 = vrcp.pop %v9714
    %v9716 = vmul.f32 %v9714, %v9715
    %v9717 = vsub.f32 1.0, %v9716
    %v9718 = vmul.f32 %v9715, %v9717
    %v9719 = vadd.f32 %v9715, %v9718
    %vm9720 = vweird.f32 %v9714
    %vm9721 = vweird.f32 %v9715
    %vm9722 = vmor %vm9720, %vm9721
    %v9723 = vsel %vm9722, %v9715, %v9719
    %v9724 = vand.u32 2147483647, %v9714
    %vm9725 = vcmp.eq.f32.partialorder %v9724, 8.507059e+37
    %v9726 = vand.u32 %v9714, 2147483648
    %v9727 = vor.u32 1.1754944e-38, %v9726
    %v9728 = vsel %vm9725, %v9727, %v9723
    %s9729 = vtos %v9728
    %s9730 = smul.f32 %s9713, %s9729
    %v9731 = vstv %s9730
    %v9732 = vrsqrt.pop %v9731
    %v9733 = vmul.f32 %v9732, %v9731
    %v9734 = vmul.f32 %v9733, %v9732
    %v9735 = vmul.f32 0.5, %v9734
    %v9736 = vsub.f32 1.5, %v9735
    %v9737 = vmul.f32 %v9732, %v9736
    %v9738 = vmul.f32 %v9731, %v9737
    %vm9739 = vcmp.eq.f32.partialorder %v9731, inf
    %v9740 = vsel %vm9739, %v9731, %v9738
    %vm9741 = vcmp.eq.f32.partialorder %v9731, 0.0
    %v9742 = vand.u32 %v9731, 2147483648
    %v9743 = vsel %vm9741, %v9742, %v9740
    %s9744 = vtos %v9743
    %s9745 = sadd.f32 %s9744, 1e-05
    %v9746 = vstv %s9745
    %v9747 = vrcp.pop %v9746
    %v9748 = vmul.f32 %v9746, %v9747
    %v9749 = vsub.f32 1.0, %v9748
    %v9750 = vmul.f32 %v9747, %v9749
    %v9751 = vadd.f32 %v9747, %v9750
    %vm9752 = vweird.f32 %v9746
    %vm9753 = vweird.f32 %v9747
    %vm9754 = vmor %vm9752, %vm9753
    %v9755 = vsel %vm9754, %v9747, %v9751
    %v9756 = vand.u32 2147483647, %v9746
    %vm9757 = vcmp.eq.f32.partialorder %v9756, 8.507059e+37
    %v9758 = vand.u32 %v9746, 2147483648
    %v9759 = vor.u32 1.1754944e-38, %v9758
    %v9760 = vsel %vm9757, %v9759, %v9755
    %v9761 = vmul.f32 %v9686, %v9760
    %v9762 = vmul.f32 %v9687, %v9760
    %v9763 = vmul.f32 %v9688, %v9760
    %v9764 = vmul.f32 %v9689, %v9760
    %v9765 = vmul.f32 %v9761, %v8452
    %v9766 = vmul.f32 %v9762, %v8452
    %v9767 = vmul.f32 %v9763, %v8452
    %v9768 = vmul.f32 %v9764, %v8452
    %v9769 = vadd.f32 %v9765, %v8457
    %v9770 = vadd.f32 %v9766, %v8457
    %v9771 = vadd.f32 %v9767, %v8457
    %v9772 = vadd.f32 %v9768, %v8457
    %v9773 = vmax.f32 %v9769, 0.0
    %v9774 = vmax.f32 %v9770, 0.0
    %v9775 = vmax.f32 %v9771, 0.0
    %v9776 = vmax.f32 %v9772, 0.0
    %v9777 = vadd.f32 %v9773, 0.0
    %v9778 = vadd.f32 %v9774, 0.0
    %v9779 = vadd.f32 %v9775, 0.0
    %v9780 = vadd.f32 %v9776, 0.0
    %v9813 = vperm.slane %v6244, %v3021
    %v9814 = vperm.slane %v6246, %v3023
    %v9815 = vsel %vm3025, %v9814, %v9813
    %v9816 = vperm.slane %v6248, %v3027
    %v9817 = vsel %vm3029, %v9816, %v9815
    %v9818 = vperm.slane %v6250, %v3031
    %v9819 = vsel %vm3033, %v9818, %v9817
    %v9820 = vperm.slane %v6252, %v3021
    %v9821 = vperm.slane %v6254, %v3023
    %v9822 = vsel %vm3025, %v9821, %v9820
    %v9823 = vperm.slane %v6256, %v3027
    %v9824 = vsel %vm3029, %v9823, %v9822
    %v9825 = vperm.slane %v6258, %v3031
    %v9826 = vsel %vm3033, %v9825, %v9824
    %v9827 = vperm.slane %v6260, %v3021
    %v9828 = vperm.slane %v6262, %v3023
    %v9829 = vsel %vm3025, %v9828, %v9827
    %v9830 = vperm.slane %v6264, %v3027
    %v9831 = vsel %vm3029, %v9830, %v9829
    %v9832 = vperm.slane %v6266, %v3031
    %v9833 = vsel %vm3033, %v9832, %v9831
    %v9834 = vperm.slane %v6268, %v3021
    %v9835 = vperm.slane %v6270, %v3023
    %v9836 = vsel %vm3025, %v9835, %v9834
    %v9837 = vperm.slane %v6272, %v3027
    %v9838 = vsel %vm3029, %v9837, %v9836
    %v9839 = vperm.slane %v6274, %v3031
    %v9840 = vsel %vm3033, %v9839, %v9838
    %v9841 = vperm.slane %v6276, %v3021
    %v9842 = vperm.slane %v6278, %v3023
    %v9843 = vsel %vm3025, %v9842, %v9841
    %v9844 = vperm.slane %v6280, %v3027
    %v9845 = vsel %vm3029, %v9844, %v9843
    %v9846 = vperm.slane %v6282, %v3031
    %v9847 = vsel %vm3033, %v9846, %v9845
    %v9848 = vperm.slane %v6284, %v3021
    %v9849 = vperm.slane %v6286, %v3023
    %v9850 = vsel %vm3025, %v9849, %v9848
    %v9851 = vperm.slane %v6288, %v3027
    %v9852 = vsel %vm3029, %v9851, %v9850
    %v9853 = vperm.slane %v6290, %v3031
    %v9854 = vsel %vm3033, %v9853, %v9852
    %v9855 = vperm.slane %v6292, %v3021
    %v9856 = vperm.slane %v6294, %v3023
    %v9857 = vsel %vm3025, %v9856, %v9855
    %v9858 = vperm.slane %v6296, %v3027
    %v9859 = vsel %vm3029, %v9858, %v9857
    %v9860 = vperm.slane %v6298, %v3031
    %v9861 = vsel %vm3033, %v9860, %v9859
    %v9862 = vperm.slane %v6300, %v3021
    %v9863 = vperm.slane %v6302, %v3023
    %v9864 = vsel %vm3025, %v9863, %v9862
    %v9865 = vperm.slane %v6304, %v3027
    %v9866 = vsel %vm3029, %v9865, %v9864
    %v9867 = vperm.slane %v6306, %v3031
    %v9868 = vsel %vm3033, %v9867, %v9866
    %v9869 = vsel %vm3084, %v9826, %v9819
    %v9870 = vsel %vm3086, %v9833, %v9869
    %v9871 = vsel %vm3088, %v9840, %v9870
    %v9872 = vsel %vm3090, %v9847, %v9871
    %v9873 = vsel %vm3092, %v9854, %v9872
    %v9874 = vsel %vm3094, %v9861, %v9873
    %v9875 = vsel %vm3096, %v9868, %v9874
    %v9909 = vperm.slane %v6748, %v3021
    %v9910 = vperm.slane %v6750, %v3023
    %v9911 = vsel %vm3025, %v9910, %v9909
    %v9912 = vperm.slane %v6752, %v3027
    %v9913 = vsel %vm3029, %v9912, %v9911
    %v9914 = vperm.slane %v6754, %v3031
    %v9915 = vsel %vm3033, %v9914, %v9913
    %v9916 = vperm.slane %v6756, %v3021
    %v9917 = vperm.slane %v6758, %v3023
    %v9918 = vsel %vm3025, %v9917, %v9916
    %v9919 = vperm.slane %v6760, %v3027
    %v9920 = vsel %vm3029, %v9919, %v9918
    %v9921 = vperm.slane %v6762, %v3031
    %v9922 = vsel %vm3033, %v9921, %v9920
    %v9923 = vperm.slane %v6764, %v3021
    %v9924 = vperm.slane %v6766, %v3023
    %v9925 = vsel %vm3025, %v9924, %v9923
    %v9926 = vperm.slane %v6768, %v3027
    %v9927 = vsel %vm3029, %v9926, %v9925
    %v9928 = vperm.slane %v6770, %v3031
    %v9929 = vsel %vm3033, %v9928, %v9927
    %v9930 = vperm.slane %v6772, %v3021
    %v9931 = vperm.slane %v6774, %v3023
    %v9932 = vsel %vm3025, %v9931, %v9930
    %v9933 = vperm.slane %v6776, %v3027
    %v9934 = vsel %vm3029, %v9933, %v9932
    %v9935 = vperm.slane %v6778, %v3031
    %v9936 = vsel %vm3033, %v9935, %v9934
    %v9937 = vperm.slane %v6780, %v3021
    %v9938 = vperm.slane %v6782, %v3023
    %v9939 = vsel %vm3025, %v9938, %v9937
    %v9940 = vperm.slane %v6784, %v3027
    %v9941 = vsel %vm3029, %v9940, %v9939
    %v9942 = vperm.slane %v6786, %v3031
    %v9943 = vsel %vm3033, %v9942, %v9941
    %v9944 = vperm.slane %v6788, %v3021
    %v9945 = vperm.slane %v6790, %v3023
    %v9946 = vsel %vm3025, %v9945, %v9944
    %v9947 = vperm.slane %v6792, %v3027
    %v9948 = vsel %vm3029, %v9947, %v9946
    %v9949 = vperm.slane %v6794, %v3031
    %v9950 = vsel %vm3033, %v9949, %v9948
    %v9951 = vperm.slane %v6796, %v3021
    %v9952 = vperm.slane %v6798, %v3023
    %v9953 = vsel %vm3025, %v9952, %v9951
    %v9954 = vperm.slane %v6800, %v3027
    %v9955 = vsel %vm3029, %v9954, %v9953
    %v9956 = vperm.slane %v6802, %v3031
    %v9957 = vsel %vm3033, %v9956, %v9955
    %v9958 = vperm.slane %v6804, %v3021
    %v9959 = vperm.slane %v6806, %v3023
    %v9960 = vsel %vm3025, %v9959, %v9958
    %v9961 = vperm.slane %v6808, %v3027
    %v9962 = vsel %vm3029, %v9961, %v9960
    %v9963 = vperm.slane %v6810, %v3031
    %v9964 = vsel %vm3033, %v9963, %v9962
    %v9965 = vsel %vm3084, %v9922, %v9915
    %v9966 = vsel %vm3086, %v9929, %v9965
    %v9967 = vsel %vm3088, %v9936, %v9966
    %v9968 = vsel %vm3090, %v9943, %v9967
    %v9969 = vsel %vm3092, %v9950, %v9968
    %v9970 = vsel %vm3094, %v9957, %v9969
    %v9971 = vsel %vm3096, %v9964, %v9970
    %v10005 = vperm.slane %v7252, %v3021
    %v10006 = vperm.slane %v7254, %v3023
    %v10007 = vsel %vm3025, %v10006, %v10005
    %v10008 = vperm.slane %v7256, %v3027
    %v10009 = vsel %vm3029, %v10008, %v10007
    %v10010 = vperm.slane %v7258, %v3031
    %v10011 = vsel %vm3033, %v10010, %v10009
    %v10012 = vperm.slane %v7260, %v3021
    %v10013 = vperm.slane %v7262, %v3023
    %v10014 = vsel %vm3025, %v10013, %v10012
    %v10015 = vperm.slane %v7264, %v3027
    %v10016 = vsel %vm3029, %v10015, %v10014
    %v10017 = vperm.slane %v7266, %v3031
    %v10018 = vsel %vm3033, %v10017, %v10016
    %v10019 = vperm.slane %v7268, %v3021
    %v10020 = vperm.slane %v7270, %v3023
    %v10021 = vsel %vm3025, %v10020, %v10019
    %v10022 = vperm.slane %v7272, %v3027
    %v10023 = vsel %vm3029, %v10022, %v10021
    %v10024 = vperm.slane %v7274, %v3031
    %v10025 = vsel %vm3033, %v10024, %v10023
    %v10026 = vperm.slane %v7276, %v3021
    %v10027 = vperm.slane %v7278, %v3023
    %v10028 = vsel %vm3025, %v10027, %v10026
    %v10029 = vperm.slane %v7280, %v3027
    %v10030 = vsel %vm3029, %v10029, %v10028
    %v10031 = vperm.slane %v7282, %v3031
    %v10032 = vsel %vm3033, %v10031, %v10030
    %v10033 = vperm.slane %v7284, %v3021
    %v10034 = vperm.slane %v7286, %v3023
    %v10035 = vsel %vm3025, %v10034, %v10033
    %v10036 = vperm.slane %v7288, %v3027
    %v10037 = vsel %vm3029, %v10036, %v10035
    %v10038 = vperm.slane %v7290, %v3031
    %v10039 = vsel %vm3033, %v10038, %v10037
    %v10040 = vperm.slane %v7292, %v3021
    %v10041 = vperm.slane %v7294, %v3023
    %v10042 = vsel %vm3025, %v10041, %v10040
    %v10043 = vperm.slane %v7296, %v3027
    %v10044 = vsel %vm3029, %v10043, %v10042
    %v10045 = vperm.slane %v7298, %v3031
    %v10046 = vsel %vm3033, %v10045, %v10044
    %v10047 = vperm.slane %v7300, %v3021
    %v10048 = vperm.slane %v7302, %v3023
    %v10049 = vsel %vm3025, %v10048, %v10047
    %v10050 = vperm.slane %v7304, %v3027
    %v10051 = vsel %vm3029, %v10050, %v10049
    %v10052 = vperm.slane %v7306, %v3031
    %v10053 = vsel %vm3033, %v10052, %v10051
    %v10054 = vperm.slane %v7308, %v3021
    %v10055 = vperm.slane %v7310, %v3023
    %v10056 = vsel %vm3025, %v10055, %v10054
    %v10057 = vperm.slane %v7312, %v3027
    %v10058 = vsel %vm3029, %v10057, %v10056
    %v10059 = vperm.slane %v7314, %v3031
    %v10060 = vsel %vm3033, %v10059, %v10058
    %v10061 = vsel %vm3084, %v10018, %v10011
    %v10062 = vsel %vm3086, %v10025, %v10061
    %v10063 = vsel %vm3088, %v10032, %v10062
    %v10064 = vsel %vm3090, %v10039, %v10063
    %v10065 = vsel %vm3092, %v10046, %v10064
    %v10066 = vsel %vm3094, %v10053, %v10065
    %v10067 = vsel %vm3096, %v10060, %v10066
    %v10101 = vperm.slane %v7756, %v3021
    %v10102 = vperm.slane %v7758, %v3023
    %v10103 = vsel %vm3025, %v10102, %v10101
    %v10104 = vperm.slane %v7760, %v3027
    %v10105 = vsel %vm3029, %v10104, %v10103
    %v10106 = vperm.slane %v7762, %v3031
    %v10107 = vsel %vm3033, %v10106, %v10105
    %v10108 = vperm.slane %v7764, %v3021
    %v10109 = vperm.slane %v7766, %v3023
    %v10110 = vsel %vm3025, %v10109, %v10108
    %v10111 = vperm.slane %v7768, %v3027
    %v10112 = vsel %vm3029, %v10111, %v10110
    %v10113 = vperm.slane %v7770, %v3031
    %v10114 = vsel %vm3033, %v10113, %v10112
    %v10115 = vperm.slane %v7772, %v3021
    %v10116 = vperm.slane %v7774, %v3023
    %v10117 = vsel %vm3025, %v10116, %v10115
    %v10118 = vperm.slane %v7776, %v3027
    %v10119 = vsel %vm3029, %v10118, %v10117
    %v10120 = vperm.slane %v7778, %v3031
    %v10121 = vsel %vm3033, %v10120, %v10119
    %v10122 = vperm.slane %v7780, %v3021
    %v10123 = vperm.slane %v7782, %v3023
    %v10124 = vsel %vm3025, %v10123, %v10122
    %v10125 = vperm.slane %v7784, %v3027
    %v10126 = vsel %vm3029, %v10125, %v10124
    %v10127 = vperm.slane %v7786, %v3031
    %v10128 = vsel %vm3033, %v10127, %v10126
    %v10129 = vperm.slane %v7788, %v3021
    %v10130 = vperm.slane %v7790, %v3023
    %v10131 = vsel %vm3025, %v10130, %v10129
    %v10132 = vperm.slane %v7792, %v3027
    %v10133 = vsel %vm3029, %v10132, %v10131
    %v10134 = vperm.slane %v7794, %v3031
    %v10135 = vsel %vm3033, %v10134, %v10133
    %v10136 = vperm.slane %v7796, %v3021
    %v10137 = vperm.slane %v7798, %v3023
    %v10138 = vsel %vm3025, %v10137, %v10136
    %v10139 = vperm.slane %v7800, %v3027
    %v10140 = vsel %vm3029, %v10139, %v10138
    %v10141 = vperm.slane %v7802, %v3031
    %v10142 = vsel %vm3033, %v10141, %v10140
    %v10143 = vperm.slane %v7804, %v3021
    %v10144 = vperm.slane %v7806, %v3023
    %v10145 = vsel %vm3025, %v10144, %v10143
    %v10146 = vperm.slane %v7808, %v3027
    %v10147 = vsel %vm3029, %v10146, %v10145
    %v10148 = vperm.slane %v7810, %v3031
    %v10149 = vsel %vm3033, %v10148, %v10147
    %v10150 = vperm.slane %v7812, %v3021
    %v10151 = vperm.slane %v7814, %v3023
    %v10152 = vsel %vm3025, %v10151, %v10150
    %v10153 = vperm.slane %v7816, %v3027
    %v10154 = vsel %vm3029, %v10153, %v10152
    %v10155 = vperm.slane %v7818, %v3031
    %v10156 = vsel %vm3033, %v10155, %v10154
    %v10157 = vsel %vm3084, %v10114, %v10107
    %v10158 = vsel %vm3086, %v10121, %v10157
    %v10159 = vsel %vm3088, %v10128, %v10158
    %v10160 = vsel %vm3090, %v10135, %v10159
    %v10161 = vsel %vm3092, %v10142, %v10160
    %v10162 = vsel %vm3094, %v10149, %v10161
    %v10163 = vsel %vm3096, %v10156, %v10162
    %v10165 = vsel %vm5408, %v9875, -1e+30
    %v10166 = vsel %vm5409, %v9971, -1e+30
    %v10167 = vsel %vm5410, %v10067, -1e+30
    %v10168 = vsel %vm5411, %v10163, -1e+30
    %v10169 = vsel %vm284, %v10165, -inf
    %v10170 = vsel %vm284, %v10166, -inf
    %v10171 = vsel %vm284, %v10167, -inf
    %v10172 = vsel %vm284, %v10168, -inf
    %v10173 = vmax.f32 %v10169, %v10170
    %v10174 = vmax.f32 %v10171, %v10172
    %v10175 = vmax.f32 %v10173, %v10174
    %v10176 = vrot.slane %v10175, 4
    %v10177 = vmax.f32 %v10175, %v10176
    %v10178 = vrot.slane %v10177, 2
    %v10179 = vmax.f32 %v10177, %v10178
    %v10180 = vrot.slane %v10179, 1
    %v10181 = vmax.f32 %v10179, %v10180
    %v10182 = vsub.f32 %v10165, %v10181
    %v10183 = vsub.f32 %v10166, %v10181
    %v10184 = vsub.f32 %v10167, %v10181
    %v10185 = vsub.f32 %v10168, %v10181
    %v10186 = vmul.f32 %v10182, 1.442695
    %v10187 = vpow.pop %v10186
    %v10188 = vmul.f32 %v10183, 1.442695
    %v10189 = vpow.pop %v10188
    %v10190 = vmul.f32 %v10184, 1.442695
    %v10191 = vpow.pop %v10190
    %v10192 = vmul.f32 %v10185, 1.442695
    %v10193 = vpow.pop %v10192
    %v10194 = vmul.f32 %v10187, %v5404
    %v10195 = vmul.f32 %v10189, %v5405
    %v10196 = vmul.f32 %v10191, %v5406
    %v10197 = vmul.f32 %v10193, %v5407
    %v10198 = vsel %vm284, %v10194, 0.0
    %v10199 = vsel %vm284, %v10195, 0.0
    %v10200 = vadd.f32 %v10198, %v10199
    %v10201 = vsel %vm284, %v10196, 0.0
    %v10202 = vadd.f32 %v10200, %v10201
    %v10203 = vsel %vm284, %v10197, 0.0
    %v10204 = vadd.f32 %v10202, %v10203
    %v10205 = vrot.slane %v10204, 4
    %v10206 = vadd.f32 %v10204, %v10205
    %v10207 = vrot.slane %v10206, 2
    %v10208 = vadd.f32 %v10206, %v10207
    %v10209 = vrot.slane %v10208, 1
    %v10210 = vadd.f32 %v10208, %v10209
    %v10211 = vmax.f32 %v10210, 1e-30
    %v10212 = vrcp.pop %v10211
    %v10213 = vmul.f32 %v10194, %v10212
    %v10214 = vmul.f32 %v10195, %v10212
    %v10215 = vmul.f32 %v10196, %v10212
    %v10216 = vmul.f32 %v10197, %v10212
    %10217 = vxpose.xlu0.b32.start [1/16] %v10213, 128
    %10218 = vxpose.xlu0.b32.cont [2/16] %v10214, 128
    %10219 = vxpose.xlu0.b32.cont [3/16] %v10215, 128
    %10220 = vxpose.xlu0.b32.cont [4/16] %v10216, 128
    %10221 = vxpose.xlu0.b32.cont [5/16] 0.0, 128
    %10222 = vxpose.xlu0.b32.cont [6/16] 0.0, 128
    %10223 = vxpose.xlu0.b32.cont [7/16] 0.0, 128
    %10224 = vxpose.xlu0.b32.cont [8/16] 0.0, 128
    %10225 = vxpose.xlu0.b32.cont [9/16] 0.0, 128
    %10226 = vxpose.xlu0.b32.cont [10/16] 0.0, 128
    %10227 = vxpose.xlu0.b32.cont [11/16] 0.0, 128
    %10228 = vxpose.xlu0.b32.cont [12/16] 0.0, 128
    %10229 = vxpose.xlu0.b32.cont [13/16] 0.0, 128
    %10230 = vxpose.xlu0.b32.cont [14/16] 0.0, 128
    %10231 = vxpose.xlu0.b32.cont [15/16] 0.0, 128
    %10232 = vxpose.xlu0.b32.end [16/16] 0.0, 128
    %v10233 = vpop.trf.xlu0
    %v10234 = vpop.trf.xlu0
    %v10235 = vpop.trf.xlu0
    %v10236 = vpop.trf.xlu0
    %v10237 = vpop.trf.xlu0
    %v10238 = vpop.trf.xlu0
    %v10239 = vpop.trf.xlu0
    %v10240 = vpop.trf.xlu0
    %v10241 = vpop.trf.xlu0
    %v10242 = vpop.trf.xlu0
    %v10243 = vpop.trf.xlu0
    %v10244 = vpop.trf.xlu0
    %v10245 = vpop.trf.xlu0
    %v10246 = vpop.trf.xlu0
    %v10247 = vpop.trf.xlu0
    %v10248 = vpop.trf.xlu0
    %10249 = vrot.lane.b32.xlu0 %v5773, 32
    %v10250 = vpop.permute.xlu0 %10249
    %10251 = vrot.lane.b32.xlu0 %v5774, 32
    %v10252 = vpop.permute.xlu0 %10251
    %10253 = vrot.lane.b32.xlu0 %v5775, 32
    %v10254 = vpop.permute.xlu0 %10253
    %10255 = vrot.lane.b32.xlu0 %v5776, 32
    %v10256 = vpop.permute.xlu0 %10255
    %v10262 = vsel %vm284, %v10233, 0
    %v10265 = vsel %vm284, %v10234, 0
    %v10268 = vsel %vm284, %v10235, 0
    %v10271 = vsel %vm284, %v10236, 0
    %10273 = vmatpush.msra.mxu0 0.0
    %10274 = vmatpush.msra.mxu0 0.0
    %10275 = vmatpush.msra.mxu0 0.0
    %10276 = vmatpush.msra.mxu0 0.0
    %10277 = vmatpush.msra.mxu0 0.0
    %10278 = vmatpush.msra.mxu0 0.0
    %10279 = vmatpush.msra.mxu0 0.0
    %10280 = vmatpush.msra.mxu0 0.0
    %10281 = vmatpush.msra.mxu0 0.0
    %10282 = vmatpush.msra.mxu0 0.0
    %10283 = vmatpush.msra.mxu0 0.0
    %10284 = vmatpush.msra.mxu0 0.0
    %10285 = vmatpush.msra.mxu0 %v10256
    %10286 = vmatpush.msra.mxu0 %v10254
    %10287 = vmatpush.msra.mxu0 %v10252
    %10288 = vmatpush.msra.mxu0 %v10250
    %10289 = vmatmul.f32.gmra.mxu0 %v10262
    %v10290 = vpop.f32.mrf.mxu0
    %v10291 = vadd.f32 %v8906, %v10290
    %10292 = vmatmul.f32.gmra.mxu0 %v10265
    %v10293 = vpop.f32.mrf.mxu0
    %v10294 = vadd.f32 %v8906, %v10293
    %10295 = vmatmul.f32.gmra.mxu0 %v10268
    %v10296 = vpop.f32.mrf.mxu0
    %v10297 = vadd.f32 %v8906, %v10296
    %10298 = vmatmul.f32.gmra.mxu0 %v10271
    %v10299 = vpop.f32.mrf.mxu0
    %v10300 = vadd.f32 %v8906, %v10299
    %10301 = vdwg.mxu0
    %v10302 = vmul.f32 %v10291, %v4871
    %v10303 = vmul.f32 %v10294, %v4875
    %v10304 = vmul.f32 %v10297, %v4879
    %v10305 = vmul.f32 %v10300, %v4883
    %v10306 = vsel %vm284, %v10302, 0.0
    %v10307 = vsel %vm284, %v10303, 0.0
    %v10308 = vadd.f32 %v10306, %v10307
    %v10309 = vsel %vm284, %v10304, 0.0
    %v10310 = vadd.f32 %v10308, %v10309
    %v10311 = vsel %vm284, %v10305, 0.0
    %v10312 = vadd.f32 %v10310, %v10311
    %10313 = vadd.xlane.f32.xlu0 %v10312
    %v10314 = vpop.xlane.xlu0 %10313
    %v10315 = vrot.slane %v10314, 4
    %v10316 = vadd.f32 %v10314, %v10315
    %v10317 = vrot.slane %v10316, 2
    %v10318 = vadd.f32 %v10316, %v10317
    %v10319 = vrot.slane %v10318, 1
    %v10320 = vadd.f32 %v10318, %v10319
    %s10321 = vtos %v10320
    %v10322 = vstv %s4905
    %v10323 = vrcp.pop %v10322
    %v10324 = vmul.f32 %v10322, %v10323
    %v10325 = vsub.f32 1.0, %v10324
    %v10326 = vmul.f32 %v10323, %v10325
    %v10327 = vadd.f32 %v10323, %v10326
    %vm10328 = vweird.f32 %v10322
    %vm10329 = vweird.f32 %v10323
    %vm10330 = vmor %vm10328, %vm10329
    %v10331 = vsel %vm10330, %v10323, %v10327
    %v10332 = vand.u32 2147483647, %v10322
    %vm10333 = vcmp.eq.f32.partialorder %v10332, 8.507059e+37
    %v10334 = vand.u32 %v10322, 2147483648
    %v10335 = vor.u32 1.1754944e-38, %v10334
    %v10336 = vsel %vm10333, %v10335, %v10331
    %s10337 = vtos %v10336
    %s10338 = smul.f32 %s10321, %s10337
    %v10339 = vstv %s10338
    %v10340 = vsub.f32 %v10291, %v10339
    %v10341 = vsub.f32 %v10294, %v10339
    %v10342 = vsub.f32 %v10297, %v10339
    %v10343 = vsub.f32 %v10300, %v10339
    %v10344 = vmul.f32 %v10340, %v4871
    %v10345 = vmul.f32 %v10341, %v4875
    %v10346 = vmul.f32 %v10342, %v4879
    %v10347 = vmul.f32 %v10343, %v4883
    %v10348 = vmul.f32 %v10344, %v10344
    %v10349 = vmul.f32 %v10345, %v10345
    %v10350 = vmul.f32 %v10346, %v10346
    %v10351 = vmul.f32 %v10347, %v10347
    %v10352 = vsel %vm284, %v10348, 0.0
    %v10353 = vsel %vm284, %v10349, 0.0
    %v10354 = vadd.f32 %v10352, %v10353
    %v10355 = vsel %vm284, %v10350, 0.0
    %v10356 = vadd.f32 %v10354, %v10355
    %v10357 = vsel %vm284, %v10351, 0.0
    %v10358 = vadd.f32 %v10356, %v10357
    %10359 = vadd.xlane.f32.xlu0 %v10358
    %v10360 = vpop.xlane.xlu0 %10359
    %v10361 = vrot.slane %v10360, 4
    %v10362 = vadd.f32 %v10360, %v10361
    %v10363 = vrot.slane %v10362, 2
    %v10364 = vadd.f32 %v10362, %v10363
    %v10365 = vrot.slane %v10364, 1
    %v10366 = vadd.f32 %v10364, %v10365
    %s10367 = vtos %v10366
    %v10368 = vstv %s4905
    %v10369 = vrcp.pop %v10368
    %v10370 = vmul.f32 %v10368, %v10369
    %v10371 = vsub.f32 1.0, %v10370
    %v10372 = vmul.f32 %v10369, %v10371
    %v10373 = vadd.f32 %v10369, %v10372
    %vm10374 = vweird.f32 %v10368
    %vm10375 = vweird.f32 %v10369
    %vm10376 = vmor %vm10374, %vm10375
    %v10377 = vsel %vm10376, %v10369, %v10373
    %v10378 = vand.u32 2147483647, %v10368
    %vm10379 = vcmp.eq.f32.partialorder %v10378, 8.507059e+37
    %v10380 = vand.u32 %v10368, 2147483648
    %v10381 = vor.u32 1.1754944e-38, %v10380
    %v10382 = vsel %vm10379, %v10381, %v10377
    %s10383 = vtos %v10382
    %s10384 = smul.f32 %s10367, %s10383
    %v10385 = vstv %s10384
    %v10386 = vrsqrt.pop %v10385
    %v10387 = vmul.f32 %v10386, %v10385
    %v10388 = vmul.f32 %v10387, %v10386
    %v10389 = vmul.f32 0.5, %v10388
    %v10390 = vsub.f32 1.5, %v10389
    %v10391 = vmul.f32 %v10386, %v10390
    %v10392 = vmul.f32 %v10385, %v10391
    %vm10393 = vcmp.eq.f32.partialorder %v10385, inf
    %v10394 = vsel %vm10393, %v10385, %v10392
    %vm10395 = vcmp.eq.f32.partialorder %v10385, 0.0
    %v10396 = vand.u32 %v10385, 2147483648
    %v10397 = vsel %vm10395, %v10396, %v10394
    %s10398 = vtos %v10397
    %s10399 = sadd.f32 %s10398, 1e-05
    %v10400 = vstv %s10399
    %v10401 = vrcp.pop %v10400
    %v10402 = vmul.f32 %v10400, %v10401
    %v10403 = vsub.f32 1.0, %v10402
    %v10404 = vmul.f32 %v10401, %v10403
    %v10405 = vadd.f32 %v10401, %v10404
    %vm10406 = vweird.f32 %v10400
    %vm10407 = vweird.f32 %v10401
    %vm10408 = vmor %vm10406, %vm10407
    %v10409 = vsel %vm10408, %v10401, %v10405
    %v10410 = vand.u32 2147483647, %v10400
    %vm10411 = vcmp.eq.f32.partialorder %v10410, 8.507059e+37
    %v10412 = vand.u32 %v10400, 2147483648
    %v10413 = vor.u32 1.1754944e-38, %v10412
    %v10414 = vsel %vm10411, %v10413, %v10409
    %v10415 = vmul.f32 %v10340, %v10414
    %v10416 = vmul.f32 %v10341, %v10414
    %v10417 = vmul.f32 %v10342, %v10414
    %v10418 = vmul.f32 %v10343, %v10414
    %v10419 = vmul.f32 %v10415, %v9109
    %v10420 = vmul.f32 %v10416, %v9109
    %v10421 = vmul.f32 %v10417, %v9109
    %v10422 = vmul.f32 %v10418, %v9109
    %v10423 = vadd.f32 %v10419, %v9114
    %v10424 = vadd.f32 %v10420, %v9114
    %v10425 = vadd.f32 %v10421, %v9114
    %v10426 = vadd.f32 %v10422, %v9114
    %v10427 = vmax.f32 %v10423, 0.0
    %v10428 = vmax.f32 %v10424, 0.0
    %v10429 = vmax.f32 %v10425, 0.0
    %v10430 = vmax.f32 %v10426, 0.0
    %v10431 = vadd.f32 %v9777, %v10427
    %v10432 = vadd.f32 %v9778, %v10428
    %v10433 = vadd.f32 %v9779, %v10429
    %v10434 = vadd.f32 %v9780, %v10430
    %v10435 = vld [vmem:[#allocation14] sm:$0xff]
    %v10436 = vld [vmem:[#allocation14 + $0x8] sm:$0xff]
    %v10437 = vld [vmem:[#allocation14 + $0x10] sm:$0xff]
    %v10438 = vld [vmem:[#allocation14 + $0x18] sm:$0xff]
    %v10439 = vld [vmem:[#allocation15] sm:$0x1]
    %v10441 = vperm.slane %v10439, 0
    %v10444 = vsel %vm284, %v9123, 0
    %v10447 = vsel %vm284, %v9124, 0
    %v10450 = vsel %vm284, %v9125, 0
    %v10453 = vsel %vm284, %v9126, 0
    %v10456 = vsel %vm284, %v10431, 0
    %v10459 = vsel %vm284, %v10432, 0
    %v10462 = vsel %vm284, %v10433, 0
    %v10465 = vsel %vm284, %v10434, 0
    %10467 = vmatpush.msra.mxu0 0.0
    %10468 = vmatpush.msra.mxu0 0.0
    %10469 = vmatpush.msra.mxu0 0.0
    %10470 = vmatpush.msra.mxu0 0.0
    %10471 = vmatpush.msra.mxu0 0.0
    %10472 = vmatpush.msra.mxu0 0.0
    %10473 = vmatpush.msra.mxu0 0.0
    %10474 = vmatpush.msra.mxu0 0.0
    %10475 = vmatpush.msra.mxu0 0.0
    %10476 = vmatpush.msra.mxu0 0.0
    %10477 = vmatpush.msra.mxu0 0.0
    %10478 = vmatpush.msra.mxu0 0.0
    %10479 = vmatpush.msra.mxu0 %v10438
    %10480 = vmatpush.msra.mxu0 %v10437
    %10481 = vmatpush.msra.mxu0 %v10436
    %10482 = vmatpush.msra.mxu0 %v10435
    %10483 = vmatmul.f32.gmra.mxu0 %v10444
    %v10484 = vpop.f32.mrf.mxu0
    %v10485 = vadd.f32 %v10441, %v10484
    %10486 = vmatmul.f32.gmra.mxu0 %v10447
    %v10487 = vpop.f32.mrf.mxu0
    %v10488 = vadd.f32 %v10441, %v10487
    %10489 = vmatmul.f32.gmra.mxu0 %v10450
    %v10490 = vpop.f32.mrf.mxu0
    %v10491 = vadd.f32 %v10441, %v10490
    %10492 = vmatmul.f32.gmra.mxu0 %v10453
    %v10493 = vpop.f32.mrf.mxu0
    %v10494 = vadd.f32 %v10441, %v10493
    %10495 = vmatmul.f32.gmra.mxu0 %v10456
    %v10496 = vpop.f32.mrf.mxu0
    %v10497 = vadd.f32 %v10441, %v10496
    %10498 = vmatmul.f32.gmra.mxu0 %v10459
    %v10499 = vpop.f32.mrf.mxu0
    %v10500 = vadd.f32 %v10441, %v10499
    %10501 = vmatmul.f32.gmra.mxu0 %v10462
    %v10502 = vpop.f32.mrf.mxu0
    %v10503 = vadd.f32 %v10441, %v10502
    %10504 = vmatmul.f32.gmra.mxu0 %v10465
    %v10505 = vpop.f32.mrf.mxu0
    %v10506 = vadd.f32 %v10441, %v10505
    %10507 = vdwg.mxu0
    %v10508 = vmax.f32 %v10485, 0.0
    %v10509 = vmax.f32 %v10488, 0.0
    %v10510 = vmax.f32 %v10491, 0.0
    %v10511 = vmax.f32 %v10494, 0.0
    %v10512 = vmax.f32 %v10497, 0.0
    %v10513 = vmax.f32 %v10500, 0.0
    %v10514 = vmax.f32 %v10503, 0.0
    %v10515 = vmax.f32 %v10506, 0.0
    %v10516 = vld [vmem:[%s16] sm:$0x1]
    %v10518 = vperm.slane %v10516, 0
    %10519 = vrot.lane.b32.xlu0 %v10518, 32
    %v10520 = vpop.permute.xlu0 %10519
    %v10522 = vmul.f32 %v10508, %v10520
    %v10523 = vmul.f32 %v10509, %v10520
    %v10524 = vmul.f32 %v10510, %v10520
    %v10525 = vmul.f32 %v10511, %v10520
    %v10526 = vmul.f32 %v10512, %v10520
    %v10527 = vmul.f32 %v10513, %v10520
    %v10528 = vmul.f32 %v10514, %v10520
    %v10529 = vmul.f32 %v10515, %v10520
    %10538 = vrot.lane.b32.xlu0 %v10522, 96
    %v10539 = vpop.permute.xlu0 %10538
    %10540 = vrot.lane.b32.xlu0 %v10523, 96
    %v10541 = vpop.permute.xlu0 %10540
    %10542 = vrot.lane.b32.xlu0 %v10524, 96
    %v10543 = vpop.permute.xlu0 %10542
    %10544 = vrot.lane.b32.xlu0 %v10525, 96
    %v10545 = vpop.permute.xlu0 %10544
    %10546 = vrot.lane.b32.xlu0 %v10526, 96
    %v10547 = vpop.permute.xlu0 %10546
    %10548 = vrot.lane.b32.xlu0 %v10527, 96
    %v10549 = vpop.permute.xlu0 %10548
    %10550 = vrot.lane.b32.xlu0 %v10528, 96
    %v10551 = vpop.permute.xlu0 %10550
    %10552 = vrot.lane.b32.xlu0 %v10529, 96
    %v10553 = vpop.permute.xlu0 %10552
    %vm10562 = vcmask 130048
    %v10563 = vsel %vm10562, %v10539, 0.0
    %10564 = vadd.xlane.f32.xlu0 %v10563
    %v10565 = vpop.xlane.xlu0 %10564
    %v10566 = vsel %vm10562, %v10541, 0.0
    %10567 = vadd.xlane.f32.xlu0 %v10566
    %v10568 = vpop.xlane.xlu0 %10567
    %v10569 = vsel %vm10562, %v10543, 0.0
    %10570 = vadd.xlane.f32.xlu0 %v10569
    %v10571 = vpop.xlane.xlu0 %10570
    %v10572 = vsel %vm10562, %v10545, 0.0
    %10573 = vadd.xlane.f32.xlu0 %v10572
    %v10574 = vpop.xlane.xlu0 %10573
    %v10575 = vsel %vm10562, %v10547, 0.0
    %10576 = vadd.xlane.f32.xlu0 %v10575
    %v10577 = vpop.xlane.xlu0 %10576
    %v10578 = vsel %vm10562, %v10549, 0.0
    %10579 = vadd.xlane.f32.xlu0 %v10578
    %v10580 = vpop.xlane.xlu0 %10579
    %v10581 = vsel %vm10562, %v10551, 0.0
    %10582 = vadd.xlane.f32.xlu0 %v10581
    %v10583 = vpop.xlane.xlu0 %10582
    %v10584 = vsel %vm10562, %v10553, 0.0
    %10585 = vadd.xlane.f32.xlu0 %v10584
    %v10586 = vpop.xlane.xlu0 %10585
    %v10587 = vld [vmem:[#allocation2] sm:$0x1]
    %v10589 = vperm.slane %v10587, 0
    %v10591 = vadd.f32 %v10565, %v10589
    %v10592 = vadd.f32 %v10568, %v10589
    %v10593 = vadd.f32 %v10571, %v10589
    %v10594 = vadd.f32 %v10574, %v10589
    %v10595 = vadd.f32 %v10577, %v10589
    %v10596 = vadd.f32 %v10580, %v10589
    %v10597 = vadd.f32 %v10583, %v10589
    %v10598 = vadd.f32 %v10586, %v10589
    %vm10599 = vcmp.gt.f32.partialorder %v219, 0.0
    %vm10600 = vcmp.gt.f32.partialorder %v220, 0.0
    %vm10601 = vcmp.gt.f32.partialorder %v221, 0.0
    %vm10602 = vcmp.gt.f32.partialorder %v222, 0.0
    %vm10603 = vcmp.gt.f32.partialorder %v223, 0.0
    %vm10604 = vcmp.gt.f32.partialorder %v224, 0.0
    %vm10605 = vcmp.gt.f32.partialorder %v225, 0.0
    %vm10606 = vcmp.gt.f32.partialorder %v226, 0.0
    %10608 = vset.pattern.permute.xlu0 0
    %10609 = vperm.xlu0 %10608, %v10591
    %v10610 = vpop.permute.xlu0 %10609
    %10613 = vset.pattern.permute.xlu0 0
    %10614 = vperm.xlu0 %10613, %v10592
    %v10615 = vpop.permute.xlu0 %10614
    %10618 = vset.pattern.permute.xlu0 0
    %10619 = vperm.xlu0 %10618, %v10593
    %v10620 = vpop.permute.xlu0 %10619
    %10623 = vset.pattern.permute.xlu0 0
    %10624 = vperm.xlu0 %10623, %v10594
    %v10625 = vpop.permute.xlu0 %10624
    %10628 = vset.pattern.permute.xlu0 0
    %10629 = vperm.xlu0 %10628, %v10595
    %v10630 = vpop.permute.xlu0 %10629
    %10633 = vset.pattern.permute.xlu0 0
    %10634 = vperm.xlu0 %10633, %v10596
    %v10635 = vpop.permute.xlu0 %10634
    %10638 = vset.pattern.permute.xlu0 0
    %10639 = vperm.xlu0 %10638, %v10597
    %v10640 = vpop.permute.xlu0 %10639
    %10643 = vset.pattern.permute.xlu0 0
    %10644 = vperm.xlu0 %10643, %v10598
    %v10645 = vpop.permute.xlu0 %10644
    %v10647 = vsel %vm10599, %v10610, -1e+30
    %v10648 = vsel %vm10600, %v10615, -1e+30
    %v10649 = vsel %vm10601, %v10620, -1e+30
    %v10650 = vsel %vm10602, %v10625, -1e+30
    %v10651 = vsel %vm10603, %v10630, -1e+30
    %v10652 = vsel %vm10604, %v10635, -1e+30
    %v10653 = vsel %vm10605, %v10640, -1e+30
    %v10654 = vsel %vm10606, %v10645, -1e+30
    %vm10655 = vcmask 64512
    %v10656 = vsel %vm10655, %v10647, -inf
    %v10657 = vsel %vm10655, %v10648, -inf
    %v10658 = vsel %vm10655, %v10649, -inf
    %v10659 = vsel %vm10655, %v10650, -inf
    %v10660 = vsel %vm10655, %v10651, -inf
    %v10661 = vmax.f32 %v10656, %v10660
    %v10662 = vsel %vm10655, %v10652, -inf
    %v10663 = vmax.f32 %v10657, %v10662
    %v10664 = vsel %vm10655, %v10653, -inf
    %v10665 = vmax.f32 %v10658, %v10664
    %v10666 = vsel %vm10655, %v10654, -inf
    %v10667 = vmax.f32 %v10659, %v10666
    %v10668 = vmax.f32 %v10661, %v10663
    %v10669 = vmax.f32 %v10665, %v10667
    %v10670 = vmax.f32 %v10668, %v10669
    %v10671 = vrot.slane %v10670, 4
    %v10672 = vmax.f32 %v10670, %v10671
    %v10673 = vrot.slane %v10672, 2
    %v10674 = vmax.f32 %v10672, %v10673
    %v10675 = vrot.slane %v10674, 1
    %v10676 = vmax.f32 %v10674, %v10675
    %v10677 = vsub.f32 %v10647, %v10676
    %v10678 = vsub.f32 %v10648, %v10676
    %v10679 = vsub.f32 %v10649, %v10676
    %v10680 = vsub.f32 %v10650, %v10676
    %v10681 = vsub.f32 %v10651, %v10676
    %v10682 = vsub.f32 %v10652, %v10676
    %v10683 = vsub.f32 %v10653, %v10676
    %v10684 = vsub.f32 %v10654, %v10676
    %v10685 = vmul.f32 %v10677, 1.442695
    %v10686 = vpow.pop %v10685
    %v10687 = vmul.f32 %v10678, 1.442695
    %v10688 = vpow.pop %v10687
    %v10689 = vmul.f32 %v10679, 1.442695
    %v10690 = vpow.pop %v10689
    %v10691 = vmul.f32 %v10680, 1.442695
    %v10692 = vpow.pop %v10691
    %v10693 = vmul.f32 %v10681, 1.442695
    %v10694 = vpow.pop %v10693
    %v10695 = vmul.f32 %v10682, 1.442695
    %v10696 = vpow.pop %v10695
    %v10697 = vmul.f32 %v10683, 1.442695
    %v10698 = vpow.pop %v10697
    %v10699 = vmul.f32 %v10684, 1.442695
    %v10700 = vpow.pop %v10699
    %v10701 = vmul.f32 %v10686, %v219
    %v10702 = vmul.f32 %v10688, %v220
    %v10703 = vmul.f32 %v10690, %v221
    %v10704 = vmul.f32 %v10692, %v222
    %v10705 = vmul.f32 %v10694, %v223
    %v10706 = vmul.f32 %v10696, %v224
    %v10707 = vmul.f32 %v10698, %v225
    %v10708 = vmul.f32 %v10700, %v226
    %v10709 = vsel %vm10655, %v10701, 0.0
    %v10710 = vsel %vm10655, %v10702, 0.0
    %v10711 = vadd.f32 %v10709, %v10710
    %v10712 = vsel %vm10655, %v10703, 0.0
    %v10713 = vadd.f32 %v10711, %v10712
    %v10714 = vsel %vm10655, %v10704, 0.0
    %v10715 = vadd.f32 %v10713, %v10714
    %v10716 = vsel %vm10655, %v10705, 0.0
    %v10717 = vadd.f32 %v10715, %v10716
    %v10718 = vsel %vm10655, %v10706, 0.0
    %v10719 = vadd.f32 %v10717, %v10718
    %v10720 = vsel %vm10655, %v10707, 0.0
    %v10721 = vadd.f32 %v10719, %v10720
    %v10722 = vsel %vm10655, %v10708, 0.0
    %v10723 = vadd.f32 %v10721, %v10722
    %v10724 = vrot.slane %v10723, 4
    %v10725 = vadd.f32 %v10723, %v10724
    %v10726 = vrot.slane %v10725, 2
    %v10727 = vadd.f32 %v10725, %v10726
    %v10728 = vrot.slane %v10727, 1
    %v10729 = vadd.f32 %v10727, %v10728
    %v10730 = vmax.f32 %v10729, 1e-30
    %v10731 = vrcp.pop %v10730
    %v10732 = vmul.f32 %v10701, %v10731
    %v10733 = vmul.f32 %v10702, %v10731
    %v10734 = vmul.f32 %v10703, %v10731
    %v10735 = vmul.f32 %v10704, %v10731
    %v10736 = vmul.f32 %v10705, %v10731
    %v10737 = vmul.f32 %v10706, %v10731
    %v10738 = vmul.f32 %v10707, %v10731
    %v10739 = vmul.f32 %v10708, %v10731
    %10740 = vxpose.xlu0.b32.start [1/16] %v10732, 128
    %10741 = vxpose.xlu0.b32.cont [2/16] %v10733, 128
    %10742 = vxpose.xlu0.b32.cont [3/16] %v10734, 128
    %10743 = vxpose.xlu0.b32.cont [4/16] %v10735, 128
    %10744 = vxpose.xlu0.b32.cont [5/16] %v10736, 128
    %10745 = vxpose.xlu0.b32.cont [6/16] %v10737, 128
    %10746 = vxpose.xlu0.b32.cont [7/16] %v10738, 128
    %10747 = vxpose.xlu0.b32.cont [8/16] %v10739, 128
    %10748 = vxpose.xlu0.b32.cont [9/16] 0.0, 128
    %10749 = vxpose.xlu0.b32.cont [10/16] 0.0, 128
    %10750 = vxpose.xlu0.b32.cont [11/16] 0.0, 128
    %10751 = vxpose.xlu0.b32.cont [12/16] 0.0, 128
    %10752 = vxpose.xlu0.b32.cont [13/16] 0.0, 128
    %10753 = vxpose.xlu0.b32.cont [14/16] 0.0, 128
    %10754 = vxpose.xlu0.b32.cont [15/16] 0.0, 128
    %10755 = vxpose.xlu0.b32.end [16/16] 0.0, 128
    %v10756 = vpop.trf.xlu0
    %v10757 = vpop.trf.xlu0
    %v10758 = vpop.trf.xlu0
    %v10759 = vpop.trf.xlu0
    %v10760 = vpop.trf.xlu0
    %v10761 = vpop.trf.xlu0
    %v10762 = vpop.trf.xlu0
    %v10763 = vpop.trf.xlu0
    %v10764 = vpop.trf.xlu0
    %v10765 = vpop.trf.xlu0
    %v10766 = vpop.trf.xlu0
    %v10767 = vpop.trf.xlu0
    %v10768 = vpop.trf.xlu0
    %v10769 = vpop.trf.xlu0
    %v10770 = vpop.trf.xlu0
    %v10771 = vpop.trf.xlu0
    %v10773 = vsel %vm939, %v10756, 0
    %10775 = vmatpush.msra.mxu0 0.0
    %10776 = vmatpush.msra.mxu0 0.0
    %10777 = vmatpush.msra.mxu0 0.0
    %10778 = vmatpush.msra.mxu0 0.0
    %10779 = vmatpush.msra.mxu0 0.0
    %10780 = vmatpush.msra.mxu0 0.0
    %10781 = vmatpush.msra.mxu0 0.0
    %10782 = vmatpush.msra.mxu0 0.0
    %10783 = vmatpush.msra.mxu0 %v10515
    %10784 = vmatpush.msra.mxu0 %v10514
    %10785 = vmatpush.msra.mxu0 %v10513
    %10786 = vmatpush.msra.mxu0 %v10512
    %10787 = vmatpush.msra.mxu0 %v10511
    %10788 = vmatpush.msra.mxu0 %v10510
    %10789 = vmatpush.msra.mxu0 %v10509
    %10790 = vmatpush.msra.mxu0 %v10508
    %10791 = vmatmul.f32.gmra.mxu0 %v10773
    %v10792 = vpop.f32.mrf.mxu0
    %v10793 = vadd.f32 0.0, %v10792
    %10794 = vdwg.mxu0
    %10795 = vst.msk [vmem:[%s20] sm:$0xff] %vm284, %v10793
    %v10796 = vperm.slane %v10793, 0
    %v10797 = vsub.f32 %v10796, %v10793
    %vm10798 = vcmask 256001
    %10799 = vst.msk [vmem:[#allocation18 - $0x1] sm:$0x6] %vm10798, %v10797
    %v10800 = vld [vmem:[%s18] sm:$0xff]
    %v10801 = vld [vmem:[%s18 + $0x8] sm:$0xff]
    %v10802 = vld [vmem:[%s18 + $0x10] sm:$0xff]
    %v10803 = vld [vmem:[%s18 + $0x18] sm:$0xff]
    %v10804 = vld [vmem:[#allocation17] sm:$0x1]
    %v10806 = vperm.slane %v10804, 0
    %v10809 = vrot.slane %v10797, 1
    %v10810 = vsel %vm284, %v10809, 0
    %10812 = vmatpush.msra.mxu0 0.0
    %10813 = vmatpush.msra.mxu0 0.0
    %10814 = vmatpush.msra.mxu0 0.0
    %10815 = vmatpush.msra.mxu0 0.0
    %10816 = vmatpush.msra.mxu0 0.0
    %10817 = vmatpush.msra.mxu0 0.0
    %10818 = vmatpush.msra.mxu0 0.0
    %10819 = vmatpush.msra.mxu0 0.0
    %10820 = vmatpush.msra.mxu0 0.0
    %10821 = vmatpush.msra.mxu0 0.0
    %10822 = vmatpush.msra.mxu0 0.0
    %10823 = vmatpush.msra.mxu0 0.0
    %10824 = vmatpush.msra.mxu0 %v10803
    %10825 = vmatpush.msra.mxu0 %v10802
    %10826 = vmatpush.msra.mxu0 %v10801
    %10827 = vmatpush.msra.mxu0 %v10800
    %10828 = vmatmul.f32.gmra.mxu0 %v10810
    %v10829 = vpop.f32.mrf.mxu0
    %v10830 = vadd.f32 %v10806, %v10829
    %10831 = vdwg.mxu0
    %vm10832 = vcmask 9216
    %10833 = vst.msk [vmem:[%s22] sm:$0x3] %vm10832, %v10830
    // Predicated region
    $region118: #{hetero_cell_forward.1} parent=1 // pred_check
      _
    $region119: #{hetero_cell_forward.1} parent=1 // pred_check_branch
      %10835 = sbr.rel (0) target = $region121
    $region120: #{hetero_cell_forward.1} parent=1 // pred_region
      _
    $region121: #{hetero_cell_forward.1} parent=1 // pred_fallthru
      _
    // Predicated region
    $region122: #{hetero_cell_forward.1} parent=1 // pred_check
      _
    $region123: #{hetero_cell_forward.1} parent=1 // pred_check_branch
      %10837 = sbr.rel (0) target = $region125
    $region124: #{hetero_cell_forward.1} parent=1 // pred_region
      %10839 = vsyncadd [#allocation5], 0
      %s10841 = sshll.u32 [#allocation18], 4
      %s10842 = int_to_ptr.vmem [resolvable:$true] %s10841
      %s10843 = sshll.u32 %s21, 4
      %s10844 = int_to_ptr.hbm [resolvable:$true] %s10843
      %10846 = dma.vmem_to_hbm [thread:$0]  %s10842, 32, %s10844, [#allocation5]
    $region125: #{hetero_cell_forward.1} parent=1 // pred_fallthru
      _
    // Predicated region
    $region126: #{hetero_cell_forward.1} parent=1 // pred_check
      _
    $region127: #{hetero_cell_forward.1} parent=1 // pred_check_branch
      %10848 = sbr.rel (0) target = $region129
    $region128: #{hetero_cell_forward.1} parent=1 // pred_region
      _
    $region129: #{hetero_cell_forward.1} parent=1 // pred_fallthru
      _
    // Predicated region
    $region130: #{hetero_cell_forward.1} parent=1 // pred_check
      _
    $region131: #{hetero_cell_forward.1} parent=1 // pred_check_branch
      %10850 = sbr.rel (0) target = $region133
    $region132: #{hetero_cell_forward.1} parent=1 // pred_region
      _
    $region133: #{hetero_cell_forward.1} parent=1 // pred_fallthru
      _
    // Predicated region
    $region134: #{hetero_cell_forward.1} parent=1 // pred_check
      _
    $region135: #{hetero_cell_forward.1} parent=1 // pred_check_branch
      %10852 = sbr.rel (0) target = $region137
    $region136: #{hetero_cell_forward.1} parent=1 // pred_region
      %10854 = dma.done [#allocation5], 32
    $region137: #{hetero_cell_forward.1} parent=1 // pred_fallthru
      _
    // Predicated region
    $region138: #{hetero_cell_forward.1} parent=1 // pred_check
      _
    $region139: #{hetero_cell_forward.1} parent=1 // pred_check_branch
      %10856 = sbr.rel (0) target = $region141
    $region140: #{hetero_cell_forward.1} parent=1 // pred_region
      _
    $region141: #{hetero_cell_forward.1} parent=1 // pred_fallthru
      _
    %10857 = vsyncpa [#allocation4], 1
    %10858 = vsyncpa [#allocation7], 1
    %10859 = vsyncpa [#allocation10], 1
    %10860 = vsyncpa [#allocation13], 1
    %10861 = vsyncpa [#allocation16], 1
    %10862 = vsyncpa [#allocation5], 1

</llo_original>
